<compile_context>
chip_gen: v6e
topology: v6e:2x2x1
jax: 0.10.0
libtpu: 0.0.40
codegen_flags: <defaults>
</compile_context>

<pallas_src>
import functools
import numpy as np

import jax
import jax.numpy as jnp
from jax import lax
from jax.experimental import pallas as pl
from jax.experimental.pallas import tpu as pltpu

# ----------------------------- scaled-down config ----------------------------
B          = 16         # batch (folded into matmul rows -> more rows per weight pass)
GROUP      = 8          # batches per grid step -> 64-row matmuls per step
C_IN       = 3          # image channels
IMG        = 16         # image H = W
PATCH      = 4          # patch size -> 4x4 = 16 patches
L_PATCH    = (IMG // PATCH) ** 2            # 16 patches (CLS dropped later)
SEQ        = L_PATCH + 1                    # +1 CLS token
D_MODEL    = 128        # stands in for 1024
NUM_HEADS  = 4          # stands in for 16
D_HEAD     = D_MODEL // NUM_HEADS
FFN_DIM    = 4 * D_MODEL
FFN_CHUNK  = 256        # FFN tiled over lanes with an f32 accumulator
P_EXP      = 64         # proj:     1024 -> 512 scaled
P_SIT      = 96         # proj_Sit: 1024 -> 768 scaled
N_TOKENS   = 7          # learnable visual tokens (7 concept keys)
T_PAD      = 8          # tokens padded to a full sublane group
CONCEPT_KEYS   = ["color", "shape", "border", "dermoscopic structures",
                  "texture", "symmetry", "elevation"]
CONCEPT_COUNTS = [5, 5, 5, 5, 5, 5, 4]      # sums to 34 == cls_head in_features
N_CONCEPTS = sum(CONCEPT_COUNTS)            # 34
NUM_CLASS  = 7          # ISIC2018
LOGIT_SCALE = float(1.0 / 0.07)             # CLIP logit scale (detached const)
LN_EPS     = 1e-5
NORM_EPS   = 1e-12      # F.normalize eps
OUT_LANES  = 256        # packed kernel output: [0:64]=ef, [128:224]=sf

assert B % GROUP == 0


# ------------------------------- small helpers -------------------------------
def layer_norm(x, g, b, eps=LN_EPS):
    mu = jnp.mean(x, axis=-1, keepdims=True)
    var = jnp.mean((x - mu) ** 2, axis=-1, keepdims=True)
    return (x - mu) / jnp.sqrt(var + eps) * g + b


# ----------------------- Pallas kernel: fused bridge --------------------------
# Per grid step (one batch group of GROUP images, weights resident across steps):
#   cross-attn(visual_tokens, vit_feats, vit_feats) -> FFN -> LayerNorm
#   -> proj & proj_Sit packed into one lane-dense matmul, both L2-normalized.
# bias_pack rows: 0=bk 1=bv 2=bo 3=b2 4=ln_g 5=ln_b 6,7=zeros
def bridge_kernel(kv_ref, q_ref, wk_ref, wv_ref, wo_ref,
                  w1_ref, w2_ref, wps_ref, bias_ref, b1_ref, out_ref):
    bf16 = jnp.bfloat16
    rows = GROUP * T_PAD
    kv = kv_ref[...]                                     # (GROUP*L, D) bf16

    # K / V projections: one full-width MXU pass each (bf16 in, f32 accumulate).
    k = jnp.dot(kv, wk_ref[...], preferred_element_type=jnp.float32) + bias_ref[0:1, :]
    v = jnp.dot(kv, wv_ref[...], preferred_element_type=jnp.float32) + bias_ref[1:2, :]
    k = k.astype(bf16)
    v = v.astype(bf16)

    # Multi-head cross-attention, lane-dense operands throughout:
    #  * q_ref[h] is q with every column outside head h zeroed (built in the
    #    wrapper), so q @ k^T over the full 128 lanes equals the per-head score.
    #  * V is masked to head h's column block in registers, so P @ V_masked puts
    #    head h's context directly in its final lanes; summing heads builds the
    #    full context with no lane slicing, no concat, no masked VMEM stores.
    inv_sqrt_dh = 1.0 / float(np.sqrt(D_HEAD))
    lane = lax.broadcasted_iota(jnp.int32, (1, D_MODEL), 1)
    ctx_blocks = []
    for b in range(GROUP):                               # static unroll (small)
        kb = k[b * L_PATCH:(b + 1) * L_PATCH, :]         # (L, D)
        vb = v[b * L_PATCH:(b + 1) * L_PATCH, :]         # (L, D)
        ctx_b = jnp.zeros((T_PAD, D_MODEL), jnp.float32)
        for h in range(NUM_HEADS):                       # static unroll
            lo, hi = h * D_HEAD, (h + 1) * D_HEAD
            qh = q_ref[h]                                # (T_PAD, D) bf16, head-masked
            s = lax.dot_general(qh, kb, (((1,), (1,)), ((), ())),
                                preferred_element_type=jnp.float32) * inv_sqrt_dh
            # softmax math kept in f32 (v5e EUP/VPU have no bf16 path)
            s = s - jnp.max(s, axis=-1, keepdims=True)
            p = jnp.exp(s)
            p = p * pl.reciprocal(jnp.sum(p, axis=-1, keepdims=True), approx=True)
            vb_h = jnp.where((lane >= lo) & (lane < hi), vb, jnp.zeros_like(vb))
            ctx_b = ctx_b + jnp.dot(p.astype(bf16), vb_h,
                                    preferred_element_type=jnp.float32)
        ctx_blocks.append(ctx_b)
    # register-resident context (sublane-aligned stack only), straight into wo.
    ctx = jnp.concatenate(ctx_blocks, axis=0).astype(bf16)       # (rows, D)

    attn = jnp.dot(ctx, wo_ref[...], preferred_element_type=jnp.float32) + bias_ref[2:3, :]
    attn = attn.astype(bf16)

    # FFN (Linear -> GELU -> Linear; dropout identity in eval), tiled over
    # FFN_DIM chunks with an f32 accumulator to bound the h1 live range.
    ff = jnp.zeros((rows, D_MODEL), jnp.float32)
    for c in range(FFN_DIM // FFN_CHUNK):                # static unroll
        lo = c * FFN_CHUNK
        h1 = jax.nn.gelu(
            jnp.dot(attn, w1_ref[:, lo:lo + FFN_CHUNK],
                    preferred_element_type=jnp.float32) + b1_ref[:, lo:lo + FFN_CHUNK],
            approximate=True)   # TODO(synk): torch nn.GELU default is exact erf
        ff = ff + jnp.dot(h1.astype(bf16), w2_ref[lo:lo + FFN_CHUNK, :],
                          preferred_element_type=jnp.float32)
    ff = ff + bias_ref[3:4, :]

    # LayerNorm
    mu = jnp.mean(ff, axis=-1, keepdims=True)
    var = jnp.mean((ff - mu) ** 2, axis=-1, keepdims=True)
    ln = (ff - mu) * lax.rsqrt(var + LN_EPS) * bias_ref[4:5, :] + bias_ref[5:6, :]

    # packed projections: cols [0:64]=proj, [128:224]=proj_Sit (zero padding
    # elsewhere keeps the per-half L2 norms exact); 128-aligned unmasked stores.
    ps = jnp.dot(ln.astype(bf16), wps_ref[...], preferred_element_type=jnp.float32)
    ef = ps[:, 0:128]
    sf = ps[:, 128:256]
    inv_ef = lax.rsqrt(jnp.maximum(jnp.sum(ef * ef, axis=-1, keepdims=True),
                                   NORM_EPS * NORM_EPS))
    inv_sf = lax.rsqrt(jnp.maximum(jnp.sum(sf * sf, axis=-1, keepdims=True),
                                   NORM_EPS * NORM_EPS))
    out_ref[:, 0:128] = ef * inv_ef
    out_ref[:, 128:256] = sf * inv_sf


def bridge_forward(vit_out, pr):
    """vit_out: (B, L, D) hooked features with CLS already dropped."""
    Bn, L, D = vit_out.shape
    assert Bn == B and L == L_PATCH and D == D_MODEL
    n_groups = Bn // GROUP
    rows = Bn * T_PAD

    # glue (XLA): fold batch into rows; activations enter the kernel as bf16
    # since they are only ever consumed as MXU operands.
    kv_flat = vit_out.reshape(Bn * L, D).astype(jnp.bfloat16)

    # batch-invariant Q projection hoisted out of the kernel (computed once in
    # f32), padded 7->8 token rows and pre-masked per head so the kernel never
    # touches 32-lane head offsets.
    q = pr["vtok"] @ pr["wq"].astype(jnp.float32) + pr["bq"]            # (7, D)
    q_pad = jnp.zeros((T_PAD, D), jnp.float32).at[:N_TOKENS].set(q)
    head_mask = (np.arange(D)[None, :] // D_HEAD ==
                 np.arange(NUM_HEADS)[:, None]).astype(np.float32)      # (H, D)
    q_heads = (q_pad[None, :, :] * jnp.asarray(head_mask)[:, None, :]).astype(jnp.bfloat16)

    # consolidate the tiny (1, D) bias / LN vectors into one (8, D) input.
    bias_pack = jnp.concatenate(
        [pr["bk"], pr["bv"], pr["bo"], pr["b2"], pr["ln_g"], pr["ln_b"],
         jnp.zeros((2, D), jnp.float32)], axis=0)                        # (8, D)
    wps = (jnp.zeros((D, OUT_LANES), jnp.bfloat16)
           .at[:, :P_EXP].set(pr["wp"])
           .at[:, 128:128 + P_SIT].set(pr["wsit"]))

    def const(shape):
        nd = len(shape)
        return pl.BlockSpec(shape, lambda i, _n=nd: (0,) * _n)

    # advisory cost hint: lets XLA overlap backbone matmuls with weight DMA.
    flops = int(
        2 * (Bn * L) * D * D * 2                                 # k, v projections
        + 2 * Bn * NUM_HEADS * T_PAD * L * D * 2                 # scores + P@V (full-width heads)
        + 2 * rows * D * D                                       # wo
        + 2 * rows * D * FFN_DIM * 2                             # FFN up + down
        + 2 * rows * D * OUT_LANES)                              # packed proj
    transcendentals = int(Bn * NUM_HEADS * T_PAD * L + rows * FFN_DIM)
    bytes_accessed = int(
        Bn * L * D * 2 + NUM_HEADS * T_PAD * D * 2               # bf16 activations
        + (3 * D * D + 2 * D * FFN_DIM + D * OUT_LANES) * 2      # bf16 weights
        + (8 * D + FFN_DIM) * 4                                  # f32 biases
        + rows * OUT_LANES * 4)                                  # f32 output

    packed = pl.pallas_call(
        bridge_kernel,
        grid=(n_groups,),
        in_specs=[
            pl.BlockSpec((GROUP * L, D), lambda i: (i, 0)),      # kv: varies per step
            const((NUM_HEADS, T_PAD, D)),                        # q, per-head masked
            const((D, D)), const((D, D)), const((D, D)),         # wk, wv, wo (resident)
            const((D, FFN_DIM)), const((FFN_DIM, D)),            # w1, w2 (resident)
            const((D, OUT_LANES)),                               # packed proj weights
            const((8, D)), const((1, FFN_DIM)),                  # packed biases / LN, b1
        ],
        out_specs=pl.BlockSpec((GROUP * T_PAD, OUT_LANES), lambda i: (i, 0)),
        out_shape=jax.ShapeDtypeStruct((rows, OUT_LANES), jnp.float32),
        compiler_params=pltpu.CompilerParams(
            # parallel batch-group axis: v7x's 2nd TensorCore takes group 1;
            # constant weight index maps keep the weight set VMEM-resident.
            dimension_semantics=("parallel",),
            # <= 48 MiB headroom rule for v7x's 64 MiB physical VMEM.
            vmem_limit_bytes=32 * 1024 * 1024),
        cost_estimate=pl.CostEstimate(flops=flops,
                                      transcendentals=transcendentals,
                                      bytes_accessed=bytes_accessed),
    )(kv_flat, q_heads,
      pr["wk"], pr["wv"], pr["wo"], pr["w1"], pr["w2"], wps, bias_pack, pr["b1"])

    # unpack lane-dense kernel output; drop the padded token row
    ef = packed[:, :P_EXP].reshape(Bn, T_PAD, P_EXP)[:, :N_TOKENS, :]
    sf = packed[:, 128:128 + P_SIT].reshape(Bn, T_PAD, P_SIT)[:, :N_TOKENS, :]

    # concept logits (token_i . concept_j, packed) + cls head: tiny, left to XLA
    full_logits = jnp.einsum("btp,mp->btm", ef, pr["concepts"])
    img_logits = LOGIT_SCALE * jnp.einsum("btm,tm->bm", full_logits, pr["selmask"])
    cls_logits = img_logits @ pr["clsw"] + pr["clsb"]
    return cls_logits, img_logits, sf


# --------------------- backbone surrogate (glue, plain JAX) -------------------
def backbone_surrogate(imgs, p):
    # TODO(synk): stand-in for the pretrained CLIP ViT-L/14 visual trunk; a single
    # deterministic resblock only (checkpoint weights are not reproducible here).
    Bn, C, H, W = imgs.shape
    ps = PATCH
    x = imgs.reshape(Bn, C, H // ps, ps, W // ps, ps)
    x = x.transpose(0, 2, 4, 1, 3, 5).reshape(Bn, -1, C * ps * ps)   # (B, L, C*P*P)
    x = x @ p["w_patch"]                                             # patch embed (XLA)
    cls = jnp.broadcast_to(p["cls_tok"][None, None, :], (Bn, 1, D_MODEL))
    x = jnp.concatenate([cls, x], axis=1) + p["pos_emb"][None]
    x = layer_norm(x, p["lnpre_g"], p["lnpre_b"])

    # one transformer resblock (pre-norm, CLIP style)
    h = layer_norm(x, p["ln1_g"], p["ln1_b"])
    qkv = h @ p["w_qkv"] + p["b_qkv"]
    q, k, v = jnp.split(qkv, 3, axis=-1)
    def heads(t):
        return t.reshape(Bn, -1, NUM_HEADS, D_HEAD).transpose(0, 2, 1, 3)
    qh, kh, vh = heads(q), heads(k), heads(v)
    att = jax.nn.softmax(jnp.einsum("bhqd,bhkd->bhqk", qh, kh) / np.sqrt(D_HEAD), -1)
    ctx = jnp.einsum("bhqk,bhkd->bhqd", att, vh).transpose(0, 2, 1, 3)
    ctx = ctx.reshape(Bn, -1, D_MODEL)
    x = x + ctx @ p["w_ao"] + p["b_ao"]
    h2 = layer_norm(x, p["ln2_g"], p["ln2_b"])
    x = x + jax.nn.gelu(h2 @ p["w_m1"] + p["b_m1"], approximate=True) @ p["w_m2"] + p["b_m2"]
    # the forward hook captures resblock output in CLIP's (seq, batch, dim) layout
    return x.transpose(1, 0, 2)


# --------------------------------- full forward -------------------------------
@functools.partial(jax.jit, static_argnums=())
def explicd_forward(imgs, params):
    feats_lnd = backbone_surrogate(imgs, params["backbone"])            # (SEQ, B, D)
    vit_l_output = jnp.transpose(feats_lnd, (1, 0, 2))[:, 1:, :]        # (B, L, D), drop CLS
    cls_logits, image_logits, sit_norm = bridge_forward(vit_l_output, params["bridge"])
    return cls_logits, image_logits, sit_norm, vit_l_output


def split_logits_dict(image_logits):
    out, off = {}, 0
    for key, n in zip(CONCEPT_KEYS, CONCEPT_COUNTS):
        out[key] = image_logits[:, off:off + n]
        off += n
    return out


# ------------------------- pure-JAX bridge reference --------------------------
def ref_bridge(vit_out, pr):
    f32 = lambda w: w.astype(jnp.float32)
    Bn = vit_out.shape[0]
    vt = jnp.broadcast_to(pr["vtok"][None], (Bn, N_TOKENS, D_MODEL))
    q = vt @ f32(pr["wq"]) + pr["bq"]
    k = vit_out @ f32(pr["wk"]) + pr["bk"]
    v = vit_out @ f32(pr["wv"]) + pr["bv"]
    def heads(t):
        return t.reshape(Bn, -1, NUM_HEADS, D_HEAD).transpose(0, 2, 1, 3)
    qh, kh, vh = heads(q), heads(k), heads(v)
    att = jax.nn.softmax(jnp.einsum("bhqd,bhkd->bhqk", qh, kh) / np.sqrt(D_HEAD), -1)
    ctx = jnp.einsum("bhqk,bhkd->bhqd", att, vh).transpose(0, 2, 1, 3)
    ctx = ctx.reshape(Bn, N_TOKENS, D_MODEL)
    attn = ctx @ f32(pr["wo"]) + pr["bo"]
    ff = (jax.nn.gelu(attn @ f32(pr["w1"]) + pr["b1"], approximate=True)
          @ f32(pr["w2"]) + pr["b2"])
    ln = layer_norm(ff, pr["ln_g"][0], pr["ln_b"][0])
    ef = ln @ f32(pr["wp"])
    ef = ef / jnp.maximum(jnp.linalg.norm(ef, axis=-1, keepdims=True), NORM_EPS)
    sf = ln @ f32(pr["wsit"])
    sf = sf / jnp.maximum(jnp.linalg.norm(sf, axis=-1, keepdims=True), NORM_EPS)
    full = jnp.einsum("btp,mp->btm", ef, pr["concepts"])
    img_logits = LOGIT_SCALE * jnp.einsum("btm,tm->bm", full, pr["selmask"])
    cls = img_logits @ pr["clsw"] + pr["clsb"]
    return cls, img_logits, sf


# ----------------------------- parameter creation ------------------------------
def init_params(key):
    keys = iter(jax.random.split(key, 64))
    nrm = lambda *s: 0.02 * jax.random.normal(next(keys), s, dtype=jnp.float32)
    bf = lambda x: x.astype(jnp.bfloat16)

    backbone = dict(
        w_patch=nrm(C_IN * PATCH * PATCH, D_MODEL),
        cls_tok=nrm(D_MODEL),
        pos_emb=nrm(SEQ, D_MODEL),
        lnpre_g=jnp.ones((D_MODEL,), jnp.float32), lnpre_b=jnp.zeros((D_MODEL,), jnp.float32),
        ln1_g=jnp.ones((D_MODEL,), jnp.float32), ln1_b=jnp.zeros((D_MODEL,), jnp.float32),
        ln2_g=jnp.ones((D_MODEL,), jnp.float32), ln2_b=jnp.zeros((D_MODEL,), jnp.float32),
        w_qkv=nrm(D_MODEL, 3 * D_MODEL), b_qkv=jnp.zeros((3 * D_MODEL,), jnp.float32),
        w_ao=nrm(D_MODEL, D_MODEL), b_ao=jnp.zeros((D_MODEL,), jnp.float32),
        w_m1=nrm(D_MODEL, 4 * D_MODEL), b_m1=jnp.zeros((4 * D_MODEL,), jnp.float32),
        w_m2=nrm(4 * D_MODEL, D_MODEL), b_m2=jnp.zeros((D_MODEL,), jnp.float32),
    )

    # TODO(synk): synthetic stand-in for CLIP text-encoded concept features.
    concepts = jax.random.normal(next(keys), (N_CONCEPTS, P_EXP), dtype=jnp.float32)
    concepts = concepts / jnp.linalg.norm(concepts, axis=-1, keepdims=True)
    tok_idx = np.concatenate([np.full(n, i) for i, n in enumerate(CONCEPT_COUNTS)])
    selmask = (np.arange(N_TOKENS)[:, None] == tok_idx[None, :]).astype(np.float32)

    bridge = dict(
        vtok=nrm(N_TOKENS, D_MODEL),
        # matmul weights stored in bf16 (MXU fast path, half the DMA bytes)
        wq=bf(nrm(D_MODEL, D_MODEL)), wk=bf(nrm(D_MODEL, D_MODEL)),
        wv=bf(nrm(D_MODEL, D_MODEL)), wo=bf(nrm(D_MODEL, D_MODEL)),
        w1=bf(nrm(D_MODEL, FFN_DIM)), w2=bf(nrm(FFN_DIM, D_MODEL)),
        wp=bf(nrm(D_MODEL, P_EXP)), wsit=bf(nrm(D_MODEL, P_SIT)),
        # biases / LN params kept f32
        bq=nrm(1, D_MODEL), bk=nrm(1, D_MODEL), bv=nrm(1, D_MODEL),
        bo=nrm(1, D_MODEL),
        b1=nrm(1, FFN_DIM), b2=nrm(1, D_MODEL),
        ln_g=jnp.ones((1, D_MODEL), jnp.float32) + nrm(1, D_MODEL),
        ln_b=nrm(1, D_MODEL),
        concepts=concepts,
        selmask=jnp.asarray(selmask),
        clsw=nrm(N_CONCEPTS, NUM_CLASS), clsb=nrm(NUM_CLASS),
    )
    return dict(backbone=backbone, bridge=bridge)


# ------------------------------------ main -------------------------------------
if __name__ == "__main__":
    key = jax.random.PRNGKey(0)
    k_img, k_par = jax.random.split(key)
    imgs = jax.random.normal(k_img, (B, C_IN, IMG, IMG), dtype=jnp.float32)
    params = init_params(k_par)

    cls_logits, image_logits, sit_norm, vit_out = jax.block_until_ready(
        explicd_forward(imgs, params))
    image_logits_dict = split_logits_dict(image_logits)

    # sanity: compare the Pallas bridge against a pure-JAX f32 reference
    ref_cls, ref_img, ref_sit = ref_bridge(vit_out, params["bridge"])
    ok = (
        bool(jnp.all(jnp.isfinite(cls_logits)))
        and bool(jnp.all(jnp.isfinite(image_logits)))
        and bool(jnp.all(jnp.isfinite(sit_norm)))
        and bool(jnp.allclose(cls_logits, ref_cls, atol=5e-2, rtol=5e-2))
        and bool(jnp.allclose(image_logits, ref_img, atol=1e-1, rtol=5e-2))
        and bool(jnp.allclose(sit_norm, ref_sit, atol=2e-2, rtol=2e-2))
        and cls_logits.shape == (B, NUM_CLASS)
        and sit_norm.shape == (B, N_TOKENS, P_SIT)
        and all(image_logits_dict[k].shape == (B, n)
                for k, n in zip(CONCEPT_KEYS, CONCEPT_COUNTS))
    )
    if ok:
        print("KERNEL_OK")
    else:
        print("KERNEL_MISMATCH")
</pallas_src>

<mosaic_0001>
module attributes {stable_mosaic.version = 11 : i64} {
  func.func @bridge_kernel(%arg0: i32, %arg1: memref<128x128xbf16, #tpu.memory_space<vmem>>, %arg2: memref<4x8x128xbf16, #tpu.memory_space<vmem>>, %arg3: memref<128x128xbf16, #tpu.memory_space<vmem>>, %arg4: memref<128x128xbf16, #tpu.memory_space<vmem>>, %arg5: memref<128x128xbf16, #tpu.memory_space<vmem>>, %arg6: memref<128x512xbf16, #tpu.memory_space<vmem>>, %arg7: memref<512x128xbf16, #tpu.memory_space<vmem>>, %arg8: memref<128x256xbf16, #tpu.memory_space<vmem>>, %arg9: memref<8x128xf32, #tpu.memory_space<vmem>>, %arg10: memref<1x512xf32, #tpu.memory_space<vmem>>, %arg11: memref<64x256xf32, #tpu.memory_space<vmem>>) attributes {dimension_semantics = [#tpu.dimension_semantics<parallel>], iteration_bounds = array<i64: 2>, scalar_prefetch = 0 : i64, scratch_operands = 0 : i64, tpu.core_type = #tpu.core_type<tc>, window_params = [{transform_indices = @transform_0, window_bounds = array<i64: 128, 128>}, {pipeline_mode = #tpu.pipeline_mode<synchronous>, transform_indices = @transform_1, window_bounds = array<i64: 4, 8, 128>}, {pipeline_mode = #tpu.pipeline_mode<synchronous>, transform_indices = @transform_2, window_bounds = array<i64: 128, 128>}, {pipeline_mode = #tpu.pipeline_mode<synchronous>, transform_indices = @transform_3, window_bounds = array<i64: 128, 128>}, {pipeline_mode = #tpu.pipeline_mode<synchronous>, transform_indices = @transform_4, window_bounds = array<i64: 128, 128>}, {pipeline_mode = #tpu.pipeline_mode<synchronous>, transform_indices = @transform_5, window_bounds = array<i64: 128, 512>}, {pipeline_mode = #tpu.pipeline_mode<synchronous>, transform_indices = @transform_6, window_bounds = array<i64: 512, 128>}, {pipeline_mode = #tpu.pipeline_mode<synchronous>, transform_indices = @transform_7, window_bounds = array<i64: 128, 256>}, {pipeline_mode = #tpu.pipeline_mode<synchronous>, transform_indices = @transform_8, window_bounds = array<i64: 8, 128>}, {pipeline_mode = #tpu.pipeline_mode<synchronous>, transform_indices = @transform_9, window_bounds = array<i64: 1, 512>}, {transform_indices = @transform_10, window_bounds = array<i64: 64, 256>}]} {
    %c0 = arith.constant 0 : index
    %c0_0 = arith.constant 0 : index
    %0 = vector.load %arg1[%c0, %c0_0] : memref<128x128xbf16, #tpu.memory_space<vmem>>, vector<128x128xbf16>
    %c0_1 = arith.constant 0 : index
    %c0_2 = arith.constant 0 : index
    %1 = vector.load %arg3[%c0_1, %c0_2] : memref<128x128xbf16, #tpu.memory_space<vmem>>, vector<128x128xbf16>
    %cst = arith.constant dense<0.000000e+00> : vector<128x128xf32>
    %2 = tpu.matmul %0, %1, %cst {dimension_numbers = #tpu.dot_dimension_numbers<[1], [0], [0], [1], [0, 0, 1, 1], [], []>} : vector<128x128xbf16>, vector<128x128xbf16>, vector<128x128xf32> -> vector<128x128xf32>
    %c0_3 = arith.constant 0 : index
    %c0_4 = arith.constant 0 : index
    %3 = vector.load %arg9[%c0_3, %c0_4] : memref<8x128xf32, #tpu.memory_space<vmem>>, vector<1x128xf32>
    %4 = vector.broadcast %3 : vector<1x128xf32> to vector<128x128xf32>
    %5 = arith.addf %2, %4 : vector<128x128xf32>
    %c0_5 = arith.constant 0 : index
    %c0_6 = arith.constant 0 : index
    %6 = vector.load %arg4[%c0_5, %c0_6] : memref<128x128xbf16, #tpu.memory_space<vmem>>, vector<128x128xbf16>
    %cst_7 = arith.constant dense<0.000000e+00> : vector<128x128xf32>
    %7 = tpu.matmul %0, %6, %cst_7 {dimension_numbers = #tpu.dot_dimension_numbers<[1], [0], [0], [1], [0, 0, 1, 1], [], []>} : vector<128x128xbf16>, vector<128x128xbf16>, vector<128x128xf32> -> vector<128x128xf32>
    %c1 = arith.constant 1 : index
    %c0_8 = arith.constant 0 : index
    %8 = vector.load %arg9[%c1, %c0_8] : memref<8x128xf32, #tpu.memory_space<vmem>>, vector<1x128xf32>
    %9 = vector.broadcast %8 : vector<1x128xf32> to vector<128x128xf32>
    %10 = arith.addf %7, %9 : vector<128x128xf32>
    %11 = arith.truncf %5 : vector<128x128xf32> to vector<128x128xbf16>
    %12 = arith.truncf %10 : vector<128x128xf32> to vector<128x128xbf16>
    %13 = tpu.iota {dimensions = array<i32: 1>} : vector<1x128xi32>
    %14 = vector.extract_strided_slice %11 {offsets = [0, 0], sizes = [16, 128], strides = [1, 1]} : vector<128x128xbf16> to vector<16x128xbf16>
    %15 = vector.extract_strided_slice %12 {offsets = [0, 0], sizes = [16, 128], strides = [1, 1]} : vector<128x128xbf16> to vector<16x128xbf16>
    %cst_9 = arith.constant 0.000000e+00 : f32
    %16 = vector.broadcast %cst_9 : f32 to vector<8x128xf32>
    %c0_10 = arith.constant 0 : index
    %c0_11 = arith.constant 0 : index
    %c0_12 = arith.constant 0 : index
    %17 = vector.load %arg2[%c0_10, %c0_11, %c0_12] : memref<4x8x128xbf16, #tpu.memory_space<vmem>>, vector<1x8x128xbf16>
    %18 = vector.shape_cast %17 : vector<1x8x128xbf16> to vector<8x128xbf16>
    %cst_13 = arith.constant dense<0.000000e+00> : vector<8x16xf32>
    %19 = tpu.matmul %18, %14, %cst_13 {dimension_numbers = #tpu.dot_dimension_numbers<[1], [1], [0], [0], [0, 0, 1, 0], [], []>} : vector<8x128xbf16>, vector<16x128xbf16>, vector<8x16xf32> -> vector<8x16xf32>
    %cst_14 = arith.constant 0.176776692 : f32
    %20 = vector.broadcast %cst_14 : f32 to vector<8x16xf32>
    %21 = arith.mulf %19, %20 : vector<8x16xf32>
    %cst_15 = arith.constant dense<0xFF800000> : vector<8xf32>
    %22 = vector.multi_reduction <maximumf>, %21, %cst_15 [1] : vector<8x16xf32> to vector<8xf32>
    %23 = vector.shape_cast %22 : vector<8xf32> to vector<8x1xf32>
    %24 = vector.broadcast %23 : vector<8x1xf32> to vector<8x16xf32>
    %25 = arith.subf %21, %24 : vector<8x16xf32>
    %26 = math.exp %25 : vector<8x16xf32>
    %cst_16 = arith.constant dense<0.000000e+00> : vector<8xf32>
    %27 = vector.multi_reduction <add>, %26, %cst_16 [1] : vector<8x16xf32> to vector<8xf32>
    %28 = vector.shape_cast %27 : vector<8xf32> to vector<8x1xf32>
    %29 = tpu.reciprocal %28 {approx = true} : vector<8x1xf32> -> vector<8x1xf32>
    %30 = vector.broadcast %29 : vector<8x1xf32> to vector<8x16xf32>
    %31 = arith.mulf %26, %30 : vector<8x16xf32>
    %c0_i32 = arith.constant 0 : i32
    %32 = vector.broadcast %c0_i32 : i32 to vector<1x128xi32>
    %33 = arith.cmpi sge, %13, %32 : vector<1x128xi32>
    %c32_i32 = arith.constant 32 : i32
    %34 = vector.broadcast %c32_i32 : i32 to vector<1x128xi32>
    %35 = arith.cmpi slt, %13, %34 : vector<1x128xi32>
    %36 = arith.andi %33, %35 : vector<1x128xi1>
    %cst_17 = arith.constant 0.000000e+00 : bf16
    %37 = vector.broadcast %cst_17 : bf16 to vector<16x128xbf16>
    %38 = vector.shape_cast %36 : vector<1x128xi1> to vector<1x128xi1>
    %39 = vector.broadcast %38 : vector<1x128xi1> to vector<16x128xi1>
    %40 = arith.select %39, %15, %37 : vector<16x128xi1>, vector<16x128xbf16>
    %41 = arith.truncf %31 : vector<8x16xf32> to vector<8x16xbf16>
    %cst_18 = arith.constant dense<0.000000e+00> : vector<8x128xf32>
    %42 = tpu.matmul %41, %40, %cst_18 {dimension_numbers = #tpu.dot_dimension_numbers<[1], [0], [0], [1], [0, 0, 1, 1], [], []>} : vector<8x16xbf16>, vector<16x128xbf16>, vector<8x128xf32> -> vector<8x128xf32>
    %43 = arith.addf %16, %42 : vector<8x128xf32>
    %c1_19 = arith.constant 1 : index
    %c0_20 = arith.constant 0 : index
    %c0_21 = arith.constant 0 : index
    %44 = vector.load %arg2[%c1_19, %c0_20, %c0_21] : memref<4x8x128xbf16, #tpu.memory_space<vmem>>, vector<1x8x128xbf16>
    %45 = vector.shape_cast %44 : vector<1x8x128xbf16> to vector<8x128xbf16>
    %cst_22 = arith.constant dense<0.000000e+00> : vector<8x16xf32>
    %46 = tpu.matmul %45, %14, %cst_22 {dimension_numbers = #tpu.dot_dimension_numbers<[1], [1], [0], [0], [0, 0, 1, 0], [], []>} : vector<8x128xbf16>, vector<16x128xbf16>, vector<8x16xf32> -> vector<8x16xf32>
    %cst_23 = arith.constant 0.176776692 : f32
    %47 = vector.broadcast %cst_23 : f32 to vector<8x16xf32>
    %48 = arith.mulf %46, %47 : vector<8x16xf32>
    %cst_24 = arith.constant dense<0xFF800000> : vector<8xf32>
    %49 = vector.multi_reduction <maximumf>, %48, %cst_24 [1] : vector<8x16xf32> to vector<8xf32>
    %50 = vector.shape_cast %49 : vector<8xf32> to vector<8x1xf32>
    %51 = vector.broadcast %50 : vector<8x1xf32> to vector<8x16xf32>
    %52 = arith.subf %48, %51 : vector<8x16xf32>
    %53 = math.exp %52 : vector<8x16xf32>
    %cst_25 = arith.constant dense<0.000000e+00> : vector<8xf32>
    %54 = vector.multi_reduction <add>, %53, %cst_25 [1] : vector<8x16xf32> to vector<8xf32>
    %55 = vector.shape_cast %54 : vector<8xf32> to vector<8x1xf32>
    %56 = tpu.reciprocal %55 {approx = true} : vector<8x1xf32> -> vector<8x1xf32>
    %57 = vector.broadcast %56 : vector<8x1xf32> to vector<8x16xf32>
    %58 = arith.mulf %53, %57 : vector<8x16xf32>
    %c32_i32_26 = arith.constant 32 : i32
    %59 = vector.broadcast %c32_i32_26 : i32 to vector<1x128xi32>
    %60 = arith.cmpi sge, %13, %59 : vector<1x128xi32>
    %c64_i32 = arith.constant 64 : i32
    %61 = vector.broadcast %c64_i32 : i32 to vector<1x128xi32>
    %62 = arith.cmpi slt, %13, %61 : vector<1x128xi32>
    %63 = arith.andi %60, %62 : vector<1x128xi1>
    %cst_27 = arith.constant 0.000000e+00 : bf16
    %64 = vector.broadcast %cst_27 : bf16 to vector<16x128xbf16>
    %65 = vector.shape_cast %63 : vector<1x128xi1> to vector<1x128xi1>
    %66 = vector.broadcast %65 : vector<1x128xi1> to vector<16x128xi1>
    %67 = arith.select %66, %15, %64 : vector<16x128xi1>, vector<16x128xbf16>
    %68 = arith.truncf %58 : vector<8x16xf32> to vector<8x16xbf16>
    %cst_28 = arith.constant dense<0.000000e+00> : vector<8x128xf32>
    %69 = tpu.matmul %68, %67, %cst_28 {dimension_numbers = #tpu.dot_dimension_numbers<[1], [0], [0], [1], [0, 0, 1, 1], [], []>} : vector<8x16xbf16>, vector<16x128xbf16>, vector<8x128xf32> -> vector<8x128xf32>
    %70 = arith.addf %43, %69 : vector<8x128xf32>
    %c2 = arith.constant 2 : index
    %c0_29 = arith.constant 0 : index
    %c0_30 = arith.constant 0 : index
    %71 = vector.load %arg2[%c2, %c0_29, %c0_30] : memref<4x8x128xbf16, #tpu.memory_space<vmem>>, vector<1x8x128xbf16>
    %72 = vector.shape_cast %71 : vector<1x8x128xbf16> to vector<8x128xbf16>
    %cst_31 = arith.constant dense<0.000000e+00> : vector<8x16xf32>
    %73 = tpu.matmul %72, %14, %cst_31 {dimension_numbers = #tpu.dot_dimension_numbers<[1], [1], [0], [0], [0, 0, 1, 0], [], []>} : vector<8x128xbf16>, vector<16x128xbf16>, vector<8x16xf32> -> vector<8x16xf32>
    %cst_32 = arith.constant 0.176776692 : f32
    %74 = vector.broadcast %cst_32 : f32 to vector<8x16xf32>
    %75 = arith.mulf %73, %74 : vector<8x16xf32>
    %cst_33 = arith.constant dense<0xFF800000> : vector<8xf32>
    %76 = vector.multi_reduction <maximumf>, %75, %cst_33 [1] : vector<8x16xf32> to vector<8xf32>
    %77 = vector.shape_cast %76 : vector<8xf32> to vector<8x1xf32>
    %78 = vector.broadcast %77 : vector<8x1xf32> to vector<8x16xf32>
    %79 = arith.subf %75, %78 : vector<8x16xf32>
    %80 = math.exp %79 : vector<8x16xf32>
    %cst_34 = arith.constant dense<0.000000e+00> : vector<8xf32>
    %81 = vector.multi_reduction <add>, %80, %cst_34 [1] : vector<8x16xf32> to vector<8xf32>
    %82 = vector.shape_cast %81 : vector<8xf32> to vector<8x1xf32>
    %83 = tpu.reciprocal %82 {approx = true} : vector<8x1xf32> -> vector<8x1xf32>
    %84 = vector.broadcast %83 : vector<8x1xf32> to vector<8x16xf32>
    %85 = arith.mulf %80, %84 : vector<8x16xf32>
    %c64_i32_35 = arith.constant 64 : i32
    %86 = vector.broadcast %c64_i32_35 : i32 to vector<1x128xi32>
    %87 = arith.cmpi sge, %13, %86 : vector<1x128xi32>
    %c96_i32 = arith.constant 96 : i32
    %88 = vector.broadcast %c96_i32 : i32 to vector<1x128xi32>
    %89 = arith.cmpi slt, %13, %88 : vector<1x128xi32>
    %90 = arith.andi %87, %89 : vector<1x128xi1>
    %cst_36 = arith.constant 0.000000e+00 : bf16
    %91 = vector.broadcast %cst_36 : bf16 to vector<16x128xbf16>
    %92 = vector.shape_cast %90 : vector<1x128xi1> to vector<1x128xi1>
    %93 = vector.broadcast %92 : vector<1x128xi1> to vector<16x128xi1>
    %94 = arith.select %93, %15, %91 : vector<16x128xi1>, vector<16x128xbf16>
    %95 = arith.truncf %85 : vector<8x16xf32> to vector<8x16xbf16>
    %cst_37 = arith.constant dense<0.000000e+00> : vector<8x128xf32>
    %96 = tpu.matmul %95, %94, %cst_37 {dimension_numbers = #tpu.dot_dimension_numbers<[1], [0], [0], [1], [0, 0, 1, 1], [], []>} : vector<8x16xbf16>, vector<16x128xbf16>, vector<8x128xf32> -> vector<8x128xf32>
    %97 = arith.addf %70, %96 : vector<8x128xf32>
    %c3 = arith.constant 3 : index
    %c0_38 = arith.constant 0 : index
    %c0_39 = arith.constant 0 : index
    %98 = vector.load %arg2[%c3, %c0_38, %c0_39] : memref<4x8x128xbf16, #tpu.memory_space<vmem>>, vector<1x8x128xbf16>
    %99 = vector.shape_cast %98 : vector<1x8x128xbf16> to vector<8x128xbf16>
    %cst_40 = arith.constant dense<0.000000e+00> : vector<8x16xf32>
    %100 = tpu.matmul %99, %14, %cst_40 {dimension_numbers = #tpu.dot_dimension_numbers<[1], [1], [0], [0], [0, 0, 1, 0], [], []>} : vector<8x128xbf16>, vector<16x128xbf16>, vector<8x16xf32> -> vector<8x16xf32>
    %cst_41 = arith.constant 0.176776692 : f32
    %101 = vector.broadcast %cst_41 : f32 to vector<8x16xf32>
    %102 = arith.mulf %100, %101 : vector<8x16xf32>
    %cst_42 = arith.constant dense<0xFF800000> : vector<8xf32>
    %103 = vector.multi_reduction <maximumf>, %102, %cst_42 [1] : vector<8x16xf32> to vector<8xf32>
    %104 = vector.shape_cast %103 : vector<8xf32> to vector<8x1xf32>
    %105 = vector.broadcast %104 : vector<8x1xf32> to vector<8x16xf32>
    %106 = arith.subf %102, %105 : vector<8x16xf32>
    %107 = math.exp %106 : vector<8x16xf32>
    %cst_43 = arith.constant dense<0.000000e+00> : vector<8xf32>
    %108 = vector.multi_reduction <add>, %107, %cst_43 [1] : vector<8x16xf32> to vector<8xf32>
    %109 = vector.shape_cast %108 : vector<8xf32> to vector<8x1xf32>
    %110 = tpu.reciprocal %109 {approx = true} : vector<8x1xf32> -> vector<8x1xf32>
    %111 = vector.broadcast %110 : vector<8x1xf32> to vector<8x16xf32>
    %112 = arith.mulf %107, %111 : vector<8x16xf32>
    %c96_i32_44 = arith.constant 96 : i32
    %113 = vector.broadcast %c96_i32_44 : i32 to vector<1x128xi32>
    %114 = arith.cmpi sge, %13, %113 : vector<1x128xi32>
    %c128_i32 = arith.constant 128 : i32
    %115 = vector.broadcast %c128_i32 : i32 to vector<1x128xi32>
    %116 = arith.cmpi slt, %13, %115 : vector<1x128xi32>
    %117 = arith.andi %114, %116 : vector<1x128xi1>
    %cst_45 = arith.constant 0.000000e+00 : bf16
    %118 = vector.broadcast %cst_45 : bf16 to vector<16x128xbf16>
    %119 = vector.shape_cast %117 : vector<1x128xi1> to vector<1x128xi1>
    %120 = vector.broadcast %119 : vector<1x128xi1> to vector<16x128xi1>
    %121 = arith.select %120, %15, %118 : vector<16x128xi1>, vector<16x128xbf16>
    %122 = arith.truncf %112 : vector<8x16xf32> to vector<8x16xbf16>
    %cst_46 = arith.constant dense<0.000000e+00> : vector<8x128xf32>
    %123 = tpu.matmul %122, %121, %cst_46 {dimension_numbers = #tpu.dot_dimension_numbers<[1], [0], [0], [1], [0, 0, 1, 1], [], []>} : vector<8x16xbf16>, vector<16x128xbf16>, vector<8x128xf32> -> vector<8x128xf32>
    %124 = arith.addf %97, %123 : vector<8x128xf32>
    %125 = vector.extract_strided_slice %11 {offsets = [16, 0], sizes = [16, 128], strides = [1, 1]} : vector<128x128xbf16> to vector<16x128xbf16>
    %126 = vector.extract_strided_slice %12 {offsets = [16, 0], sizes = [16, 128], strides = [1, 1]} : vector<128x128xbf16> to vector<16x128xbf16>
    %cst_47 = arith.constant 0.000000e+00 : f32
    %127 = vector.broadcast %cst_47 : f32 to vector<8x128xf32>
    %c0_48 = arith.constant 0 : index
    %c0_49 = arith.constant 0 : index
    %c0_50 = arith.constant 0 : index
    %128 = vector.load %arg2[%c0_48, %c0_49, %c0_50] : memref<4x8x128xbf16, #tpu.memory_space<vmem>>, vector<1x8x128xbf16>
    %129 = vector.shape_cast %128 : vector<1x8x128xbf16> to vector<8x128xbf16>
    %cst_51 = arith.constant dense<0.000000e+00> : vector<8x16xf32>
    %130 = tpu.matmul %129, %125, %cst_51 {dimension_numbers = #tpu.dot_dimension_numbers<[1], [1], [0], [0], [0, 0, 1, 0], [], []>} : vector<8x128xbf16>, vector<16x128xbf16>, vector<8x16xf32> -> vector<8x16xf32>
    %cst_52 = arith.constant 0.176776692 : f32
    %131 = vector.broadcast %cst_52 : f32 to vector<8x16xf32>
    %132 = arith.mulf %130, %131 : vector<8x16xf32>
    %cst_53 = arith.constant dense<0xFF800000> : vector<8xf32>
    %133 = vector.multi_reduction <maximumf>, %132, %cst_53 [1] : vector<8x16xf32> to vector<8xf32>
    %134 = vector.shape_cast %133 : vector<8xf32> to vector<8x1xf32>
    %135 = vector.broadcast %134 : vector<8x1xf32> to vector<8x16xf32>
    %136 = arith.subf %132, %135 : vector<8x16xf32>
    %137 = math.exp %136 : vector<8x16xf32>
    %cst_54 = arith.constant dense<0.000000e+00> : vector<8xf32>
    %138 = vector.multi_reduction <add>, %137, %cst_54 [1] : vector<8x16xf32> to vector<8xf32>
    %139 = vector.shape_cast %138 : vector<8xf32> to vector<8x1xf32>
    %140 = tpu.reciprocal %139 {approx = true} : vector<8x1xf32> -> vector<8x1xf32>
    %141 = vector.broadcast %140 : vector<8x1xf32> to vector<8x16xf32>
    %142 = arith.mulf %137, %141 : vector<8x16xf32>
    %c0_i32_55 = arith.constant 0 : i32
    %143 = vector.broadcast %c0_i32_55 : i32 to vector<1x128xi32>
    %144 = arith.cmpi sge, %13, %143 : vector<1x128xi32>
    %c32_i32_56 = arith.constant 32 : i32
    %145 = vector.broadcast %c32_i32_56 : i32 to vector<1x128xi32>
    %146 = arith.cmpi slt, %13, %145 : vector<1x128xi32>
    %147 = arith.andi %144, %146 : vector<1x128xi1>
    %cst_57 = arith.constant 0.000000e+00 : bf16
    %148 = vector.broadcast %cst_57 : bf16 to vector<16x128xbf16>
    %149 = vector.shape_cast %147 : vector<1x128xi1> to vector<1x128xi1>
    %150 = vector.broadcast %149 : vector<1x128xi1> to vector<16x128xi1>
    %151 = arith.select %150, %126, %148 : vector<16x128xi1>, vector<16x128xbf16>
    %152 = arith.truncf %142 : vector<8x16xf32> to vector<8x16xbf16>
    %cst_58 = arith.constant dense<0.000000e+00> : vector<8x128xf32>
    %153 = tpu.matmul %152, %151, %cst_58 {dimension_numbers = #tpu.dot_dimension_numbers<[1], [0], [0], [1], [0, 0, 1, 1], [], []>} : vector<8x16xbf16>, vector<16x128xbf16>, vector<8x128xf32> -> vector<8x128xf32>
    %154 = arith.addf %127, %153 : vector<8x128xf32>
    %c1_59 = arith.constant 1 : index
    %c0_60 = arith.constant 0 : index
    %c0_61 = arith.constant 0 : index
    %155 = vector.load %arg2[%c1_59, %c0_60, %c0_61] : memref<4x8x128xbf16, #tpu.memory_space<vmem>>, vector<1x8x128xbf16>
    %156 = vector.shape_cast %155 : vector<1x8x128xbf16> to vector<8x128xbf16>
    %cst_62 = arith.constant dense<0.000000e+00> : vector<8x16xf32>
    %157 = tpu.matmul %156, %125, %cst_62 {dimension_numbers = #tpu.dot_dimension_numbers<[1], [1], [0], [0], [0, 0, 1, 0], [], []>} : vector<8x128xbf16>, vector<16x128xbf16>, vector<8x16xf32> -> vector<8x16xf32>
    %cst_63 = arith.constant 0.176776692 : f32
    %158 = vector.broadcast %cst_63 : f32 to vector<8x16xf32>
    %159 = arith.mulf %157, %158 : vector<8x16xf32>
    %cst_64 = arith.constant dense<0xFF800000> : vector<8xf32>
    %160 = vector.multi_reduction <maximumf>, %159, %cst_64 [1] : vector<8x16xf32> to vector<8xf32>
    %161 = vector.shape_cast %160 : vector<8xf32> to vector<8x1xf32>
    %162 = vector.broadcast %161 : vector<8x1xf32> to vector<8x16xf32>
    %163 = arith.subf %159, %162 : vector<8x16xf32>
    %164 = math.exp %163 : vector<8x16xf32>
    %cst_65 = arith.constant dense<0.000000e+00> : vector<8xf32>
    %165 = vector.multi_reduction <add>, %164, %cst_65 [1] : vector<8x16xf32> to vector<8xf32>
    %166 = vector.shape_cast %165 : vector<8xf32> to vector<8x1xf32>
    %167 = tpu.reciprocal %166 {approx = true} : vector<8x1xf32> -> vector<8x1xf32>
    %168 = vector.broadcast %167 : vector<8x1xf32> to vector<8x16xf32>
    %169 = arith.mulf %164, %168 : vector<8x16xf32>
    %c32_i32_66 = arith.constant 32 : i32
    %170 = vector.broadcast %c32_i32_66 : i32 to vector<1x128xi32>
    %171 = arith.cmpi sge, %13, %170 : vector<1x128xi32>
    %c64_i32_67 = arith.constant 64 : i32
    %172 = vector.broadcast %c64_i32_67 : i32 to vector<1x128xi32>
    %173 = arith.cmpi slt, %13, %172 : vector<1x128xi32>
    %174 = arith.andi %171, %173 : vector<1x128xi1>
    %cst_68 = arith.constant 0.000000e+00 : bf16
    %175 = vector.broadcast %cst_68 : bf16 to vector<16x128xbf16>
    %176 = vector.shape_cast %174 : vector<1x128xi1> to vector<1x128xi1>
    %177 = vector.broadcast %176 : vector<1x128xi1> to vector<16x128xi1>
    %178 = arith.select %177, %126, %175 : vector<16x128xi1>, vector<16x128xbf16>
    %179 = arith.truncf %169 : vector<8x16xf32> to vector<8x16xbf16>
    %cst_69 = arith.constant dense<0.000000e+00> : vector<8x128xf32>
    %180 = tpu.matmul %179, %178, %cst_69 {dimension_numbers = #tpu.dot_dimension_numbers<[1], [0], [0], [1], [0, 0, 1, 1], [], []>} : vector<8x16xbf16>, vector<16x128xbf16>, vector<8x128xf32> -> vector<8x128xf32>
    %181 = arith.addf %154, %180 : vector<8x128xf32>
    %c2_70 = arith.constant 2 : index
    %c0_71 = arith.constant 0 : index
    %c0_72 = arith.constant 0 : index
    %182 = vector.load %arg2[%c2_70, %c0_71, %c0_72] : memref<4x8x128xbf16, #tpu.memory_space<vmem>>, vector<1x8x128xbf16>
    %183 = vector.shape_cast %182 : vector<1x8x128xbf16> to vector<8x128xbf16>
    %cst_73 = arith.constant dense<0.000000e+00> : vector<8x16xf32>
    %184 = tpu.matmul %183, %125, %cst_73 {dimension_numbers = #tpu.dot_dimension_numbers<[1], [1], [0], [0], [0, 0, 1, 0], [], []>} : vector<8x128xbf16>, vector<16x128xbf16>, vector<8x16xf32> -> vector<8x16xf32>
    %cst_74 = arith.constant 0.176776692 : f32
    %185 = vector.broadcast %cst_74 : f32 to vector<8x16xf32>
    %186 = arith.mulf %184, %185 : vector<8x16xf32>
    %cst_75 = arith.constant dense<0xFF800000> : vector<8xf32>
    %187 = vector.multi_reduction <maximumf>, %186, %cst_75 [1] : vector<8x16xf32> to vector<8xf32>
    %188 = vector.shape_cast %187 : vector<8xf32> to vector<8x1xf32>
    %189 = vector.broadcast %188 : vector<8x1xf32> to vector<8x16xf32>
    %190 = arith.subf %186, %189 : vector<8x16xf32>
    %191 = math.exp %190 : vector<8x16xf32>
    %cst_76 = arith.constant dense<0.000000e+00> : vector<8xf32>
    %192 = vector.multi_reduction <add>, %191, %cst_76 [1] : vector<8x16xf32> to vector<8xf32>
    %193 = vector.shape_cast %192 : vector<8xf32> to vector<8x1xf32>
    %194 = tpu.reciprocal %193 {approx = true} : vector<8x1xf32> -> vector<8x1xf32>
    %195 = vector.broadcast %194 : vector<8x1xf32> to vector<8x16xf32>
    %196 = arith.mulf %191, %195 : vector<8x16xf32>
    %c64_i32_77 = arith.constant 64 : i32
    %197 = vector.broadcast %c64_i32_77 : i32 to vector<1x128xi32>
    %198 = arith.cmpi sge, %13, %197 : vector<1x128xi32>
    %c96_i32_78 = arith.constant 96 : i32
    %199 = vector.broadcast %c96_i32_78 : i32 to vector<1x128xi32>
    %200 = arith.cmpi slt, %13, %199 : vector<1x128xi32>
    %201 = arith.andi %198, %200 : vector<1x128xi1>
    %cst_79 = arith.constant 0.000000e+00 : bf16
    %202 = vector.broadcast %cst_79 : bf16 to vector<16x128xbf16>
    %203 = vector.shape_cast %201 : vector<1x128xi1> to vector<1x128xi1>
    %204 = vector.broadcast %203 : vector<1x128xi1> to vector<16x128xi1>
    %205 = arith.select %204, %126, %202 : vector<16x128xi1>, vector<16x128xbf16>
    %206 = arith.truncf %196 : vector<8x16xf32> to vector<8x16xbf16>
    %cst_80 = arith.constant dense<0.000000e+00> : vector<8x128xf32>
    %207 = tpu.matmul %206, %205, %cst_80 {dimension_numbers = #tpu.dot_dimension_numbers<[1], [0], [0], [1], [0, 0, 1, 1], [], []>} : vector<8x16xbf16>, vector<16x128xbf16>, vector<8x128xf32> -> vector<8x128xf32>
    %208 = arith.addf %181, %207 : vector<8x128xf32>
    %c3_81 = arith.constant 3 : index
    %c0_82 = arith.constant 0 : index
    %c0_83 = arith.constant 0 : index
    %209 = vector.load %arg2[%c3_81, %c0_82, %c0_83] : memref<4x8x128xbf16, #tpu.memory_space<vmem>>, vector<1x8x128xbf16>
    %210 = vector.shape_cast %209 : vector<1x8x128xbf16> to vector<8x128xbf16>
    %cst_84 = arith.constant dense<0.000000e+00> : vector<8x16xf32>
    %211 = tpu.matmul %210, %125, %cst_84 {dimension_numbers = #tpu.dot_dimension_numbers<[1], [1], [0], [0], [0, 0, 1, 0], [], []>} : vector<8x128xbf16>, vector<16x128xbf16>, vector<8x16xf32> -> vector<8x16xf32>
    %cst_85 = arith.constant 0.176776692 : f32
    %212 = vector.broadcast %cst_85 : f32 to vector<8x16xf32>
    %213 = arith.mulf %211, %212 : vector<8x16xf32>
    %cst_86 = arith.constant dense<0xFF800000> : vector<8xf32>
    %214 = vector.multi_reduction <maximumf>, %213, %cst_86 [1] : vector<8x16xf32> to vector<8xf32>
    %215 = vector.shape_cast %214 : vector<8xf32> to vector<8x1xf32>
    %216 = vector.broadcast %215 : vector<8x1xf32> to vector<8x16xf32>
    %217 = arith.subf %213, %216 : vector<8x16xf32>
    %218 = math.exp %217 : vector<8x16xf32>
    %cst_87 = arith.constant dense<0.000000e+00> : vector<8xf32>
    %219 = vector.multi_reduction <add>, %218, %cst_87 [1] : vector<8x16xf32> to vector<8xf32>
    %220 = vector.shape_cast %219 : vector<8xf32> to vector<8x1xf32>
    %221 = tpu.reciprocal %220 {approx = true} : vector<8x1xf32> -> vector<8x1xf32>
    %222 = vector.broadcast %221 : vector<8x1xf32> to vector<8x16xf32>
    %223 = arith.mulf %218, %222 : vector<8x16xf32>
    %c96_i32_88 = arith.constant 96 : i32
    %224 = vector.broadcast %c96_i32_88 : i32 to vector<1x128xi32>
    %225 = arith.cmpi sge, %13, %224 : vector<1x128xi32>
    %c128_i32_89 = arith.constant 128 : i32
    %226 = vector.broadcast %c128_i32_89 : i32 to vector<1x128xi32>
    %227 = arith.cmpi slt, %13, %226 : vector<1x128xi32>
    %228 = arith.andi %225, %227 : vector<1x128xi1>
    %cst_90 = arith.constant 0.000000e+00 : bf16
    %229 = vector.broadcast %cst_90 : bf16 to vector<16x128xbf16>
    %230 = vector.shape_cast %228 : vector<1x128xi1> to vector<1x128xi1>
    %231 = vector.broadcast %230 : vector<1x128xi1> to vector<16x128xi1>
    %232 = arith.select %231, %126, %229 : vector<16x128xi1>, vector<16x128xbf16>
    %233 = arith.truncf %223 : vector<8x16xf32> to vector<8x16xbf16>
    %cst_91 = arith.constant dense<0.000000e+00> : vector<8x128xf32>
    %234 = tpu.matmul %233, %232, %cst_91 {dimension_numbers = #tpu.dot_dimension_numbers<[1], [0], [0], [1], [0, 0, 1, 1], [], []>} : vector<8x16xbf16>, vector<16x128xbf16>, vector<8x128xf32> -> vector<8x128xf32>
    %235 = arith.addf %208, %234 : vector<8x128xf32>
    %236 = vector.extract_strided_slice %11 {offsets = [32, 0], sizes = [16, 128], strides = [1, 1]} : vector<128x128xbf16> to vector<16x128xbf16>
    %237 = vector.extract_strided_slice %12 {offsets = [32, 0], sizes = [16, 128], strides = [1, 1]} : vector<128x128xbf16> to vector<16x128xbf16>
    %cst_92 = arith.constant 0.000000e+00 : f32
    %238 = vector.broadcast %cst_92 : f32 to vector<8x128xf32>
    %c0_93 = arith.constant 0 : index
    %c0_94 = arith.constant 0 : index
    %c0_95 = arith.constant 0 : index
    %239 = vector.load %arg2[%c0_93, %c0_94, %c0_95] : memref<4x8x128xbf16, #tpu.memory_space<vmem>>, vector<1x8x128xbf16>
    %240 = vector.shape_cast %239 : vector<1x8x128xbf16> to vector<8x128xbf16>
    %cst_96 = arith.constant dense<0.000000e+00> : vector<8x16xf32>
    %241 = tpu.matmul %240, %236, %cst_96 {dimension_numbers = #tpu.dot_dimension_numbers<[1], [1], [0], [0], [0, 0, 1, 0], [], []>} : vector<8x128xbf16>, vector<16x128xbf16>, vector<8x16xf32> -> vector<8x16xf32>
    %cst_97 = arith.constant 0.176776692 : f32
    %242 = vector.broadcast %cst_97 : f32 to vector<8x16xf32>
    %243 = arith.mulf %241, %242 : vector<8x16xf32>
    %cst_98 = arith.constant dense<0xFF800000> : vector<8xf32>
    %244 = vector.multi_reduction <maximumf>, %243, %cst_98 [1] : vector<8x16xf32> to vector<8xf32>
    %245 = vector.shape_cast %244 : vector<8xf32> to vector<8x1xf32>
    %246 = vector.broadcast %245 : vector<8x1xf32> to vector<8x16xf32>
    %247 = arith.subf %243, %246 : vector<8x16xf32>
    %248 = math.exp %247 : vector<8x16xf32>
    %cst_99 = arith.constant dense<0.000000e+00> : vector<8xf32>
    %249 = vector.multi_reduction <add>, %248, %cst_99 [1] : vector<8x16xf32> to vector<8xf32>
    %250 = vector.shape_cast %249 : vector<8xf32> to vector<8x1xf32>
    %251 = tpu.reciprocal %250 {approx = true} : vector<8x1xf32> -> vector<8x1xf32>
    %252 = vector.broadcast %251 : vector<8x1xf32> to vector<8x16xf32>
    %253 = arith.mulf %248, %252 : vector<8x16xf32>
    %c0_i32_100 = arith.constant 0 : i32
    %254 = vector.broadcast %c0_i32_100 : i32 to vector<1x128xi32>
    %255 = arith.cmpi sge, %13, %254 : vector<1x128xi32>
    %c32_i32_101 = arith.constant 32 : i32
    %256 = vector.broadcast %c32_i32_101 : i32 to vector<1x128xi32>
    %257 = arith.cmpi slt, %13, %256 : vector<1x128xi32>
    %258 = arith.andi %255, %257 : vector<1x128xi1>
    %cst_102 = arith.constant 0.000000e+00 : bf16
    %259 = vector.broadcast %cst_102 : bf16 to vector<16x128xbf16>
    %260 = vector.shape_cast %258 : vector<1x128xi1> to vector<1x128xi1>
    %261 = vector.broadcast %260 : vector<1x128xi1> to vector<16x128xi1>
    %262 = arith.select %261, %237, %259 : vector<16x128xi1>, vector<16x128xbf16>
    %263 = arith.truncf %253 : vector<8x16xf32> to vector<8x16xbf16>
    %cst_103 = arith.constant dense<0.000000e+00> : vector<8x128xf32>
    %264 = tpu.matmul %263, %262, %cst_103 {dimension_numbers = #tpu.dot_dimension_numbers<[1], [0], [0], [1], [0, 0, 1, 1], [], []>} : vector<8x16xbf16>, vector<16x128xbf16>, vector<8x128xf32> -> vector<8x128xf32>
    %265 = arith.addf %238, %264 : vector<8x128xf32>
    %c1_104 = arith.constant 1 : index
    %c0_105 = arith.constant 0 : index
    %c0_106 = arith.constant 0 : index
    %266 = vector.load %arg2[%c1_104, %c0_105, %c0_106] : memref<4x8x128xbf16, #tpu.memory_space<vmem>>, vector<1x8x128xbf16>
    %267 = vector.shape_cast %266 : vector<1x8x128xbf16> to vector<8x128xbf16>
    %cst_107 = arith.constant dense<0.000000e+00> : vector<8x16xf32>
    %268 = tpu.matmul %267, %236, %cst_107 {dimension_numbers = #tpu.dot_dimension_numbers<[1], [1], [0], [0], [0, 0, 1, 0], [], []>} : vector<8x128xbf16>, vector<16x128xbf16>, vector<8x16xf32> -> vector<8x16xf32>
    %cst_108 = arith.constant 0.176776692 : f32
    %269 = vector.broadcast %cst_108 : f32 to vector<8x16xf32>
    %270 = arith.mulf %268, %269 : vector<8x16xf32>
    %cst_109 = arith.constant dense<0xFF800000> : vector<8xf32>
    %271 = vector.multi_reduction <maximumf>, %270, %cst_109 [1] : vector<8x16xf32> to vector<8xf32>
    %272 = vector.shape_cast %271 : vector<8xf32> to vector<8x1xf32>
    %273 = vector.broadcast %272 : vector<8x1xf32> to vector<8x16xf32>
    %274 = arith.subf %270, %273 : vector<8x16xf32>
    %275 = math.exp %274 : vector<8x16xf32>
    %cst_110 = arith.constant dense<0.000000e+00> : vector<8xf32>
    %276 = vector.multi_reduction <add>, %275, %cst_110 [1] : vector<8x16xf32> to vector<8xf32>
    %277 = vector.shape_cast %276 : vector<8xf32> to vector<8x1xf32>
    %278 = tpu.reciprocal %277 {approx = true} : vector<8x1xf32> -> vector<8x1xf32>
    %279 = vector.broadcast %278 : vector<8x1xf32> to vector<8x16xf32>
    %280 = arith.mulf %275, %279 : vector<8x16xf32>
    %c32_i32_111 = arith.constant 32 : i32
    %281 = vector.broadcast %c32_i32_111 : i32 to vector<1x128xi32>
    %282 = arith.cmpi sge, %13, %281 : vector<1x128xi32>
    %c64_i32_112 = arith.constant 64 : i32
    %283 = vector.broadcast %c64_i32_112 : i32 to vector<1x128xi32>
    %284 = arith.cmpi slt, %13, %283 : vector<1x128xi32>
    %285 = arith.andi %282, %284 : vector<1x128xi1>
    %cst_113 = arith.constant 0.000000e+00 : bf16
    %286 = vector.broadcast %cst_113 : bf16 to vector<16x128xbf16>
    %287 = vector.shape_cast %285 : vector<1x128xi1> to vector<1x128xi1>
    %288 = vector.broadcast %287 : vector<1x128xi1> to vector<16x128xi1>
    %289 = arith.select %288, %237, %286 : vector<16x128xi1>, vector<16x128xbf16>
    %290 = arith.truncf %280 : vector<8x16xf32> to vector<8x16xbf16>
    %cst_114 = arith.constant dense<0.000000e+00> : vector<8x128xf32>
    %291 = tpu.matmul %290, %289, %cst_114 {dimension_numbers = #tpu.dot_dimension_numbers<[1], [0], [0], [1], [0, 0, 1, 1], [], []>} : vector<8x16xbf16>, vector<16x128xbf16>, vector<8x128xf32> -> vector<8x128xf32>
    %292 = arith.addf %265, %291 : vector<8x128xf32>
    %c2_115 = arith.constant 2 : index
    %c0_116 = arith.constant 0 : index
    %c0_117 = arith.constant 0 : index
    %293 = vector.load %arg2[%c2_115, %c0_116, %c0_117] : memref<4x8x128xbf16, #tpu.memory_space<vmem>>, vector<1x8x128xbf16>
    %294 = vector.shape_cast %293 : vector<1x8x128xbf16> to vector<8x128xbf16>
    %cst_118 = arith.constant dense<0.000000e+00> : vector<8x16xf32>
    %295 = tpu.matmul %294, %236, %cst_118 {dimension_numbers = #tpu.dot_dimension_numbers<[1], [1], [0], [0], [0, 0, 1, 0], [], []>} : vector<8x128xbf16>, vector<16x128xbf16>, vector<8x16xf32> -> vector<8x16xf32>
    %cst_119 = arith.constant 0.176776692 : f32
    %296 = vector.broadcast %cst_119 : f32 to vector<8x16xf32>
    %297 = arith.mulf %295, %296 : vector<8x16xf32>
    %cst_120 = arith.constant dense<0xFF800000> : vector<8xf32>
    %298 = vector.multi_reduction <maximumf>, %297, %cst_120 [1] : vector<8x16xf32> to vector<8xf32>
    %299 = vector.shape_cast %298 : vector<8xf32> to vector<8x1xf32>
    %300 = vector.broadcast %299 : vector<8x1xf32> to vector<8x16xf32>
    %301 = arith.subf %297, %300 : vector<8x16xf32>
    %302 = math.exp %301 : vector<8x16xf32>
    %cst_121 = arith.constant dense<0.000000e+00> : vector<8xf32>
    %303 = vector.multi_reduction <add>, %302, %cst_121 [1] : vector<8x16xf32> to vector<8xf32>
    %304 = vector.shape_cast %303 : vector<8xf32> to vector<8x1xf32>
    %305 = tpu.reciprocal %304 {approx = true} : vector<8x1xf32> -> vector<8x1xf32>
    %306 = vector.broadcast %305 : vector<8x1xf32> to vector<8x16xf32>
    %307 = arith.mulf %302, %306 : vector<8x16xf32>
    %c64_i32_122 = arith.constant 64 : i32
    %308 = vector.broadcast %c64_i32_122 : i32 to vector<1x128xi32>
    %309 = arith.cmpi sge, %13, %308 : vector<1x128xi32>
    %c96_i32_123 = arith.constant 96 : i32
    %310 = vector.broadcast %c96_i32_123 : i32 to vector<1x128xi32>
    %311 = arith.cmpi slt, %13, %310 : vector<1x128xi32>
    %312 = arith.andi %309, %311 : vector<1x128xi1>
    %cst_124 = arith.constant 0.000000e+00 : bf16
    %313 = vector.broadcast %cst_124 : bf16 to vector<16x128xbf16>
    %314 = vector.shape_cast %312 : vector<1x128xi1> to vector<1x128xi1>
    %315 = vector.broadcast %314 : vector<1x128xi1> to vector<16x128xi1>
    %316 = arith.select %315, %237, %313 : vector<16x128xi1>, vector<16x128xbf16>
    %317 = arith.truncf %307 : vector<8x16xf32> to vector<8x16xbf16>
    %cst_125 = arith.constant dense<0.000000e+00> : vector<8x128xf32>
    %318 = tpu.matmul %317, %316, %cst_125 {dimension_numbers = #tpu.dot_dimension_numbers<[1], [0], [0], [1], [0, 0, 1, 1], [], []>} : vector<8x16xbf16>, vector<16x128xbf16>, vector<8x128xf32> -> vector<8x128xf32>
    %319 = arith.addf %292, %318 : vector<8x128xf32>
    %c3_126 = arith.constant 3 : index
    %c0_127 = arith.constant 0 : index
    %c0_128 = arith.constant 0 : index
    %320 = vector.load %arg2[%c3_126, %c0_127, %c0_128] : memref<4x8x128xbf16, #tpu.memory_space<vmem>>, vector<1x8x128xbf16>
    %321 = vector.shape_cast %320 : vector<1x8x128xbf16> to vector<8x128xbf16>
    %cst_129 = arith.constant dense<0.000000e+00> : vector<8x16xf32>
    %322 = tpu.matmul %321, %236, %cst_129 {dimension_numbers = #tpu.dot_dimension_numbers<[1], [1], [0], [0], [0, 0, 1, 0], [], []>} : vector<8x128xbf16>, vector<16x128xbf16>, vector<8x16xf32> -> vector<8x16xf32>
    %cst_130 = arith.constant 0.176776692 : f32
    %323 = vector.broadcast %cst_130 : f32 to vector<8x16xf32>
    %324 = arith.mulf %322, %323 : vector<8x16xf32>
    %cst_131 = arith.constant dense<0xFF800000> : vector<8xf32>
    %325 = vector.multi_reduction <maximumf>, %324, %cst_131 [1] : vector<8x16xf32> to vector<8xf32>
    %326 = vector.shape_cast %325 : vector<8xf32> to vector<8x1xf32>
    %327 = vector.broadcast %326 : vector<8x1xf32> to vector<8x16xf32>
    %328 = arith.subf %324, %327 : vector<8x16xf32>
    %329 = math.exp %328 : vector<8x16xf32>
    %cst_132 = arith.constant dense<0.000000e+00> : vector<8xf32>
    %330 = vector.multi_reduction <add>, %329, %cst_132 [1] : vector<8x16xf32> to vector<8xf32>
    %331 = vector.shape_cast %330 : vector<8xf32> to vector<8x1xf32>
    %332 = tpu.reciprocal %331 {approx = true} : vector<8x1xf32> -> vector<8x1xf32>
    %333 = vector.broadcast %332 : vector<8x1xf32> to vector<8x16xf32>
    %334 = arith.mulf %329, %333 : vector<8x16xf32>
    %c96_i32_133 = arith.constant 96 : i32
    %335 = vector.broadcast %c96_i32_133 : i32 to vector<1x128xi32>
    %336 = arith.cmpi sge, %13, %335 : vector<1x128xi32>
    %c128_i32_134 = arith.constant 128 : i32
    %337 = vector.broadcast %c128_i32_134 : i32 to vector<1x128xi32>
    %338 = arith.cmpi slt, %13, %337 : vector<1x128xi32>
    %339 = arith.andi %336, %338 : vector<1x128xi1>
    %cst_135 = arith.constant 0.000000e+00 : bf16
    %340 = vector.broadcast %cst_135 : bf16 to vector<16x128xbf16>
    %341 = vector.shape_cast %339 : vector<1x128xi1> to vector<1x128xi1>
    %342 = vector.broadcast %341 : vector<1x128xi1> to vector<16x128xi1>
    %343 = arith.select %342, %237, %340 : vector<16x128xi1>, vector<16x128xbf16>
    %344 = arith.truncf %334 : vector<8x16xf32> to vector<8x16xbf16>
    %cst_136 = arith.constant dense<0.000000e+00> : vector<8x128xf32>
    %345 = tpu.matmul %344, %343, %cst_136 {dimension_numbers = #tpu.dot_dimension_numbers<[1], [0], [0], [1], [0, 0, 1, 1], [], []>} : vector<8x16xbf16>, vector<16x128xbf16>, vector<8x128xf32> -> vector<8x128xf32>
    %346 = arith.addf %319, %345 : vector<8x128xf32>
    %347 = vector.extract_strided_slice %11 {offsets = [48, 0], sizes = [16, 128], strides = [1, 1]} : vector<128x128xbf16> to vector<16x128xbf16>
    %348 = vector.extract_strided_slice %12 {offsets = [48, 0], sizes = [16, 128], strides = [1, 1]} : vector<128x128xbf16> to vector<16x128xbf16>
    %cst_137 = arith.constant 0.000000e+00 : f32
    %349 = vector.broadcast %cst_137 : f32 to vector<8x128xf32>
    %c0_138 = arith.constant 0 : index
    %c0_139 = arith.constant 0 : index
    %c0_140 = arith.constant 0 : index
    %350 = vector.load %arg2[%c0_138, %c0_139, %c0_140] : memref<4x8x128xbf16, #tpu.memory_space<vmem>>, vector<1x8x128xbf16>
    %351 = vector.shape_cast %350 : vector<1x8x128xbf16> to vector<8x128xbf16>
    %cst_141 = arith.constant dense<0.000000e+00> : vector<8x16xf32>
    %352 = tpu.matmul %351, %347, %cst_141 {dimension_numbers = #tpu.dot_dimension_numbers<[1], [1], [0], [0], [0, 0, 1, 0], [], []>} : vector<8x128xbf16>, vector<16x128xbf16>, vector<8x16xf32> -> vector<8x16xf32>
    %cst_142 = arith.constant 0.176776692 : f32
    %353 = vector.broadcast %cst_142 : f32 to vector<8x16xf32>
    %354 = arith.mulf %352, %353 : vector<8x16xf32>
    %cst_143 = arith.constant dense<0xFF800000> : vector<8xf32>
    %355 = vector.multi_reduction <maximumf>, %354, %cst_143 [1] : vector<8x16xf32> to vector<8xf32>
    %356 = vector.shape_cast %355 : vector<8xf32> to vector<8x1xf32>
    %357 = vector.broadcast %356 : vector<8x1xf32> to vector<8x16xf32>
    %358 = arith.subf %354, %357 : vector<8x16xf32>
    %359 = math.exp %358 : vector<8x16xf32>
    %cst_144 = arith.constant dense<0.000000e+00> : vector<8xf32>
    %360 = vector.multi_reduction <add>, %359, %cst_144 [1] : vector<8x16xf32> to vector<8xf32>
    %361 = vector.shape_cast %360 : vector<8xf32> to vector<8x1xf32>
    %362 = tpu.reciprocal %361 {approx = true} : vector<8x1xf32> -> vector<8x1xf32>
    %363 = vector.broadcast %362 : vector<8x1xf32> to vector<8x16xf32>
    %364 = arith.mulf %359, %363 : vector<8x16xf32>
    %c0_i32_145 = arith.constant 0 : i32
    %365 = vector.broadcast %c0_i32_145 : i32 to vector<1x128xi32>
    %366 = arith.cmpi sge, %13, %365 : vector<1x128xi32>
    %c32_i32_146 = arith.constant 32 : i32
    %367 = vector.broadcast %c32_i32_146 : i32 to vector<1x128xi32>
    %368 = arith.cmpi slt, %13, %367 : vector<1x128xi32>
    %369 = arith.andi %366, %368 : vector<1x128xi1>
    %cst_147 = arith.constant 0.000000e+00 : bf16
    %370 = vector.broadcast %cst_147 : bf16 to vector<16x128xbf16>
    %371 = vector.shape_cast %369 : vector<1x128xi1> to vector<1x128xi1>
    %372 = vector.broadcast %371 : vector<1x128xi1> to vector<16x128xi1>
    %373 = arith.select %372, %348, %370 : vector<16x128xi1>, vector<16x128xbf16>
    %374 = arith.truncf %364 : vector<8x16xf32> to vector<8x16xbf16>
    %cst_148 = arith.constant dense<0.000000e+00> : vector<8x128xf32>
    %375 = tpu.matmul %374, %373, %cst_148 {dimension_numbers = #tpu.dot_dimension_numbers<[1], [0], [0], [1], [0, 0, 1, 1], [], []>} : vector<8x16xbf16>, vector<16x128xbf16>, vector<8x128xf32> -> vector<8x128xf32>
    %376 = arith.addf %349, %375 : vector<8x128xf32>
    %c1_149 = arith.constant 1 : index
    %c0_150 = arith.constant 0 : index
    %c0_151 = arith.constant 0 : index
    %377 = vector.load %arg2[%c1_149, %c0_150, %c0_151] : memref<4x8x128xbf16, #tpu.memory_space<vmem>>, vector<1x8x128xbf16>
    %378 = vector.shape_cast %377 : vector<1x8x128xbf16> to vector<8x128xbf16>
    %cst_152 = arith.constant dense<0.000000e+00> : vector<8x16xf32>
    %379 = tpu.matmul %378, %347, %cst_152 {dimension_numbers = #tpu.dot_dimension_numbers<[1], [1], [0], [0], [0, 0, 1, 0], [], []>} : vector<8x128xbf16>, vector<16x128xbf16>, vector<8x16xf32> -> vector<8x16xf32>
    %cst_153 = arith.constant 0.176776692 : f32
    %380 = vector.broadcast %cst_153 : f32 to vector<8x16xf32>
    %381 = arith.mulf %379, %380 : vector<8x16xf32>
    %cst_154 = arith.constant dense<0xFF800000> : vector<8xf32>
    %382 = vector.multi_reduction <maximumf>, %381, %cst_154 [1] : vector<8x16xf32> to vector<8xf32>
    %383 = vector.shape_cast %382 : vector<8xf32> to vector<8x1xf32>
    %384 = vector.broadcast %383 : vector<8x1xf32> to vector<8x16xf32>
    %385 = arith.subf %381, %384 : vector<8x16xf32>
    %386 = math.exp %385 : vector<8x16xf32>
    %cst_155 = arith.constant dense<0.000000e+00> : vector<8xf32>
    %387 = vector.multi_reduction <add>, %386, %cst_155 [1] : vector<8x16xf32> to vector<8xf32>
    %388 = vector.shape_cast %387 : vector<8xf32> to vector<8x1xf32>
    %389 = tpu.reciprocal %388 {approx = true} : vector<8x1xf32> -> vector<8x1xf32>
    %390 = vector.broadcast %389 : vector<8x1xf32> to vector<8x16xf32>
    %391 = arith.mulf %386, %390 : vector<8x16xf32>
    %c32_i32_156 = arith.constant 32 : i32
    %392 = vector.broadcast %c32_i32_156 : i32 to vector<1x128xi32>
    %393 = arith.cmpi sge, %13, %392 : vector<1x128xi32>
    %c64_i32_157 = arith.constant 64 : i32
    %394 = vector.broadcast %c64_i32_157 : i32 to vector<1x128xi32>
    %395 = arith.cmpi slt, %13, %394 : vector<1x128xi32>
    %396 = arith.andi %393, %395 : vector<1x128xi1>
    %cst_158 = arith.constant 0.000000e+00 : bf16
    %397 = vector.broadcast %cst_158 : bf16 to vector<16x128xbf16>
    %398 = vector.shape_cast %396 : vector<1x128xi1> to vector<1x128xi1>
    %399 = vector.broadcast %398 : vector<1x128xi1> to vector<16x128xi1>
    %400 = arith.select %399, %348, %397 : vector<16x128xi1>, vector<16x128xbf16>
    %401 = arith.truncf %391 : vector<8x16xf32> to vector<8x16xbf16>
    %cst_159 = arith.constant dense<0.000000e+00> : vector<8x128xf32>
    %402 = tpu.matmul %401, %400, %cst_159 {dimension_numbers = #tpu.dot_dimension_numbers<[1], [0], [0], [1], [0, 0, 1, 1], [], []>} : vector<8x16xbf16>, vector<16x128xbf16>, vector<8x128xf32> -> vector<8x128xf32>
    %403 = arith.addf %376, %402 : vector<8x128xf32>
    %c2_160 = arith.constant 2 : index
    %c0_161 = arith.constant 0 : index
    %c0_162 = arith.constant 0 : index
    %404 = vector.load %arg2[%c2_160, %c0_161, %c0_162] : memref<4x8x128xbf16, #tpu.memory_space<vmem>>, vector<1x8x128xbf16>
    %405 = vector.shape_cast %404 : vector<1x8x128xbf16> to vector<8x128xbf16>
    %cst_163 = arith.constant dense<0.000000e+00> : vector<8x16xf32>
    %406 = tpu.matmul %405, %347, %cst_163 {dimension_numbers = #tpu.dot_dimension_numbers<[1], [1], [0], [0], [0, 0, 1, 0], [], []>} : vector<8x128xbf16>, vector<16x128xbf16>, vector<8x16xf32> -> vector<8x16xf32>
    %cst_164 = arith.constant 0.176776692 : f32
    %407 = vector.broadcast %cst_164 : f32 to vector<8x16xf32>
    %408 = arith.mulf %406, %407 : vector<8x16xf32>
    %cst_165 = arith.constant dense<0xFF800000> : vector<8xf32>
    %409 = vector.multi_reduction <maximumf>, %408, %cst_165 [1] : vector<8x16xf32> to vector<8xf32>
    %410 = vector.shape_cast %409 : vector<8xf32> to vector<8x1xf32>
    %411 = vector.broadcast %410 : vector<8x1xf32> to vector<8x16xf32>
    %412 = arith.subf %408, %411 : vector<8x16xf32>
    %413 = math.exp %412 : vector<8x16xf32>
    %cst_166 = arith.constant dense<0.000000e+00> : vector<8xf32>
    %414 = vector.multi_reduction <add>, %413, %cst_166 [1] : vector<8x16xf32> to vector<8xf32>
    %415 = vector.shape_cast %414 : vector<8xf32> to vector<8x1xf32>
    %416 = tpu.reciprocal %415 {approx = true} : vector<8x1xf32> -> vector<8x1xf32>
    %417 = vector.broadcast %416 : vector<8x1xf32> to vector<8x16xf32>
    %418 = arith.mulf %413, %417 : vector<8x16xf32>
    %c64_i32_167 = arith.constant 64 : i32
    %419 = vector.broadcast %c64_i32_167 : i32 to vector<1x128xi32>
    %420 = arith.cmpi sge, %13, %419 : vector<1x128xi32>
    %c96_i32_168 = arith.constant 96 : i32
    %421 = vector.broadcast %c96_i32_168 : i32 to vector<1x128xi32>
    %422 = arith.cmpi slt, %13, %421 : vector<1x128xi32>
    %423 = arith.andi %420, %422 : vector<1x128xi1>
    %cst_169 = arith.constant 0.000000e+00 : bf16
    %424 = vector.broadcast %cst_169 : bf16 to vector<16x128xbf16>
    %425 = vector.shape_cast %423 : vector<1x128xi1> to vector<1x128xi1>
    %426 = vector.broadcast %425 : vector<1x128xi1> to vector<16x128xi1>
    %427 = arith.select %426, %348, %424 : vector<16x128xi1>, vector<16x128xbf16>
    %428 = arith.truncf %418 : vector<8x16xf32> to vector<8x16xbf16>
    %cst_170 = arith.constant dense<0.000000e+00> : vector<8x128xf32>
    %429 = tpu.matmul %428, %427, %cst_170 {dimension_numbers = #tpu.dot_dimension_numbers<[1], [0], [0], [1], [0, 0, 1, 1], [], []>} : vector<8x16xbf16>, vector<16x128xbf16>, vector<8x128xf32> -> vector<8x128xf32>
    %430 = arith.addf %403, %429 : vector<8x128xf32>
    %c3_171 = arith.constant 3 : index
    %c0_172 = arith.constant 0 : index
    %c0_173 = arith.constant 0 : index
    %431 = vector.load %arg2[%c3_171, %c0_172, %c0_173] : memref<4x8x128xbf16, #tpu.memory_space<vmem>>, vector<1x8x128xbf16>
    %432 = vector.shape_cast %431 : vector<1x8x128xbf16> to vector<8x128xbf16>
    %cst_174 = arith.constant dense<0.000000e+00> : vector<8x16xf32>
    %433 = tpu.matmul %432, %347, %cst_174 {dimension_numbers = #tpu.dot_dimension_numbers<[1], [1], [0], [0], [0, 0, 1, 0], [], []>} : vector<8x128xbf16>, vector<16x128xbf16>, vector<8x16xf32> -> vector<8x16xf32>
    %cst_175 = arith.constant 0.176776692 : f32
    %434 = vector.broadcast %cst_175 : f32 to vector<8x16xf32>
    %435 = arith.mulf %433, %434 : vector<8x16xf32>
    %cst_176 = arith.constant dense<0xFF800000> : vector<8xf32>
    %436 = vector.multi_reduction <maximumf>, %435, %cst_176 [1] : vector<8x16xf32> to vector<8xf32>
    %437 = vector.shape_cast %436 : vector<8xf32> to vector<8x1xf32>
    %438 = vector.broadcast %437 : vector<8x1xf32> to vector<8x16xf32>
    %439 = arith.subf %435, %438 : vector<8x16xf32>
    %440 = math.exp %439 : vector<8x16xf32>
    %cst_177 = arith.constant dense<0.000000e+00> : vector<8xf32>
    %441 = vector.multi_reduction <add>, %440, %cst_177 [1] : vector<8x16xf32> to vector<8xf32>
    %442 = vector.shape_cast %441 : vector<8xf32> to vector<8x1xf32>
    %443 = tpu.reciprocal %442 {approx = true} : vector<8x1xf32> -> vector<8x1xf32>
    %444 = vector.broadcast %443 : vector<8x1xf32> to vector<8x16xf32>
    %445 = arith.mulf %440, %444 : vector<8x16xf32>
    %c96_i32_178 = arith.constant 96 : i32
    %446 = vector.broadcast %c96_i32_178 : i32 to vector<1x128xi32>
    %447 = arith.cmpi sge, %13, %446 : vector<1x128xi32>
    %c128_i32_179 = arith.constant 128 : i32
    %448 = vector.broadcast %c128_i32_179 : i32 to vector<1x128xi32>
    %449 = arith.cmpi slt, %13, %448 : vector<1x128xi32>
    %450 = arith.andi %447, %449 : vector<1x128xi1>
    %cst_180 = arith.constant 0.000000e+00 : bf16
    %451 = vector.broadcast %cst_180 : bf16 to vector<16x128xbf16>
    %452 = vector.shape_cast %450 : vector<1x128xi1> to vector<1x128xi1>
    %453 = vector.broadcast %452 : vector<1x128xi1> to vector<16x128xi1>
    %454 = arith.select %453, %348, %451 : vector<16x128xi1>, vector<16x128xbf16>
    %455 = arith.truncf %445 : vector<8x16xf32> to vector<8x16xbf16>
    %cst_181 = arith.constant dense<0.000000e+00> : vector<8x128xf32>
    %456 = tpu.matmul %455, %454, %cst_181 {dimension_numbers = #tpu.dot_dimension_numbers<[1], [0], [0], [1], [0, 0, 1, 1], [], []>} : vector<8x16xbf16>, vector<16x128xbf16>, vector<8x128xf32> -> vector<8x128xf32>
    %457 = arith.addf %430, %456 : vector<8x128xf32>
    %458 = vector.extract_strided_slice %11 {offsets = [64, 0], sizes = [16, 128], strides = [1, 1]} : vector<128x128xbf16> to vector<16x128xbf16>
    %459 = vector.extract_strided_slice %12 {offsets = [64, 0], sizes = [16, 128], strides = [1, 1]} : vector<128x128xbf16> to vector<16x128xbf16>
    %cst_182 = arith.constant 0.000000e+00 : f32
    %460 = vector.broadcast %cst_182 : f32 to vector<8x128xf32>
    %c0_183 = arith.constant 0 : index
    %c0_184 = arith.constant 0 : index
    %c0_185 = arith.constant 0 : index
    %461 = vector.load %arg2[%c0_183, %c0_184, %c0_185] : memref<4x8x128xbf16, #tpu.memory_space<vmem>>, vector<1x8x128xbf16>
    %462 = vector.shape_cast %461 : vector<1x8x128xbf16> to vector<8x128xbf16>
    %cst_186 = arith.constant dense<0.000000e+00> : vector<8x16xf32>
    %463 = tpu.matmul %462, %458, %cst_186 {dimension_numbers = #tpu.dot_dimension_numbers<[1], [1], [0], [0], [0, 0, 1, 0], [], []>} : vector<8x128xbf16>, vector<16x128xbf16>, vector<8x16xf32> -> vector<8x16xf32>
    %cst_187 = arith.constant 0.176776692 : f32
    %464 = vector.broadcast %cst_187 : f32 to vector<8x16xf32>
    %465 = arith.mulf %463, %464 : vector<8x16xf32>
    %cst_188 = arith.constant dense<0xFF800000> : vector<8xf32>
    %466 = vector.multi_reduction <maximumf>, %465, %cst_188 [1] : vector<8x16xf32> to vector<8xf32>
    %467 = vector.shape_cast %466 : vector<8xf32> to vector<8x1xf32>
    %468 = vector.broadcast %467 : vector<8x1xf32> to vector<8x16xf32>
    %469 = arith.subf %465, %468 : vector<8x16xf32>
    %470 = math.exp %469 : vector<8x16xf32>
    %cst_189 = arith.constant dense<0.000000e+00> : vector<8xf32>
    %471 = vector.multi_reduction <add>, %470, %cst_189 [1] : vector<8x16xf32> to vector<8xf32>
    %472 = vector.shape_cast %471 : vector<8xf32> to vector<8x1xf32>
    %473 = tpu.reciprocal %472 {approx = true} : vector<8x1xf32> -> vector<8x1xf32>
    %474 = vector.broadcast %473 : vector<8x1xf32> to vector<8x16xf32>
    %475 = arith.mulf %470, %474 : vector<8x16xf32>
    %c0_i32_190 = arith.constant 0 : i32
    %476 = vector.broadcast %c0_i32_190 : i32 to vector<1x128xi32>
    %477 = arith.cmpi sge, %13, %476 : vector<1x128xi32>
    %c32_i32_191 = arith.constant 32 : i32
    %478 = vector.broadcast %c32_i32_191 : i32 to vector<1x128xi32>
    %479 = arith.cmpi slt, %13, %478 : vector<1x128xi32>
    %480 = arith.andi %477, %479 : vector<1x128xi1>
    %cst_192 = arith.constant 0.000000e+00 : bf16
    %481 = vector.broadcast %cst_192 : bf16 to vector<16x128xbf16>
    %482 = vector.shape_cast %480 : vector<1x128xi1> to vector<1x128xi1>
    %483 = vector.broadcast %482 : vector<1x128xi1> to vector<16x128xi1>
    %484 = arith.select %483, %459, %481 : vector<16x128xi1>, vector<16x128xbf16>
    %485 = arith.truncf %475 : vector<8x16xf32> to vector<8x16xbf16>
    %cst_193 = arith.constant dense<0.000000e+00> : vector<8x128xf32>
    %486 = tpu.matmul %485, %484, %cst_193 {dimension_numbers = #tpu.dot_dimension_numbers<[1], [0], [0], [1], [0, 0, 1, 1], [], []>} : vector<8x16xbf16>, vector<16x128xbf16>, vector<8x128xf32> -> vector<8x128xf32>
    %487 = arith.addf %460, %486 : vector<8x128xf32>
    %c1_194 = arith.constant 1 : index
    %c0_195 = arith.constant 0 : index
    %c0_196 = arith.constant 0 : index
    %488 = vector.load %arg2[%c1_194, %c0_195, %c0_196] : memref<4x8x128xbf16, #tpu.memory_space<vmem>>, vector<1x8x128xbf16>
    %489 = vector.shape_cast %488 : vector<1x8x128xbf16> to vector<8x128xbf16>
    %cst_197 = arith.constant dense<0.000000e+00> : vector<8x16xf32>
    %490 = tpu.matmul %489, %458, %cst_197 {dimension_numbers = #tpu.dot_dimension_numbers<[1], [1], [0], [0], [0, 0, 1, 0], [], []>} : vector<8x128xbf16>, vector<16x128xbf16>, vector<8x16xf32> -> vector<8x16xf32>
    %cst_198 = arith.constant 0.176776692 : f32
    %491 = vector.broadcast %cst_198 : f32 to vector<8x16xf32>
    %492 = arith.mulf %490, %491 : vector<8x16xf32>
    %cst_199 = arith.constant dense<0xFF800000> : vector<8xf32>
    %493 = vector.multi_reduction <maximumf>, %492, %cst_199 [1] : vector<8x16xf32> to vector<8xf32>
    %494 = vector.shape_cast %493 : vector<8xf32> to vector<8x1xf32>
    %495 = vector.broadcast %494 : vector<8x1xf32> to vector<8x16xf32>
    %496 = arith.subf %492, %495 : vector<8x16xf32>
    %497 = math.exp %496 : vector<8x16xf32>
    %cst_200 = arith.constant dense<0.000000e+00> : vector<8xf32>
    %498 = vector.multi_reduction <add>, %497, %cst_200 [1] : vector<8x16xf32> to vector<8xf32>
    %499 = vector.shape_cast %498 : vector<8xf32> to vector<8x1xf32>
    %500 = tpu.reciprocal %499 {approx = true} : vector<8x1xf32> -> vector<8x1xf32>
    %501 = vector.broadcast %500 : vector<8x1xf32> to vector<8x16xf32>
    %502 = arith.mulf %497, %501 : vector<8x16xf32>
    %c32_i32_201 = arith.constant 32 : i32
    %503 = vector.broadcast %c32_i32_201 : i32 to vector<1x128xi32>
    %504 = arith.cmpi sge, %13, %503 : vector<1x128xi32>
    %c64_i32_202 = arith.constant 64 : i32
    %505 = vector.broadcast %c64_i32_202 : i32 to vector<1x128xi32>
    %506 = arith.cmpi slt, %13, %505 : vector<1x128xi32>
    %507 = arith.andi %504, %506 : vector<1x128xi1>
    %cst_203 = arith.constant 0.000000e+00 : bf16
    %508 = vector.broadcast %cst_203 : bf16 to vector<16x128xbf16>
    %509 = vector.shape_cast %507 : vector<1x128xi1> to vector<1x128xi1>
    %510 = vector.broadcast %509 : vector<1x128xi1> to vector<16x128xi1>
    %511 = arith.select %510, %459, %508 : vector<16x128xi1>, vector<16x128xbf16>
    %512 = arith.truncf %502 : vector<8x16xf32> to vector<8x16xbf16>
    %cst_204 = arith.constant dense<0.000000e+00> : vector<8x128xf32>
    %513 = tpu.matmul %512, %511, %cst_204 {dimension_numbers = #tpu.dot_dimension_numbers<[1], [0], [0], [1], [0, 0, 1, 1], [], []>} : vector<8x16xbf16>, vector<16x128xbf16>, vector<8x128xf32> -> vector<8x128xf32>
    %514 = arith.addf %487, %513 : vector<8x128xf32>
    %c2_205 = arith.constant 2 : index
    %c0_206 = arith.constant 0 : index
    %c0_207 = arith.constant 0 : index
    %515 = vector.load %arg2[%c2_205, %c0_206, %c0_207] : memref<4x8x128xbf16, #tpu.memory_space<vmem>>, vector<1x8x128xbf16>
    %516 = vector.shape_cast %515 : vector<1x8x128xbf16> to vector<8x128xbf16>
    %cst_208 = arith.constant dense<0.000000e+00> : vector<8x16xf32>
    %517 = tpu.matmul %516, %458, %cst_208 {dimension_numbers = #tpu.dot_dimension_numbers<[1], [1], [0], [0], [0, 0, 1, 0], [], []>} : vector<8x128xbf16>, vector<16x128xbf16>, vector<8x16xf32> -> vector<8x16xf32>
    %cst_209 = arith.constant 0.176776692 : f32
    %518 = vector.broadcast %cst_209 : f32 to vector<8x16xf32>
    %519 = arith.mulf %517, %518 : vector<8x16xf32>
    %cst_210 = arith.constant dense<0xFF800000> : vector<8xf32>
    %520 = vector.multi_reduction <maximumf>, %519, %cst_210 [1] : vector<8x16xf32> to vector<8xf32>
    %521 = vector.shape_cast %520 : vector<8xf32> to vector<8x1xf32>
    %522 = vector.broadcast %521 : vector<8x1xf32> to vector<8x16xf32>
    %523 = arith.subf %519, %522 : vector<8x16xf32>
    %524 = math.exp %523 : vector<8x16xf32>
    %cst_211 = arith.constant dense<0.000000e+00> : vector<8xf32>
    %525 = vector.multi_reduction <add>, %524, %cst_211 [1] : vector<8x16xf32> to vector<8xf32>
    %526 = vector.shape_cast %525 : vector<8xf32> to vector<8x1xf32>
    %527 = tpu.reciprocal %526 {approx = true} : vector<8x1xf32> -> vector<8x1xf32>
    %528 = vector.broadcast %527 : vector<8x1xf32> to vector<8x16xf32>
    %529 = arith.mulf %524, %528 : vector<8x16xf32>
    %c64_i32_212 = arith.constant 64 : i32
    %530 = vector.broadcast %c64_i32_212 : i32 to vector<1x128xi32>
    %531 = arith.cmpi sge, %13, %530 : vector<1x128xi32>
    %c96_i32_213 = arith.constant 96 : i32
    %532 = vector.broadcast %c96_i32_213 : i32 to vector<1x128xi32>
    %533 = arith.cmpi slt, %13, %532 : vector<1x128xi32>
    %534 = arith.andi %531, %533 : vector<1x128xi1>
    %cst_214 = arith.constant 0.000000e+00 : bf16
    %535 = vector.broadcast %cst_214 : bf16 to vector<16x128xbf16>
    %536 = vector.shape_cast %534 : vector<1x128xi1> to vector<1x128xi1>
    %537 = vector.broadcast %536 : vector<1x128xi1> to vector<16x128xi1>
    %538 = arith.select %537, %459, %535 : vector<16x128xi1>, vector<16x128xbf16>
    %539 = arith.truncf %529 : vector<8x16xf32> to vector<8x16xbf16>
    %cst_215 = arith.constant dense<0.000000e+00> : vector<8x128xf32>
    %540 = tpu.matmul %539, %538, %cst_215 {dimension_numbers = #tpu.dot_dimension_numbers<[1], [0], [0], [1], [0, 0, 1, 1], [], []>} : vector<8x16xbf16>, vector<16x128xbf16>, vector<8x128xf32> -> vector<8x128xf32>
    %541 = arith.addf %514, %540 : vector<8x128xf32>
    %c3_216 = arith.constant 3 : index
    %c0_217 = arith.constant 0 : index
    %c0_218 = arith.constant 0 : index
    %542 = vector.load %arg2[%c3_216, %c0_217, %c0_218] : memref<4x8x128xbf16, #tpu.memory_space<vmem>>, vector<1x8x128xbf16>
    %543 = vector.shape_cast %542 : vector<1x8x128xbf16> to vector<8x128xbf16>
    %cst_219 = arith.constant dense<0.000000e+00> : vector<8x16xf32>
    %544 = tpu.matmul %543, %458, %cst_219 {dimension_numbers = #tpu.dot_dimension_numbers<[1], [1], [0], [0], [0, 0, 1, 0], [], []>} : vector<8x128xbf16>, vector<16x128xbf16>, vector<8x16xf32> -> vector<8x16xf32>
    %cst_220 = arith.constant 0.176776692 : f32
    %545 = vector.broadcast %cst_220 : f32 to vector<8x16xf32>
    %546 = arith.mulf %544, %545 : vector<8x16xf32>
    %cst_221 = arith.constant dense<0xFF800000> : vector<8xf32>
    %547 = vector.multi_reduction <maximumf>, %546, %cst_221 [1] : vector<8x16xf32> to vector<8xf32>
    %548 = vector.shape_cast %547 : vector<8xf32> to vector<8x1xf32>
    %549 = vector.broadcast %548 : vector<8x1xf32> to vector<8x16xf32>
    %550 = arith.subf %546, %549 : vector<8x16xf32>
    %551 = math.exp %550 : vector<8x16xf32>
    %cst_222 = arith.constant dense<0.000000e+00> : vector<8xf32>
    %552 = vector.multi_reduction <add>, %551, %cst_222 [1] : vector<8x16xf32> to vector<8xf32>
    %553 = vector.shape_cast %552 : vector<8xf32> to vector<8x1xf32>
    %554 = tpu.reciprocal %553 {approx = true} : vector<8x1xf32> -> vector<8x1xf32>
    %555 = vector.broadcast %554 : vector<8x1xf32> to vector<8x16xf32>
    %556 = arith.mulf %551, %555 : vector<8x16xf32>
    %c96_i32_223 = arith.constant 96 : i32
    %557 = vector.broadcast %c96_i32_223 : i32 to vector<1x128xi32>
    %558 = arith.cmpi sge, %13, %557 : vector<1x128xi32>
    %c128_i32_224 = arith.constant 128 : i32
    %559 = vector.broadcast %c128_i32_224 : i32 to vector<1x128xi32>
    %560 = arith.cmpi slt, %13, %559 : vector<1x128xi32>
    %561 = arith.andi %558, %560 : vector<1x128xi1>
    %cst_225 = arith.constant 0.000000e+00 : bf16
    %562 = vector.broadcast %cst_225 : bf16 to vector<16x128xbf16>
    %563 = vector.shape_cast %561 : vector<1x128xi1> to vector<1x128xi1>
    %564 = vector.broadcast %563 : vector<1x128xi1> to vector<16x128xi1>
    %565 = arith.select %564, %459, %562 : vector<16x128xi1>, vector<16x128xbf16>
    %566 = arith.truncf %556 : vector<8x16xf32> to vector<8x16xbf16>
    %cst_226 = arith.constant dense<0.000000e+00> : vector<8x128xf32>
    %567 = tpu.matmul %566, %565, %cst_226 {dimension_numbers = #tpu.dot_dimension_numbers<[1], [0], [0], [1], [0, 0, 1, 1], [], []>} : vector<8x16xbf16>, vector<16x128xbf16>, vector<8x128xf32> -> vector<8x128xf32>
    %568 = arith.addf %541, %567 : vector<8x128xf32>
    %569 = vector.extract_strided_slice %11 {offsets = [80, 0], sizes = [16, 128], strides = [1, 1]} : vector<128x128xbf16> to vector<16x128xbf16>
    %570 = vector.extract_strided_slice %12 {offsets = [80, 0], sizes = [16, 128], strides = [1, 1]} : vector<128x128xbf16> to vector<16x128xbf16>
    %cst_227 = arith.constant 0.000000e+00 : f32
    %571 = vector.broadcast %cst_227 : f32 to vector<8x128xf32>
    %c0_228 = arith.constant 0 : index
    %c0_229 = arith.constant 0 : index
    %c0_230 = arith.constant 0 : index
    %572 = vector.load %arg2[%c0_228, %c0_229, %c0_230] : memref<4x8x128xbf16, #tpu.memory_space<vmem>>, vector<1x8x128xbf16>
    %573 = vector.shape_cast %572 : vector<1x8x128xbf16> to vector<8x128xbf16>
    %cst_231 = arith.constant dense<0.000000e+00> : vector<8x16xf32>
    %574 = tpu.matmul %573, %569, %cst_231 {dimension_numbers = #tpu.dot_dimension_numbers<[1], [1], [0], [0], [0, 0, 1, 0], [], []>} : vector<8x128xbf16>, vector<16x128xbf16>, vector<8x16xf32> -> vector<8x16xf32>
    %cst_232 = arith.constant 0.176776692 : f32
    %575 = vector.broadcast %cst_232 : f32 to vector<8x16xf32>
    %576 = arith.mulf %574, %575 : vector<8x16xf32>
    %cst_233 = arith.constant dense<0xFF800000> : vector<8xf32>
    %577 = vector.multi_reduction <maximumf>, %576, %cst_233 [1] : vector<8x16xf32> to vector<8xf32>
    %578 = vector.shape_cast %577 : vector<8xf32> to vector<8x1xf32>
    %579 = vector.broadcast %578 : vector<8x1xf32> to vector<8x16xf32>
    %580 = arith.subf %576, %579 : vector<8x16xf32>
    %581 = math.exp %580 : vector<8x16xf32>
    %cst_234 = arith.constant dense<0.000000e+00> : vector<8xf32>
    %582 = vector.multi_reduction <add>, %581, %cst_234 [1] : vector<8x16xf32> to vector<8xf32>
    %583 = vector.shape_cast %582 : vector<8xf32> to vector<8x1xf32>
    %584 = tpu.reciprocal %583 {approx = true} : vector<8x1xf32> -> vector<8x1xf32>
    %585 = vector.broadcast %584 : vector<8x1xf32> to vector<8x16xf32>
    %586 = arith.mulf %581, %585 : vector<8x16xf32>
    %c0_i32_235 = arith.constant 0 : i32
    %587 = vector.broadcast %c0_i32_235 : i32 to vector<1x128xi32>
    %588 = arith.cmpi sge, %13, %587 : vector<1x128xi32>
    %c32_i32_236 = arith.constant 32 : i32
    %589 = vector.broadcast %c32_i32_236 : i32 to vector<1x128xi32>
    %590 = arith.cmpi slt, %13, %589 : vector<1x128xi32>
    %591 = arith.andi %588, %590 : vector<1x128xi1>
    %cst_237 = arith.constant 0.000000e+00 : bf16
    %592 = vector.broadcast %cst_237 : bf16 to vector<16x128xbf16>
    %593 = vector.shape_cast %591 : vector<1x128xi1> to vector<1x128xi1>
    %594 = vector.broadcast %593 : vector<1x128xi1> to vector<16x128xi1>
    %595 = arith.select %594, %570, %592 : vector<16x128xi1>, vector<16x128xbf16>
    %596 = arith.truncf %586 : vector<8x16xf32> to vector<8x16xbf16>
    %cst_238 = arith.constant dense<0.000000e+00> : vector<8x128xf32>
    %597 = tpu.matmul %596, %595, %cst_238 {dimension_numbers = #tpu.dot_dimension_numbers<[1], [0], [0], [1], [0, 0, 1, 1], [], []>} : vector<8x16xbf16>, vector<16x128xbf16>, vector<8x128xf32> -> vector<8x128xf32>
    %598 = arith.addf %571, %597 : vector<8x128xf32>
    %c1_239 = arith.constant 1 : index
    %c0_240 = arith.constant 0 : index
    %c0_241 = arith.constant 0 : index
    %599 = vector.load %arg2[%c1_239, %c0_240, %c0_241] : memref<4x8x128xbf16, #tpu.memory_space<vmem>>, vector<1x8x128xbf16>
    %600 = vector.shape_cast %599 : vector<1x8x128xbf16> to vector<8x128xbf16>
    %cst_242 = arith.constant dense<0.000000e+00> : vector<8x16xf32>
    %601 = tpu.matmul %600, %569, %cst_242 {dimension_numbers = #tpu.dot_dimension_numbers<[1], [1], [0], [0], [0, 0, 1, 0], [], []>} : vector<8x128xbf16>, vector<16x128xbf16>, vector<8x16xf32> -> vector<8x16xf32>
    %cst_243 = arith.constant 0.176776692 : f32
    %602 = vector.broadcast %cst_243 : f32 to vector<8x16xf32>
    %603 = arith.mulf %601, %602 : vector<8x16xf32>
    %cst_244 = arith.constant dense<0xFF800000> : vector<8xf32>
    %604 = vector.multi_reduction <maximumf>, %603, %cst_244 [1] : vector<8x16xf32> to vector<8xf32>
    %605 = vector.shape_cast %604 : vector<8xf32> to vector<8x1xf32>
    %606 = vector.broadcast %605 : vector<8x1xf32> to vector<8x16xf32>
    %607 = arith.subf %603, %606 : vector<8x16xf32>
    %608 = math.exp %607 : vector<8x16xf32>
    %cst_245 = arith.constant dense<0.000000e+00> : vector<8xf32>
    %609 = vector.multi_reduction <add>, %608, %cst_245 [1] : vector<8x16xf32> to vector<8xf32>
    %610 = vector.shape_cast %609 : vector<8xf32> to vector<8x1xf32>
    %611 = tpu.reciprocal %610 {approx = true} : vector<8x1xf32> -> vector<8x1xf32>
    %612 = vector.broadcast %611 : vector<8x1xf32> to vector<8x16xf32>
    %613 = arith.mulf %608, %612 : vector<8x16xf32>
    %c32_i32_246 = arith.constant 32 : i32
    %614 = vector.broadcast %c32_i32_246 : i32 to vector<1x128xi32>
    %615 = arith.cmpi sge, %13, %614 : vector<1x128xi32>
    %c64_i32_247 = arith.constant 64 : i32
    %616 = vector.broadcast %c64_i32_247 : i32 to vector<1x128xi32>
    %617 = arith.cmpi slt, %13, %616 : vector<1x128xi32>
    %618 = arith.andi %615, %617 : vector<1x128xi1>
    %cst_248 = arith.constant 0.000000e+00 : bf16
    %619 = vector.broadcast %cst_248 : bf16 to vector<16x128xbf16>
    %620 = vector.shape_cast %618 : vector<1x128xi1> to vector<1x128xi1>
    %621 = vector.broadcast %620 : vector<1x128xi1> to vector<16x128xi1>
    %622 = arith.select %621, %570, %619 : vector<16x128xi1>, vector<16x128xbf16>
    %623 = arith.truncf %613 : vector<8x16xf32> to vector<8x16xbf16>
    %cst_249 = arith.constant dense<0.000000e+00> : vector<8x128xf32>
    %624 = tpu.matmul %623, %622, %cst_249 {dimension_numbers = #tpu.dot_dimension_numbers<[1], [0], [0], [1], [0, 0, 1, 1], [], []>} : vector<8x16xbf16>, vector<16x128xbf16>, vector<8x128xf32> -> vector<8x128xf32>
    %625 = arith.addf %598, %624 : vector<8x128xf32>
    %c2_250 = arith.constant 2 : index
    %c0_251 = arith.constant 0 : index
    %c0_252 = arith.constant 0 : index
    %626 = vector.load %arg2[%c2_250, %c0_251, %c0_252] : memref<4x8x128xbf16, #tpu.memory_space<vmem>>, vector<1x8x128xbf16>
    %627 = vector.shape_cast %626 : vector<1x8x128xbf16> to vector<8x128xbf16>
    %cst_253 = arith.constant dense<0.000000e+00> : vector<8x16xf32>
    %628 = tpu.matmul %627, %569, %cst_253 {dimension_numbers = #tpu.dot_dimension_numbers<[1], [1], [0], [0], [0, 0, 1, 0], [], []>} : vector<8x128xbf16>, vector<16x128xbf16>, vector<8x16xf32> -> vector<8x16xf32>
    %cst_254 = arith.constant 0.176776692 : f32
    %629 = vector.broadcast %cst_254 : f32 to vector<8x16xf32>
    %630 = arith.mulf %628, %629 : vector<8x16xf32>
    %cst_255 = arith.constant dense<0xFF800000> : vector<8xf32>
    %631 = vector.multi_reduction <maximumf>, %630, %cst_255 [1] : vector<8x16xf32> to vector<8xf32>
    %632 = vector.shape_cast %631 : vector<8xf32> to vector<8x1xf32>
    %633 = vector.broadcast %632 : vector<8x1xf32> to vector<8x16xf32>
    %634 = arith.subf %630, %633 : vector<8x16xf32>
    %635 = math.exp %634 : vector<8x16xf32>
    %cst_256 = arith.constant dense<0.000000e+00> : vector<8xf32>
    %636 = vector.multi_reduction <add>, %635, %cst_256 [1] : vector<8x16xf32> to vector<8xf32>
    %637 = vector.shape_cast %636 : vector<8xf32> to vector<8x1xf32>
    %638 = tpu.reciprocal %637 {approx = true} : vector<8x1xf32> -> vector<8x1xf32>
    %639 = vector.broadcast %638 : vector<8x1xf32> to vector<8x16xf32>
    %640 = arith.mulf %635, %639 : vector<8x16xf32>
    %c64_i32_257 = arith.constant 64 : i32
    %641 = vector.broadcast %c64_i32_257 : i32 to vector<1x128xi32>
    %642 = arith.cmpi sge, %13, %641 : vector<1x128xi32>
    %c96_i32_258 = arith.constant 96 : i32
    %643 = vector.broadcast %c96_i32_258 : i32 to vector<1x128xi32>
    %644 = arith.cmpi slt, %13, %643 : vector<1x128xi32>
    %645 = arith.andi %642, %644 : vector<1x128xi1>
    %cst_259 = arith.constant 0.000000e+00 : bf16
    %646 = vector.broadcast %cst_259 : bf16 to vector<16x128xbf16>
    %647 = vector.shape_cast %645 : vector<1x128xi1> to vector<1x128xi1>
    %648 = vector.broadcast %647 : vector<1x128xi1> to vector<16x128xi1>
    %649 = arith.select %648, %570, %646 : vector<16x128xi1>, vector<16x128xbf16>
    %650 = arith.truncf %640 : vector<8x16xf32> to vector<8x16xbf16>
    %cst_260 = arith.constant dense<0.000000e+00> : vector<8x128xf32>
    %651 = tpu.matmul %650, %649, %cst_260 {dimension_numbers = #tpu.dot_dimension_numbers<[1], [0], [0], [1], [0, 0, 1, 1], [], []>} : vector<8x16xbf16>, vector<16x128xbf16>, vector<8x128xf32> -> vector<8x128xf32>
    %652 = arith.addf %625, %651 : vector<8x128xf32>
    %c3_261 = arith.constant 3 : index
    %c0_262 = arith.constant 0 : index
    %c0_263 = arith.constant 0 : index
    %653 = vector.load %arg2[%c3_261, %c0_262, %c0_263] : memref<4x8x128xbf16, #tpu.memory_space<vmem>>, vector<1x8x128xbf16>
    %654 = vector.shape_cast %653 : vector<1x8x128xbf16> to vector<8x128xbf16>
    %cst_264 = arith.constant dense<0.000000e+00> : vector<8x16xf32>
    %655 = tpu.matmul %654, %569, %cst_264 {dimension_numbers = #tpu.dot_dimension_numbers<[1], [1], [0], [0], [0, 0, 1, 0], [], []>} : vector<8x128xbf16>, vector<16x128xbf16>, vector<8x16xf32> -> vector<8x16xf32>
    %cst_265 = arith.constant 0.176776692 : f32
    %656 = vector.broadcast %cst_265 : f32 to vector<8x16xf32>
    %657 = arith.mulf %655, %656 : vector<8x16xf32>
    %cst_266 = arith.constant dense<0xFF800000> : vector<8xf32>
    %658 = vector.multi_reduction <maximumf>, %657, %cst_266 [1] : vector<8x16xf32> to vector<8xf32>
    %659 = vector.shape_cast %658 : vector<8xf32> to vector<8x1xf32>
    %660 = vector.broadcast %659 : vector<8x1xf32> to vector<8x16xf32>
    %661 = arith.subf %657, %660 : vector<8x16xf32>
    %662 = math.exp %661 : vector<8x16xf32>
    %cst_267 = arith.constant dense<0.000000e+00> : vector<8xf32>
    %663 = vector.multi_reduction <add>, %662, %cst_267 [1] : vector<8x16xf32> to vector<8xf32>
    %664 = vector.shape_cast %663 : vector<8xf32> to vector<8x1xf32>
    %665 = tpu.reciprocal %664 {approx = true} : vector<8x1xf32> -> vector<8x1xf32>
    %666 = vector.broadcast %665 : vector<8x1xf32> to vector<8x16xf32>
    %667 = arith.mulf %662, %666 : vector<8x16xf32>
    %c96_i32_268 = arith.constant 96 : i32
    %668 = vector.broadcast %c96_i32_268 : i32 to vector<1x128xi32>
    %669 = arith.cmpi sge, %13, %668 : vector<1x128xi32>
    %c128_i32_269 = arith.constant 128 : i32
    %670 = vector.broadcast %c128_i32_269 : i32 to vector<1x128xi32>
    %671 = arith.cmpi slt, %13, %670 : vector<1x128xi32>
    %672 = arith.andi %669, %671 : vector<1x128xi1>
    %cst_270 = arith.constant 0.000000e+00 : bf16
    %673 = vector.broadcast %cst_270 : bf16 to vector<16x128xbf16>
    %674 = vector.shape_cast %672 : vector<1x128xi1> to vector<1x128xi1>
    %675 = vector.broadcast %674 : vector<1x128xi1> to vector<16x128xi1>
    %676 = arith.select %675, %570, %673 : vector<16x128xi1>, vector<16x128xbf16>
    %677 = arith.truncf %667 : vector<8x16xf32> to vector<8x16xbf16>
    %cst_271 = arith.constant dense<0.000000e+00> : vector<8x128xf32>
    %678 = tpu.matmul %677, %676, %cst_271 {dimension_numbers = #tpu.dot_dimension_numbers<[1], [0], [0], [1], [0, 0, 1, 1], [], []>} : vector<8x16xbf16>, vector<16x128xbf16>, vector<8x128xf32> -> vector<8x128xf32>
    %679 = arith.addf %652, %678 : vector<8x128xf32>
    %680 = vector.extract_strided_slice %11 {offsets = [96, 0], sizes = [16, 128], strides = [1, 1]} : vector<128x128xbf16> to vector<16x128xbf16>
    %681 = vector.extract_strided_slice %12 {offsets = [96, 0], sizes = [16, 128], strides = [1, 1]} : vector<128x128xbf16> to vector<16x128xbf16>
    %cst_272 = arith.constant 0.000000e+00 : f32
    %682 = vector.broadcast %cst_272 : f32 to vector<8x128xf32>
    %c0_273 = arith.constant 0 : index
    %c0_274 = arith.constant 0 : index
    %c0_275 = arith.constant 0 : index
    %683 = vector.load %arg2[%c0_273, %c0_274, %c0_275] : memref<4x8x128xbf16, #tpu.memory_space<vmem>>, vector<1x8x128xbf16>
    %684 = vector.shape_cast %683 : vector<1x8x128xbf16> to vector<8x128xbf16>
    %cst_276 = arith.constant dense<0.000000e+00> : vector<8x16xf32>
    %685 = tpu.matmul %684, %680, %cst_276 {dimension_numbers = #tpu.dot_dimension_numbers<[1], [1], [0], [0], [0, 0, 1, 0], [], []>} : vector<8x128xbf16>, vector<16x128xbf16>, vector<8x16xf32> -> vector<8x16xf32>
    %cst_277 = arith.constant 0.176776692 : f32
    %686 = vector.broadcast %cst_277 : f32 to vector<8x16xf32>
    %687 = arith.mulf %685, %686 : vector<8x16xf32>
    %cst_278 = arith.constant dense<0xFF800000> : vector<8xf32>
    %688 = vector.multi_reduction <maximumf>, %687, %cst_278 [1] : vector<8x16xf32> to vector<8xf32>
    %689 = vector.shape_cast %688 : vector<8xf32> to vector<8x1xf32>
    %690 = vector.broadcast %689 : vector<8x1xf32> to vector<8x16xf32>
    %691 = arith.subf %687, %690 : vector<8x16xf32>
    %692 = math.exp %691 : vector<8x16xf32>
    %cst_279 = arith.constant dense<0.000000e+00> : vector<8xf32>
    %693 = vector.multi_reduction <add>, %692, %cst_279 [1] : vector<8x16xf32> to vector<8xf32>
    %694 = vector.shape_cast %693 : vector<8xf32> to vector<8x1xf32>
    %695 = tpu.reciprocal %694 {approx = true} : vector<8x1xf32> -> vector<8x1xf32>
    %696 = vector.broadcast %695 : vector<8x1xf32> to vector<8x16xf32>
    %697 = arith.mulf %692, %696 : vector<8x16xf32>
    %c0_i32_280 = arith.constant 0 : i32
    %698 = vector.broadcast %c0_i32_280 : i32 to vector<1x128xi32>
    %699 = arith.cmpi sge, %13, %698 : vector<1x128xi32>
    %c32_i32_281 = arith.constant 32 : i32
    %700 = vector.broadcast %c32_i32_281 : i32 to vector<1x128xi32>
    %701 = arith.cmpi slt, %13, %700 : vector<1x128xi32>
    %702 = arith.andi %699, %701 : vector<1x128xi1>
    %cst_282 = arith.constant 0.000000e+00 : bf16
    %703 = vector.broadcast %cst_282 : bf16 to vector<16x128xbf16>
    %704 = vector.shape_cast %702 : vector<1x128xi1> to vector<1x128xi1>
    %705 = vector.broadcast %704 : vector<1x128xi1> to vector<16x128xi1>
    %706 = arith.select %705, %681, %703 : vector<16x128xi1>, vector<16x128xbf16>
    %707 = arith.truncf %697 : vector<8x16xf32> to vector<8x16xbf16>
    %cst_283 = arith.constant dense<0.000000e+00> : vector<8x128xf32>
    %708 = tpu.matmul %707, %706, %cst_283 {dimension_numbers = #tpu.dot_dimension_numbers<[1], [0], [0], [1], [0, 0, 1, 1], [], []>} : vector<8x16xbf16>, vector<16x128xbf16>, vector<8x128xf32> -> vector<8x128xf32>
    %709 = arith.addf %682, %708 : vector<8x128xf32>
    %c1_284 = arith.constant 1 : index
    %c0_285 = arith.constant 0 : index
    %c0_286 = arith.constant 0 : index
    %710 = vector.load %arg2[%c1_284, %c0_285, %c0_286] : memref<4x8x128xbf16, #tpu.memory_space<vmem>>, vector<1x8x128xbf16>
    %711 = vector.shape_cast %710 : vector<1x8x128xbf16> to vector<8x128xbf16>
    %cst_287 = arith.constant dense<0.000000e+00> : vector<8x16xf32>
    %712 = tpu.matmul %711, %680, %cst_287 {dimension_numbers = #tpu.dot_dimension_numbers<[1], [1], [0], [0], [0, 0, 1, 0], [], []>} : vector<8x128xbf16>, vector<16x128xbf16>, vector<8x16xf32> -> vector<8x16xf32>
    %cst_288 = arith.constant 0.176776692 : f32
    %713 = vector.broadcast %cst_288 : f32 to vector<8x16xf32>
    %714 = arith.mulf %712, %713 : vector<8x16xf32>
    %cst_289 = arith.constant dense<0xFF800000> : vector<8xf32>
    %715 = vector.multi_reduction <maximumf>, %714, %cst_289 [1] : vector<8x16xf32> to vector<8xf32>
    %716 = vector.shape_cast %715 : vector<8xf32> to vector<8x1xf32>
    %717 = vector.broadcast %716 : vector<8x1xf32> to vector<8x16xf32>
    %718 = arith.subf %714, %717 : vector<8x16xf32>
    %719 = math.exp %718 : vector<8x16xf32>
    %cst_290 = arith.constant dense<0.000000e+00> : vector<8xf32>
    %720 = vector.multi_reduction <add>, %719, %cst_290 [1] : vector<8x16xf32> to vector<8xf32>
    %721 = vector.shape_cast %720 : vector<8xf32> to vector<8x1xf32>
    %722 = tpu.reciprocal %721 {approx = true} : vector<8x1xf32> -> vector<8x1xf32>
    %723 = vector.broadcast %722 : vector<8x1xf32> to vector<8x16xf32>
    %724 = arith.mulf %719, %723 : vector<8x16xf32>
    %c32_i32_291 = arith.constant 32 : i32
    %725 = vector.broadcast %c32_i32_291 : i32 to vector<1x128xi32>
    %726 = arith.cmpi sge, %13, %725 : vector<1x128xi32>
    %c64_i32_292 = arith.constant 64 : i32
    %727 = vector.broadcast %c64_i32_292 : i32 to vector<1x128xi32>
    %728 = arith.cmpi slt, %13, %727 : vector<1x128xi32>
    %729 = arith.andi %726, %728 : vector<1x128xi1>
    %cst_293 = arith.constant 0.000000e+00 : bf16
    %730 = vector.broadcast %cst_293 : bf16 to vector<16x128xbf16>
    %731 = vector.shape_cast %729 : vector<1x128xi1> to vector<1x128xi1>
    %732 = vector.broadcast %731 : vector<1x128xi1> to vector<16x128xi1>
    %733 = arith.select %732, %681, %730 : vector<16x128xi1>, vector<16x128xbf16>
    %734 = arith.truncf %724 : vector<8x16xf32> to vector<8x16xbf16>
    %cst_294 = arith.constant dense<0.000000e+00> : vector<8x128xf32>
    %735 = tpu.matmul %734, %733, %cst_294 {dimension_numbers = #tpu.dot_dimension_numbers<[1], [0], [0], [1], [0, 0, 1, 1], [], []>} : vector<8x16xbf16>, vector<16x128xbf16>, vector<8x128xf32> -> vector<8x128xf32>
    %736 = arith.addf %709, %735 : vector<8x128xf32>
    %c2_295 = arith.constant 2 : index
    %c0_296 = arith.constant 0 : index
    %c0_297 = arith.constant 0 : index
    %737 = vector.load %arg2[%c2_295, %c0_296, %c0_297] : memref<4x8x128xbf16, #tpu.memory_space<vmem>>, vector<1x8x128xbf16>
    %738 = vector.shape_cast %737 : vector<1x8x128xbf16> to vector<8x128xbf16>
    %cst_298 = arith.constant dense<0.000000e+00> : vector<8x16xf32>
    %739 = tpu.matmul %738, %680, %cst_298 {dimension_numbers = #tpu.dot_dimension_numbers<[1], [1], [0], [0], [0, 0, 1, 0], [], []>} : vector<8x128xbf16>, vector<16x128xbf16>, vector<8x16xf32> -> vector<8x16xf32>
    %cst_299 = arith.constant 0.176776692 : f32
    %740 = vector.broadcast %cst_299 : f32 to vector<8x16xf32>
    %741 = arith.mulf %739, %740 : vector<8x16xf32>
    %cst_300 = arith.constant dense<0xFF800000> : vector<8xf32>
    %742 = vector.multi_reduction <maximumf>, %741, %cst_300 [1] : vector<8x16xf32> to vector<8xf32>
    %743 = vector.shape_cast %742 : vector<8xf32> to vector<8x1xf32>
    %744 = vector.broadcast %743 : vector<8x1xf32> to vector<8x16xf32>
    %745 = arith.subf %741, %744 : vector<8x16xf32>
    %746 = math.exp %745 : vector<8x16xf32>
    %cst_301 = arith.constant dense<0.000000e+00> : vector<8xf32>
    %747 = vector.multi_reduction <add>, %746, %cst_301 [1] : vector<8x16xf32> to vector<8xf32>
    %748 = vector.shape_cast %747 : vector<8xf32> to vector<8x1xf32>
    %749 = tpu.reciprocal %748 {approx = true} : vector<8x1xf32> -> vector<8x1xf32>
    %750 = vector.broadcast %749 : vector<8x1xf32> to vector<8x16xf32>
    %751 = arith.mulf %746, %750 : vector<8x16xf32>
    %c64_i32_302 = arith.constant 64 : i32
    %752 = vector.broadcast %c64_i32_302 : i32 to vector<1x128xi32>
    %753 = arith.cmpi sge, %13, %752 : vector<1x128xi32>
    %c96_i32_303 = arith.constant 96 : i32
    %754 = vector.broadcast %c96_i32_303 : i32 to vector<1x128xi32>
    %755 = arith.cmpi slt, %13, %754 : vector<1x128xi32>
    %756 = arith.andi %753, %755 : vector<1x128xi1>
    %cst_304 = arith.constant 0.000000e+00 : bf16
    %757 = vector.broadcast %cst_304 : bf16 to vector<16x128xbf16>
    %758 = vector.shape_cast %756 : vector<1x128xi1> to vector<1x128xi1>
    %759 = vector.broadcast %758 : vector<1x128xi1> to vector<16x128xi1>
    %760 = arith.select %759, %681, %757 : vector<16x128xi1>, vector<16x128xbf16>
    %761 = arith.truncf %751 : vector<8x16xf32> to vector<8x16xbf16>
    %cst_305 = arith.constant dense<0.000000e+00> : vector<8x128xf32>
    %762 = tpu.matmul %761, %760, %cst_305 {dimension_numbers = #tpu.dot_dimension_numbers<[1], [0], [0], [1], [0, 0, 1, 1], [], []>} : vector<8x16xbf16>, vector<16x128xbf16>, vector<8x128xf32> -> vector<8x128xf32>
    %763 = arith.addf %736, %762 : vector<8x128xf32>
    %c3_306 = arith.constant 3 : index
    %c0_307 = arith.constant 0 : index
    %c0_308 = arith.constant 0 : index
    %764 = vector.load %arg2[%c3_306, %c0_307, %c0_308] : memref<4x8x128xbf16, #tpu.memory_space<vmem>>, vector<1x8x128xbf16>
    %765 = vector.shape_cast %764 : vector<1x8x128xbf16> to vector<8x128xbf16>
    %cst_309 = arith.constant dense<0.000000e+00> : vector<8x16xf32>
    %766 = tpu.matmul %765, %680, %cst_309 {dimension_numbers = #tpu.dot_dimension_numbers<[1], [1], [0], [0], [0, 0, 1, 0], [], []>} : vector<8x128xbf16>, vector<16x128xbf16>, vector<8x16xf32> -> vector<8x16xf32>
    %cst_310 = arith.constant 0.176776692 : f32
    %767 = vector.broadcast %cst_310 : f32 to vector<8x16xf32>
    %768 = arith.mulf %766, %767 : vector<8x16xf32>
    %cst_311 = arith.constant dense<0xFF800000> : vector<8xf32>
    %769 = vector.multi_reduction <maximumf>, %768, %cst_311 [1] : vector<8x16xf32> to vector<8xf32>
    %770 = vector.shape_cast %769 : vector<8xf32> to vector<8x1xf32>
    %771 = vector.broadcast %770 : vector<8x1xf32> to vector<8x16xf32>
    %772 = arith.subf %768, %771 : vector<8x16xf32>
    %773 = math.exp %772 : vector<8x16xf32>
    %cst_312 = arith.constant dense<0.000000e+00> : vector<8xf32>
    %774 = vector.multi_reduction <add>, %773, %cst_312 [1] : vector<8x16xf32> to vector<8xf32>
    %775 = vector.shape_cast %774 : vector<8xf32> to vector<8x1xf32>
    %776 = tpu.reciprocal %775 {approx = true} : vector<8x1xf32> -> vector<8x1xf32>
    %777 = vector.broadcast %776 : vector<8x1xf32> to vector<8x16xf32>
    %778 = arith.mulf %773, %777 : vector<8x16xf32>
    %c96_i32_313 = arith.constant 96 : i32
    %779 = vector.broadcast %c96_i32_313 : i32 to vector<1x128xi32>
    %780 = arith.cmpi sge, %13, %779 : vector<1x128xi32>
    %c128_i32_314 = arith.constant 128 : i32
    %781 = vector.broadcast %c128_i32_314 : i32 to vector<1x128xi32>
    %782 = arith.cmpi slt, %13, %781 : vector<1x128xi32>
    %783 = arith.andi %780, %782 : vector<1x128xi1>
    %cst_315 = arith.constant 0.000000e+00 : bf16
    %784 = vector.broadcast %cst_315 : bf16 to vector<16x128xbf16>
    %785 = vector.shape_cast %783 : vector<1x128xi1> to vector<1x128xi1>
    %786 = vector.broadcast %785 : vector<1x128xi1> to vector<16x128xi1>
    %787 = arith.select %786, %681, %784 : vector<16x128xi1>, vector<16x128xbf16>
    %788 = arith.truncf %778 : vector<8x16xf32> to vector<8x16xbf16>
    %cst_316 = arith.constant dense<0.000000e+00> : vector<8x128xf32>
    %789 = tpu.matmul %788, %787, %cst_316 {dimension_numbers = #tpu.dot_dimension_numbers<[1], [0], [0], [1], [0, 0, 1, 1], [], []>} : vector<8x16xbf16>, vector<16x128xbf16>, vector<8x128xf32> -> vector<8x128xf32>
    %790 = arith.addf %763, %789 : vector<8x128xf32>
    %791 = vector.extract_strided_slice %11 {offsets = [112, 0], sizes = [16, 128], strides = [1, 1]} : vector<128x128xbf16> to vector<16x128xbf16>
    %792 = vector.extract_strided_slice %12 {offsets = [112, 0], sizes = [16, 128], strides = [1, 1]} : vector<128x128xbf16> to vector<16x128xbf16>
    %cst_317 = arith.constant 0.000000e+00 : f32
    %793 = vector.broadcast %cst_317 : f32 to vector<8x128xf32>
    %c0_318 = arith.constant 0 : index
    %c0_319 = arith.constant 0 : index
    %c0_320 = arith.constant 0 : index
    %794 = vector.load %arg2[%c0_318, %c0_319, %c0_320] : memref<4x8x128xbf16, #tpu.memory_space<vmem>>, vector<1x8x128xbf16>
    %795 = vector.shape_cast %794 : vector<1x8x128xbf16> to vector<8x128xbf16>
    %cst_321 = arith.constant dense<0.000000e+00> : vector<8x16xf32>
    %796 = tpu.matmul %795, %791, %cst_321 {dimension_numbers = #tpu.dot_dimension_numbers<[1], [1], [0], [0], [0, 0, 1, 0], [], []>} : vector<8x128xbf16>, vector<16x128xbf16>, vector<8x16xf32> -> vector<8x16xf32>
    %cst_322 = arith.constant 0.176776692 : f32
    %797 = vector.broadcast %cst_322 : f32 to vector<8x16xf32>
    %798 = arith.mulf %796, %797 : vector<8x16xf32>
    %cst_323 = arith.constant dense<0xFF800000> : vector<8xf32>
    %799 = vector.multi_reduction <maximumf>, %798, %cst_323 [1] : vector<8x16xf32> to vector<8xf32>
    %800 = vector.shape_cast %799 : vector<8xf32> to vector<8x1xf32>
    %801 = vector.broadcast %800 : vector<8x1xf32> to vector<8x16xf32>
    %802 = arith.subf %798, %801 : vector<8x16xf32>
    %803 = math.exp %802 : vector<8x16xf32>
    %cst_324 = arith.constant dense<0.000000e+00> : vector<8xf32>
    %804 = vector.multi_reduction <add>, %803, %cst_324 [1] : vector<8x16xf32> to vector<8xf32>
    %805 = vector.shape_cast %804 : vector<8xf32> to vector<8x1xf32>
    %806 = tpu.reciprocal %805 {approx = true} : vector<8x1xf32> -> vector<8x1xf32>
    %807 = vector.broadcast %806 : vector<8x1xf32> to vector<8x16xf32>
    %808 = arith.mulf %803, %807 : vector<8x16xf32>
    %c0_i32_325 = arith.constant 0 : i32
    %809 = vector.broadcast %c0_i32_325 : i32 to vector<1x128xi32>
    %810 = arith.cmpi sge, %13, %809 : vector<1x128xi32>
    %c32_i32_326 = arith.constant 32 : i32
    %811 = vector.broadcast %c32_i32_326 : i32 to vector<1x128xi32>
    %812 = arith.cmpi slt, %13, %811 : vector<1x128xi32>
    %813 = arith.andi %810, %812 : vector<1x128xi1>
    %cst_327 = arith.constant 0.000000e+00 : bf16
    %814 = vector.broadcast %cst_327 : bf16 to vector<16x128xbf16>
    %815 = vector.shape_cast %813 : vector<1x128xi1> to vector<1x128xi1>
    %816 = vector.broadcast %815 : vector<1x128xi1> to vector<16x128xi1>
    %817 = arith.select %816, %792, %814 : vector<16x128xi1>, vector<16x128xbf16>
    %818 = arith.truncf %808 : vector<8x16xf32> to vector<8x16xbf16>
    %cst_328 = arith.constant dense<0.000000e+00> : vector<8x128xf32>
    %819 = tpu.matmul %818, %817, %cst_328 {dimension_numbers = #tpu.dot_dimension_numbers<[1], [0], [0], [1], [0, 0, 1, 1], [], []>} : vector<8x16xbf16>, vector<16x128xbf16>, vector<8x128xf32> -> vector<8x128xf32>
    %820 = arith.addf %793, %819 : vector<8x128xf32>
    %c1_329 = arith.constant 1 : index
    %c0_330 = arith.constant 0 : index
    %c0_331 = arith.constant 0 : index
    %821 = vector.load %arg2[%c1_329, %c0_330, %c0_331] : memref<4x8x128xbf16, #tpu.memory_space<vmem>>, vector<1x8x128xbf16>
    %822 = vector.shape_cast %821 : vector<1x8x128xbf16> to vector<8x128xbf16>
    %cst_332 = arith.constant dense<0.000000e+00> : vector<8x16xf32>
    %823 = tpu.matmul %822, %791, %cst_332 {dimension_numbers = #tpu.dot_dimension_numbers<[1], [1], [0], [0], [0, 0, 1, 0], [], []>} : vector<8x128xbf16>, vector<16x128xbf16>, vector<8x16xf32> -> vector<8x16xf32>
    %cst_333 = arith.constant 0.176776692 : f32
    %824 = vector.broadcast %cst_333 : f32 to vector<8x16xf32>
    %825 = arith.mulf %823, %824 : vector<8x16xf32>
    %cst_334 = arith.constant dense<0xFF800000> : vector<8xf32>
    %826 = vector.multi_reduction <maximumf>, %825, %cst_334 [1] : vector<8x16xf32> to vector<8xf32>
    %827 = vector.shape_cast %826 : vector<8xf32> to vector<8x1xf32>
    %828 = vector.broadcast %827 : vector<8x1xf32> to vector<8x16xf32>
    %829 = arith.subf %825, %828 : vector<8x16xf32>
    %830 = math.exp %829 : vector<8x16xf32>
    %cst_335 = arith.constant dense<0.000000e+00> : vector<8xf32>
    %831 = vector.multi_reduction <add>, %830, %cst_335 [1] : vector<8x16xf32> to vector<8xf32>
    %832 = vector.shape_cast %831 : vector<8xf32> to vector<8x1xf32>
    %833 = tpu.reciprocal %832 {approx = true} : vector<8x1xf32> -> vector<8x1xf32>
    %834 = vector.broadcast %833 : vector<8x1xf32> to vector<8x16xf32>
    %835 = arith.mulf %830, %834 : vector<8x16xf32>
    %c32_i32_336 = arith.constant 32 : i32
    %836 = vector.broadcast %c32_i32_336 : i32 to vector<1x128xi32>
    %837 = arith.cmpi sge, %13, %836 : vector<1x128xi32>
    %c64_i32_337 = arith.constant 64 : i32
    %838 = vector.broadcast %c64_i32_337 : i32 to vector<1x128xi32>
    %839 = arith.cmpi slt, %13, %838 : vector<1x128xi32>
    %840 = arith.andi %837, %839 : vector<1x128xi1>
    %cst_338 = arith.constant 0.000000e+00 : bf16
    %841 = vector.broadcast %cst_338 : bf16 to vector<16x128xbf16>
    %842 = vector.shape_cast %840 : vector<1x128xi1> to vector<1x128xi1>
    %843 = vector.broadcast %842 : vector<1x128xi1> to vector<16x128xi1>
    %844 = arith.select %843, %792, %841 : vector<16x128xi1>, vector<16x128xbf16>
    %845 = arith.truncf %835 : vector<8x16xf32> to vector<8x16xbf16>
    %cst_339 = arith.constant dense<0.000000e+00> : vector<8x128xf32>
    %846 = tpu.matmul %845, %844, %cst_339 {dimension_numbers = #tpu.dot_dimension_numbers<[1], [0], [0], [1], [0, 0, 1, 1], [], []>} : vector<8x16xbf16>, vector<16x128xbf16>, vector<8x128xf32> -> vector<8x128xf32>
    %847 = arith.addf %820, %846 : vector<8x128xf32>
    %c2_340 = arith.constant 2 : index
    %c0_341 = arith.constant 0 : index
    %c0_342 = arith.constant 0 : index
    %848 = vector.load %arg2[%c2_340, %c0_341, %c0_342] : memref<4x8x128xbf16, #tpu.memory_space<vmem>>, vector<1x8x128xbf16>
    %849 = vector.shape_cast %848 : vector<1x8x128xbf16> to vector<8x128xbf16>
    %cst_343 = arith.constant dense<0.000000e+00> : vector<8x16xf32>
    %850 = tpu.matmul %849, %791, %cst_343 {dimension_numbers = #tpu.dot_dimension_numbers<[1], [1], [0], [0], [0, 0, 1, 0], [], []>} : vector<8x128xbf16>, vector<16x128xbf16>, vector<8x16xf32> -> vector<8x16xf32>
    %cst_344 = arith.constant 0.176776692 : f32
    %851 = vector.broadcast %cst_344 : f32 to vector<8x16xf32>
    %852 = arith.mulf %850, %851 : vector<8x16xf32>
    %cst_345 = arith.constant dense<0xFF800000> : vector<8xf32>
    %853 = vector.multi_reduction <maximumf>, %852, %cst_345 [1] : vector<8x16xf32> to vector<8xf32>
    %854 = vector.shape_cast %853 : vector<8xf32> to vector<8x1xf32>
    %855 = vector.broadcast %854 : vector<8x1xf32> to vector<8x16xf32>
    %856 = arith.subf %852, %855 : vector<8x16xf32>
    %857 = math.exp %856 : vector<8x16xf32>
    %cst_346 = arith.constant dense<0.000000e+00> : vector<8xf32>
    %858 = vector.multi_reduction <add>, %857, %cst_346 [1] : vector<8x16xf32> to vector<8xf32>
    %859 = vector.shape_cast %858 : vector<8xf32> to vector<8x1xf32>
    %860 = tpu.reciprocal %859 {approx = true} : vector<8x1xf32> -> vector<8x1xf32>
    %861 = vector.broadcast %860 : vector<8x1xf32> to vector<8x16xf32>
    %862 = arith.mulf %857, %861 : vector<8x16xf32>
    %c64_i32_347 = arith.constant 64 : i32
    %863 = vector.broadcast %c64_i32_347 : i32 to vector<1x128xi32>
    %864 = arith.cmpi sge, %13, %863 : vector<1x128xi32>
    %c96_i32_348 = arith.constant 96 : i32
    %865 = vector.broadcast %c96_i32_348 : i32 to vector<1x128xi32>
    %866 = arith.cmpi slt, %13, %865 : vector<1x128xi32>
    %867 = arith.andi %864, %866 : vector<1x128xi1>
    %cst_349 = arith.constant 0.000000e+00 : bf16
    %868 = vector.broadcast %cst_349 : bf16 to vector<16x128xbf16>
    %869 = vector.shape_cast %867 : vector<1x128xi1> to vector<1x128xi1>
    %870 = vector.broadcast %869 : vector<1x128xi1> to vector<16x128xi1>
    %871 = arith.select %870, %792, %868 : vector<16x128xi1>, vector<16x128xbf16>
    %872 = arith.truncf %862 : vector<8x16xf32> to vector<8x16xbf16>
    %cst_350 = arith.constant dense<0.000000e+00> : vector<8x128xf32>
    %873 = tpu.matmul %872, %871, %cst_350 {dimension_numbers = #tpu.dot_dimension_numbers<[1], [0], [0], [1], [0, 0, 1, 1], [], []>} : vector<8x16xbf16>, vector<16x128xbf16>, vector<8x128xf32> -> vector<8x128xf32>
    %874 = arith.addf %847, %873 : vector<8x128xf32>
    %c3_351 = arith.constant 3 : index
    %c0_352 = arith.constant 0 : index
    %c0_353 = arith.constant 0 : index
    %875 = vector.load %arg2[%c3_351, %c0_352, %c0_353] : memref<4x8x128xbf16, #tpu.memory_space<vmem>>, vector<1x8x128xbf16>
    %876 = vector.shape_cast %875 : vector<1x8x128xbf16> to vector<8x128xbf16>
    %cst_354 = arith.constant dense<0.000000e+00> : vector<8x16xf32>
    %877 = tpu.matmul %876, %791, %cst_354 {dimension_numbers = #tpu.dot_dimension_numbers<[1], [1], [0], [0], [0, 0, 1, 0], [], []>} : vector<8x128xbf16>, vector<16x128xbf16>, vector<8x16xf32> -> vector<8x16xf32>
    %cst_355 = arith.constant 0.176776692 : f32
    %878 = vector.broadcast %cst_355 : f32 to vector<8x16xf32>
    %879 = arith.mulf %877, %878 : vector<8x16xf32>
    %cst_356 = arith.constant dense<0xFF800000> : vector<8xf32>
    %880 = vector.multi_reduction <maximumf>, %879, %cst_356 [1] : vector<8x16xf32> to vector<8xf32>
    %881 = vector.shape_cast %880 : vector<8xf32> to vector<8x1xf32>
    %882 = vector.broadcast %881 : vector<8x1xf32> to vector<8x16xf32>
    %883 = arith.subf %879, %882 : vector<8x16xf32>
    %884 = math.exp %883 : vector<8x16xf32>
    %cst_357 = arith.constant dense<0.000000e+00> : vector<8xf32>
    %885 = vector.multi_reduction <add>, %884, %cst_357 [1] : vector<8x16xf32> to vector<8xf32>
    %886 = vector.shape_cast %885 : vector<8xf32> to vector<8x1xf32>
    %887 = tpu.reciprocal %886 {approx = true} : vector<8x1xf32> -> vector<8x1xf32>
    %888 = vector.broadcast %887 : vector<8x1xf32> to vector<8x16xf32>
    %889 = arith.mulf %884, %888 : vector<8x16xf32>
    %c96_i32_358 = arith.constant 96 : i32
    %890 = vector.broadcast %c96_i32_358 : i32 to vector<1x128xi32>
    %891 = arith.cmpi sge, %13, %890 : vector<1x128xi32>
    %c128_i32_359 = arith.constant 128 : i32
    %892 = vector.broadcast %c128_i32_359 : i32 to vector<1x128xi32>
    %893 = arith.cmpi slt, %13, %892 : vector<1x128xi32>
    %894 = arith.andi %891, %893 : vector<1x128xi1>
    %cst_360 = arith.constant 0.000000e+00 : bf16
    %895 = vector.broadcast %cst_360 : bf16 to vector<16x128xbf16>
    %896 = vector.shape_cast %894 : vector<1x128xi1> to vector<1x128xi1>
    %897 = vector.broadcast %896 : vector<1x128xi1> to vector<16x128xi1>
    %898 = arith.select %897, %792, %895 : vector<16x128xi1>, vector<16x128xbf16>
    %899 = arith.truncf %889 : vector<8x16xf32> to vector<8x16xbf16>
    %cst_361 = arith.constant dense<0.000000e+00> : vector<8x128xf32>
    %900 = tpu.matmul %899, %898, %cst_361 {dimension_numbers = #tpu.dot_dimension_numbers<[1], [0], [0], [1], [0, 0, 1, 1], [], []>} : vector<8x16xbf16>, vector<16x128xbf16>, vector<8x128xf32> -> vector<8x128xf32>
    %901 = arith.addf %874, %900 : vector<8x128xf32>
    %902 = tpu.concatenate %124, %235, %346, %457, %568, %679, %790, %901 in 0 : vector<8x128xf32>, vector<8x128xf32>, vector<8x128xf32>, vector<8x128xf32>, vector<8x128xf32>, vector<8x128xf32>, vector<8x128xf32>, vector<8x128xf32> -> vector<64x128xf32>
    %903 = arith.truncf %902 : vector<64x128xf32> to vector<64x128xbf16>
    %c0_362 = arith.constant 0 : index
    %c0_363 = arith.constant 0 : index
    %904 = vector.load %arg5[%c0_362, %c0_363] : memref<128x128xbf16, #tpu.memory_space<vmem>>, vector<128x128xbf16>
    %cst_364 = arith.constant dense<0.000000e+00> : vector<64x128xf32>
    %905 = tpu.matmul %903, %904, %cst_364 {dimension_numbers = #tpu.dot_dimension_numbers<[1], [0], [0], [1], [0, 0, 1, 1], [], []>} : vector<64x128xbf16>, vector<128x128xbf16>, vector<64x128xf32> -> vector<64x128xf32>
    %c2_365 = arith.constant 2 : index
    %c0_366 = arith.constant 0 : index
    %906 = vector.load %arg9[%c2_365, %c0_366] : memref<8x128xf32, #tpu.memory_space<vmem>>, vector<1x128xf32>
    %907 = vector.broadcast %906 : vector<1x128xf32> to vector<64x128xf32>
    %908 = arith.addf %905, %907 : vector<64x128xf32>
    %909 = arith.truncf %908 : vector<64x128xf32> to vector<64x128xbf16>
    %cst_367 = arith.constant 0.000000e+00 : f32
    %910 = vector.broadcast %cst_367 : f32 to vector<64x128xf32>
    %c0_368 = arith.constant 0 : index
    %c0_369 = arith.constant 0 : index
    %911 = vector.load %arg6[%c0_368, %c0_369] : memref<128x512xbf16, #tpu.memory_space<vmem>>, vector<128x256xbf16>
    %cst_370 = arith.constant dense<0.000000e+00> : vector<64x256xf32>
    %912 = tpu.matmul %909, %911, %cst_370 {dimension_numbers = #tpu.dot_dimension_numbers<[1], [0], [0], [1], [0, 0, 1, 1], [], []>} : vector<64x128xbf16>, vector<128x256xbf16>, vector<64x256xf32> -> vector<64x256xf32>
    %c0_371 = arith.constant 0 : index
    %c0_372 = arith.constant 0 : index
    %913 = vector.load %arg10[%c0_371, %c0_372] : memref<1x512xf32, #tpu.memory_space<vmem>>, vector<1x256xf32>
    %914 = vector.broadcast %913 : vector<1x256xf32> to vector<64x256xf32>
    %915 = arith.addf %912, %914 : vector<64x256xf32>
    %916 = arith.mulf %915, %915 : vector<64x256xf32>
    %917 = arith.mulf %915, %916 : vector<64x256xf32>
    %cst_373 = arith.constant 4.471500e-02 : f32
    %918 = vector.broadcast %cst_373 : f32 to vector<64x256xf32>
    %919 = arith.mulf %918, %917 : vector<64x256xf32>
    %920 = arith.addf %915, %919 : vector<64x256xf32>
    %cst_374 = arith.constant 0.797884583 : f32
    %921 = vector.broadcast %cst_374 : f32 to vector<64x256xf32>
    %922 = arith.mulf %921, %920 : vector<64x256xf32>
    %923 = math.tanh %922 : vector<64x256xf32>
    %cst_375 = arith.constant 1.000000e+00 : f32
    %924 = vector.broadcast %cst_375 : f32 to vector<64x256xf32>
    %925 = arith.addf %924, %923 : vector<64x256xf32>
    %cst_376 = arith.constant 5.000000e-01 : f32
    %926 = vector.broadcast %cst_376 : f32 to vector<64x256xf32>
    %927 = arith.mulf %926, %925 : vector<64x256xf32>
    %928 = arith.mulf %915, %927 : vector<64x256xf32>
    %929 = arith.truncf %928 : vector<64x256xf32> to vector<64x256xbf16>
    %c0_377 = arith.constant 0 : index
    %c0_378 = arith.constant 0 : index
    %930 = vector.load %arg7[%c0_377, %c0_378] : memref<512x128xbf16, #tpu.memory_space<vmem>>, vector<256x128xbf16>
    %cst_379 = arith.constant dense<0.000000e+00> : vector<64x128xf32>
    %931 = tpu.matmul %929, %930, %cst_379 {dimension_numbers = #tpu.dot_dimension_numbers<[1], [0], [0], [1], [0, 0, 1, 1], [], []>} : vector<64x256xbf16>, vector<256x128xbf16>, vector<64x128xf32> -> vector<64x128xf32>
    %932 = arith.addf %910, %931 : vector<64x128xf32>
    %c0_380 = arith.constant 0 : index
    %c256 = arith.constant 256 : index
    %933 = vector.load %arg6[%c0_380, %c256] : memref<128x512xbf16, #tpu.memory_space<vmem>>, vector<128x256xbf16>
    %cst_381 = arith.constant dense<0.000000e+00> : vector<64x256xf32>
    %934 = tpu.matmul %909, %933, %cst_381 {dimension_numbers = #tpu.dot_dimension_numbers<[1], [0], [0], [1], [0, 0, 1, 1], [], []>} : vector<64x128xbf16>, vector<128x256xbf16>, vector<64x256xf32> -> vector<64x256xf32>
    %c0_382 = arith.constant 0 : index
    %c256_383 = arith.constant 256 : index
    %935 = vector.load %arg10[%c0_382, %c256_383] : memref<1x512xf32, #tpu.memory_space<vmem>>, vector<1x256xf32>
    %936 = vector.broadcast %935 : vector<1x256xf32> to vector<64x256xf32>
    %937 = arith.addf %934, %936 : vector<64x256xf32>
    %938 = arith.mulf %937, %937 : vector<64x256xf32>
    %939 = arith.mulf %937, %938 : vector<64x256xf32>
    %cst_384 = arith.constant 4.471500e-02 : f32
    %940 = vector.broadcast %cst_384 : f32 to vector<64x256xf32>
    %941 = arith.mulf %940, %939 : vector<64x256xf32>
    %942 = arith.addf %937, %941 : vector<64x256xf32>
    %cst_385 = arith.constant 0.797884583 : f32
    %943 = vector.broadcast %cst_385 : f32 to vector<64x256xf32>
    %944 = arith.mulf %943, %942 : vector<64x256xf32>
    %945 = math.tanh %944 : vector<64x256xf32>
    %cst_386 = arith.constant 1.000000e+00 : f32
    %946 = vector.broadcast %cst_386 : f32 to vector<64x256xf32>
    %947 = arith.addf %946, %945 : vector<64x256xf32>
    %cst_387 = arith.constant 5.000000e-01 : f32
    %948 = vector.broadcast %cst_387 : f32 to vector<64x256xf32>
    %949 = arith.mulf %948, %947 : vector<64x256xf32>
    %950 = arith.mulf %937, %949 : vector<64x256xf32>
    %951 = arith.truncf %950 : vector<64x256xf32> to vector<64x256xbf16>
    %c256_388 = arith.constant 256 : index
    %c0_389 = arith.constant 0 : index
    %952 = vector.load %arg7[%c256_388, %c0_389] : memref<512x128xbf16, #tpu.memory_space<vmem>>, vector<256x128xbf16>
    %cst_390 = arith.constant dense<0.000000e+00> : vector<64x128xf32>
    %953 = tpu.matmul %951, %952, %cst_390 {dimension_numbers = #tpu.dot_dimension_numbers<[1], [0], [0], [1], [0, 0, 1, 1], [], []>} : vector<64x256xbf16>, vector<256x128xbf16>, vector<64x128xf32> -> vector<64x128xf32>
    %954 = arith.addf %932, %953 : vector<64x128xf32>
    %c3_391 = arith.constant 3 : index
    %c0_392 = arith.constant 0 : index
    %955 = vector.load %arg9[%c3_391, %c0_392] : memref<8x128xf32, #tpu.memory_space<vmem>>, vector<1x128xf32>
    %956 = vector.broadcast %955 : vector<1x128xf32> to vector<64x128xf32>
    %957 = arith.addf %954, %956 : vector<64x128xf32>
    %cst_393 = arith.constant dense<0.000000e+00> : vector<64xf32>
    %958 = vector.multi_reduction <add>, %957, %cst_393 [1] : vector<64x128xf32> to vector<64xf32>
    %959 = vector.shape_cast %958 : vector<64xf32> to vector<64x1xf32>
    %cst_394 = arith.constant 1.280000e+02 : f32
    %960 = vector.broadcast %cst_394 : f32 to vector<64x1xf32>
    %961 = arith.divf %959, %960 : vector<64x1xf32>
    %962 = vector.broadcast %961 : vector<64x1xf32> to vector<64x128xf32>
    %963 = arith.subf %957, %962 : vector<64x128xf32>
    %964 = arith.mulf %963, %963 : vector<64x128xf32>
    %cst_395 = arith.constant dense<0.000000e+00> : vector<64xf32>
    %965 = vector.multi_reduction <add>, %964, %cst_395 [1] : vector<64x128xf32> to vector<64xf32>
    %966 = vector.shape_cast %965 : vector<64xf32> to vector<64x1xf32>
    %cst_396 = arith.constant 1.280000e+02 : f32
    %967 = vector.broadcast %cst_396 : f32 to vector<64x1xf32>
    %968 = arith.divf %966, %967 : vector<64x1xf32>
    %969 = vector.broadcast %961 : vector<64x1xf32> to vector<64x128xf32>
    %970 = arith.subf %957, %969 : vector<64x128xf32>
    %cst_397 = arith.constant 9.99999974E-6 : f32
    %971 = vector.broadcast %cst_397 : f32 to vector<64x1xf32>
    %972 = arith.addf %968, %971 : vector<64x1xf32>
    %973 = math.rsqrt %972 : vector<64x1xf32>
    %974 = vector.broadcast %973 : vector<64x1xf32> to vector<64x128xf32>
    %975 = arith.mulf %970, %974 : vector<64x128xf32>
    %c4 = arith.constant 4 : index
    %c0_398 = arith.constant 0 : index
    %976 = vector.load %arg9[%c4, %c0_398] : memref<8x128xf32, #tpu.memory_space<vmem>>, vector<1x128xf32>
    %977 = vector.broadcast %976 : vector<1x128xf32> to vector<64x128xf32>
    %978 = arith.mulf %975, %977 : vector<64x128xf32>
    %c5 = arith.constant 5 : index
    %c0_399 = arith.constant 0 : index
    %979 = vector.load %arg9[%c5, %c0_399] : memref<8x128xf32, #tpu.memory_space<vmem>>, vector<1x128xf32>
    %980 = vector.broadcast %979 : vector<1x128xf32> to vector<64x128xf32>
    %981 = arith.addf %978, %980 : vector<64x128xf32>
    %982 = arith.truncf %981 : vector<64x128xf32> to vector<64x128xbf16>
    %c0_400 = arith.constant 0 : index
    %c0_401 = arith.constant 0 : index
    %983 = vector.load %arg8[%c0_400, %c0_401] : memref<128x256xbf16, #tpu.memory_space<vmem>>, vector<128x256xbf16>
    %cst_402 = arith.constant dense<0.000000e+00> : vector<64x256xf32>
    %984 = tpu.matmul %982, %983, %cst_402 {dimension_numbers = #tpu.dot_dimension_numbers<[1], [0], [0], [1], [0, 0, 1, 1], [], []>} : vector<64x128xbf16>, vector<128x256xbf16>, vector<64x256xf32> -> vector<64x256xf32>
    %985 = vector.extract_strided_slice %984 {offsets = [0, 0], sizes = [64, 128], strides = [1, 1]} : vector<64x256xf32> to vector<64x128xf32>
    %986 = vector.extract_strided_slice %984 {offsets = [0, 128], sizes = [64, 128], strides = [1, 1]} : vector<64x256xf32> to vector<64x128xf32>
    %987 = arith.mulf %985, %985 : vector<64x128xf32>
    %cst_403 = arith.constant dense<0.000000e+00> : vector<64xf32>
    %988 = vector.multi_reduction <add>, %987, %cst_403 [1] : vector<64x128xf32> to vector<64xf32>
    %989 = vector.shape_cast %988 : vector<64xf32> to vector<64x1xf32>
    %cst_404 = arith.constant 1.000000e-24 : f32
    %990 = vector.broadcast %cst_404 : f32 to vector<64x1xf32>
    %991 = arith.maximumf %989, %990 : vector<64x1xf32>
    %992 = math.rsqrt %991 : vector<64x1xf32>
    %993 = arith.mulf %986, %986 : vector<64x128xf32>
    %cst_405 = arith.constant dense<0.000000e+00> : vector<64xf32>
    %994 = vector.multi_reduction <add>, %993, %cst_405 [1] : vector<64x128xf32> to vector<64xf32>
    %995 = vector.shape_cast %994 : vector<64xf32> to vector<64x1xf32>
    %cst_406 = arith.constant 1.000000e-24 : f32
    %996 = vector.broadcast %cst_406 : f32 to vector<64x1xf32>
    %997 = arith.maximumf %995, %996 : vector<64x1xf32>
    %998 = math.rsqrt %997 : vector<64x1xf32>
    %999 = vector.broadcast %992 : vector<64x1xf32> to vector<64x128xf32>
    %1000 = arith.mulf %985, %999 : vector<64x128xf32>
    %c0_407 = arith.constant 0 : index
    %c0_408 = arith.constant 0 : index
    %1001 = vector.load %arg11[%c0_407, %c0_408] : memref<64x256xf32, #tpu.memory_space<vmem>>, vector<64x128xf32>
    tpu.vector_store %arg11[%c0_407, %c0_408], %1000 {strides = array<i32>} : memref<64x256xf32, #tpu.memory_space<vmem>>, vector<64x128xf32>,
    %1002 = vector.broadcast %998 : vector<64x1xf32> to vector<64x128xf32>
    %1003 = arith.mulf %986, %1002 : vector<64x128xf32>
    %c0_409 = arith.constant 0 : index
    %c128 = arith.constant 128 : index
    %1004 = vector.load %arg11[%c0_409, %c128] : memref<64x256xf32, #tpu.memory_space<vmem>>, vector<64x128xf32>
    tpu.vector_store %arg11[%c0_409, %c128], %1003 {strides = array<i32>} : memref<64x256xf32, #tpu.memory_space<vmem>>, vector<64x128xf32>,
    return
  }
  func.func @transform_0(%arg0: i32) -> (i32, i32) {
    %c0_i32 = arith.constant 0 : i32
    %c0_i32_0 = arith.constant 0 : i32
    return %arg0, %c0_i32 : i32, i32
  }
  func.func @transform_1(%arg0: i32) -> (i32, i32, i32) {
    %c0_i32 = arith.constant 0 : i32
    %c0_i32_0 = arith.constant 0 : i32
    %c0_i32_1 = arith.constant 0 : i32
    %c0_i32_2 = arith.constant 0 : i32
    return %c0_i32, %c0_i32_0, %c0_i32_1 : i32, i32, i32
  }
  func.func @transform_2(%arg0: i32) -> (i32, i32) {
    %c0_i32 = arith.constant 0 : i32
    %c0_i32_0 = arith.constant 0 : i32
    %c0_i32_1 = arith.constant 0 : i32
    return %c0_i32, %c0_i32_0 : i32, i32
  }
  func.func @transform_3(%arg0: i32) -> (i32, i32) {
    %c0_i32 = arith.constant 0 : i32
    %c0_i32_0 = arith.constant 0 : i32
    %c0_i32_1 = arith.constant 0 : i32
    return %c0_i32, %c0_i32_0 : i32, i32
  }
  func.func @transform_4(%arg0: i32) -> (i32, i32) {
    %c0_i32 = arith.constant 0 : i32
    %c0_i32_0 = arith.constant 0 : i32
    %c0_i32_1 = arith.constant 0 : i32
    return %c0_i32, %c0_i32_0 : i32, i32
  }
  func.func @transform_5(%arg0: i32) -> (i32, i32) {
    %c0_i32 = arith.constant 0 : i32
    %c0_i32_0 = arith.constant 0 : i32
    %c0_i32_1 = arith.constant 0 : i32
    return %c0_i32, %c0_i32_0 : i32, i32
  }
  func.func @transform_6(%arg0: i32) -> (i32, i32) {
    %c0_i32 = arith.constant 0 : i32
    %c0_i32_0 = arith.constant 0 : i32
    %c0_i32_1 = arith.constant 0 : i32
    return %c0_i32, %c0_i32_0 : i32, i32
  }
  func.func @transform_7(%arg0: i32) -> (i32, i32) {
    %c0_i32 = arith.constant 0 : i32
    %c0_i32_0 = arith.constant 0 : i32
    %c0_i32_1 = arith.constant 0 : i32
    return %c0_i32, %c0_i32_0 : i32, i32
  }
  func.func @transform_8(%arg0: i32) -> (i32, i32) {
    %c0_i32 = arith.constant 0 : i32
    %c0_i32_0 = arith.constant 0 : i32
    %c0_i32_1 = arith.constant 0 : i32
    return %c0_i32, %c0_i32_0 : i32, i32
  }
  func.func @transform_9(%arg0: i32) -> (i32, i32) {
    %c0_i32 = arith.constant 0 : i32
    %c0_i32_0 = arith.constant 0 : i32
    %c0_i32_1 = arith.constant 0 : i32
    return %c0_i32, %c0_i32_0 : i32, i32
  }
  func.func @transform_10(%arg0: i32) -> (i32, i32) {
    %c0_i32 = arith.constant 0 : i32
    %c0_i32_0 = arith.constant 0 : i32
    return %arg0, %c0_i32 : i32, i32
  }
}

</mosaic_0001>

<llo_original>
// kernel: explicd_forward.1
$region0: #{explicd_forward.1}
  #allocation0 [shape = 'u32[]', space=smem, size = 0x4, offset = 0x4, fixed_abs, tag = 'smem constant byte address 0x4 - core index']
  #allocation1 [shape = 'u32[144,128]{1,0:T(1,128)}', space=vmem, size = 0x12000, scoped, tag = 'internal scratch']
  %s0 = inlined_call_operand.vmem [shape: bf16[256,128], index: 0, kind: input, shape index: {}]
  %s1 = inlined_call_operand.vmem [shape: bf16[4,8,128], index: 1, kind: input, shape index: {}]
  %s2 = inlined_call_operand.vmem [shape: bf16[128,128], index: 2, kind: input, shape index: {}]
  %s3 = inlined_call_operand.vmem [shape: bf16[128,128], index: 3, kind: input, shape index: {}]
  %s4 = inlined_call_operand.vmem [shape: bf16[128,128], index: 4, kind: input, shape index: {}]
  %s5 = inlined_call_operand.vmem [shape: bf16[128,512], index: 5, kind: input, shape index: {}]
  %s6 = inlined_call_operand.vmem [shape: bf16[512,128], index: 6, kind: input, shape index: {}]
  %s7 = inlined_call_operand.vmem [shape: bf16[128,256], index: 7, kind: input, shape index: {}]
  %s8 = inlined_call_operand.vmem [shape: f32[8,128], index: 8, kind: input, shape index: {}]
  %s9 = inlined_call_operand.vmem [shape: f32[1,512], index: 9, kind: input, shape index: {}]
  %s10 = inlined_call_operand.vmem [shape: f32[128,256], index: 10, kind: output, shape index: {}]
  %s11 = sld [smem:[#allocation0]]
  $region73: #{explicd_forward.1} parent=0
    _
  %s13 = ssub.s32 1, %s11
  %s14 = scalar_select 0, %s13, %s11
  loop: start=0, step=1, limit=4
  $region2: #{explicd_forward.1} parent=0 // loop_pre_header
    _
  $region3: #{explicd_forward.1} parent=0 // loop_header
    %s16 = sphi 0, %s20
    %p17 = scmp.ge.s32.totalorder %s16, 4
    %s26 = sphi 0, %s28
    %s29 = sphi 0, %s26
    %s30 = sphi 0, %s29
    %s46 = sphi 0, %s30
    %s50 = sphi 0, %s50
    %s52 = sphi 0, %s50
    %s53 = sphi 0, %s52
    %s67 = sphi 0, %s53
    %s71 = sphi 0, %s71
    %s73 = sphi 0, %s71
    %s74 = sphi 0, %s73
    %s88 = sphi 0, %s74
    %s92 = sphi 0, %s92
    %s94 = sphi 0, %s92
    %s95 = sphi 0, %s94
    %s109 = sphi 0, %s95
    %s113 = sphi 0, %s113
    %s115 = sphi 0, %s113
    %s116 = sphi 0, %s115
    %s130 = sphi 0, %s116
    %s134 = sphi 0, %s134
    %s136 = sphi 0, %s134
    %s137 = sphi 0, %s136
    %s151 = sphi 0, %s137
    %s155 = sphi 0, %s155
    %s157 = sphi 0, %s155
    %s158 = sphi 0, %s157
    %s172 = sphi 0, %s158
    %s176 = sphi 0, %s176
    %s178 = sphi 0, %s176
    %s179 = sphi 0, %s178
    %s193 = sphi 0, %s179
    %s197 = sphi 0, %s197
    %s199 = sphi 0, %s197
    %s200 = sphi 0, %s199
    %s214 = sphi 0, %s200
    %s218 = sphi 0, %s218
    %s220 = sphi 0, %s218
    %s221 = sphi 0, %s220
    %s235 = sphi 0, %s221
    %s241 = sphi 0, %s243
    %s244 = sphi 0, %s241
    %s245 = sphi 0, %s244
    %s261 = sphi 0, %s245
  $region4: #{explicd_forward.1} parent=0 // loop_header_branch
    %19 = sbr.rel (%p17) target = $region8
  $region5: #{explicd_forward.1} parent=0 // loop_body
    %s21 = ssub.s32 %s16, 1
    %s22 = ssub.s32 %s16, 2
    %s23 = sadd.s32 %s16, 1
    %s24 = ssub.s32 %s16, %s23
    %p25 = scmp.eq.s32.totalorder %s24, 0
    %s27 = sadd.s32 %s26, 1
    %s28 = scalar_select %p25, %s26, %s27
    %p31 = pneg %p25
    %p32 = scmp.eq.s32.totalorder %s16, 1
    %p33 = por %p31, %p32
    %p34 = scmp.ne.s32.totalorder %s26, %s29
    %p35 = scmp.eq.s32.totalorder %s16, 0
    %p36 = por %p34, %p35
    %p37 = scmp.ne.s32.totalorder %s26, %s29
    %p38 = scmp.eq.s32.totalorder %s21, 1
    %p39 = por %p37, %p38
    %p40 = scmp.ne.s32.totalorder %s29, %s30
    %p41 = scmp.eq.s32.totalorder %s21, 0
    %p42 = por %p40, %p41
    %p43 = scmp.ne.s32.totalorder %s29, %s30
    %p44 = scmp.eq.s32.totalorder %s22, 1
    %p45 = por %p43, %p44
    %p47 = scmp.ne.s32.totalorder %s30, %s46
    %p48 = scmp.eq.s32.totalorder %s22, 0
    %p49 = por %p47, %p48
    %s51 = sadd.s32 %s50, 1
    %p54 = scmp.eq.s32.totalorder %s16, 1
    %p55 = scmp.ne.s32.totalorder %s50, %s52
    %p56 = scmp.eq.s32.totalorder %s16, 0
    %p57 = por %p55, %p56
    %p58 = scmp.ne.s32.totalorder %s50, %s52
    %p59 = scmp.eq.s32.totalorder %s21, 1
    %p60 = por %p58, %p59
    %p61 = scmp.ne.s32.totalorder %s52, %s53
    %p62 = scmp.eq.s32.totalorder %s21, 0
    %p63 = por %p61, %p62
    %p64 = scmp.ne.s32.totalorder %s52, %s53
    %p65 = scmp.eq.s32.totalorder %s22, 1
    %p66 = por %p64, %p65
    %p68 = scmp.ne.s32.totalorder %s53, %s67
    %p69 = scmp.eq.s32.totalorder %s22, 0
    %p70 = por %p68, %p69
    %s72 = sadd.s32 %s71, 1
    %p75 = scmp.eq.s32.totalorder %s16, 1
    %p76 = scmp.ne.s32.totalorder %s71, %s73
    %p77 = scmp.eq.s32.totalorder %s16, 0
    %p78 = por %p76, %p77
    %p79 = scmp.ne.s32.totalorder %s71, %s73
    %p80 = scmp.eq.s32.totalorder %s21, 1
    %p81 = por %p79, %p80
    %p82 = scmp.ne.s32.totalorder %s73, %s74
    %p83 = scmp.eq.s32.totalorder %s21, 0
    %p84 = por %p82, %p83
    %p85 = scmp.ne.s32.totalorder %s73, %s74
    %p86 = scmp.eq.s32.totalorder %s22, 1
    %p87 = por %p85, %p86
    %p89 = scmp.ne.s32.totalorder %s74, %s88
    %p90 = scmp.eq.s32.totalorder %s22, 0
    %p91 = por %p89, %p90
    %s93 = sadd.s32 %s92, 1
    %p96 = scmp.eq.s32.totalorder %s16, 1
    %p97 = scmp.ne.s32.totalorder %s92, %s94
    %p98 = scmp.eq.s32.totalorder %s16, 0
    %p99 = por %p97, %p98
    %p100 = scmp.ne.s32.totalorder %s92, %s94
    %p101 = scmp.eq.s32.totalorder %s21, 1
    %p102 = por %p100, %p101
    %p103 = scmp.ne.s32.totalorder %s94, %s95
    %p104 = scmp.eq.s32.totalorder %s21, 0
    %p105 = por %p103, %p104
    %p106 = scmp.ne.s32.totalorder %s94, %s95
    %p107 = scmp.eq.s32.totalorder %s22, 1
    %p108 = por %p106, %p107
    %p110 = scmp.ne.s32.totalorder %s95, %s109
    %p111 = scmp.eq.s32.totalorder %s22, 0
    %p112 = por %p110, %p111
    %s114 = sadd.s32 %s113, 1
    %p117 = scmp.eq.s32.totalorder %s16, 1
    %p118 = scmp.ne.s32.totalorder %s113, %s115
    %p119 = scmp.eq.s32.totalorder %s16, 0
    %p120 = por %p118, %p119
    %p121 = scmp.ne.s32.totalorder %s113, %s115
    %p122 = scmp.eq.s32.totalorder %s21, 1
    %p123 = por %p121, %p122
    %p124 = scmp.ne.s32.totalorder %s115, %s116
    %p125 = scmp.eq.s32.totalorder %s21, 0
    %p126 = por %p124, %p125
    %p127 = scmp.ne.s32.totalorder %s115, %s116
    %p128 = scmp.eq.s32.totalorder %s22, 1
    %p129 = por %p127, %p128
    %p131 = scmp.ne.s32.totalorder %s116, %s130
    %p132 = scmp.eq.s32.totalorder %s22, 0
    %p133 = por %p131, %p132
    %s135 = sadd.s32 %s134, 1
    %p138 = scmp.eq.s32.totalorder %s16, 1
    %p139 = scmp.ne.s32.totalorder %s134, %s136
    %p140 = scmp.eq.s32.totalorder %s16, 0
    %p141 = por %p139, %p140
    %p142 = scmp.ne.s32.totalorder %s134, %s136
    %p143 = scmp.eq.s32.totalorder %s21, 1
    %p144 = por %p142, %p143
    %p145 = scmp.ne.s32.totalorder %s136, %s137
    %p146 = scmp.eq.s32.totalorder %s21, 0
    %p147 = por %p145, %p146
    %p148 = scmp.ne.s32.totalorder %s136, %s137
    %p149 = scmp.eq.s32.totalorder %s22, 1
    %p150 = por %p148, %p149
    %p152 = scmp.ne.s32.totalorder %s137, %s151
    %p153 = scmp.eq.s32.totalorder %s22, 0
    %p154 = por %p152, %p153
    %s156 = sadd.s32 %s155, 1
    %p159 = scmp.eq.s32.totalorder %s16, 1
    %p160 = scmp.ne.s32.totalorder %s155, %s157
    %p161 = scmp.eq.s32.totalorder %s16, 0
    %p162 = por %p160, %p161
    %p163 = scmp.ne.s32.totalorder %s155, %s157
    %p164 = scmp.eq.s32.totalorder %s21, 1
    %p165 = por %p163, %p164
    %p166 = scmp.ne.s32.totalorder %s157, %s158
    %p167 = scmp.eq.s32.totalorder %s21, 0
    %p168 = por %p166, %p167
    %p169 = scmp.ne.s32.totalorder %s157, %s158
    %p170 = scmp.eq.s32.totalorder %s22, 1
    %p171 = por %p169, %p170
    %p173 = scmp.ne.s32.totalorder %s158, %s172
    %p174 = scmp.eq.s32.totalorder %s22, 0
    %p175 = por %p173, %p174
    %s177 = sadd.s32 %s176, 1
    %p180 = scmp.eq.s32.totalorder %s16, 1
    %p181 = scmp.ne.s32.totalorder %s176, %s178
    %p182 = scmp.eq.s32.totalorder %s16, 0
    %p183 = por %p181, %p182
    %p184 = scmp.ne.s32.totalorder %s176, %s178
    %p185 = scmp.eq.s32.totalorder %s21, 1
    %p186 = por %p184, %p185
    %p187 = scmp.ne.s32.totalorder %s178, %s179
    %p188 = scmp.eq.s32.totalorder %s21, 0
    %p189 = por %p187, %p188
    %p190 = scmp.ne.s32.totalorder %s178, %s179
    %p191 = scmp.eq.s32.totalorder %s22, 1
    %p192 = por %p190, %p191
    %p194 = scmp.ne.s32.totalorder %s179, %s193
    %p195 = scmp.eq.s32.totalorder %s22, 0
    %p196 = por %p194, %p195
    %s198 = sadd.s32 %s197, 1
    %p201 = scmp.eq.s32.totalorder %s16, 1
    %p202 = scmp.ne.s32.totalorder %s197, %s199
    %p203 = scmp.eq.s32.totalorder %s16, 0
    %p204 = por %p202, %p203
    %p205 = scmp.ne.s32.totalorder %s197, %s199
    %p206 = scmp.eq.s32.totalorder %s21, 1
    %p207 = por %p205, %p206
    %p208 = scmp.ne.s32.totalorder %s199, %s200
    %p209 = scmp.eq.s32.totalorder %s21, 0
    %p210 = por %p208, %p209
    %p211 = scmp.ne.s32.totalorder %s199, %s200
    %p212 = scmp.eq.s32.totalorder %s22, 1
    %p213 = por %p211, %p212
    %p215 = scmp.ne.s32.totalorder %s200, %s214
    %p216 = scmp.eq.s32.totalorder %s22, 0
    %p217 = por %p215, %p216
    %s219 = sadd.s32 %s218, 1
    %p222 = scmp.eq.s32.totalorder %s16, 1
    %p223 = scmp.ne.s32.totalorder %s218, %s220
    %p224 = scmp.eq.s32.totalorder %s16, 0
    %p225 = por %p223, %p224
    %p226 = scmp.ne.s32.totalorder %s218, %s220
    %p227 = scmp.eq.s32.totalorder %s21, 1
    %p228 = por %p226, %p227
    %p229 = scmp.ne.s32.totalorder %s220, %s221
    %p230 = scmp.eq.s32.totalorder %s21, 0
    %p231 = por %p229, %p230
    %p232 = scmp.ne.s32.totalorder %s220, %s221
    %p233 = scmp.eq.s32.totalorder %s22, 1
    %p234 = por %p232, %p233
    %p236 = scmp.ne.s32.totalorder %s221, %s235
    %p237 = scmp.eq.s32.totalorder %s22, 0
    %p238 = por %p236, %p237
    %s239 = ssub.s32 %s16, %s23
    %p240 = scmp.eq.s32.totalorder %s239, 0
    %s242 = sadd.s32 %s241, 1
    %s243 = scalar_select %p240, %s241, %s242
    %p246 = pneg %p240
    %p247 = scmp.eq.s32.totalorder %s16, 1
    %p248 = por %p246, %p247
    %p249 = scmp.ne.s32.totalorder %s241, %s244
    %p250 = scmp.eq.s32.totalorder %s16, 0
    %p251 = por %p249, %p250
    %p252 = scmp.ne.s32.totalorder %s241, %s244
    %p253 = scmp.eq.s32.totalorder %s21, 1
    %p254 = por %p252, %p253
    %p255 = scmp.ne.s32.totalorder %s244, %s245
    %p256 = scmp.eq.s32.totalorder %s21, 0
    %p257 = por %p255, %p256
    %p258 = scmp.ne.s32.totalorder %s244, %s245
    %p259 = scmp.eq.s32.totalorder %s22, 1
    %p260 = por %p258, %p259
    %p262 = scmp.ne.s32.totalorder %s245, %s261
    %p263 = scmp.eq.s32.totalorder %s22, 0
    %p264 = por %p262, %p263
    %p265 = scmp.le.s32.totalorder 1, %s16
    %p266 = scmp.lt.s32.totalorder %s16, 3
    %p267 = pnand %p265, %p266
    %p268 = pneg %p267
    // Predicated region
    $region9: #{explicd_forward.1} parent=5 // pred_check
      _
    $region10: #{explicd_forward.1} parent=5 // pred_check_branch
      %270 = sbr.rel (%p267) target = $region12
    $region11: #{explicd_forward.1} parent=5 // pred_region
      %s271 = ssub.s32 %s16, 1
      // Predicated region
      $region13: #{explicd_forward.1} parent=11 // pred_check
        %p272 = pneg %p63
      $region14: #{explicd_forward.1} parent=11 // pred_check_branch
        %274 = sbr.rel (%p272) target = $region16
      $region15: #{explicd_forward.1} parent=11 // pred_region
        _
      $region16: #{explicd_forward.1} parent=11 // pred_fallthru
        _
      // Predicated region
      $region17: #{explicd_forward.1} parent=11 // pred_check
        %p275 = pneg %p84
      $region18: #{explicd_forward.1} parent=11 // pred_check_branch
        %277 = sbr.rel (%p275) target = $region20
      $region19: #{explicd_forward.1} parent=11 // pred_region
        _
      $region20: #{explicd_forward.1} parent=11 // pred_fallthru
        _
      // Predicated region
      $region21: #{explicd_forward.1} parent=11 // pred_check
        %p278 = pneg %p105
      $region22: #{explicd_forward.1} parent=11 // pred_check_branch
        %280 = sbr.rel (%p278) target = $region24
      $region23: #{explicd_forward.1} parent=11 // pred_region
        _
      $region24: #{explicd_forward.1} parent=11 // pred_fallthru
        _
      // Predicated region
      $region25: #{explicd_forward.1} parent=11 // pred_check
        %p281 = pneg %p126
      $region26: #{explicd_forward.1} parent=11 // pred_check_branch
        %283 = sbr.rel (%p281) target = $region28
      $region27: #{explicd_forward.1} parent=11 // pred_region
        _
      $region28: #{explicd_forward.1} parent=11 // pred_fallthru
        _
      // Predicated region
      $region29: #{explicd_forward.1} parent=11 // pred_check
        %p284 = pneg %p147
      $region30: #{explicd_forward.1} parent=11 // pred_check_branch
        %286 = sbr.rel (%p284) target = $region32
      $region31: #{explicd_forward.1} parent=11 // pred_region
        _
      $region32: #{explicd_forward.1} parent=11 // pred_fallthru
        _
      // Predicated region
      $region33: #{explicd_forward.1} parent=11 // pred_check
        %p287 = pneg %p168
      $region34: #{explicd_forward.1} parent=11 // pred_check_branch
        %289 = sbr.rel (%p287) target = $region36
      $region35: #{explicd_forward.1} parent=11 // pred_region
        _
      $region36: #{explicd_forward.1} parent=11 // pred_fallthru
        _
      // Predicated region
      $region37: #{explicd_forward.1} parent=11 // pred_check
        %p290 = pneg %p189
      $region38: #{explicd_forward.1} parent=11 // pred_check_branch
        %292 = sbr.rel (%p290) target = $region40
      $region39: #{explicd_forward.1} parent=11 // pred_region
        _
      $region40: #{explicd_forward.1} parent=11 // pred_fallthru
        _
      // Predicated region
      $region41: #{explicd_forward.1} parent=11 // pred_check
        %p293 = pneg %p210
      $region42: #{explicd_forward.1} parent=11 // pred_check_branch
        %295 = sbr.rel (%p293) target = $region44
      $region43: #{explicd_forward.1} parent=11 // pred_region
        _
      $region44: #{explicd_forward.1} parent=11 // pred_fallthru
        _
      // Predicated region
      $region45: #{explicd_forward.1} parent=11 // pred_check
        %p296 = pneg %p231
      $region46: #{explicd_forward.1} parent=11 // pred_check_branch
        %298 = sbr.rel (%p296) target = $region48
      $region47: #{explicd_forward.1} parent=11 // pred_region
        _
      $region48: #{explicd_forward.1} parent=11 // pred_fallthru
        _
    $region12: #{explicd_forward.1} parent=5 // pred_fallthru
      _
    %p299 = scmp.lt.s32.totalorder %s16, 2
    // Predicated region
    $region49: #{explicd_forward.1} parent=5 // pred_check
      %p300 = pneg %p299
    $region50: #{explicd_forward.1} parent=5 // pred_check_branch
      %302 = sbr.rel (%p300) target = $region52
    $region51: #{explicd_forward.1} parent=5 // pred_region
      // Predicated region
      $region53: #{explicd_forward.1} parent=51 // pred_check
        %p303 = pneg %p36
      $region54: #{explicd_forward.1} parent=51 // pred_check_branch
        %305 = sbr.rel (%p303) target = $region56
      $region55: #{explicd_forward.1} parent=51 // pred_region
        %s306 = smul.u32 16, %s16
        %p307 = scmp.lt.s32.totalorder %s306, 31
        %s308 = scalar_select %p307, %s306, 31
        %s309 = smul.addr %s308, 4
        %s310 = scalar_lea.vmem %s0, %s309
        %s311 = smul.u32 16, %s16
      $region56: #{explicd_forward.1} parent=51 // pred_fallthru
        _
    $region52: #{explicd_forward.1} parent=5 // pred_fallthru
      _
    %p312 = scmp.le.s32.totalorder 1, %s16
    %p313 = scmp.lt.s32.totalorder %s16, 3
    %p314 = pnand %p312, %p313
    %p315 = pneg %p314
    // Predicated region
    $region57: #{explicd_forward.1} parent=5 // pred_check
      _
    $region58: #{explicd_forward.1} parent=5 // pred_check_branch
      %317 = sbr.rel (%p314) target = $region60
    $region59: #{explicd_forward.1} parent=5 // pred_region
      %s318 = ssub.s32 %s16, 1
      %s319 = smul.u32 16, %s21
      %p320 = scmp.lt.s32.totalorder %s319, 31
      %s321 = scalar_select %p320, %s319, 31
      %s322 = smul.addr %s321, 4
      %s323 = scalar_lea.vmem %s0, %s322
      %p324 = pneg %p42
      %p325 = pneg %p39
      %p326 = pneg %p63
      %p327 = pneg %p60
      %p328 = pneg %p84
      %p329 = pneg %p81
      %p330 = pneg %p105
      %p331 = pneg %p102
      %p332 = pneg %p126
      %p333 = pneg %p123
      %p334 = pneg %p147
      %p335 = pneg %p144
      %p336 = pneg %p168
      %p337 = pneg %p165
      %p338 = pneg %p189
      %p339 = pneg %p186
      %p340 = pneg %p210
      %p341 = pneg %p207
      %p342 = pneg %p231
      %p343 = pneg %p228
      %p344 = pneg %p257
      %p345 = pneg %p254
      %s346 = smul.u32 8, %s21
      %p347 = scmp.lt.s32.totalorder %s346, 15
      %s348 = scalar_select %p347, %s346, 15
      %s349 = smul.addr %s348, 2
      %s350 = smul.addr %s349, 8
      %s351 = scalar_lea.vmem %s10, %s350
      %s352 = smul.u32 16, %s21
      %p353 = scmp.lt.s32.totalorder %s352, 31
      %s354 = scalar_select %p353, %s352, 31
      %s355 = smul.addr %s354, 4
      %s356 = scalar_lea.vmem %s0, %s355
      %s357 = smul.u32 16, %s21
      %s358 = smul.u32 8, %s21
      %p359 = scmp.lt.s32.totalorder %s358, 15
      %s360 = scalar_select %p359, %s358, 15
      %s361 = smul.addr %s360, 2
      %s362 = smul.addr %s361, 8
      %s363 = scalar_lea.vmem %s10, %s362
      %s364 = smul.u32 8, %s21
      %v368 = vld [vmem:[%s356] sm:$0xf]
      %v369 = vld [vmem:[%s356 + $0x4] sm:$0xf]
      %v370 = vld [vmem:[%s356 + $0x8] sm:$0xf]
      %v371 = vld [vmem:[%s356 + $0xc] sm:$0xf]
      %v372 = vld [vmem:[%s356 + $0x10] sm:$0xf]
      %v373 = vld [vmem:[%s356 + $0x14] sm:$0xf]
      %v374 = vld [vmem:[%s356 + $0x18] sm:$0xf]
      %v375 = vld [vmem:[%s356 + $0x1c] sm:$0xf]
      %v376 = vld [vmem:[%s356 + $0x20] sm:$0xf]
      %v377 = vld [vmem:[%s356 + $0x24] sm:$0xf]
      %v378 = vld [vmem:[%s356 + $0x28] sm:$0xf]
      %v379 = vld [vmem:[%s356 + $0x2c] sm:$0xf]
      %v380 = vld [vmem:[%s356 + $0x30] sm:$0xf]
      %v381 = vld [vmem:[%s356 + $0x34] sm:$0xf]
      %v382 = vld [vmem:[%s356 + $0x38] sm:$0xf]
      %v383 = vld [vmem:[%s356 + $0x3c] sm:$0xf]
      %v384 = vld [vmem:[%s2] sm:$0xf]
      %v385 = vld [vmem:[%s2 + $0x4] sm:$0xf]
      %v386 = vld [vmem:[%s2 + $0x8] sm:$0xf]
      %v387 = vld [vmem:[%s2 + $0xc] sm:$0xf]
      %v388 = vld [vmem:[%s2 + $0x10] sm:$0xf]
      %v389 = vld [vmem:[%s2 + $0x14] sm:$0xf]
      %v390 = vld [vmem:[%s2 + $0x18] sm:$0xf]
      %v391 = vld [vmem:[%s2 + $0x1c] sm:$0xf]
      %v392 = vld [vmem:[%s2 + $0x20] sm:$0xf]
      %v393 = vld [vmem:[%s2 + $0x24] sm:$0xf]
      %v394 = vld [vmem:[%s2 + $0x28] sm:$0xf]
      %v395 = vld [vmem:[%s2 + $0x2c] sm:$0xf]
      %v396 = vld [vmem:[%s2 + $0x30] sm:$0xf]
      %v397 = vld [vmem:[%s2 + $0x34] sm:$0xf]
      %v398 = vld [vmem:[%s2 + $0x38] sm:$0xf]
      %v399 = vld [vmem:[%s2 + $0x3c] sm:$0xf]
      %v400 = vld [vmem:[%s8] sm:$0x1]
      %v401 = vlaneseq
      %v402 = vshrl.u32 %v401, 7
      %v403 = vsub.s32 0, %v402
      %v404 = vrot.slane %v400, %v403
      %v421 = vunpack.c.l.b16 %v368
      %v422 = vunpack.c.l.b16 %v369
      %v423 = vunpack.c.l.b16 %v370
      %v424 = vunpack.c.l.b16 %v371
      %v425 = vunpack.c.l.b16 %v372
      %v426 = vunpack.c.l.b16 %v373
      %v427 = vunpack.c.l.b16 %v374
      %v428 = vunpack.c.l.b16 %v375
      %v429 = vunpack.c.l.b16 %v376
      %v430 = vunpack.c.l.b16 %v377
      %v431 = vunpack.c.l.b16 %v378
      %v432 = vunpack.c.l.b16 %v379
      %v433 = vunpack.c.l.b16 %v380
      %v434 = vunpack.c.l.b16 %v381
      %v435 = vunpack.c.l.b16 %v382
      %v436 = vunpack.c.l.b16 %v383
      %v437 = vpack.c.b16 %v422, %v421
      %v438 = vpack.c.b16 %v424, %v423
      %v439 = vpack.c.b16 %v426, %v425
      %v440 = vpack.c.b16 %v428, %v427
      %v441 = vpack.c.b16 %v430, %v429
      %v442 = vpack.c.b16 %v432, %v431
      %v443 = vpack.c.b16 %v434, %v433
      %v444 = vpack.c.b16 %v436, %v435
      %v469 = vunpack.c.l.b16 %v384
      %v470 = vunpack.c.l.b16 %v385
      %v471 = vunpack.c.l.b16 %v386
      %v472 = vunpack.c.l.b16 %v387
      %v473 = vunpack.c.l.b16 %v388
      %v474 = vunpack.c.l.b16 %v389
      %v475 = vunpack.c.l.b16 %v390
      %v476 = vunpack.c.l.b16 %v391
      %v477 = vunpack.c.l.b16 %v392
      %v478 = vunpack.c.l.b16 %v393
      %v479 = vunpack.c.l.b16 %v394
      %v480 = vunpack.c.l.b16 %v395
      %v481 = vunpack.c.l.b16 %v396
      %v482 = vunpack.c.l.b16 %v397
      %v483 = vunpack.c.l.b16 %v398
      %v484 = vunpack.c.l.b16 %v399
      %v485 = vpack.c.b16 %v470, %v469
      %v486 = vpack.c.b16 %v472, %v471
      %v487 = vpack.c.b16 %v474, %v473
      %v488 = vpack.c.b16 %v476, %v475
      %v489 = vpack.c.b16 %v478, %v477
      %v490 = vpack.c.b16 %v480, %v479
      %v491 = vpack.c.b16 %v482, %v481
      %v492 = vpack.c.b16 %v484, %v483
      %501 = vmatprep.subr.bf16.mxu0 0
      %502 = vmatpush1.bf16.msra.mxu0 %v492
      %503 = vmatprep.subr.bf16.mxu0 0
      %504 = vmatpush1.bf16.msra.mxu0 %v491
      %505 = vmatprep.subr.bf16.mxu0 0
      %506 = vmatpush1.bf16.msra.mxu0 %v490
      %507 = vmatprep.subr.bf16.mxu0 0
      %508 = vmatpush1.bf16.msra.mxu0 %v489
      %509 = vmatprep.subr.bf16.mxu0 0
      %510 = vmatpush1.bf16.msra.mxu0 %v488
      %511 = vmatprep.subr.bf16.mxu0 0
      %512 = vmatpush1.bf16.msra.mxu0 %v487
      %513 = vmatprep.subr.bf16.mxu0 0
      %514 = vmatpush1.bf16.msra.mxu0 %v486
      %515 = vmatprep.subr.bf16.mxu0 0
      %516 = vmatpush1.bf16.msra.mxu0 %v485
      %517 = vmatprep.subr.bf16.mxu0 0
      %518 = vmatpush2.bf16.msra.mxu0 0
      %519 = vmatprep.subr.bf16.mxu0 0
      %520 = vmatpush2.bf16.msra.mxu0 0
      %521 = vmatprep.subr.bf16.mxu0 0
      %522 = vmatpush2.bf16.msra.mxu0 0
      %523 = vmatprep.subr.bf16.mxu0 0
      %524 = vmatpush2.bf16.msra.mxu0 0
      %525 = vmatprep.subr.bf16.mxu0 0
      %526 = vmatpush2.bf16.msra.mxu0 0
      %527 = vmatprep.subr.bf16.mxu0 0
      %528 = vmatpush2.bf16.msra.mxu0 0
      %529 = vmatprep.subr.bf16.mxu0 0
      %530 = vmatpush2.bf16.msra.mxu0 0
      %531 = vmatprep.subr.bf16.mxu0 0
      %532 = vmatpush2.bf16.msra.mxu0 0
      %533 = vmatprep.mubr.bf16.mxu0 0
      %534 = vmatmul.mubr.bf16.gmra.mxu0 %v437
      %v535 = vpop.f32.mrf.mxu0
      %v536 = vadd.f32 %v404, %v535
      %v537 = vpop.f32.mrf.mxu0
      %v538 = vpop.f32.mrf.mxu0
      %v539 = vadd.f32 %v404, %v538
      %v540 = vpop.f32.mrf.mxu0
      %541 = vmatprep.mubr.bf16.mxu0 0
      %542 = vmatmul.mubr.bf16.gmra.mxu0 %v438
      %v543 = vpop.f32.mrf.mxu0
      %v544 = vadd.f32 %v404, %v543
      %v545 = vpop.f32.mrf.mxu0
      %v546 = vpop.f32.mrf.mxu0
      %v547 = vadd.f32 %v404, %v546
      %v548 = vpop.f32.mrf.mxu0
      %549 = vmatprep.mubr.bf16.mxu0 0
      %550 = vmatmul.mubr.bf16.gmra.mxu0 %v439
      %v551 = vpop.f32.mrf.mxu0
      %v552 = vadd.f32 %v404, %v551
      %v553 = vpop.f32.mrf.mxu0
      %v554 = vpop.f32.mrf.mxu0
      %v555 = vadd.f32 %v404, %v554
      %v556 = vpop.f32.mrf.mxu0
      %557 = vmatprep.mubr.bf16.mxu0 0
      %558 = vmatmul.mubr.bf16.gmra.mxu0 %v440
      %v559 = vpop.f32.mrf.mxu0
      %v560 = vadd.f32 %v404, %v559
      %v561 = vpop.f32.mrf.mxu0
      %v562 = vpop.f32.mrf.mxu0
      %v563 = vadd.f32 %v404, %v562
      %v564 = vpop.f32.mrf.mxu0
      %565 = vmatprep.mubr.bf16.mxu0 0
      %566 = vmatmul.mubr.bf16.gmra.mxu0 %v441
      %v567 = vpop.f32.mrf.mxu0
      %v568 = vadd.f32 %v404, %v567
      %v569 = vpop.f32.mrf.mxu0
      %v570 = vpop.f32.mrf.mxu0
      %v571 = vadd.f32 %v404, %v570
      %v572 = vpop.f32.mrf.mxu0
      %573 = vmatprep.mubr.bf16.mxu0 0
      %574 = vmatmul.mubr.bf16.gmra.mxu0 %v442
      %v575 = vpop.f32.mrf.mxu0
      %v576 = vadd.f32 %v404, %v575
      %v577 = vpop.f32.mrf.mxu0
      %v578 = vpop.f32.mrf.mxu0
      %v579 = vadd.f32 %v404, %v578
      %v580 = vpop.f32.mrf.mxu0
      %581 = vmatprep.mubr.bf16.mxu0 0
      %582 = vmatmul.mubr.bf16.gmra.mxu0 %v443
      %v583 = vpop.f32.mrf.mxu0
      %v584 = vadd.f32 %v404, %v583
      %v585 = vpop.f32.mrf.mxu0
      %v586 = vpop.f32.mrf.mxu0
      %v587 = vadd.f32 %v404, %v586
      %v588 = vpop.f32.mrf.mxu0
      %589 = vmatprep.mubr.bf16.mxu0 0
      %590 = vmatmul.mubr.bf16.gmra.mxu0 %v444
      %v591 = vpop.f32.mrf.mxu0
      %v592 = vadd.f32 %v404, %v591
      %v593 = vpop.f32.mrf.mxu0
      %v594 = vpop.f32.mrf.mxu0
      %v595 = vadd.f32 %v404, %v594
      %v596 = vpop.f32.mrf.mxu0
      %597 = vdwg.mxu0
      %v598 = vld [vmem:[%s3] sm:$0xf]
      %v599 = vld [vmem:[%s3 + $0x4] sm:$0xf]
      %v600 = vld [vmem:[%s3 + $0x8] sm:$0xf]
      %v601 = vld [vmem:[%s3 + $0xc] sm:$0xf]
      %v602 = vld [vmem:[%s3 + $0x10] sm:$0xf]
      %v603 = vld [vmem:[%s3 + $0x14] sm:$0xf]
      %v604 = vld [vmem:[%s3 + $0x18] sm:$0xf]
      %v605 = vld [vmem:[%s3 + $0x1c] sm:$0xf]
      %v606 = vld [vmem:[%s3 + $0x20] sm:$0xf]
      %v607 = vld [vmem:[%s3 + $0x24] sm:$0xf]
      %v608 = vld [vmem:[%s3 + $0x28] sm:$0xf]
      %v609 = vld [vmem:[%s3 + $0x2c] sm:$0xf]
      %v610 = vld [vmem:[%s3 + $0x30] sm:$0xf]
      %v611 = vld [vmem:[%s3 + $0x34] sm:$0xf]
      %v612 = vld [vmem:[%s3 + $0x38] sm:$0xf]
      %v613 = vld [vmem:[%s3 + $0x3c] sm:$0xf]
      %v614 = vld [vmem:[%s8 + $0x1] sm:$0x1]
      %v615 = vlaneseq
      %v616 = vshrl.u32 %v615, 7
      %v617 = vsub.s32 0, %v616
      %v618 = vrot.slane %v614, %v617
      %v635 = vunpack.c.l.b16 %v598
      %v636 = vunpack.c.l.b16 %v599
      %v637 = vunpack.c.l.b16 %v600
      %v638 = vunpack.c.l.b16 %v601
      %v639 = vunpack.c.l.b16 %v602
      %v640 = vunpack.c.l.b16 %v603
      %v641 = vunpack.c.l.b16 %v604
      %v642 = vunpack.c.l.b16 %v605
      %v643 = vunpack.c.l.b16 %v606
      %v644 = vunpack.c.l.b16 %v607
      %v645 = vunpack.c.l.b16 %v608
      %v646 = vunpack.c.l.b16 %v609
      %v647 = vunpack.c.l.b16 %v610
      %v648 = vunpack.c.l.b16 %v611
      %v649 = vunpack.c.l.b16 %v612
      %v650 = vunpack.c.l.b16 %v613
      %v651 = vpack.c.b16 %v636, %v635
      %v652 = vpack.c.b16 %v638, %v637
      %v653 = vpack.c.b16 %v640, %v639
      %v654 = vpack.c.b16 %v642, %v641
      %v655 = vpack.c.b16 %v644, %v643
      %v656 = vpack.c.b16 %v646, %v645
      %v657 = vpack.c.b16 %v648, %v647
      %v658 = vpack.c.b16 %v650, %v649
      %667 = vmatprep.subr.bf16.mxu0 0
      %668 = vmatpush1.bf16.msra.mxu0 %v658
      %669 = vmatprep.subr.bf16.mxu0 0
      %670 = vmatpush1.bf16.msra.mxu0 %v657
      %671 = vmatprep.subr.bf16.mxu0 0
      %672 = vmatpush1.bf16.msra.mxu0 %v656
      %673 = vmatprep.subr.bf16.mxu0 0
      %674 = vmatpush1.bf16.msra.mxu0 %v655
      %675 = vmatprep.subr.bf16.mxu0 0
      %676 = vmatpush1.bf16.msra.mxu0 %v654
      %677 = vmatprep.subr.bf16.mxu0 0
      %678 = vmatpush1.bf16.msra.mxu0 %v653
      %679 = vmatprep.subr.bf16.mxu0 0
      %680 = vmatpush1.bf16.msra.mxu0 %v652
      %681 = vmatprep.subr.bf16.mxu0 0
      %682 = vmatpush1.bf16.msra.mxu0 %v651
      %683 = vmatprep.subr.bf16.mxu0 0
      %684 = vmatpush2.bf16.msra.mxu0 0
      %685 = vmatprep.subr.bf16.mxu0 0
      %686 = vmatpush2.bf16.msra.mxu0 0
      %687 = vmatprep.subr.bf16.mxu0 0
      %688 = vmatpush2.bf16.msra.mxu0 0
      %689 = vmatprep.subr.bf16.mxu0 0
      %690 = vmatpush2.bf16.msra.mxu0 0
      %691 = vmatprep.subr.bf16.mxu0 0
      %692 = vmatpush2.bf16.msra.mxu0 0
      %693 = vmatprep.subr.bf16.mxu0 0
      %694 = vmatpush2.bf16.msra.mxu0 0
      %695 = vmatprep.subr.bf16.mxu0 0
      %696 = vmatpush2.bf16.msra.mxu0 0
      %697 = vmatprep.subr.bf16.mxu0 0
      %698 = vmatpush2.bf16.msra.mxu0 0
      %699 = vmatprep.mubr.bf16.mxu0 0
      %700 = vmatmul.mubr.bf16.gmra.mxu0 %v437
      %v701 = vpop.f32.mrf.mxu0
      %v702 = vadd.f32 %v618, %v701
      %v703 = vpop.f32.mrf.mxu0
      %v704 = vpop.f32.mrf.mxu0
      %v705 = vadd.f32 %v618, %v704
      %v706 = vpop.f32.mrf.mxu0
      %707 = vmatprep.mubr.bf16.mxu0 0
      %708 = vmatmul.mubr.bf16.gmra.mxu0 %v438
      %v709 = vpop.f32.mrf.mxu0
      %v710 = vadd.f32 %v618, %v709
      %v711 = vpop.f32.mrf.mxu0
      %v712 = vpop.f32.mrf.mxu0
      %v713 = vadd.f32 %v618, %v712
      %v714 = vpop.f32.mrf.mxu0
      %715 = vmatprep.mubr.bf16.mxu0 0
      %716 = vmatmul.mubr.bf16.gmra.mxu0 %v439
      %v717 = vpop.f32.mrf.mxu0
      %v718 = vadd.f32 %v618, %v717
      %v719 = vpop.f32.mrf.mxu0
      %v720 = vpop.f32.mrf.mxu0
      %v721 = vadd.f32 %v618, %v720
      %v722 = vpop.f32.mrf.mxu0
      %723 = vmatprep.mubr.bf16.mxu0 0
      %724 = vmatmul.mubr.bf16.gmra.mxu0 %v440
      %v725 = vpop.f32.mrf.mxu0
      %v726 = vadd.f32 %v618, %v725
      %v727 = vpop.f32.mrf.mxu0
      %v728 = vpop.f32.mrf.mxu0
      %v729 = vadd.f32 %v618, %v728
      %v730 = vpop.f32.mrf.mxu0
      %731 = vmatprep.mubr.bf16.mxu0 0
      %732 = vmatmul.mubr.bf16.gmra.mxu0 %v441
      %v733 = vpop.f32.mrf.mxu0
      %v734 = vadd.f32 %v618, %v733
      %v735 = vpop.f32.mrf.mxu0
      %v736 = vpop.f32.mrf.mxu0
      %v737 = vadd.f32 %v618, %v736
      %v738 = vpop.f32.mrf.mxu0
      %739 = vmatprep.mubr.bf16.mxu0 0
      %740 = vmatmul.mubr.bf16.gmra.mxu0 %v442
      %v741 = vpop.f32.mrf.mxu0
      %v742 = vadd.f32 %v618, %v741
      %v743 = vpop.f32.mrf.mxu0
      %v744 = vpop.f32.mrf.mxu0
      %v745 = vadd.f32 %v618, %v744
      %v746 = vpop.f32.mrf.mxu0
      %747 = vmatprep.mubr.bf16.mxu0 0
      %748 = vmatmul.mubr.bf16.gmra.mxu0 %v443
      %v749 = vpop.f32.mrf.mxu0
      %v750 = vadd.f32 %v618, %v749
      %v751 = vpop.f32.mrf.mxu0
      %v752 = vpop.f32.mrf.mxu0
      %v753 = vadd.f32 %v618, %v752
      %v754 = vpop.f32.mrf.mxu0
      %755 = vmatprep.mubr.bf16.mxu0 0
      %756 = vmatmul.mubr.bf16.gmra.mxu0 %v444
      %v757 = vpop.f32.mrf.mxu0
      %v758 = vadd.f32 %v618, %v757
      %v759 = vpop.f32.mrf.mxu0
      %v760 = vpop.f32.mrf.mxu0
      %v761 = vadd.f32 %v618, %v760
      %v762 = vpop.f32.mrf.mxu0
      %763 = vdwg.mxu0
      %v764 = vpack.c.bf16 %v539, %v536
      %v765 = vpack.c.bf16 %v547, %v544
      %v766 = vpack.c.bf16 %v555, %v552
      %v767 = vpack.c.bf16 %v563, %v560
      %v768 = vpack.c.bf16 %v571, %v568
      %v769 = vpack.c.bf16 %v579, %v576
      %v770 = vpack.c.bf16 %v587, %v584
      %v771 = vpack.c.bf16 %v595, %v592
      %v772 = vpack.c.bf16 %v705, %v702
      %v773 = vpack.c.bf16 %v713, %v710
      %v774 = vpack.c.bf16 %v721, %v718
      %v775 = vpack.c.bf16 %v729, %v726
      %v776 = vpack.c.bf16 %v737, %v734
      %v777 = vpack.c.bf16 %v745, %v742
      %v778 = vpack.c.bf16 %v753, %v750
      %v779 = vpack.c.bf16 %v761, %v758
      %v780 = vlaneseq
      %v781 = vand.u32 %v780, 127
      %v782 = vld [vmem:[%s1] sm:$0xf]
      %783 = vmatprep.subr.bf16.mxu0 0
      %784 = vmatpush1.bf16.xpose.msra.mxu0 0
      %785 = vmatprep.subr.bf16.mxu0 0
      %786 = vmatpush1.bf16.xpose.msra.mxu0 0
      %787 = vmatprep.subr.bf16.mxu0 0
      %788 = vmatpush1.bf16.xpose.msra.mxu0 0
      %789 = vmatprep.subr.bf16.mxu0 0
      %790 = vmatpush1.bf16.xpose.msra.mxu0 0
      %791 = vmatprep.subr.bf16.mxu0 0
      %792 = vmatpush1.bf16.xpose.msra.mxu0 0
      %793 = vmatprep.subr.bf16.mxu0 0
      %794 = vmatpush1.bf16.xpose.msra.mxu0 0
      %795 = vmatprep.subr.bf16.mxu0 0
      %796 = vmatpush1.bf16.xpose.msra.mxu0 0
      %797 = vmatprep.subr.bf16.mxu0 0
      %798 = vmatpush1.bf16.xpose.msra.mxu0 %v764
      %799 = vmatprep.subr.bf16.mxu0 0
      %800 = vmatpush2.bf16.xpose.msra.mxu0 0
      %801 = vmatprep.subr.bf16.mxu0 0
      %802 = vmatpush2.bf16.xpose.msra.mxu0 0
      %803 = vmatprep.subr.bf16.mxu0 0
      %804 = vmatpush2.bf16.xpose.msra.mxu0 0
      %805 = vmatprep.subr.bf16.mxu0 0
      %806 = vmatpush2.bf16.xpose.msra.mxu0 0
      %807 = vmatprep.subr.bf16.mxu0 0
      %808 = vmatpush2.bf16.xpose.msra.mxu0 0
      %809 = vmatprep.subr.bf16.mxu0 0
      %810 = vmatpush2.bf16.xpose.msra.mxu0 0
      %811 = vmatprep.subr.bf16.mxu0 0
      %812 = vmatpush2.bf16.xpose.msra.mxu0 0
      %813 = vmatprep.subr.bf16.mxu0 0
      %814 = vmatpush2.bf16.xpose.msra.mxu0 0
      %815 = vmatprep.mubr.bf16.mxu0 0
      %816 = vmatmul.mubr.bf16.gmra.mxu0 %v782
      %v817 = vpop.f32.mrf.mxu0
      %v818 = vadd.f32 0.0, %v817
      %v819 = vpop.f32.mrf.mxu0
      %v820 = vpop.f32.mrf.mxu0
      %v821 = vpop.f32.mrf.mxu0
      %822 = vdwg.mxu0
      %v823 = vmul.f32 %v818, 0.17677669
      %vm824 = vcmask 130048
      %v825 = vsel %vm824, %v823, -inf
      %826 = vmax.xlane.f32.xlu0 %v825
      %v827 = vpop.xlane.xlu0 %826
      %v828 = vsub.f32 %v823, %v827
      %v829 = vmul.f32 %v828, 1.442695
      %v830 = vpow.pop %v829
      %v831 = vsel %vm824, %v830, 0.0
      %832 = vadd.xlane.f32.xlu0 %v831
      %v833 = vpop.xlane.xlu0 %832
      %v834 = vrcp.pop %v833
      %v835 = vmul.f32 %v830, %v834
      %vm836 = vcmp.ge.s32.totalorder %v781, 0
      %vm837 = vcmp.lt.s32.totalorder %v781, 32
      %vm838 = vmand %vm836, %vm837
      %v839 = vsel %vm838, 1, 0
      %vm840 = vcmp.eq.s32.totalorder %v839, 1
      %vm841 = vmpackc.low %vm840, %vm840
      %v842 = vsel %vm841, 65537, 0
      %v843 = vlaneseq
      %v844 = vshrl.u32 %v843, 7
      %v845 = vsub.s32 0, %v844
      %v846 = vrot.slane %v842, %v845
      %vm847 = vcmp.ne.s16.totalorder %v846, 0
      %v848 = vsel %vm847, %v772, 0
      %v849 = vpack.c.bf16 %v835, %v835
      %s850 = scalar_lea.vmem %s1, 4
      %v851 = vld [vmem:[%s850] sm:$0xf]
      %852 = vmatprep.subr.bf16.mxu0 0
      %853 = vmatpush1.bf16.xpose.msra.mxu0 0
      %854 = vmatprep.subr.bf16.mxu0 0
      %855 = vmatpush1.bf16.xpose.msra.mxu0 0
      %856 = vmatprep.subr.bf16.mxu0 0
      %857 = vmatpush1.bf16.xpose.msra.mxu0 0
      %858 = vmatprep.subr.bf16.mxu0 0
      %859 = vmatpush1.bf16.xpose.msra.mxu0 0
      %860 = vmatprep.subr.bf16.mxu0 0
      %861 = vmatpush1.bf16.xpose.msra.mxu0 0
      %862 = vmatprep.subr.bf16.mxu0 0
      %863 = vmatpush1.bf16.xpose.msra.mxu0 0
      %864 = vmatprep.subr.bf16.mxu0 0
      %865 = vmatpush1.bf16.xpose.msra.mxu0 0
      %866 = vmatprep.subr.bf16.mxu0 0
      %867 = vmatpush1.bf16.xpose.msra.mxu0 %v764
      %868 = vmatprep.subr.bf16.mxu0 0
      %869 = vmatpush2.bf16.xpose.msra.mxu0 0
      %870 = vmatprep.subr.bf16.mxu0 0
      %871 = vmatpush2.bf16.xpose.msra.mxu0 0
      %872 = vmatprep.subr.bf16.mxu0 0
      %873 = vmatpush2.bf16.xpose.msra.mxu0 0
      %874 = vmatprep.subr.bf16.mxu0 0
      %875 = vmatpush2.bf16.xpose.msra.mxu0 0
      %876 = vmatprep.subr.bf16.mxu0 0
      %877 = vmatpush2.bf16.xpose.msra.mxu0 0
      %878 = vmatprep.subr.bf16.mxu0 0
      %879 = vmatpush2.bf16.xpose.msra.mxu0 0
      %880 = vmatprep.subr.bf16.mxu0 0
      %881 = vmatpush2.bf16.xpose.msra.mxu0 0
      %882 = vmatprep.subr.bf16.mxu0 0
      %883 = vmatpush2.bf16.xpose.msra.mxu0 0
      %884 = vmatprep.mubr.bf16.mxu0 0
      %885 = vmatmul.mubr.bf16.gmra.mxu0 %v851
      %v886 = vpop.f32.mrf.mxu0
      %v887 = vadd.f32 0.0, %v886
      %v888 = vpop.f32.mrf.mxu0
      %v889 = vpop.f32.mrf.mxu0
      %v890 = vpop.f32.mrf.mxu0
      %891 = vdwg.mxu0
      %v892 = vmul.f32 %v887, 0.17677669
      %v893 = vsel %vm824, %v892, -inf
      %894 = vmax.xlane.f32.xlu0 %v893
      %v895 = vpop.xlane.xlu0 %894
      %v896 = vsub.f32 %v892, %v895
      %v897 = vmul.f32 %v896, 1.442695
      %v898 = vpow.pop %v897
      %v899 = vsel %vm824, %v898, 0.0
      %900 = vadd.xlane.f32.xlu0 %v899
      %v901 = vpop.xlane.xlu0 %900
      %v902 = vrcp.pop %v901
      %v903 = vmul.f32 %v898, %v902
      %vm904 = vcmp.ge.s32.totalorder %v781, 32
      %vm905 = vcmp.lt.s32.totalorder %v781, 64
      %vm906 = vmand %vm904, %vm905
      %v907 = vsel %vm906, 1, 0
      %vm908 = vcmp.eq.s32.totalorder %v907, 1
      %vm909 = vmpackc.low %vm908, %vm908
      %v910 = vsel %vm909, 65537, 0
      %v911 = vlaneseq
      %v912 = vshrl.u32 %v911, 7
      %v913 = vsub.s32 0, %v912
      %v914 = vrot.slane %v910, %v913
      %vm915 = vcmp.ne.s16.totalorder %v914, 0
      %v916 = vsel %vm915, %v772, 0
      %v917 = vpack.c.bf16 %v903, %v903
      %v919 = vsel %vm824, %v917, 0
      %921 = vmatprep.subr.bf16.mxu0 0
      %922 = vmatpush1.bf16.msra.mxu0 0
      %923 = vmatprep.subr.bf16.mxu0 0
      %924 = vmatpush1.bf16.msra.mxu0 0
      %925 = vmatprep.subr.bf16.mxu0 0
      %926 = vmatpush1.bf16.msra.mxu0 0
      %927 = vmatprep.subr.bf16.mxu0 0
      %928 = vmatpush1.bf16.msra.mxu0 0
      %929 = vmatprep.subr.bf16.mxu0 0
      %930 = vmatpush1.bf16.msra.mxu0 0
      %931 = vmatprep.subr.bf16.mxu0 0
      %932 = vmatpush1.bf16.msra.mxu0 0
      %933 = vmatprep.subr.bf16.mxu0 0
      %934 = vmatpush1.bf16.msra.mxu0 0
      %935 = vmatprep.subr.bf16.mxu0 0
      %936 = vmatpush1.bf16.msra.mxu0 %v916
      %937 = vmatprep.subr.bf16.mxu0 0
      %938 = vmatpush2.bf16.msra.mxu0 0
      %939 = vmatprep.subr.bf16.mxu0 0
      %940 = vmatpush2.bf16.msra.mxu0 0
      %941 = vmatprep.subr.bf16.mxu0 0
      %942 = vmatpush2.bf16.msra.mxu0 0
      %943 = vmatprep.subr.bf16.mxu0 0
      %944 = vmatpush2.bf16.msra.mxu0 0
      %945 = vmatprep.subr.bf16.mxu0 0
      %946 = vmatpush2.bf16.msra.mxu0 0
      %947 = vmatprep.subr.bf16.mxu0 0
      %948 = vmatpush2.bf16.msra.mxu0 0
      %949 = vmatprep.subr.bf16.mxu0 0
      %950 = vmatpush2.bf16.msra.mxu0 0
      %951 = vmatprep.subr.bf16.mxu0 0
      %952 = vmatpush2.bf16.msra.mxu0 0
      %953 = vmatprep.mubr.bf16.mxu0 0
      %954 = vmatmul.mubr.bf16.gmra.mxu0 %v919
      %v955 = vpop.f32.mrf.mxu0
      %v956 = vadd.f32 0.0, %v955
      %v957 = vpop.f32.mrf.mxu0
      %v958 = vpop.f32.mrf.mxu0
      %v959 = vpop.f32.mrf.mxu0
      %960 = vdwg.mxu0
      %v962 = vsel %vm824, %v849, 0
      %964 = vmatprep.subr.bf16.mxu0 0
      %965 = vmatpush1.bf16.msra.mxu0 0
      %966 = vmatprep.subr.bf16.mxu0 0
      %967 = vmatpush1.bf16.msra.mxu0 0
      %968 = vmatprep.subr.bf16.mxu0 0
      %969 = vmatpush1.bf16.msra.mxu0 0
      %970 = vmatprep.subr.bf16.mxu0 0
      %971 = vmatpush1.bf16.msra.mxu0 0
      %972 = vmatprep.subr.bf16.mxu0 0
      %973 = vmatpush1.bf16.msra.mxu0 0
      %974 = vmatprep.subr.bf16.mxu0 0
      %975 = vmatpush1.bf16.msra.mxu0 0
      %976 = vmatprep.subr.bf16.mxu0 0
      %977 = vmatpush1.bf16.msra.mxu0 0
      %978 = vmatprep.subr.bf16.mxu0 0
      %979 = vmatpush1.bf16.msra.mxu0 %v848
      %980 = vmatprep.subr.bf16.mxu0 0
      %981 = vmatpush2.bf16.msra.mxu0 0
      %982 = vmatprep.subr.bf16.mxu0 0
      %983 = vmatpush2.bf16.msra.mxu0 0
      %984 = vmatprep.subr.bf16.mxu0 0
      %985 = vmatpush2.bf16.msra.mxu0 0
      %986 = vmatprep.subr.bf16.mxu0 0
      %987 = vmatpush2.bf16.msra.mxu0 0
      %988 = vmatprep.subr.bf16.mxu0 0
      %989 = vmatpush2.bf16.msra.mxu0 0
      %990 = vmatprep.subr.bf16.mxu0 0
      %991 = vmatpush2.bf16.msra.mxu0 0
      %992 = vmatprep.subr.bf16.mxu0 0
      %993 = vmatpush2.bf16.msra.mxu0 0
      %994 = vmatprep.subr.bf16.mxu0 0
      %995 = vmatpush2.bf16.msra.mxu0 0
      %996 = vmatprep.mubr.bf16.mxu0 0
      %997 = vmatmul.mubr.bf16.gmra.mxu0 %v962
      %v998 = vpop.f32.mrf.mxu0
      %v999 = vadd.f32 %v956, %v998
      %v1000 = vpop.f32.mrf.mxu0
      %v1001 = vpop.f32.mrf.mxu0
      %v1002 = vpop.f32.mrf.mxu0
      %1003 = vdwg.mxu0
      %s1004 = scalar_lea.vmem %s1, 8
      %v1005 = vld [vmem:[%s1004] sm:$0xf]
      %1006 = vmatprep.subr.bf16.mxu0 0
      %1007 = vmatpush1.bf16.xpose.msra.mxu0 0
      %1008 = vmatprep.subr.bf16.mxu0 0
      %1009 = vmatpush1.bf16.xpose.msra.mxu0 0
      %1010 = vmatprep.subr.bf16.mxu0 0
      %1011 = vmatpush1.bf16.xpose.msra.mxu0 0
      %1012 = vmatprep.subr.bf16.mxu0 0
      %1013 = vmatpush1.bf16.xpose.msra.mxu0 0
      %1014 = vmatprep.subr.bf16.mxu0 0
      %1015 = vmatpush1.bf16.xpose.msra.mxu0 0
      %1016 = vmatprep.subr.bf16.mxu0 0
      %1017 = vmatpush1.bf16.xpose.msra.mxu0 0
      %1018 = vmatprep.subr.bf16.mxu0 0
      %1019 = vmatpush1.bf16.xpose.msra.mxu0 0
      %1020 = vmatprep.subr.bf16.mxu0 0
      %1021 = vmatpush1.bf16.xpose.msra.mxu0 %v764
      %1022 = vmatprep.subr.bf16.mxu0 0
      %1023 = vmatpush2.bf16.xpose.msra.mxu0 0
      %1024 = vmatprep.subr.bf16.mxu0 0
      %1025 = vmatpush2.bf16.xpose.msra.mxu0 0
      %1026 = vmatprep.subr.bf16.mxu0 0
      %1027 = vmatpush2.bf16.xpose.msra.mxu0 0
      %1028 = vmatprep.subr.bf16.mxu0 0
      %1029 = vmatpush2.bf16.xpose.msra.mxu0 0
      %1030 = vmatprep.subr.bf16.mxu0 0
      %1031 = vmatpush2.bf16.xpose.msra.mxu0 0
      %1032 = vmatprep.subr.bf16.mxu0 0
      %1033 = vmatpush2.bf16.xpose.msra.mxu0 0
      %1034 = vmatprep.subr.bf16.mxu0 0
      %1035 = vmatpush2.bf16.xpose.msra.mxu0 0
      %1036 = vmatprep.subr.bf16.mxu0 0
      %1037 = vmatpush2.bf16.xpose.msra.mxu0 0
      %1038 = vmatprep.mubr.bf16.mxu0 0
      %1039 = vmatmul.mubr.bf16.gmra.mxu0 %v1005
      %v1040 = vpop.f32.mrf.mxu0
      %v1041 = vadd.f32 0.0, %v1040
      %v1042 = vpop.f32.mrf.mxu0
      %v1043 = vpop.f32.mrf.mxu0
      %v1044 = vpop.f32.mrf.mxu0
      %1045 = vdwg.mxu0
      %v1046 = vmul.f32 %v1041, 0.17677669
      %v1047 = vsel %vm824, %v1046, -inf
      %1048 = vmax.xlane.f32.xlu0 %v1047
      %v1049 = vpop.xlane.xlu0 %1048
      %v1050 = vsub.f32 %v1046, %v1049
      %v1051 = vmul.f32 %v1050, 1.442695
      %v1052 = vpow.pop %v1051
      %v1053 = vsel %vm824, %v1052, 0.0
      %1054 = vadd.xlane.f32.xlu0 %v1053
      %v1055 = vpop.xlane.xlu0 %1054
      %v1056 = vrcp.pop %v1055
      %v1057 = vmul.f32 %v1052, %v1056
      %vm1058 = vcmp.ge.s32.totalorder %v781, 64
      %vm1059 = vcmp.lt.s32.totalorder %v781, 96
      %vm1060 = vmand %vm1058, %vm1059
      %v1061 = vsel %vm1060, 1, 0
      %vm1062 = vcmp.eq.s32.totalorder %v1061, 1
      %vm1063 = vmpackc.low %vm1062, %vm1062
      %v1064 = vsel %vm1063, 65537, 0
      %v1065 = vlaneseq
      %v1066 = vshrl.u32 %v1065, 7
      %v1067 = vsub.s32 0, %v1066
      %v1068 = vrot.slane %v1064, %v1067
      %vm1069 = vcmp.ne.s16.totalorder %v1068, 0
      %v1070 = vsel %vm1069, %v772, 0
      %v1071 = vpack.c.bf16 %v1057, %v1057
      %v1073 = vsel %vm824, %v1071, 0
      %1075 = vmatprep.subr.bf16.mxu0 0
      %1076 = vmatpush1.bf16.msra.mxu0 0
      %1077 = vmatprep.subr.bf16.mxu0 0
      %1078 = vmatpush1.bf16.msra.mxu0 0
      %1079 = vmatprep.subr.bf16.mxu0 0
      %1080 = vmatpush1.bf16.msra.mxu0 0
      %1081 = vmatprep.subr.bf16.mxu0 0
      %1082 = vmatpush1.bf16.msra.mxu0 0
      %1083 = vmatprep.subr.bf16.mxu0 0
      %1084 = vmatpush1.bf16.msra.mxu0 0
      %1085 = vmatprep.subr.bf16.mxu0 0
      %1086 = vmatpush1.bf16.msra.mxu0 0
      %1087 = vmatprep.subr.bf16.mxu0 0
      %1088 = vmatpush1.bf16.msra.mxu0 0
      %1089 = vmatprep.subr.bf16.mxu0 0
      %1090 = vmatpush1.bf16.msra.mxu0 %v1070
      %1091 = vmatprep.subr.bf16.mxu0 0
      %1092 = vmatpush2.bf16.msra.mxu0 0
      %1093 = vmatprep.subr.bf16.mxu0 0
      %1094 = vmatpush2.bf16.msra.mxu0 0
      %1095 = vmatprep.subr.bf16.mxu0 0
      %1096 = vmatpush2.bf16.msra.mxu0 0
      %1097 = vmatprep.subr.bf16.mxu0 0
      %1098 = vmatpush2.bf16.msra.mxu0 0
      %1099 = vmatprep.subr.bf16.mxu0 0
      %1100 = vmatpush2.bf16.msra.mxu0 0
      %1101 = vmatprep.subr.bf16.mxu0 0
      %1102 = vmatpush2.bf16.msra.mxu0 0
      %1103 = vmatprep.subr.bf16.mxu0 0
      %1104 = vmatpush2.bf16.msra.mxu0 0
      %1105 = vmatprep.subr.bf16.mxu0 0
      %1106 = vmatpush2.bf16.msra.mxu0 0
      %1107 = vmatprep.mubr.bf16.mxu0 0
      %1108 = vmatmul.mubr.bf16.gmra.mxu0 %v1073
      %v1109 = vpop.f32.mrf.mxu0
      %v1110 = vadd.f32 0.0, %v1109
      %v1111 = vpop.f32.mrf.mxu0
      %v1112 = vpop.f32.mrf.mxu0
      %v1113 = vpop.f32.mrf.mxu0
      %1114 = vdwg.mxu0
      %v1115 = vadd.f32 %v999, %v1110
      %s1116 = scalar_lea.vmem %s1, 12
      %v1117 = vld [vmem:[%s1116] sm:$0xf]
      %1118 = vmatprep.subr.bf16.mxu0 0
      %1119 = vmatpush1.bf16.xpose.msra.mxu0 0
      %1120 = vmatprep.subr.bf16.mxu0 0
      %1121 = vmatpush1.bf16.xpose.msra.mxu0 0
      %1122 = vmatprep.subr.bf16.mxu0 0
      %1123 = vmatpush1.bf16.xpose.msra.mxu0 0
      %1124 = vmatprep.subr.bf16.mxu0 0
      %1125 = vmatpush1.bf16.xpose.msra.mxu0 0
      %1126 = vmatprep.subr.bf16.mxu0 0
      %1127 = vmatpush1.bf16.xpose.msra.mxu0 0
      %1128 = vmatprep.subr.bf16.mxu0 0
      %1129 = vmatpush1.bf16.xpose.msra.mxu0 0
      %1130 = vmatprep.subr.bf16.mxu0 0
      %1131 = vmatpush1.bf16.xpose.msra.mxu0 0
      %1132 = vmatprep.subr.bf16.mxu0 0
      %1133 = vmatpush1.bf16.xpose.msra.mxu0 %v764
      %1134 = vmatprep.subr.bf16.mxu0 0
      %1135 = vmatpush2.bf16.xpose.msra.mxu0 0
      %1136 = vmatprep.subr.bf16.mxu0 0
      %1137 = vmatpush2.bf16.xpose.msra.mxu0 0
      %1138 = vmatprep.subr.bf16.mxu0 0
      %1139 = vmatpush2.bf16.xpose.msra.mxu0 0
      %1140 = vmatprep.subr.bf16.mxu0 0
      %1141 = vmatpush2.bf16.xpose.msra.mxu0 0
      %1142 = vmatprep.subr.bf16.mxu0 0
      %1143 = vmatpush2.bf16.xpose.msra.mxu0 0
      %1144 = vmatprep.subr.bf16.mxu0 0
      %1145 = vmatpush2.bf16.xpose.msra.mxu0 0
      %1146 = vmatprep.subr.bf16.mxu0 0
      %1147 = vmatpush2.bf16.xpose.msra.mxu0 0
      %1148 = vmatprep.subr.bf16.mxu0 0
      %1149 = vmatpush2.bf16.xpose.msra.mxu0 0
      %1150 = vmatprep.mubr.bf16.mxu0 0
      %1151 = vmatmul.mubr.bf16.gmra.mxu0 %v1117
      %v1152 = vpop.f32.mrf.mxu0
      %v1153 = vadd.f32 0.0, %v1152
      %v1154 = vpop.f32.mrf.mxu0
      %v1155 = vpop.f32.mrf.mxu0
      %v1156 = vpop.f32.mrf.mxu0
      %1157 = vdwg.mxu0
      %v1158 = vmul.f32 %v1153, 0.17677669
      %v1159 = vsel %vm824, %v1158, -inf
      %1160 = vmax.xlane.f32.xlu0 %v1159
      %v1161 = vpop.xlane.xlu0 %1160
      %v1162 = vsub.f32 %v1158, %v1161
      %v1163 = vmul.f32 %v1162, 1.442695
      %v1164 = vpow.pop %v1163
      %v1165 = vsel %vm824, %v1164, 0.0
      %1166 = vadd.xlane.f32.xlu0 %v1165
      %v1167 = vpop.xlane.xlu0 %1166
      %v1168 = vrcp.pop %v1167
      %v1169 = vmul.f32 %v1164, %v1168
      %vm1170 = vcmp.ge.s32.totalorder %v781, 96
      %vm1171 = vcmp.lt.s32.totalorder %v781, 128
      %vm1172 = vmand %vm1170, %vm1171
      %v1173 = vsel %vm1172, 1, 0
      %vm1174 = vcmp.eq.s32.totalorder %v1173, 1
      %vm1175 = vmpackc.low %vm1174, %vm1174
      %v1176 = vsel %vm1175, 65537, 0
      %v1177 = vlaneseq
      %v1178 = vshrl.u32 %v1177, 7
      %v1179 = vsub.s32 0, %v1178
      %v1180 = vrot.slane %v1176, %v1179
      %vm1181 = vcmp.ne.s16.totalorder %v1180, 0
      %v1182 = vsel %vm1181, %v772, 0
      %v1183 = vpack.c.bf16 %v1169, %v1169
      %v1185 = vsel %vm824, %v1183, 0
      %1187 = vmatprep.subr.bf16.mxu0 0
      %1188 = vmatpush1.bf16.msra.mxu0 0
      %1189 = vmatprep.subr.bf16.mxu0 0
      %1190 = vmatpush1.bf16.msra.mxu0 0
      %1191 = vmatprep.subr.bf16.mxu0 0
      %1192 = vmatpush1.bf16.msra.mxu0 0
      %1193 = vmatprep.subr.bf16.mxu0 0
      %1194 = vmatpush1.bf16.msra.mxu0 0
      %1195 = vmatprep.subr.bf16.mxu0 0
      %1196 = vmatpush1.bf16.msra.mxu0 0
      %1197 = vmatprep.subr.bf16.mxu0 0
      %1198 = vmatpush1.bf16.msra.mxu0 0
      %1199 = vmatprep.subr.bf16.mxu0 0
      %1200 = vmatpush1.bf16.msra.mxu0 0
      %1201 = vmatprep.subr.bf16.mxu0 0
      %1202 = vmatpush1.bf16.msra.mxu0 %v1182
      %1203 = vmatprep.subr.bf16.mxu0 0
      %1204 = vmatpush2.bf16.msra.mxu0 0
      %1205 = vmatprep.subr.bf16.mxu0 0
      %1206 = vmatpush2.bf16.msra.mxu0 0
      %1207 = vmatprep.subr.bf16.mxu0 0
      %1208 = vmatpush2.bf16.msra.mxu0 0
      %1209 = vmatprep.subr.bf16.mxu0 0
      %1210 = vmatpush2.bf16.msra.mxu0 0
      %1211 = vmatprep.subr.bf16.mxu0 0
      %1212 = vmatpush2.bf16.msra.mxu0 0
      %1213 = vmatprep.subr.bf16.mxu0 0
      %1214 = vmatpush2.bf16.msra.mxu0 0
      %1215 = vmatprep.subr.bf16.mxu0 0
      %1216 = vmatpush2.bf16.msra.mxu0 0
      %1217 = vmatprep.subr.bf16.mxu0 0
      %1218 = vmatpush2.bf16.msra.mxu0 0
      %1219 = vmatprep.mubr.bf16.mxu0 0
      %1220 = vmatmul.mubr.bf16.gmra.mxu0 %v1185
      %v1221 = vpop.f32.mrf.mxu0
      %v1222 = vadd.f32 0.0, %v1221
      %v1223 = vpop.f32.mrf.mxu0
      %v1224 = vpop.f32.mrf.mxu0
      %v1225 = vpop.f32.mrf.mxu0
      %1226 = vdwg.mxu0
      %v1227 = vadd.f32 %v1115, %v1222
      %1228 = vmatprep.subr.bf16.mxu0 0
      %1229 = vmatpush1.bf16.xpose.msra.mxu0 0
      %1230 = vmatprep.subr.bf16.mxu0 0
      %1231 = vmatpush1.bf16.xpose.msra.mxu0 0
      %1232 = vmatprep.subr.bf16.mxu0 0
      %1233 = vmatpush1.bf16.xpose.msra.mxu0 0
      %1234 = vmatprep.subr.bf16.mxu0 0
      %1235 = vmatpush1.bf16.xpose.msra.mxu0 0
      %1236 = vmatprep.subr.bf16.mxu0 0
      %1237 = vmatpush1.bf16.xpose.msra.mxu0 0
      %1238 = vmatprep.subr.bf16.mxu0 0
      %1239 = vmatpush1.bf16.xpose.msra.mxu0 0
      %1240 = vmatprep.subr.bf16.mxu0 0
      %1241 = vmatpush1.bf16.xpose.msra.mxu0 0
      %1242 = vmatprep.subr.bf16.mxu0 0
      %1243 = vmatpush1.bf16.xpose.msra.mxu0 %v765
      %1244 = vmatprep.subr.bf16.mxu0 0
      %1245 = vmatpush2.bf16.xpose.msra.mxu0 0
      %1246 = vmatprep.subr.bf16.mxu0 0
      %1247 = vmatpush2.bf16.xpose.msra.mxu0 0
      %1248 = vmatprep.subr.bf16.mxu0 0
      %1249 = vmatpush2.bf16.xpose.msra.mxu0 0
      %1250 = vmatprep.subr.bf16.mxu0 0
      %1251 = vmatpush2.bf16.xpose.msra.mxu0 0
      %1252 = vmatprep.subr.bf16.mxu0 0
      %1253 = vmatpush2.bf16.xpose.msra.mxu0 0
      %1254 = vmatprep.subr.bf16.mxu0 0
      %1255 = vmatpush2.bf16.xpose.msra.mxu0 0
      %1256 = vmatprep.subr.bf16.mxu0 0
      %1257 = vmatpush2.bf16.xpose.msra.mxu0 0
      %1258 = vmatprep.subr.bf16.mxu0 0
      %1259 = vmatpush2.bf16.xpose.msra.mxu0 0
      %1260 = vmatprep.mubr.bf16.mxu0 0
      %1261 = vmatmul.mubr.bf16.gmra.mxu0 %v782
      %v1262 = vpop.f32.mrf.mxu0
      %v1263 = vadd.f32 0.0, %v1262
      %v1264 = vpop.f32.mrf.mxu0
      %v1265 = vpop.f32.mrf.mxu0
      %v1266 = vpop.f32.mrf.mxu0
      %1267 = vdwg.mxu0
      %v1268 = vmul.f32 %v1263, 0.17677669
      %v1269 = vsel %vm824, %v1268, -inf
      %1270 = vmax.xlane.f32.xlu0 %v1269
      %v1271 = vpop.xlane.xlu0 %1270
      %v1272 = vsub.f32 %v1268, %v1271
      %v1273 = vmul.f32 %v1272, 1.442695
      %v1274 = vpow.pop %v1273
      %v1275 = vsel %vm824, %v1274, 0.0
      %1276 = vadd.xlane.f32.xlu0 %v1275
      %v1277 = vpop.xlane.xlu0 %1276
      %v1278 = vrcp.pop %v1277
      %v1279 = vmul.f32 %v1274, %v1278
      %v1280 = vsel %vm847, %v773, 0
      %v1281 = vpack.c.bf16 %v1279, %v1279
      %1282 = vmatprep.subr.bf16.mxu0 0
      %1283 = vmatpush1.bf16.xpose.msra.mxu0 0
      %1284 = vmatprep.subr.bf16.mxu0 0
      %1285 = vmatpush1.bf16.xpose.msra.mxu0 0
      %1286 = vmatprep.subr.bf16.mxu0 0
      %1287 = vmatpush1.bf16.xpose.msra.mxu0 0
      %1288 = vmatprep.subr.bf16.mxu0 0
      %1289 = vmatpush1.bf16.xpose.msra.mxu0 0
      %1290 = vmatprep.subr.bf16.mxu0 0
      %1291 = vmatpush1.bf16.xpose.msra.mxu0 0
      %1292 = vmatprep.subr.bf16.mxu0 0
      %1293 = vmatpush1.bf16.xpose.msra.mxu0 0
      %1294 = vmatprep.subr.bf16.mxu0 0
      %1295 = vmatpush1.bf16.xpose.msra.mxu0 0
      %1296 = vmatprep.subr.bf16.mxu0 0
      %1297 = vmatpush1.bf16.xpose.msra.mxu0 %v765
      %1298 = vmatprep.subr.bf16.mxu0 0
      %1299 = vmatpush2.bf16.xpose.msra.mxu0 0
      %1300 = vmatprep.subr.bf16.mxu0 0
      %1301 = vmatpush2.bf16.xpose.msra.mxu0 0
      %1302 = vmatprep.subr.bf16.mxu0 0
      %1303 = vmatpush2.bf16.xpose.msra.mxu0 0
      %1304 = vmatprep.subr.bf16.mxu0 0
      %1305 = vmatpush2.bf16.xpose.msra.mxu0 0
      %1306 = vmatprep.subr.bf16.mxu0 0
      %1307 = vmatpush2.bf16.xpose.msra.mxu0 0
      %1308 = vmatprep.subr.bf16.mxu0 0
      %1309 = vmatpush2.bf16.xpose.msra.mxu0 0
      %1310 = vmatprep.subr.bf16.mxu0 0
      %1311 = vmatpush2.bf16.xpose.msra.mxu0 0
      %1312 = vmatprep.subr.bf16.mxu0 0
      %1313 = vmatpush2.bf16.xpose.msra.mxu0 0
      %1314 = vmatprep.mubr.bf16.mxu0 0
      %1315 = vmatmul.mubr.bf16.gmra.mxu0 %v851
      %v1316 = vpop.f32.mrf.mxu0
      %v1317 = vadd.f32 0.0, %v1316
      %v1318 = vpop.f32.mrf.mxu0
      %v1319 = vpop.f32.mrf.mxu0
      %v1320 = vpop.f32.mrf.mxu0
      %1321 = vdwg.mxu0
      %v1322 = vmul.f32 %v1317, 0.17677669
      %v1323 = vsel %vm824, %v1322, -inf
      %1324 = vmax.xlane.f32.xlu0 %v1323
      %v1325 = vpop.xlane.xlu0 %1324
      %v1326 = vsub.f32 %v1322, %v1325
      %v1327 = vmul.f32 %v1326, 1.442695
      %v1328 = vpow.pop %v1327
      %v1329 = vsel %vm824, %v1328, 0.0
      %1330 = vadd.xlane.f32.xlu0 %v1329
      %v1331 = vpop.xlane.xlu0 %1330
      %v1332 = vrcp.pop %v1331
      %v1333 = vmul.f32 %v1328, %v1332
      %v1334 = vsel %vm915, %v773, 0
      %v1335 = vpack.c.bf16 %v1333, %v1333
      %v1337 = vsel %vm824, %v1335, 0
      %1339 = vmatprep.subr.bf16.mxu0 0
      %1340 = vmatpush1.bf16.msra.mxu0 0
      %1341 = vmatprep.subr.bf16.mxu0 0
      %1342 = vmatpush1.bf16.msra.mxu0 0
      %1343 = vmatprep.subr.bf16.mxu0 0
      %1344 = vmatpush1.bf16.msra.mxu0 0
      %1345 = vmatprep.subr.bf16.mxu0 0
      %1346 = vmatpush1.bf16.msra.mxu0 0
      %1347 = vmatprep.subr.bf16.mxu0 0
      %1348 = vmatpush1.bf16.msra.mxu0 0
      %1349 = vmatprep.subr.bf16.mxu0 0
      %1350 = vmatpush1.bf16.msra.mxu0 0
      %1351 = vmatprep.subr.bf16.mxu0 0
      %1352 = vmatpush1.bf16.msra.mxu0 0
      %1353 = vmatprep.subr.bf16.mxu0 0
      %1354 = vmatpush1.bf16.msra.mxu0 %v1334
      %1355 = vmatprep.subr.bf16.mxu0 0
      %1356 = vmatpush2.bf16.msra.mxu0 0
      %1357 = vmatprep.subr.bf16.mxu0 0
      %1358 = vmatpush2.bf16.msra.mxu0 0
      %1359 = vmatprep.subr.bf16.mxu0 0
      %1360 = vmatpush2.bf16.msra.mxu0 0
      %1361 = vmatprep.subr.bf16.mxu0 0
      %1362 = vmatpush2.bf16.msra.mxu0 0
      %1363 = vmatprep.subr.bf16.mxu0 0
      %1364 = vmatpush2.bf16.msra.mxu0 0
      %1365 = vmatprep.subr.bf16.mxu0 0
      %1366 = vmatpush2.bf16.msra.mxu0 0
      %1367 = vmatprep.subr.bf16.mxu0 0
      %1368 = vmatpush2.bf16.msra.mxu0 0
      %1369 = vmatprep.subr.bf16.mxu0 0
      %1370 = vmatpush2.bf16.msra.mxu0 0
      %1371 = vmatprep.mubr.bf16.mxu0 0
      %1372 = vmatmul.mubr.bf16.gmra.mxu0 %v1337
      %v1373 = vpop.f32.mrf.mxu0
      %v1374 = vadd.f32 0.0, %v1373
      %v1375 = vpop.f32.mrf.mxu0
      %v1376 = vpop.f32.mrf.mxu0
      %v1377 = vpop.f32.mrf.mxu0
      %1378 = vdwg.mxu0
      %v1380 = vsel %vm824, %v1281, 0
      %1382 = vmatprep.subr.bf16.mxu0 0
      %1383 = vmatpush1.bf16.msra.mxu0 0
      %1384 = vmatprep.subr.bf16.mxu0 0
      %1385 = vmatpush1.bf16.msra.mxu0 0
      %1386 = vmatprep.subr.bf16.mxu0 0
      %1387 = vmatpush1.bf16.msra.mxu0 0
      %1388 = vmatprep.subr.bf16.mxu0 0
      %1389 = vmatpush1.bf16.msra.mxu0 0
      %1390 = vmatprep.subr.bf16.mxu0 0
      %1391 = vmatpush1.bf16.msra.mxu0 0
      %1392 = vmatprep.subr.bf16.mxu0 0
      %1393 = vmatpush1.bf16.msra.mxu0 0
      %1394 = vmatprep.subr.bf16.mxu0 0
      %1395 = vmatpush1.bf16.msra.mxu0 0
      %1396 = vmatprep.subr.bf16.mxu0 0
      %1397 = vmatpush1.bf16.msra.mxu0 %v1280
      %1398 = vmatprep.subr.bf16.mxu0 0
      %1399 = vmatpush2.bf16.msra.mxu0 0
      %1400 = vmatprep.subr.bf16.mxu0 0
      %1401 = vmatpush2.bf16.msra.mxu0 0
      %1402 = vmatprep.subr.bf16.mxu0 0
      %1403 = vmatpush2.bf16.msra.mxu0 0
      %1404 = vmatprep.subr.bf16.mxu0 0
      %1405 = vmatpush2.bf16.msra.mxu0 0
      %1406 = vmatprep.subr.bf16.mxu0 0
      %1407 = vmatpush2.bf16.msra.mxu0 0
      %1408 = vmatprep.subr.bf16.mxu0 0
      %1409 = vmatpush2.bf16.msra.mxu0 0
      %1410 = vmatprep.subr.bf16.mxu0 0
      %1411 = vmatpush2.bf16.msra.mxu0 0
      %1412 = vmatprep.subr.bf16.mxu0 0
      %1413 = vmatpush2.bf16.msra.mxu0 0
      %1414 = vmatprep.mubr.bf16.mxu0 0
      %1415 = vmatmul.mubr.bf16.gmra.mxu0 %v1380
      %v1416 = vpop.f32.mrf.mxu0
      %v1417 = vadd.f32 %v1374, %v1416
      %v1418 = vpop.f32.mrf.mxu0
      %v1419 = vpop.f32.mrf.mxu0
      %v1420 = vpop.f32.mrf.mxu0
      %1421 = vdwg.mxu0
      %1422 = vmatprep.subr.bf16.mxu0 0
      %1423 = vmatpush1.bf16.xpose.msra.mxu0 0
      %1424 = vmatprep.subr.bf16.mxu0 0
      %1425 = vmatpush1.bf16.xpose.msra.mxu0 0
      %1426 = vmatprep.subr.bf16.mxu0 0
      %1427 = vmatpush1.bf16.xpose.msra.mxu0 0
      %1428 = vmatprep.subr.bf16.mxu0 0
      %1429 = vmatpush1.bf16.xpose.msra.mxu0 0
      %1430 = vmatprep.subr.bf16.mxu0 0
      %1431 = vmatpush1.bf16.xpose.msra.mxu0 0
      %1432 = vmatprep.subr.bf16.mxu0 0
      %1433 = vmatpush1.bf16.xpose.msra.mxu0 0
      %1434 = vmatprep.subr.bf16.mxu0 0
      %1435 = vmatpush1.bf16.xpose.msra.mxu0 0
      %1436 = vmatprep.subr.bf16.mxu0 0
      %1437 = vmatpush1.bf16.xpose.msra.mxu0 %v765
      %1438 = vmatprep.subr.bf16.mxu0 0
      %1439 = vmatpush2.bf16.xpose.msra.mxu0 0
      %1440 = vmatprep.subr.bf16.mxu0 0
      %1441 = vmatpush2.bf16.xpose.msra.mxu0 0
      %1442 = vmatprep.subr.bf16.mxu0 0
      %1443 = vmatpush2.bf16.xpose.msra.mxu0 0
      %1444 = vmatprep.subr.bf16.mxu0 0
      %1445 = vmatpush2.bf16.xpose.msra.mxu0 0
      %1446 = vmatprep.subr.bf16.mxu0 0
      %1447 = vmatpush2.bf16.xpose.msra.mxu0 0
      %1448 = vmatprep.subr.bf16.mxu0 0
      %1449 = vmatpush2.bf16.xpose.msra.mxu0 0
      %1450 = vmatprep.subr.bf16.mxu0 0
      %1451 = vmatpush2.bf16.xpose.msra.mxu0 0
      %1452 = vmatprep.subr.bf16.mxu0 0
      %1453 = vmatpush2.bf16.xpose.msra.mxu0 0
      %1454 = vmatprep.mubr.bf16.mxu0 0
      %1455 = vmatmul.mubr.bf16.gmra.mxu0 %v1005
      %v1456 = vpop.f32.mrf.mxu0
      %v1457 = vadd.f32 0.0, %v1456
      %v1458 = vpop.f32.mrf.mxu0
      %v1459 = vpop.f32.mrf.mxu0
      %v1460 = vpop.f32.mrf.mxu0
      %1461 = vdwg.mxu0
      %v1462 = vmul.f32 %v1457, 0.17677669
      %v1463 = vsel %vm824, %v1462, -inf
      %1464 = vmax.xlane.f32.xlu0 %v1463
      %v1465 = vpop.xlane.xlu0 %1464
      %v1466 = vsub.f32 %v1462, %v1465
      %v1467 = vmul.f32 %v1466, 1.442695
      %v1468 = vpow.pop %v1467
      %v1469 = vsel %vm824, %v1468, 0.0
      %1470 = vadd.xlane.f32.xlu0 %v1469
      %v1471 = vpop.xlane.xlu0 %1470
      %v1472 = vrcp.pop %v1471
      %v1473 = vmul.f32 %v1468, %v1472
      %v1474 = vsel %vm1069, %v773, 0
      %v1475 = vpack.c.bf16 %v1473, %v1473
      %v1477 = vsel %vm824, %v1475, 0
      %1479 = vmatprep.subr.bf16.mxu0 0
      %1480 = vmatpush1.bf16.msra.mxu0 0
      %1481 = vmatprep.subr.bf16.mxu0 0
      %1482 = vmatpush1.bf16.msra.mxu0 0
      %1483 = vmatprep.subr.bf16.mxu0 0
      %1484 = vmatpush1.bf16.msra.mxu0 0
      %1485 = vmatprep.subr.bf16.mxu0 0
      %1486 = vmatpush1.bf16.msra.mxu0 0
      %1487 = vmatprep.subr.bf16.mxu0 0
      %1488 = vmatpush1.bf16.msra.mxu0 0
      %1489 = vmatprep.subr.bf16.mxu0 0
      %1490 = vmatpush1.bf16.msra.mxu0 0
      %1491 = vmatprep.subr.bf16.mxu0 0
      %1492 = vmatpush1.bf16.msra.mxu0 0
      %1493 = vmatprep.subr.bf16.mxu0 0
      %1494 = vmatpush1.bf16.msra.mxu0 %v1474
      %1495 = vmatprep.subr.bf16.mxu0 0
      %1496 = vmatpush2.bf16.msra.mxu0 0
      %1497 = vmatprep.subr.bf16.mxu0 0
      %1498 = vmatpush2.bf16.msra.mxu0 0
      %1499 = vmatprep.subr.bf16.mxu0 0
      %1500 = vmatpush2.bf16.msra.mxu0 0
      %1501 = vmatprep.subr.bf16.mxu0 0
      %1502 = vmatpush2.bf16.msra.mxu0 0
      %1503 = vmatprep.subr.bf16.mxu0 0
      %1504 = vmatpush2.bf16.msra.mxu0 0
      %1505 = vmatprep.subr.bf16.mxu0 0
      %1506 = vmatpush2.bf16.msra.mxu0 0
      %1507 = vmatprep.subr.bf16.mxu0 0
      %1508 = vmatpush2.bf16.msra.mxu0 0
      %1509 = vmatprep.subr.bf16.mxu0 0
      %1510 = vmatpush2.bf16.msra.mxu0 0
      %1511 = vmatprep.mubr.bf16.mxu0 0
      %1512 = vmatmul.mubr.bf16.gmra.mxu0 %v1477
      %v1513 = vpop.f32.mrf.mxu0
      %v1514 = vadd.f32 0.0, %v1513
      %v1515 = vpop.f32.mrf.mxu0
      %v1516 = vpop.f32.mrf.mxu0
      %v1517 = vpop.f32.mrf.mxu0
      %1518 = vdwg.mxu0
      %v1519 = vadd.f32 %v1417, %v1514
      %1520 = vmatprep.subr.bf16.mxu0 0
      %1521 = vmatpush1.bf16.xpose.msra.mxu0 0
      %1522 = vmatprep.subr.bf16.mxu0 0
      %1523 = vmatpush1.bf16.xpose.msra.mxu0 0
      %1524 = vmatprep.subr.bf16.mxu0 0
      %1525 = vmatpush1.bf16.xpose.msra.mxu0 0
      %1526 = vmatprep.subr.bf16.mxu0 0
      %1527 = vmatpush1.bf16.xpose.msra.mxu0 0
      %1528 = vmatprep.subr.bf16.mxu0 0
      %1529 = vmatpush1.bf16.xpose.msra.mxu0 0
      %1530 = vmatprep.subr.bf16.mxu0 0
      %1531 = vmatpush1.bf16.xpose.msra.mxu0 0
      %1532 = vmatprep.subr.bf16.mxu0 0
      %1533 = vmatpush1.bf16.xpose.msra.mxu0 0
      %1534 = vmatprep.subr.bf16.mxu0 0
      %1535 = vmatpush1.bf16.xpose.msra.mxu0 %v765
      %1536 = vmatprep.subr.bf16.mxu0 0
      %1537 = vmatpush2.bf16.xpose.msra.mxu0 0
      %1538 = vmatprep.subr.bf16.mxu0 0
      %1539 = vmatpush2.bf16.xpose.msra.mxu0 0
      %1540 = vmatprep.subr.bf16.mxu0 0
      %1541 = vmatpush2.bf16.xpose.msra.mxu0 0
      %1542 = vmatprep.subr.bf16.mxu0 0
      %1543 = vmatpush2.bf16.xpose.msra.mxu0 0
      %1544 = vmatprep.subr.bf16.mxu0 0
      %1545 = vmatpush2.bf16.xpose.msra.mxu0 0
      %1546 = vmatprep.subr.bf16.mxu0 0
      %1547 = vmatpush2.bf16.xpose.msra.mxu0 0
      %1548 = vmatprep.subr.bf16.mxu0 0
      %1549 = vmatpush2.bf16.xpose.msra.mxu0 0
      %1550 = vmatprep.subr.bf16.mxu0 0
      %1551 = vmatpush2.bf16.xpose.msra.mxu0 0
      %1552 = vmatprep.mubr.bf16.mxu0 0
      %1553 = vmatmul.mubr.bf16.gmra.mxu0 %v1117
      %v1554 = vpop.f32.mrf.mxu0
      %v1555 = vadd.f32 0.0, %v1554
      %v1556 = vpop.f32.mrf.mxu0
      %v1557 = vpop.f32.mrf.mxu0
      %v1558 = vpop.f32.mrf.mxu0
      %1559 = vdwg.mxu0
      %v1560 = vmul.f32 %v1555, 0.17677669
      %v1561 = vsel %vm824, %v1560, -inf
      %1562 = vmax.xlane.f32.xlu0 %v1561
      %v1563 = vpop.xlane.xlu0 %1562
      %v1564 = vsub.f32 %v1560, %v1563
      %v1565 = vmul.f32 %v1564, 1.442695
      %v1566 = vpow.pop %v1565
      %v1567 = vsel %vm824, %v1566, 0.0
      %1568 = vadd.xlane.f32.xlu0 %v1567
      %v1569 = vpop.xlane.xlu0 %1568
      %v1570 = vrcp.pop %v1569
      %v1571 = vmul.f32 %v1566, %v1570
      %v1572 = vsel %vm1181, %v773, 0
      %v1573 = vpack.c.bf16 %v1571, %v1571
      %v1575 = vsel %vm824, %v1573, 0
      %1577 = vmatprep.subr.bf16.mxu0 0
      %1578 = vmatpush1.bf16.msra.mxu0 0
      %1579 = vmatprep.subr.bf16.mxu0 0
      %1580 = vmatpush1.bf16.msra.mxu0 0
      %1581 = vmatprep.subr.bf16.mxu0 0
      %1582 = vmatpush1.bf16.msra.mxu0 0
      %1583 = vmatprep.subr.bf16.mxu0 0
      %1584 = vmatpush1.bf16.msra.mxu0 0
      %1585 = vmatprep.subr.bf16.mxu0 0
      %1586 = vmatpush1.bf16.msra.mxu0 0
      %1587 = vmatprep.subr.bf16.mxu0 0
      %1588 = vmatpush1.bf16.msra.mxu0 0
      %1589 = vmatprep.subr.bf16.mxu0 0
      %1590 = vmatpush1.bf16.msra.mxu0 0
      %1591 = vmatprep.subr.bf16.mxu0 0
      %1592 = vmatpush1.bf16.msra.mxu0 %v1572
      %1593 = vmatprep.subr.bf16.mxu0 0
      %1594 = vmatpush2.bf16.msra.mxu0 0
      %1595 = vmatprep.subr.bf16.mxu0 0
      %1596 = vmatpush2.bf16.msra.mxu0 0
      %1597 = vmatprep.subr.bf16.mxu0 0
      %1598 = vmatpush2.bf16.msra.mxu0 0
      %1599 = vmatprep.subr.bf16.mxu0 0
      %1600 = vmatpush2.bf16.msra.mxu0 0
      %1601 = vmatprep.subr.bf16.mxu0 0
      %1602 = vmatpush2.bf16.msra.mxu0 0
      %1603 = vmatprep.subr.bf16.mxu0 0
      %1604 = vmatpush2.bf16.msra.mxu0 0
      %1605 = vmatprep.subr.bf16.mxu0 0
      %1606 = vmatpush2.bf16.msra.mxu0 0
      %1607 = vmatprep.subr.bf16.mxu0 0
      %1608 = vmatpush2.bf16.msra.mxu0 0
      %1609 = vmatprep.mubr.bf16.mxu0 0
      %1610 = vmatmul.mubr.bf16.gmra.mxu0 %v1575
      %v1611 = vpop.f32.mrf.mxu0
      %v1612 = vadd.f32 0.0, %v1611
      %v1613 = vpop.f32.mrf.mxu0
      %v1614 = vpop.f32.mrf.mxu0
      %v1615 = vpop.f32.mrf.mxu0
      %1616 = vdwg.mxu0
      %v1617 = vadd.f32 %v1519, %v1612
      %1618 = vmatprep.subr.bf16.mxu0 0
      %1619 = vmatpush1.bf16.xpose.msra.mxu0 0
      %1620 = vmatprep.subr.bf16.mxu0 0
      %1621 = vmatpush1.bf16.xpose.msra.mxu0 0
      %1622 = vmatprep.subr.bf16.mxu0 0
      %1623 = vmatpush1.bf16.xpose.msra.mxu0 0
      %1624 = vmatprep.subr.bf16.mxu0 0
      %1625 = vmatpush1.bf16.xpose.msra.mxu0 0
      %1626 = vmatprep.subr.bf16.mxu0 0
      %1627 = vmatpush1.bf16.xpose.msra.mxu0 0
      %1628 = vmatprep.subr.bf16.mxu0 0
      %1629 = vmatpush1.bf16.xpose.msra.mxu0 0
      %1630 = vmatprep.subr.bf16.mxu0 0
      %1631 = vmatpush1.bf16.xpose.msra.mxu0 0
      %1632 = vmatprep.subr.bf16.mxu0 0
      %1633 = vmatpush1.bf16.xpose.msra.mxu0 %v766
      %1634 = vmatprep.subr.bf16.mxu0 0
      %1635 = vmatpush2.bf16.xpose.msra.mxu0 0
      %1636 = vmatprep.subr.bf16.mxu0 0
      %1637 = vmatpush2.bf16.xpose.msra.mxu0 0
      %1638 = vmatprep.subr.bf16.mxu0 0
      %1639 = vmatpush2.bf16.xpose.msra.mxu0 0
      %1640 = vmatprep.subr.bf16.mxu0 0
      %1641 = vmatpush2.bf16.xpose.msra.mxu0 0
      %1642 = vmatprep.subr.bf16.mxu0 0
      %1643 = vmatpush2.bf16.xpose.msra.mxu0 0
      %1644 = vmatprep.subr.bf16.mxu0 0
      %1645 = vmatpush2.bf16.xpose.msra.mxu0 0
      %1646 = vmatprep.subr.bf16.mxu0 0
      %1647 = vmatpush2.bf16.xpose.msra.mxu0 0
      %1648 = vmatprep.subr.bf16.mxu0 0
      %1649 = vmatpush2.bf16.xpose.msra.mxu0 0
      %1650 = vmatprep.mubr.bf16.mxu0 0
      %1651 = vmatmul.mubr.bf16.gmra.mxu0 %v782
      %v1652 = vpop.f32.mrf.mxu0
      %v1653 = vadd.f32 0.0, %v1652
      %v1654 = vpop.f32.mrf.mxu0
      %v1655 = vpop.f32.mrf.mxu0
      %v1656 = vpop.f32.mrf.mxu0
      %1657 = vdwg.mxu0
      %v1658 = vmul.f32 %v1653, 0.17677669
      %v1659 = vsel %vm824, %v1658, -inf
      %1660 = vmax.xlane.f32.xlu0 %v1659
      %v1661 = vpop.xlane.xlu0 %1660
      %v1662 = vsub.f32 %v1658, %v1661
      %v1663 = vmul.f32 %v1662, 1.442695
      %v1664 = vpow.pop %v1663
      %v1665 = vsel %vm824, %v1664, 0.0
      %1666 = vadd.xlane.f32.xlu0 %v1665
      %v1667 = vpop.xlane.xlu0 %1666
      %v1668 = vrcp.pop %v1667
      %v1669 = vmul.f32 %v1664, %v1668
      %v1670 = vsel %vm847, %v774, 0
      %v1671 = vpack.c.bf16 %v1669, %v1669
      %1672 = vmatprep.subr.bf16.mxu0 0
      %1673 = vmatpush1.bf16.xpose.msra.mxu0 0
      %1674 = vmatprep.subr.bf16.mxu0 0
      %1675 = vmatpush1.bf16.xpose.msra.mxu0 0
      %1676 = vmatprep.subr.bf16.mxu0 0
      %1677 = vmatpush1.bf16.xpose.msra.mxu0 0
      %1678 = vmatprep.subr.bf16.mxu0 0
      %1679 = vmatpush1.bf16.xpose.msra.mxu0 0
      %1680 = vmatprep.subr.bf16.mxu0 0
      %1681 = vmatpush1.bf16.xpose.msra.mxu0 0
      %1682 = vmatprep.subr.bf16.mxu0 0
      %1683 = vmatpush1.bf16.xpose.msra.mxu0 0
      %1684 = vmatprep.subr.bf16.mxu0 0
      %1685 = vmatpush1.bf16.xpose.msra.mxu0 0
      %1686 = vmatprep.subr.bf16.mxu0 0
      %1687 = vmatpush1.bf16.xpose.msra.mxu0 %v766
      %1688 = vmatprep.subr.bf16.mxu0 0
      %1689 = vmatpush2.bf16.xpose.msra.mxu0 0
      %1690 = vmatprep.subr.bf16.mxu0 0
      %1691 = vmatpush2.bf16.xpose.msra.mxu0 0
      %1692 = vmatprep.subr.bf16.mxu0 0
      %1693 = vmatpush2.bf16.xpose.msra.mxu0 0
      %1694 = vmatprep.subr.bf16.mxu0 0
      %1695 = vmatpush2.bf16.xpose.msra.mxu0 0
      %1696 = vmatprep.subr.bf16.mxu0 0
      %1697 = vmatpush2.bf16.xpose.msra.mxu0 0
      %1698 = vmatprep.subr.bf16.mxu0 0
      %1699 = vmatpush2.bf16.xpose.msra.mxu0 0
      %1700 = vmatprep.subr.bf16.mxu0 0
      %1701 = vmatpush2.bf16.xpose.msra.mxu0 0
      %1702 = vmatprep.subr.bf16.mxu0 0
      %1703 = vmatpush2.bf16.xpose.msra.mxu0 0
      %1704 = vmatprep.mubr.bf16.mxu0 0
      %1705 = vmatmul.mubr.bf16.gmra.mxu0 %v851
      %v1706 = vpop.f32.mrf.mxu0
      %v1707 = vadd.f32 0.0, %v1706
      %v1708 = vpop.f32.mrf.mxu0
      %v1709 = vpop.f32.mrf.mxu0
      %v1710 = vpop.f32.mrf.mxu0
      %1711 = vdwg.mxu0
      %v1712 = vmul.f32 %v1707, 0.17677669
      %v1713 = vsel %vm824, %v1712, -inf
      %1714 = vmax.xlane.f32.xlu0 %v1713
      %v1715 = vpop.xlane.xlu0 %1714
      %v1716 = vsub.f32 %v1712, %v1715
      %v1717 = vmul.f32 %v1716, 1.442695
      %v1718 = vpow.pop %v1717
      %v1719 = vsel %vm824, %v1718, 0.0
      %1720 = vadd.xlane.f32.xlu0 %v1719
      %v1721 = vpop.xlane.xlu0 %1720
      %v1722 = vrcp.pop %v1721
      %v1723 = vmul.f32 %v1718, %v1722
      %v1724 = vsel %vm915, %v774, 0
      %v1725 = vpack.c.bf16 %v1723, %v1723
      %v1727 = vsel %vm824, %v1725, 0
      %1729 = vmatprep.subr.bf16.mxu0 0
      %1730 = vmatpush1.bf16.msra.mxu0 0
      %1731 = vmatprep.subr.bf16.mxu0 0
      %1732 = vmatpush1.bf16.msra.mxu0 0
      %1733 = vmatprep.subr.bf16.mxu0 0
      %1734 = vmatpush1.bf16.msra.mxu0 0
      %1735 = vmatprep.subr.bf16.mxu0 0
      %1736 = vmatpush1.bf16.msra.mxu0 0
      %1737 = vmatprep.subr.bf16.mxu0 0
      %1738 = vmatpush1.bf16.msra.mxu0 0
      %1739 = vmatprep.subr.bf16.mxu0 0
      %1740 = vmatpush1.bf16.msra.mxu0 0
      %1741 = vmatprep.subr.bf16.mxu0 0
      %1742 = vmatpush1.bf16.msra.mxu0 0
      %1743 = vmatprep.subr.bf16.mxu0 0
      %1744 = vmatpush1.bf16.msra.mxu0 %v1724
      %1745 = vmatprep.subr.bf16.mxu0 0
      %1746 = vmatpush2.bf16.msra.mxu0 0
      %1747 = vmatprep.subr.bf16.mxu0 0
      %1748 = vmatpush2.bf16.msra.mxu0 0
      %1749 = vmatprep.subr.bf16.mxu0 0
      %1750 = vmatpush2.bf16.msra.mxu0 0
      %1751 = vmatprep.subr.bf16.mxu0 0
      %1752 = vmatpush2.bf16.msra.mxu0 0
      %1753 = vmatprep.subr.bf16.mxu0 0
      %1754 = vmatpush2.bf16.msra.mxu0 0
      %1755 = vmatprep.subr.bf16.mxu0 0
      %1756 = vmatpush2.bf16.msra.mxu0 0
      %1757 = vmatprep.subr.bf16.mxu0 0
      %1758 = vmatpush2.bf16.msra.mxu0 0
      %1759 = vmatprep.subr.bf16.mxu0 0
      %1760 = vmatpush2.bf16.msra.mxu0 0
      %1761 = vmatprep.mubr.bf16.mxu0 0
      %1762 = vmatmul.mubr.bf16.gmra.mxu0 %v1727
      %v1763 = vpop.f32.mrf.mxu0
      %v1764 = vadd.f32 0.0, %v1763
      %v1765 = vpop.f32.mrf.mxu0
      %v1766 = vpop.f32.mrf.mxu0
      %v1767 = vpop.f32.mrf.mxu0
      %1768 = vdwg.mxu0
      %v1770 = vsel %vm824, %v1671, 0
      %1772 = vmatprep.subr.bf16.mxu0 0
      %1773 = vmatpush1.bf16.msra.mxu0 0
      %1774 = vmatprep.subr.bf16.mxu0 0
      %1775 = vmatpush1.bf16.msra.mxu0 0
      %1776 = vmatprep.subr.bf16.mxu0 0
      %1777 = vmatpush1.bf16.msra.mxu0 0
      %1778 = vmatprep.subr.bf16.mxu0 0
      %1779 = vmatpush1.bf16.msra.mxu0 0
      %1780 = vmatprep.subr.bf16.mxu0 0
      %1781 = vmatpush1.bf16.msra.mxu0 0
      %1782 = vmatprep.subr.bf16.mxu0 0
      %1783 = vmatpush1.bf16.msra.mxu0 0
      %1784 = vmatprep.subr.bf16.mxu0 0
      %1785 = vmatpush1.bf16.msra.mxu0 0
      %1786 = vmatprep.subr.bf16.mxu0 0
      %1787 = vmatpush1.bf16.msra.mxu0 %v1670
      %1788 = vmatprep.subr.bf16.mxu0 0
      %1789 = vmatpush2.bf16.msra.mxu0 0
      %1790 = vmatprep.subr.bf16.mxu0 0
      %1791 = vmatpush2.bf16.msra.mxu0 0
      %1792 = vmatprep.subr.bf16.mxu0 0
      %1793 = vmatpush2.bf16.msra.mxu0 0
      %1794 = vmatprep.subr.bf16.mxu0 0
      %1795 = vmatpush2.bf16.msra.mxu0 0
      %1796 = vmatprep.subr.bf16.mxu0 0
      %1797 = vmatpush2.bf16.msra.mxu0 0
      %1798 = vmatprep.subr.bf16.mxu0 0
      %1799 = vmatpush2.bf16.msra.mxu0 0
      %1800 = vmatprep.subr.bf16.mxu0 0
      %1801 = vmatpush2.bf16.msra.mxu0 0
      %1802 = vmatprep.subr.bf16.mxu0 0
      %1803 = vmatpush2.bf16.msra.mxu0 0
      %1804 = vmatprep.mubr.bf16.mxu0 0
      %1805 = vmatmul.mubr.bf16.gmra.mxu0 %v1770
      %v1806 = vpop.f32.mrf.mxu0
      %v1807 = vadd.f32 %v1764, %v1806
      %v1808 = vpop.f32.mrf.mxu0
      %v1809 = vpop.f32.mrf.mxu0
      %v1810 = vpop.f32.mrf.mxu0
      %1811 = vdwg.mxu0
      %1812 = vmatprep.subr.bf16.mxu0 0
      %1813 = vmatpush1.bf16.xpose.msra.mxu0 0
      %1814 = vmatprep.subr.bf16.mxu0 0
      %1815 = vmatpush1.bf16.xpose.msra.mxu0 0
      %1816 = vmatprep.subr.bf16.mxu0 0
      %1817 = vmatpush1.bf16.xpose.msra.mxu0 0
      %1818 = vmatprep.subr.bf16.mxu0 0
      %1819 = vmatpush1.bf16.xpose.msra.mxu0 0
      %1820 = vmatprep.subr.bf16.mxu0 0
      %1821 = vmatpush1.bf16.xpose.msra.mxu0 0
      %1822 = vmatprep.subr.bf16.mxu0 0
      %1823 = vmatpush1.bf16.xpose.msra.mxu0 0
      %1824 = vmatprep.subr.bf16.mxu0 0
      %1825 = vmatpush1.bf16.xpose.msra.mxu0 0
      %1826 = vmatprep.subr.bf16.mxu0 0
      %1827 = vmatpush1.bf16.xpose.msra.mxu0 %v766
      %1828 = vmatprep.subr.bf16.mxu0 0
      %1829 = vmatpush2.bf16.xpose.msra.mxu0 0
      %1830 = vmatprep.subr.bf16.mxu0 0
      %1831 = vmatpush2.bf16.xpose.msra.mxu0 0
      %1832 = vmatprep.subr.bf16.mxu0 0
      %1833 = vmatpush2.bf16.xpose.msra.mxu0 0
      %1834 = vmatprep.subr.bf16.mxu0 0
      %1835 = vmatpush2.bf16.xpose.msra.mxu0 0
      %1836 = vmatprep.subr.bf16.mxu0 0
      %1837 = vmatpush2.bf16.xpose.msra.mxu0 0
      %1838 = vmatprep.subr.bf16.mxu0 0
      %1839 = vmatpush2.bf16.xpose.msra.mxu0 0
      %1840 = vmatprep.subr.bf16.mxu0 0
      %1841 = vmatpush2.bf16.xpose.msra.mxu0 0
      %1842 = vmatprep.subr.bf16.mxu0 0
      %1843 = vmatpush2.bf16.xpose.msra.mxu0 0
      %1844 = vmatprep.mubr.bf16.mxu0 0
      %1845 = vmatmul.mubr.bf16.gmra.mxu0 %v1005
      %v1846 = vpop.f32.mrf.mxu0
      %v1847 = vadd.f32 0.0, %v1846
      %v1848 = vpop.f32.mrf.mxu0
      %v1849 = vpop.f32.mrf.mxu0
      %v1850 = vpop.f32.mrf.mxu0
      %1851 = vdwg.mxu0
      %v1852 = vmul.f32 %v1847, 0.17677669
      %v1853 = vsel %vm824, %v1852, -inf
      %1854 = vmax.xlane.f32.xlu0 %v1853
      %v1855 = vpop.xlane.xlu0 %1854
      %v1856 = vsub.f32 %v1852, %v1855
      %v1857 = vmul.f32 %v1856, 1.442695
      %v1858 = vpow.pop %v1857
      %v1859 = vsel %vm824, %v1858, 0.0
      %1860 = vadd.xlane.f32.xlu0 %v1859
      %v1861 = vpop.xlane.xlu0 %1860
      %v1862 = vrcp.pop %v1861
      %v1863 = vmul.f32 %v1858, %v1862
      %v1864 = vsel %vm1069, %v774, 0
      %v1865 = vpack.c.bf16 %v1863, %v1863
      %v1867 = vsel %vm824, %v1865, 0
      %1869 = vmatprep.subr.bf16.mxu0 0
      %1870 = vmatpush1.bf16.msra.mxu0 0
      %1871 = vmatprep.subr.bf16.mxu0 0
      %1872 = vmatpush1.bf16.msra.mxu0 0
      %1873 = vmatprep.subr.bf16.mxu0 0
      %1874 = vmatpush1.bf16.msra.mxu0 0
      %1875 = vmatprep.subr.bf16.mxu0 0
      %1876 = vmatpush1.bf16.msra.mxu0 0
      %1877 = vmatprep.subr.bf16.mxu0 0
      %1878 = vmatpush1.bf16.msra.mxu0 0
      %1879 = vmatprep.subr.bf16.mxu0 0
      %1880 = vmatpush1.bf16.msra.mxu0 0
      %1881 = vmatprep.subr.bf16.mxu0 0
      %1882 = vmatpush1.bf16.msra.mxu0 0
      %1883 = vmatprep.subr.bf16.mxu0 0
      %1884 = vmatpush1.bf16.msra.mxu0 %v1864
      %1885 = vmatprep.subr.bf16.mxu0 0
      %1886 = vmatpush2.bf16.msra.mxu0 0
      %1887 = vmatprep.subr.bf16.mxu0 0
      %1888 = vmatpush2.bf16.msra.mxu0 0
      %1889 = vmatprep.subr.bf16.mxu0 0
      %1890 = vmatpush2.bf16.msra.mxu0 0
      %1891 = vmatprep.subr.bf16.mxu0 0
      %1892 = vmatpush2.bf16.msra.mxu0 0
      %1893 = vmatprep.subr.bf16.mxu0 0
      %1894 = vmatpush2.bf16.msra.mxu0 0
      %1895 = vmatprep.subr.bf16.mxu0 0
      %1896 = vmatpush2.bf16.msra.mxu0 0
      %1897 = vmatprep.subr.bf16.mxu0 0
      %1898 = vmatpush2.bf16.msra.mxu0 0
      %1899 = vmatprep.subr.bf16.mxu0 0
      %1900 = vmatpush2.bf16.msra.mxu0 0
      %1901 = vmatprep.mubr.bf16.mxu0 0
      %1902 = vmatmul.mubr.bf16.gmra.mxu0 %v1867
      %v1903 = vpop.f32.mrf.mxu0
      %v1904 = vadd.f32 0.0, %v1903
      %v1905 = vpop.f32.mrf.mxu0
      %v1906 = vpop.f32.mrf.mxu0
      %v1907 = vpop.f32.mrf.mxu0
      %1908 = vdwg.mxu0
      %v1909 = vadd.f32 %v1807, %v1904
      %1910 = vmatprep.subr.bf16.mxu0 0
      %1911 = vmatpush1.bf16.xpose.msra.mxu0 0
      %1912 = vmatprep.subr.bf16.mxu0 0
      %1913 = vmatpush1.bf16.xpose.msra.mxu0 0
      %1914 = vmatprep.subr.bf16.mxu0 0
      %1915 = vmatpush1.bf16.xpose.msra.mxu0 0
      %1916 = vmatprep.subr.bf16.mxu0 0
      %1917 = vmatpush1.bf16.xpose.msra.mxu0 0
      %1918 = vmatprep.subr.bf16.mxu0 0
      %1919 = vmatpush1.bf16.xpose.msra.mxu0 0
      %1920 = vmatprep.subr.bf16.mxu0 0
      %1921 = vmatpush1.bf16.xpose.msra.mxu0 0
      %1922 = vmatprep.subr.bf16.mxu0 0
      %1923 = vmatpush1.bf16.xpose.msra.mxu0 0
      %1924 = vmatprep.subr.bf16.mxu0 0
      %1925 = vmatpush1.bf16.xpose.msra.mxu0 %v766
      %1926 = vmatprep.subr.bf16.mxu0 0
      %1927 = vmatpush2.bf16.xpose.msra.mxu0 0
      %1928 = vmatprep.subr.bf16.mxu0 0
      %1929 = vmatpush2.bf16.xpose.msra.mxu0 0
      %1930 = vmatprep.subr.bf16.mxu0 0
      %1931 = vmatpush2.bf16.xpose.msra.mxu0 0
      %1932 = vmatprep.subr.bf16.mxu0 0
      %1933 = vmatpush2.bf16.xpose.msra.mxu0 0
      %1934 = vmatprep.subr.bf16.mxu0 0
      %1935 = vmatpush2.bf16.xpose.msra.mxu0 0
      %1936 = vmatprep.subr.bf16.mxu0 0
      %1937 = vmatpush2.bf16.xpose.msra.mxu0 0
      %1938 = vmatprep.subr.bf16.mxu0 0
      %1939 = vmatpush2.bf16.xpose.msra.mxu0 0
      %1940 = vmatprep.subr.bf16.mxu0 0
      %1941 = vmatpush2.bf16.xpose.msra.mxu0 0
      %1942 = vmatprep.mubr.bf16.mxu0 0
      %1943 = vmatmul.mubr.bf16.gmra.mxu0 %v1117
      %v1944 = vpop.f32.mrf.mxu0
      %v1945 = vadd.f32 0.0, %v1944
      %v1946 = vpop.f32.mrf.mxu0
      %v1947 = vpop.f32.mrf.mxu0
      %v1948 = vpop.f32.mrf.mxu0
      %1949 = vdwg.mxu0
      %v1950 = vmul.f32 %v1945, 0.17677669
      %v1951 = vsel %vm824, %v1950, -inf
      %1952 = vmax.xlane.f32.xlu0 %v1951
      %v1953 = vpop.xlane.xlu0 %1952
      %v1954 = vsub.f32 %v1950, %v1953
      %v1955 = vmul.f32 %v1954, 1.442695
      %v1956 = vpow.pop %v1955
      %v1957 = vsel %vm824, %v1956, 0.0
      %1958 = vadd.xlane.f32.xlu0 %v1957
      %v1959 = vpop.xlane.xlu0 %1958
      %v1960 = vrcp.pop %v1959
      %v1961 = vmul.f32 %v1956, %v1960
      %v1962 = vsel %vm1181, %v774, 0
      %v1963 = vpack.c.bf16 %v1961, %v1961
      %v1965 = vsel %vm824, %v1963, 0
      %1967 = vmatprep.subr.bf16.mxu0 0
      %1968 = vmatpush1.bf16.msra.mxu0 0
      %1969 = vmatprep.subr.bf16.mxu0 0
      %1970 = vmatpush1.bf16.msra.mxu0 0
      %1971 = vmatprep.subr.bf16.mxu0 0
      %1972 = vmatpush1.bf16.msra.mxu0 0
      %1973 = vmatprep.subr.bf16.mxu0 0
      %1974 = vmatpush1.bf16.msra.mxu0 0
      %1975 = vmatprep.subr.bf16.mxu0 0
      %1976 = vmatpush1.bf16.msra.mxu0 0
      %1977 = vmatprep.subr.bf16.mxu0 0
      %1978 = vmatpush1.bf16.msra.mxu0 0
      %1979 = vmatprep.subr.bf16.mxu0 0
      %1980 = vmatpush1.bf16.msra.mxu0 0
      %1981 = vmatprep.subr.bf16.mxu0 0
      %1982 = vmatpush1.bf16.msra.mxu0 %v1962
      %1983 = vmatprep.subr.bf16.mxu0 0
      %1984 = vmatpush2.bf16.msra.mxu0 0
      %1985 = vmatprep.subr.bf16.mxu0 0
      %1986 = vmatpush2.bf16.msra.mxu0 0
      %1987 = vmatprep.subr.bf16.mxu0 0
      %1988 = vmatpush2.bf16.msra.mxu0 0
      %1989 = vmatprep.subr.bf16.mxu0 0
      %1990 = vmatpush2.bf16.msra.mxu0 0
      %1991 = vmatprep.subr.bf16.mxu0 0
      %1992 = vmatpush2.bf16.msra.mxu0 0
      %1993 = vmatprep.subr.bf16.mxu0 0
      %1994 = vmatpush2.bf16.msra.mxu0 0
      %1995 = vmatprep.subr.bf16.mxu0 0
      %1996 = vmatpush2.bf16.msra.mxu0 0
      %1997 = vmatprep.subr.bf16.mxu0 0
      %1998 = vmatpush2.bf16.msra.mxu0 0
      %1999 = vmatprep.mubr.bf16.mxu0 0
      %2000 = vmatmul.mubr.bf16.gmra.mxu0 %v1965
      %v2001 = vpop.f32.mrf.mxu0
      %v2002 = vadd.f32 0.0, %v2001
      %v2003 = vpop.f32.mrf.mxu0
      %v2004 = vpop.f32.mrf.mxu0
      %v2005 = vpop.f32.mrf.mxu0
      %2006 = vdwg.mxu0
      %v2007 = vadd.f32 %v1909, %v2002
      %2008 = vmatprep.subr.bf16.mxu0 0
      %2009 = vmatpush1.bf16.xpose.msra.mxu0 0
      %2010 = vmatprep.subr.bf16.mxu0 0
      %2011 = vmatpush1.bf16.xpose.msra.mxu0 0
      %2012 = vmatprep.subr.bf16.mxu0 0
      %2013 = vmatpush1.bf16.xpose.msra.mxu0 0
      %2014 = vmatprep.subr.bf16.mxu0 0
      %2015 = vmatpush1.bf16.xpose.msra.mxu0 0
      %2016 = vmatprep.subr.bf16.mxu0 0
      %2017 = vmatpush1.bf16.xpose.msra.mxu0 0
      %2018 = vmatprep.subr.bf16.mxu0 0
      %2019 = vmatpush1.bf16.xpose.msra.mxu0 0
      %2020 = vmatprep.subr.bf16.mxu0 0
      %2021 = vmatpush1.bf16.xpose.msra.mxu0 0
      %2022 = vmatprep.subr.bf16.mxu0 0
      %2023 = vmatpush1.bf16.xpose.msra.mxu0 %v767
      %2024 = vmatprep.subr.bf16.mxu0 0
      %2025 = vmatpush2.bf16.xpose.msra.mxu0 0
      %2026 = vmatprep.subr.bf16.mxu0 0
      %2027 = vmatpush2.bf16.xpose.msra.mxu0 0
      %2028 = vmatprep.subr.bf16.mxu0 0
      %2029 = vmatpush2.bf16.xpose.msra.mxu0 0
      %2030 = vmatprep.subr.bf16.mxu0 0
      %2031 = vmatpush2.bf16.xpose.msra.mxu0 0
      %2032 = vmatprep.subr.bf16.mxu0 0
      %2033 = vmatpush2.bf16.xpose.msra.mxu0 0
      %2034 = vmatprep.subr.bf16.mxu0 0
      %2035 = vmatpush2.bf16.xpose.msra.mxu0 0
      %2036 = vmatprep.subr.bf16.mxu0 0
      %2037 = vmatpush2.bf16.xpose.msra.mxu0 0
      %2038 = vmatprep.subr.bf16.mxu0 0
      %2039 = vmatpush2.bf16.xpose.msra.mxu0 0
      %2040 = vmatprep.mubr.bf16.mxu0 0
      %2041 = vmatmul.mubr.bf16.gmra.mxu0 %v782
      %v2042 = vpop.f32.mrf.mxu0
      %v2043 = vadd.f32 0.0, %v2042
      %v2044 = vpop.f32.mrf.mxu0
      %v2045 = vpop.f32.mrf.mxu0
      %v2046 = vpop.f32.mrf.mxu0
      %2047 = vdwg.mxu0
      %v2048 = vmul.f32 %v2043, 0.17677669
      %v2049 = vsel %vm824, %v2048, -inf
      %2050 = vmax.xlane.f32.xlu0 %v2049
      %v2051 = vpop.xlane.xlu0 %2050
      %v2052 = vsub.f32 %v2048, %v2051
      %v2053 = vmul.f32 %v2052, 1.442695
      %v2054 = vpow.pop %v2053
      %v2055 = vsel %vm824, %v2054, 0.0
      %2056 = vadd.xlane.f32.xlu0 %v2055
      %v2057 = vpop.xlane.xlu0 %2056
      %v2058 = vrcp.pop %v2057
      %v2059 = vmul.f32 %v2054, %v2058
      %v2060 = vsel %vm847, %v775, 0
      %v2061 = vpack.c.bf16 %v2059, %v2059
      %2062 = vmatprep.subr.bf16.mxu0 0
      %2063 = vmatpush1.bf16.xpose.msra.mxu0 0
      %2064 = vmatprep.subr.bf16.mxu0 0
      %2065 = vmatpush1.bf16.xpose.msra.mxu0 0
      %2066 = vmatprep.subr.bf16.mxu0 0
      %2067 = vmatpush1.bf16.xpose.msra.mxu0 0
      %2068 = vmatprep.subr.bf16.mxu0 0
      %2069 = vmatpush1.bf16.xpose.msra.mxu0 0
      %2070 = vmatprep.subr.bf16.mxu0 0
      %2071 = vmatpush1.bf16.xpose.msra.mxu0 0
      %2072 = vmatprep.subr.bf16.mxu0 0
      %2073 = vmatpush1.bf16.xpose.msra.mxu0 0
      %2074 = vmatprep.subr.bf16.mxu0 0
      %2075 = vmatpush1.bf16.xpose.msra.mxu0 0
      %2076 = vmatprep.subr.bf16.mxu0 0
      %2077 = vmatpush1.bf16.xpose.msra.mxu0 %v767
      %2078 = vmatprep.subr.bf16.mxu0 0
      %2079 = vmatpush2.bf16.xpose.msra.mxu0 0
      %2080 = vmatprep.subr.bf16.mxu0 0
      %2081 = vmatpush2.bf16.xpose.msra.mxu0 0
      %2082 = vmatprep.subr.bf16.mxu0 0
      %2083 = vmatpush2.bf16.xpose.msra.mxu0 0
      %2084 = vmatprep.subr.bf16.mxu0 0
      %2085 = vmatpush2.bf16.xpose.msra.mxu0 0
      %2086 = vmatprep.subr.bf16.mxu0 0
      %2087 = vmatpush2.bf16.xpose.msra.mxu0 0
      %2088 = vmatprep.subr.bf16.mxu0 0
      %2089 = vmatpush2.bf16.xpose.msra.mxu0 0
      %2090 = vmatprep.subr.bf16.mxu0 0
      %2091 = vmatpush2.bf16.xpose.msra.mxu0 0
      %2092 = vmatprep.subr.bf16.mxu0 0
      %2093 = vmatpush2.bf16.xpose.msra.mxu0 0
      %2094 = vmatprep.mubr.bf16.mxu0 0
      %2095 = vmatmul.mubr.bf16.gmra.mxu0 %v851
      %v2096 = vpop.f32.mrf.mxu0
      %v2097 = vadd.f32 0.0, %v2096
      %v2098 = vpop.f32.mrf.mxu0
      %v2099 = vpop.f32.mrf.mxu0
      %v2100 = vpop.f32.mrf.mxu0
      %2101 = vdwg.mxu0
      %v2102 = vmul.f32 %v2097, 0.17677669
      %v2103 = vsel %vm824, %v2102, -inf
      %2104 = vmax.xlane.f32.xlu0 %v2103
      %v2105 = vpop.xlane.xlu0 %2104
      %v2106 = vsub.f32 %v2102, %v2105
      %v2107 = vmul.f32 %v2106, 1.442695
      %v2108 = vpow.pop %v2107
      %v2109 = vsel %vm824, %v2108, 0.0
      %2110 = vadd.xlane.f32.xlu0 %v2109
      %v2111 = vpop.xlane.xlu0 %2110
      %v2112 = vrcp.pop %v2111
      %v2113 = vmul.f32 %v2108, %v2112
      %v2114 = vsel %vm915, %v775, 0
      %v2115 = vpack.c.bf16 %v2113, %v2113
      %v2117 = vsel %vm824, %v2115, 0
      %2119 = vmatprep.subr.bf16.mxu0 0
      %2120 = vmatpush1.bf16.msra.mxu0 0
      %2121 = vmatprep.subr.bf16.mxu0 0
      %2122 = vmatpush1.bf16.msra.mxu0 0
      %2123 = vmatprep.subr.bf16.mxu0 0
      %2124 = vmatpush1.bf16.msra.mxu0 0
      %2125 = vmatprep.subr.bf16.mxu0 0
      %2126 = vmatpush1.bf16.msra.mxu0 0
      %2127 = vmatprep.subr.bf16.mxu0 0
      %2128 = vmatpush1.bf16.msra.mxu0 0
      %2129 = vmatprep.subr.bf16.mxu0 0
      %2130 = vmatpush1.bf16.msra.mxu0 0
      %2131 = vmatprep.subr.bf16.mxu0 0
      %2132 = vmatpush1.bf16.msra.mxu0 0
      %2133 = vmatprep.subr.bf16.mxu0 0
      %2134 = vmatpush1.bf16.msra.mxu0 %v2114
      %2135 = vmatprep.subr.bf16.mxu0 0
      %2136 = vmatpush2.bf16.msra.mxu0 0
      %2137 = vmatprep.subr.bf16.mxu0 0
      %2138 = vmatpush2.bf16.msra.mxu0 0
      %2139 = vmatprep.subr.bf16.mxu0 0
      %2140 = vmatpush2.bf16.msra.mxu0 0
      %2141 = vmatprep.subr.bf16.mxu0 0
      %2142 = vmatpush2.bf16.msra.mxu0 0
      %2143 = vmatprep.subr.bf16.mxu0 0
      %2144 = vmatpush2.bf16.msra.mxu0 0
      %2145 = vmatprep.subr.bf16.mxu0 0
      %2146 = vmatpush2.bf16.msra.mxu0 0
      %2147 = vmatprep.subr.bf16.mxu0 0
      %2148 = vmatpush2.bf16.msra.mxu0 0
      %2149 = vmatprep.subr.bf16.mxu0 0
      %2150 = vmatpush2.bf16.msra.mxu0 0
      %2151 = vmatprep.mubr.bf16.mxu0 0
      %2152 = vmatmul.mubr.bf16.gmra.mxu0 %v2117
      %v2153 = vpop.f32.mrf.mxu0
      %v2154 = vadd.f32 0.0, %v2153
      %v2155 = vpop.f32.mrf.mxu0
      %v2156 = vpop.f32.mrf.mxu0
      %v2157 = vpop.f32.mrf.mxu0
      %2158 = vdwg.mxu0
      %v2160 = vsel %vm824, %v2061, 0
      %2162 = vmatprep.subr.bf16.mxu0 0
      %2163 = vmatpush1.bf16.msra.mxu0 0
      %2164 = vmatprep.subr.bf16.mxu0 0
      %2165 = vmatpush1.bf16.msra.mxu0 0
      %2166 = vmatprep.subr.bf16.mxu0 0
      %2167 = vmatpush1.bf16.msra.mxu0 0
      %2168 = vmatprep.subr.bf16.mxu0 0
      %2169 = vmatpush1.bf16.msra.mxu0 0
      %2170 = vmatprep.subr.bf16.mxu0 0
      %2171 = vmatpush1.bf16.msra.mxu0 0
      %2172 = vmatprep.subr.bf16.mxu0 0
      %2173 = vmatpush1.bf16.msra.mxu0 0
      %2174 = vmatprep.subr.bf16.mxu0 0
      %2175 = vmatpush1.bf16.msra.mxu0 0
      %2176 = vmatprep.subr.bf16.mxu0 0
      %2177 = vmatpush1.bf16.msra.mxu0 %v2060
      %2178 = vmatprep.subr.bf16.mxu0 0
      %2179 = vmatpush2.bf16.msra.mxu0 0
      %2180 = vmatprep.subr.bf16.mxu0 0
      %2181 = vmatpush2.bf16.msra.mxu0 0
      %2182 = vmatprep.subr.bf16.mxu0 0
      %2183 = vmatpush2.bf16.msra.mxu0 0
      %2184 = vmatprep.subr.bf16.mxu0 0
      %2185 = vmatpush2.bf16.msra.mxu0 0
      %2186 = vmatprep.subr.bf16.mxu0 0
      %2187 = vmatpush2.bf16.msra.mxu0 0
      %2188 = vmatprep.subr.bf16.mxu0 0
      %2189 = vmatpush2.bf16.msra.mxu0 0
      %2190 = vmatprep.subr.bf16.mxu0 0
      %2191 = vmatpush2.bf16.msra.mxu0 0
      %2192 = vmatprep.subr.bf16.mxu0 0
      %2193 = vmatpush2.bf16.msra.mxu0 0
      %2194 = vmatprep.mubr.bf16.mxu0 0
      %2195 = vmatmul.mubr.bf16.gmra.mxu0 %v2160
      %v2196 = vpop.f32.mrf.mxu0
      %v2197 = vadd.f32 %v2154, %v2196
      %v2198 = vpop.f32.mrf.mxu0
      %v2199 = vpop.f32.mrf.mxu0
      %v2200 = vpop.f32.mrf.mxu0
      %2201 = vdwg.mxu0
      %2202 = vmatprep.subr.bf16.mxu0 0
      %2203 = vmatpush1.bf16.xpose.msra.mxu0 0
      %2204 = vmatprep.subr.bf16.mxu0 0
      %2205 = vmatpush1.bf16.xpose.msra.mxu0 0
      %2206 = vmatprep.subr.bf16.mxu0 0
      %2207 = vmatpush1.bf16.xpose.msra.mxu0 0
      %2208 = vmatprep.subr.bf16.mxu0 0
      %2209 = vmatpush1.bf16.xpose.msra.mxu0 0
      %2210 = vmatprep.subr.bf16.mxu0 0
      %2211 = vmatpush1.bf16.xpose.msra.mxu0 0
      %2212 = vmatprep.subr.bf16.mxu0 0
      %2213 = vmatpush1.bf16.xpose.msra.mxu0 0
      %2214 = vmatprep.subr.bf16.mxu0 0
      %2215 = vmatpush1.bf16.xpose.msra.mxu0 0
      %2216 = vmatprep.subr.bf16.mxu0 0
      %2217 = vmatpush1.bf16.xpose.msra.mxu0 %v767
      %2218 = vmatprep.subr.bf16.mxu0 0
      %2219 = vmatpush2.bf16.xpose.msra.mxu0 0
      %2220 = vmatprep.subr.bf16.mxu0 0
      %2221 = vmatpush2.bf16.xpose.msra.mxu0 0
      %2222 = vmatprep.subr.bf16.mxu0 0
      %2223 = vmatpush2.bf16.xpose.msra.mxu0 0
      %2224 = vmatprep.subr.bf16.mxu0 0
      %2225 = vmatpush2.bf16.xpose.msra.mxu0 0
      %2226 = vmatprep.subr.bf16.mxu0 0
      %2227 = vmatpush2.bf16.xpose.msra.mxu0 0
      %2228 = vmatprep.subr.bf16.mxu0 0
      %2229 = vmatpush2.bf16.xpose.msra.mxu0 0
      %2230 = vmatprep.subr.bf16.mxu0 0
      %2231 = vmatpush2.bf16.xpose.msra.mxu0 0
      %2232 = vmatprep.subr.bf16.mxu0 0
      %2233 = vmatpush2.bf16.xpose.msra.mxu0 0
      %2234 = vmatprep.mubr.bf16.mxu0 0
      %2235 = vmatmul.mubr.bf16.gmra.mxu0 %v1005
      %v2236 = vpop.f32.mrf.mxu0
      %v2237 = vadd.f32 0.0, %v2236
      %v2238 = vpop.f32.mrf.mxu0
      %v2239 = vpop.f32.mrf.mxu0
      %v2240 = vpop.f32.mrf.mxu0
      %2241 = vdwg.mxu0
      %v2242 = vmul.f32 %v2237, 0.17677669
      %v2243 = vsel %vm824, %v2242, -inf
      %2244 = vmax.xlane.f32.xlu0 %v2243
      %v2245 = vpop.xlane.xlu0 %2244
      %v2246 = vsub.f32 %v2242, %v2245
      %v2247 = vmul.f32 %v2246, 1.442695
      %v2248 = vpow.pop %v2247
      %v2249 = vsel %vm824, %v2248, 0.0
      %2250 = vadd.xlane.f32.xlu0 %v2249
      %v2251 = vpop.xlane.xlu0 %2250
      %v2252 = vrcp.pop %v2251
      %v2253 = vmul.f32 %v2248, %v2252
      %v2254 = vsel %vm1069, %v775, 0
      %v2255 = vpack.c.bf16 %v2253, %v2253
      %v2257 = vsel %vm824, %v2255, 0
      %2259 = vmatprep.subr.bf16.mxu0 0
      %2260 = vmatpush1.bf16.msra.mxu0 0
      %2261 = vmatprep.subr.bf16.mxu0 0
      %2262 = vmatpush1.bf16.msra.mxu0 0
      %2263 = vmatprep.subr.bf16.mxu0 0
      %2264 = vmatpush1.bf16.msra.mxu0 0
      %2265 = vmatprep.subr.bf16.mxu0 0
      %2266 = vmatpush1.bf16.msra.mxu0 0
      %2267 = vmatprep.subr.bf16.mxu0 0
      %2268 = vmatpush1.bf16.msra.mxu0 0
      %2269 = vmatprep.subr.bf16.mxu0 0
      %2270 = vmatpush1.bf16.msra.mxu0 0
      %2271 = vmatprep.subr.bf16.mxu0 0
      %2272 = vmatpush1.bf16.msra.mxu0 0
      %2273 = vmatprep.subr.bf16.mxu0 0
      %2274 = vmatpush1.bf16.msra.mxu0 %v2254
      %2275 = vmatprep.subr.bf16.mxu0 0
      %2276 = vmatpush2.bf16.msra.mxu0 0
      %2277 = vmatprep.subr.bf16.mxu0 0
      %2278 = vmatpush2.bf16.msra.mxu0 0
      %2279 = vmatprep.subr.bf16.mxu0 0
      %2280 = vmatpush2.bf16.msra.mxu0 0
      %2281 = vmatprep.subr.bf16.mxu0 0
      %2282 = vmatpush2.bf16.msra.mxu0 0
      %2283 = vmatprep.subr.bf16.mxu0 0
      %2284 = vmatpush2.bf16.msra.mxu0 0
      %2285 = vmatprep.subr.bf16.mxu0 0
      %2286 = vmatpush2.bf16.msra.mxu0 0
      %2287 = vmatprep.subr.bf16.mxu0 0
      %2288 = vmatpush2.bf16.msra.mxu0 0
      %2289 = vmatprep.subr.bf16.mxu0 0
      %2290 = vmatpush2.bf16.msra.mxu0 0
      %2291 = vmatprep.mubr.bf16.mxu0 0
      %2292 = vmatmul.mubr.bf16.gmra.mxu0 %v2257
      %v2293 = vpop.f32.mrf.mxu0
      %v2294 = vadd.f32 0.0, %v2293
      %v2295 = vpop.f32.mrf.mxu0
      %v2296 = vpop.f32.mrf.mxu0
      %v2297 = vpop.f32.mrf.mxu0
      %2298 = vdwg.mxu0
      %v2299 = vadd.f32 %v2197, %v2294
      %2300 = vmatprep.subr.bf16.mxu0 0
      %2301 = vmatpush1.bf16.xpose.msra.mxu0 0
      %2302 = vmatprep.subr.bf16.mxu0 0
      %2303 = vmatpush1.bf16.xpose.msra.mxu0 0
      %2304 = vmatprep.subr.bf16.mxu0 0
      %2305 = vmatpush1.bf16.xpose.msra.mxu0 0
      %2306 = vmatprep.subr.bf16.mxu0 0
      %2307 = vmatpush1.bf16.xpose.msra.mxu0 0
      %2308 = vmatprep.subr.bf16.mxu0 0
      %2309 = vmatpush1.bf16.xpose.msra.mxu0 0
      %2310 = vmatprep.subr.bf16.mxu0 0
      %2311 = vmatpush1.bf16.xpose.msra.mxu0 0
      %2312 = vmatprep.subr.bf16.mxu0 0
      %2313 = vmatpush1.bf16.xpose.msra.mxu0 0
      %2314 = vmatprep.subr.bf16.mxu0 0
      %2315 = vmatpush1.bf16.xpose.msra.mxu0 %v767
      %2316 = vmatprep.subr.bf16.mxu0 0
      %2317 = vmatpush2.bf16.xpose.msra.mxu0 0
      %2318 = vmatprep.subr.bf16.mxu0 0
      %2319 = vmatpush2.bf16.xpose.msra.mxu0 0
      %2320 = vmatprep.subr.bf16.mxu0 0
      %2321 = vmatpush2.bf16.xpose.msra.mxu0 0
      %2322 = vmatprep.subr.bf16.mxu0 0
      %2323 = vmatpush2.bf16.xpose.msra.mxu0 0
      %2324 = vmatprep.subr.bf16.mxu0 0
      %2325 = vmatpush2.bf16.xpose.msra.mxu0 0
      %2326 = vmatprep.subr.bf16.mxu0 0
      %2327 = vmatpush2.bf16.xpose.msra.mxu0 0
      %2328 = vmatprep.subr.bf16.mxu0 0
      %2329 = vmatpush2.bf16.xpose.msra.mxu0 0
      %2330 = vmatprep.subr.bf16.mxu0 0
      %2331 = vmatpush2.bf16.xpose.msra.mxu0 0
      %2332 = vmatprep.mubr.bf16.mxu0 0
      %2333 = vmatmul.mubr.bf16.gmra.mxu0 %v1117
      %v2334 = vpop.f32.mrf.mxu0
      %v2335 = vadd.f32 0.0, %v2334
      %v2336 = vpop.f32.mrf.mxu0
      %v2337 = vpop.f32.mrf.mxu0
      %v2338 = vpop.f32.mrf.mxu0
      %2339 = vdwg.mxu0
      %v2340 = vmul.f32 %v2335, 0.17677669
      %v2341 = vsel %vm824, %v2340, -inf
      %2342 = vmax.xlane.f32.xlu0 %v2341
      %v2343 = vpop.xlane.xlu0 %2342
      %v2344 = vsub.f32 %v2340, %v2343
      %v2345 = vmul.f32 %v2344, 1.442695
      %v2346 = vpow.pop %v2345
      %v2347 = vsel %vm824, %v2346, 0.0
      %2348 = vadd.xlane.f32.xlu0 %v2347
      %v2349 = vpop.xlane.xlu0 %2348
      %v2350 = vrcp.pop %v2349
      %v2351 = vmul.f32 %v2346, %v2350
      %v2352 = vsel %vm1181, %v775, 0
      %v2353 = vpack.c.bf16 %v2351, %v2351
      %v2355 = vsel %vm824, %v2353, 0
      %2357 = vmatprep.subr.bf16.mxu0 0
      %2358 = vmatpush1.bf16.msra.mxu0 0
      %2359 = vmatprep.subr.bf16.mxu0 0
      %2360 = vmatpush1.bf16.msra.mxu0 0
      %2361 = vmatprep.subr.bf16.mxu0 0
      %2362 = vmatpush1.bf16.msra.mxu0 0
      %2363 = vmatprep.subr.bf16.mxu0 0
      %2364 = vmatpush1.bf16.msra.mxu0 0
      %2365 = vmatprep.subr.bf16.mxu0 0
      %2366 = vmatpush1.bf16.msra.mxu0 0
      %2367 = vmatprep.subr.bf16.mxu0 0
      %2368 = vmatpush1.bf16.msra.mxu0 0
      %2369 = vmatprep.subr.bf16.mxu0 0
      %2370 = vmatpush1.bf16.msra.mxu0 0
      %2371 = vmatprep.subr.bf16.mxu0 0
      %2372 = vmatpush1.bf16.msra.mxu0 %v2352
      %2373 = vmatprep.subr.bf16.mxu0 0
      %2374 = vmatpush2.bf16.msra.mxu0 0
      %2375 = vmatprep.subr.bf16.mxu0 0
      %2376 = vmatpush2.bf16.msra.mxu0 0
      %2377 = vmatprep.subr.bf16.mxu0 0
      %2378 = vmatpush2.bf16.msra.mxu0 0
      %2379 = vmatprep.subr.bf16.mxu0 0
      %2380 = vmatpush2.bf16.msra.mxu0 0
      %2381 = vmatprep.subr.bf16.mxu0 0
      %2382 = vmatpush2.bf16.msra.mxu0 0
      %2383 = vmatprep.subr.bf16.mxu0 0
      %2384 = vmatpush2.bf16.msra.mxu0 0
      %2385 = vmatprep.subr.bf16.mxu0 0
      %2386 = vmatpush2.bf16.msra.mxu0 0
      %2387 = vmatprep.subr.bf16.mxu0 0
      %2388 = vmatpush2.bf16.msra.mxu0 0
      %2389 = vmatprep.mubr.bf16.mxu0 0
      %2390 = vmatmul.mubr.bf16.gmra.mxu0 %v2355
      %v2391 = vpop.f32.mrf.mxu0
      %v2392 = vadd.f32 0.0, %v2391
      %v2393 = vpop.f32.mrf.mxu0
      %v2394 = vpop.f32.mrf.mxu0
      %v2395 = vpop.f32.mrf.mxu0
      %2396 = vdwg.mxu0
      %v2397 = vadd.f32 %v2299, %v2392
      %2398 = vmatprep.subr.bf16.mxu0 0
      %2399 = vmatpush1.bf16.xpose.msra.mxu0 0
      %2400 = vmatprep.subr.bf16.mxu0 0
      %2401 = vmatpush1.bf16.xpose.msra.mxu0 0
      %2402 = vmatprep.subr.bf16.mxu0 0
      %2403 = vmatpush1.bf16.xpose.msra.mxu0 0
      %2404 = vmatprep.subr.bf16.mxu0 0
      %2405 = vmatpush1.bf16.xpose.msra.mxu0 0
      %2406 = vmatprep.subr.bf16.mxu0 0
      %2407 = vmatpush1.bf16.xpose.msra.mxu0 0
      %2408 = vmatprep.subr.bf16.mxu0 0
      %2409 = vmatpush1.bf16.xpose.msra.mxu0 0
      %2410 = vmatprep.subr.bf16.mxu0 0
      %2411 = vmatpush1.bf16.xpose.msra.mxu0 0
      %2412 = vmatprep.subr.bf16.mxu0 0
      %2413 = vmatpush1.bf16.xpose.msra.mxu0 %v768
      %2414 = vmatprep.subr.bf16.mxu0 0
      %2415 = vmatpush2.bf16.xpose.msra.mxu0 0
      %2416 = vmatprep.subr.bf16.mxu0 0
      %2417 = vmatpush2.bf16.xpose.msra.mxu0 0
      %2418 = vmatprep.subr.bf16.mxu0 0
      %2419 = vmatpush2.bf16.xpose.msra.mxu0 0
      %2420 = vmatprep.subr.bf16.mxu0 0
      %2421 = vmatpush2.bf16.xpose.msra.mxu0 0
      %2422 = vmatprep.subr.bf16.mxu0 0
      %2423 = vmatpush2.bf16.xpose.msra.mxu0 0
      %2424 = vmatprep.subr.bf16.mxu0 0
      %2425 = vmatpush2.bf16.xpose.msra.mxu0 0
      %2426 = vmatprep.subr.bf16.mxu0 0
      %2427 = vmatpush2.bf16.xpose.msra.mxu0 0
      %2428 = vmatprep.subr.bf16.mxu0 0
      %2429 = vmatpush2.bf16.xpose.msra.mxu0 0
      %2430 = vmatprep.mubr.bf16.mxu0 0
      %2431 = vmatmul.mubr.bf16.gmra.mxu0 %v782
      %v2432 = vpop.f32.mrf.mxu0
      %v2433 = vadd.f32 0.0, %v2432
      %v2434 = vpop.f32.mrf.mxu0
      %v2435 = vpop.f32.mrf.mxu0
      %v2436 = vpop.f32.mrf.mxu0
      %2437 = vdwg.mxu0
      %v2438 = vmul.f32 %v2433, 0.17677669
      %v2439 = vsel %vm824, %v2438, -inf
      %2440 = vmax.xlane.f32.xlu0 %v2439
      %v2441 = vpop.xlane.xlu0 %2440
      %v2442 = vsub.f32 %v2438, %v2441
      %v2443 = vmul.f32 %v2442, 1.442695
      %v2444 = vpow.pop %v2443
      %v2445 = vsel %vm824, %v2444, 0.0
      %2446 = vadd.xlane.f32.xlu0 %v2445
      %v2447 = vpop.xlane.xlu0 %2446
      %v2448 = vrcp.pop %v2447
      %v2449 = vmul.f32 %v2444, %v2448
      %v2450 = vsel %vm847, %v776, 0
      %v2451 = vpack.c.bf16 %v2449, %v2449
      %2452 = vmatprep.subr.bf16.mxu0 0
      %2453 = vmatpush1.bf16.xpose.msra.mxu0 0
      %2454 = vmatprep.subr.bf16.mxu0 0
      %2455 = vmatpush1.bf16.xpose.msra.mxu0 0
      %2456 = vmatprep.subr.bf16.mxu0 0
      %2457 = vmatpush1.bf16.xpose.msra.mxu0 0
      %2458 = vmatprep.subr.bf16.mxu0 0
      %2459 = vmatpush1.bf16.xpose.msra.mxu0 0
      %2460 = vmatprep.subr.bf16.mxu0 0
      %2461 = vmatpush1.bf16.xpose.msra.mxu0 0
      %2462 = vmatprep.subr.bf16.mxu0 0
      %2463 = vmatpush1.bf16.xpose.msra.mxu0 0
      %2464 = vmatprep.subr.bf16.mxu0 0
      %2465 = vmatpush1.bf16.xpose.msra.mxu0 0
      %2466 = vmatprep.subr.bf16.mxu0 0
      %2467 = vmatpush1.bf16.xpose.msra.mxu0 %v768
      %2468 = vmatprep.subr.bf16.mxu0 0
      %2469 = vmatpush2.bf16.xpose.msra.mxu0 0
      %2470 = vmatprep.subr.bf16.mxu0 0
      %2471 = vmatpush2.bf16.xpose.msra.mxu0 0
      %2472 = vmatprep.subr.bf16.mxu0 0
      %2473 = vmatpush2.bf16.xpose.msra.mxu0 0
      %2474 = vmatprep.subr.bf16.mxu0 0
      %2475 = vmatpush2.bf16.xpose.msra.mxu0 0
      %2476 = vmatprep.subr.bf16.mxu0 0
      %2477 = vmatpush2.bf16.xpose.msra.mxu0 0
      %2478 = vmatprep.subr.bf16.mxu0 0
      %2479 = vmatpush2.bf16.xpose.msra.mxu0 0
      %2480 = vmatprep.subr.bf16.mxu0 0
      %2481 = vmatpush2.bf16.xpose.msra.mxu0 0
      %2482 = vmatprep.subr.bf16.mxu0 0
      %2483 = vmatpush2.bf16.xpose.msra.mxu0 0
      %2484 = vmatprep.mubr.bf16.mxu0 0
      %2485 = vmatmul.mubr.bf16.gmra.mxu0 %v851
      %v2486 = vpop.f32.mrf.mxu0
      %v2487 = vadd.f32 0.0, %v2486
      %v2488 = vpop.f32.mrf.mxu0
      %v2489 = vpop.f32.mrf.mxu0
      %v2490 = vpop.f32.mrf.mxu0
      %2491 = vdwg.mxu0
      %v2492 = vmul.f32 %v2487, 0.17677669
      %v2493 = vsel %vm824, %v2492, -inf
      %2494 = vmax.xlane.f32.xlu0 %v2493
      %v2495 = vpop.xlane.xlu0 %2494
      %v2496 = vsub.f32 %v2492, %v2495
      %v2497 = vmul.f32 %v2496, 1.442695
      %v2498 = vpow.pop %v2497
      %v2499 = vsel %vm824, %v2498, 0.0
      %2500 = vadd.xlane.f32.xlu0 %v2499
      %v2501 = vpop.xlane.xlu0 %2500
      %v2502 = vrcp.pop %v2501
      %v2503 = vmul.f32 %v2498, %v2502
      %v2504 = vsel %vm915, %v776, 0
      %v2505 = vpack.c.bf16 %v2503, %v2503
      %v2507 = vsel %vm824, %v2505, 0
      %2509 = vmatprep.subr.bf16.mxu0 0
      %2510 = vmatpush1.bf16.msra.mxu0 0
      %2511 = vmatprep.subr.bf16.mxu0 0
      %2512 = vmatpush1.bf16.msra.mxu0 0
      %2513 = vmatprep.subr.bf16.mxu0 0
      %2514 = vmatpush1.bf16.msra.mxu0 0
      %2515 = vmatprep.subr.bf16.mxu0 0
      %2516 = vmatpush1.bf16.msra.mxu0 0
      %2517 = vmatprep.subr.bf16.mxu0 0
      %2518 = vmatpush1.bf16.msra.mxu0 0
      %2519 = vmatprep.subr.bf16.mxu0 0
      %2520 = vmatpush1.bf16.msra.mxu0 0
      %2521 = vmatprep.subr.bf16.mxu0 0
      %2522 = vmatpush1.bf16.msra.mxu0 0
      %2523 = vmatprep.subr.bf16.mxu0 0
      %2524 = vmatpush1.bf16.msra.mxu0 %v2504
      %2525 = vmatprep.subr.bf16.mxu0 0
      %2526 = vmatpush2.bf16.msra.mxu0 0
      %2527 = vmatprep.subr.bf16.mxu0 0
      %2528 = vmatpush2.bf16.msra.mxu0 0
      %2529 = vmatprep.subr.bf16.mxu0 0
      %2530 = vmatpush2.bf16.msra.mxu0 0
      %2531 = vmatprep.subr.bf16.mxu0 0
      %2532 = vmatpush2.bf16.msra.mxu0 0
      %2533 = vmatprep.subr.bf16.mxu0 0
      %2534 = vmatpush2.bf16.msra.mxu0 0
      %2535 = vmatprep.subr.bf16.mxu0 0
      %2536 = vmatpush2.bf16.msra.mxu0 0
      %2537 = vmatprep.subr.bf16.mxu0 0
      %2538 = vmatpush2.bf16.msra.mxu0 0
      %2539 = vmatprep.subr.bf16.mxu0 0
      %2540 = vmatpush2.bf16.msra.mxu0 0
      %2541 = vmatprep.mubr.bf16.mxu0 0
      %2542 = vmatmul.mubr.bf16.gmra.mxu0 %v2507
      %v2543 = vpop.f32.mrf.mxu0
      %v2544 = vadd.f32 0.0, %v2543
      %v2545 = vpop.f32.mrf.mxu0
      %v2546 = vpop.f32.mrf.mxu0
      %v2547 = vpop.f32.mrf.mxu0
      %2548 = vdwg.mxu0
      %v2550 = vsel %vm824, %v2451, 0
      %2552 = vmatprep.subr.bf16.mxu0 0
      %2553 = vmatpush1.bf16.msra.mxu0 0
      %2554 = vmatprep.subr.bf16.mxu0 0
      %2555 = vmatpush1.bf16.msra.mxu0 0
      %2556 = vmatprep.subr.bf16.mxu0 0
      %2557 = vmatpush1.bf16.msra.mxu0 0
      %2558 = vmatprep.subr.bf16.mxu0 0
      %2559 = vmatpush1.bf16.msra.mxu0 0
      %2560 = vmatprep.subr.bf16.mxu0 0
      %2561 = vmatpush1.bf16.msra.mxu0 0
      %2562 = vmatprep.subr.bf16.mxu0 0
      %2563 = vmatpush1.bf16.msra.mxu0 0
      %2564 = vmatprep.subr.bf16.mxu0 0
      %2565 = vmatpush1.bf16.msra.mxu0 0
      %2566 = vmatprep.subr.bf16.mxu0 0
      %2567 = vmatpush1.bf16.msra.mxu0 %v2450
      %2568 = vmatprep.subr.bf16.mxu0 0
      %2569 = vmatpush2.bf16.msra.mxu0 0
      %2570 = vmatprep.subr.bf16.mxu0 0
      %2571 = vmatpush2.bf16.msra.mxu0 0
      %2572 = vmatprep.subr.bf16.mxu0 0
      %2573 = vmatpush2.bf16.msra.mxu0 0
      %2574 = vmatprep.subr.bf16.mxu0 0
      %2575 = vmatpush2.bf16.msra.mxu0 0
      %2576 = vmatprep.subr.bf16.mxu0 0
      %2577 = vmatpush2.bf16.msra.mxu0 0
      %2578 = vmatprep.subr.bf16.mxu0 0
      %2579 = vmatpush2.bf16.msra.mxu0 0
      %2580 = vmatprep.subr.bf16.mxu0 0
      %2581 = vmatpush2.bf16.msra.mxu0 0
      %2582 = vmatprep.subr.bf16.mxu0 0
      %2583 = vmatpush2.bf16.msra.mxu0 0
      %2584 = vmatprep.mubr.bf16.mxu0 0
      %2585 = vmatmul.mubr.bf16.gmra.mxu0 %v2550
      %v2586 = vpop.f32.mrf.mxu0
      %v2587 = vadd.f32 %v2544, %v2586
      %v2588 = vpop.f32.mrf.mxu0
      %v2589 = vpop.f32.mrf.mxu0
      %v2590 = vpop.f32.mrf.mxu0
      %2591 = vdwg.mxu0
      %2592 = vmatprep.subr.bf16.mxu0 0
      %2593 = vmatpush1.bf16.xpose.msra.mxu0 0
      %2594 = vmatprep.subr.bf16.mxu0 0
      %2595 = vmatpush1.bf16.xpose.msra.mxu0 0
      %2596 = vmatprep.subr.bf16.mxu0 0
      %2597 = vmatpush1.bf16.xpose.msra.mxu0 0
      %2598 = vmatprep.subr.bf16.mxu0 0
      %2599 = vmatpush1.bf16.xpose.msra.mxu0 0
      %2600 = vmatprep.subr.bf16.mxu0 0
      %2601 = vmatpush1.bf16.xpose.msra.mxu0 0
      %2602 = vmatprep.subr.bf16.mxu0 0
      %2603 = vmatpush1.bf16.xpose.msra.mxu0 0
      %2604 = vmatprep.subr.bf16.mxu0 0
      %2605 = vmatpush1.bf16.xpose.msra.mxu0 0
      %2606 = vmatprep.subr.bf16.mxu0 0
      %2607 = vmatpush1.bf16.xpose.msra.mxu0 %v768
      %2608 = vmatprep.subr.bf16.mxu0 0
      %2609 = vmatpush2.bf16.xpose.msra.mxu0 0
      %2610 = vmatprep.subr.bf16.mxu0 0
      %2611 = vmatpush2.bf16.xpose.msra.mxu0 0
      %2612 = vmatprep.subr.bf16.mxu0 0
      %2613 = vmatpush2.bf16.xpose.msra.mxu0 0
      %2614 = vmatprep.subr.bf16.mxu0 0
      %2615 = vmatpush2.bf16.xpose.msra.mxu0 0
      %2616 = vmatprep.subr.bf16.mxu0 0
      %2617 = vmatpush2.bf16.xpose.msra.mxu0 0
      %2618 = vmatprep.subr.bf16.mxu0 0
      %2619 = vmatpush2.bf16.xpose.msra.mxu0 0
      %2620 = vmatprep.subr.bf16.mxu0 0
      %2621 = vmatpush2.bf16.xpose.msra.mxu0 0
      %2622 = vmatprep.subr.bf16.mxu0 0
      %2623 = vmatpush2.bf16.xpose.msra.mxu0 0
      %2624 = vmatprep.mubr.bf16.mxu0 0
      %2625 = vmatmul.mubr.bf16.gmra.mxu0 %v1005
      %v2626 = vpop.f32.mrf.mxu0
      %v2627 = vadd.f32 0.0, %v2626
      %v2628 = vpop.f32.mrf.mxu0
      %v2629 = vpop.f32.mrf.mxu0
      %v2630 = vpop.f32.mrf.mxu0
      %2631 = vdwg.mxu0
      %v2632 = vmul.f32 %v2627, 0.17677669
      %v2633 = vsel %vm824, %v2632, -inf
      %2634 = vmax.xlane.f32.xlu0 %v2633
      %v2635 = vpop.xlane.xlu0 %2634
      %v2636 = vsub.f32 %v2632, %v2635
      %v2637 = vmul.f32 %v2636, 1.442695
      %v2638 = vpow.pop %v2637
      %v2639 = vsel %vm824, %v2638, 0.0
      %2640 = vadd.xlane.f32.xlu0 %v2639
      %v2641 = vpop.xlane.xlu0 %2640
      %v2642 = vrcp.pop %v2641
      %v2643 = vmul.f32 %v2638, %v2642
      %v2644 = vsel %vm1069, %v776, 0
      %v2645 = vpack.c.bf16 %v2643, %v2643
      %v2647 = vsel %vm824, %v2645, 0
      %2649 = vmatprep.subr.bf16.mxu0 0
      %2650 = vmatpush1.bf16.msra.mxu0 0
      %2651 = vmatprep.subr.bf16.mxu0 0
      %2652 = vmatpush1.bf16.msra.mxu0 0
      %2653 = vmatprep.subr.bf16.mxu0 0
      %2654 = vmatpush1.bf16.msra.mxu0 0
      %2655 = vmatprep.subr.bf16.mxu0 0
      %2656 = vmatpush1.bf16.msra.mxu0 0
      %2657 = vmatprep.subr.bf16.mxu0 0
      %2658 = vmatpush1.bf16.msra.mxu0 0
      %2659 = vmatprep.subr.bf16.mxu0 0
      %2660 = vmatpush1.bf16.msra.mxu0 0
      %2661 = vmatprep.subr.bf16.mxu0 0
      %2662 = vmatpush1.bf16.msra.mxu0 0
      %2663 = vmatprep.subr.bf16.mxu0 0
      %2664 = vmatpush1.bf16.msra.mxu0 %v2644
      %2665 = vmatprep.subr.bf16.mxu0 0
      %2666 = vmatpush2.bf16.msra.mxu0 0
      %2667 = vmatprep.subr.bf16.mxu0 0
      %2668 = vmatpush2.bf16.msra.mxu0 0
      %2669 = vmatprep.subr.bf16.mxu0 0
      %2670 = vmatpush2.bf16.msra.mxu0 0
      %2671 = vmatprep.subr.bf16.mxu0 0
      %2672 = vmatpush2.bf16.msra.mxu0 0
      %2673 = vmatprep.subr.bf16.mxu0 0
      %2674 = vmatpush2.bf16.msra.mxu0 0
      %2675 = vmatprep.subr.bf16.mxu0 0
      %2676 = vmatpush2.bf16.msra.mxu0 0
      %2677 = vmatprep.subr.bf16.mxu0 0
      %2678 = vmatpush2.bf16.msra.mxu0 0
      %2679 = vmatprep.subr.bf16.mxu0 0
      %2680 = vmatpush2.bf16.msra.mxu0 0
      %2681 = vmatprep.mubr.bf16.mxu0 0
      %2682 = vmatmul.mubr.bf16.gmra.mxu0 %v2647
      %v2683 = vpop.f32.mrf.mxu0
      %v2684 = vadd.f32 0.0, %v2683
      %v2685 = vpop.f32.mrf.mxu0
      %v2686 = vpop.f32.mrf.mxu0
      %v2687 = vpop.f32.mrf.mxu0
      %2688 = vdwg.mxu0
      %v2689 = vadd.f32 %v2587, %v2684
      %2690 = vmatprep.subr.bf16.mxu0 0
      %2691 = vmatpush1.bf16.xpose.msra.mxu0 0
      %2692 = vmatprep.subr.bf16.mxu0 0
      %2693 = vmatpush1.bf16.xpose.msra.mxu0 0
      %2694 = vmatprep.subr.bf16.mxu0 0
      %2695 = vmatpush1.bf16.xpose.msra.mxu0 0
      %2696 = vmatprep.subr.bf16.mxu0 0
      %2697 = vmatpush1.bf16.xpose.msra.mxu0 0
      %2698 = vmatprep.subr.bf16.mxu0 0
      %2699 = vmatpush1.bf16.xpose.msra.mxu0 0
      %2700 = vmatprep.subr.bf16.mxu0 0
      %2701 = vmatpush1.bf16.xpose.msra.mxu0 0
      %2702 = vmatprep.subr.bf16.mxu0 0
      %2703 = vmatpush1.bf16.xpose.msra.mxu0 0
      %2704 = vmatprep.subr.bf16.mxu0 0
      %2705 = vmatpush1.bf16.xpose.msra.mxu0 %v768
      %2706 = vmatprep.subr.bf16.mxu0 0
      %2707 = vmatpush2.bf16.xpose.msra.mxu0 0
      %2708 = vmatprep.subr.bf16.mxu0 0
      %2709 = vmatpush2.bf16.xpose.msra.mxu0 0
      %2710 = vmatprep.subr.bf16.mxu0 0
      %2711 = vmatpush2.bf16.xpose.msra.mxu0 0
      %2712 = vmatprep.subr.bf16.mxu0 0
      %2713 = vmatpush2.bf16.xpose.msra.mxu0 0
      %2714 = vmatprep.subr.bf16.mxu0 0
      %2715 = vmatpush2.bf16.xpose.msra.mxu0 0
      %2716 = vmatprep.subr.bf16.mxu0 0
      %2717 = vmatpush2.bf16.xpose.msra.mxu0 0
      %2718 = vmatprep.subr.bf16.mxu0 0
      %2719 = vmatpush2.bf16.xpose.msra.mxu0 0
      %2720 = vmatprep.subr.bf16.mxu0 0
      %2721 = vmatpush2.bf16.xpose.msra.mxu0 0
      %2722 = vmatprep.mubr.bf16.mxu0 0
      %2723 = vmatmul.mubr.bf16.gmra.mxu0 %v1117
      %v2724 = vpop.f32.mrf.mxu0
      %v2725 = vadd.f32 0.0, %v2724
      %v2726 = vpop.f32.mrf.mxu0
      %v2727 = vpop.f32.mrf.mxu0
      %v2728 = vpop.f32.mrf.mxu0
      %2729 = vdwg.mxu0
      %v2730 = vmul.f32 %v2725, 0.17677669
      %v2731 = vsel %vm824, %v2730, -inf
      %2732 = vmax.xlane.f32.xlu0 %v2731
      %v2733 = vpop.xlane.xlu0 %2732
      %v2734 = vsub.f32 %v2730, %v2733
      %v2735 = vmul.f32 %v2734, 1.442695
      %v2736 = vpow.pop %v2735
      %v2737 = vsel %vm824, %v2736, 0.0
      %2738 = vadd.xlane.f32.xlu0 %v2737
      %v2739 = vpop.xlane.xlu0 %2738
      %v2740 = vrcp.pop %v2739
      %v2741 = vmul.f32 %v2736, %v2740
      %v2742 = vsel %vm1181, %v776, 0
      %v2743 = vpack.c.bf16 %v2741, %v2741
      %v2745 = vsel %vm824, %v2743, 0
      %2747 = vmatprep.subr.bf16.mxu0 0
      %2748 = vmatpush1.bf16.msra.mxu0 0
      %2749 = vmatprep.subr.bf16.mxu0 0
      %2750 = vmatpush1.bf16.msra.mxu0 0
      %2751 = vmatprep.subr.bf16.mxu0 0
      %2752 = vmatpush1.bf16.msra.mxu0 0
      %2753 = vmatprep.subr.bf16.mxu0 0
      %2754 = vmatpush1.bf16.msra.mxu0 0
      %2755 = vmatprep.subr.bf16.mxu0 0
      %2756 = vmatpush1.bf16.msra.mxu0 0
      %2757 = vmatprep.subr.bf16.mxu0 0
      %2758 = vmatpush1.bf16.msra.mxu0 0
      %2759 = vmatprep.subr.bf16.mxu0 0
      %2760 = vmatpush1.bf16.msra.mxu0 0
      %2761 = vmatprep.subr.bf16.mxu0 0
      %2762 = vmatpush1.bf16.msra.mxu0 %v2742
      %2763 = vmatprep.subr.bf16.mxu0 0
      %2764 = vmatpush2.bf16.msra.mxu0 0
      %2765 = vmatprep.subr.bf16.mxu0 0
      %2766 = vmatpush2.bf16.msra.mxu0 0
      %2767 = vmatprep.subr.bf16.mxu0 0
      %2768 = vmatpush2.bf16.msra.mxu0 0
      %2769 = vmatprep.subr.bf16.mxu0 0
      %2770 = vmatpush2.bf16.msra.mxu0 0
      %2771 = vmatprep.subr.bf16.mxu0 0
      %2772 = vmatpush2.bf16.msra.mxu0 0
      %2773 = vmatprep.subr.bf16.mxu0 0
      %2774 = vmatpush2.bf16.msra.mxu0 0
      %2775 = vmatprep.subr.bf16.mxu0 0
      %2776 = vmatpush2.bf16.msra.mxu0 0
      %2777 = vmatprep.subr.bf16.mxu0 0
      %2778 = vmatpush2.bf16.msra.mxu0 0
      %2779 = vmatprep.mubr.bf16.mxu0 0
      %2780 = vmatmul.mubr.bf16.gmra.mxu0 %v2745
      %v2781 = vpop.f32.mrf.mxu0
      %v2782 = vadd.f32 0.0, %v2781
      %v2783 = vpop.f32.mrf.mxu0
      %v2784 = vpop.f32.mrf.mxu0
      %v2785 = vpop.f32.mrf.mxu0
      %2786 = vdwg.mxu0
      %v2787 = vadd.f32 %v2689, %v2782
      %2788 = vmatprep.subr.bf16.mxu0 0
      %2789 = vmatpush1.bf16.xpose.msra.mxu0 0
      %2790 = vmatprep.subr.bf16.mxu0 0
      %2791 = vmatpush1.bf16.xpose.msra.mxu0 0
      %2792 = vmatprep.subr.bf16.mxu0 0
      %2793 = vmatpush1.bf16.xpose.msra.mxu0 0
      %2794 = vmatprep.subr.bf16.mxu0 0
      %2795 = vmatpush1.bf16.xpose.msra.mxu0 0
      %2796 = vmatprep.subr.bf16.mxu0 0
      %2797 = vmatpush1.bf16.xpose.msra.mxu0 0
      %2798 = vmatprep.subr.bf16.mxu0 0
      %2799 = vmatpush1.bf16.xpose.msra.mxu0 0
      %2800 = vmatprep.subr.bf16.mxu0 0
      %2801 = vmatpush1.bf16.xpose.msra.mxu0 0
      %2802 = vmatprep.subr.bf16.mxu0 0
      %2803 = vmatpush1.bf16.xpose.msra.mxu0 %v769
      %2804 = vmatprep.subr.bf16.mxu0 0
      %2805 = vmatpush2.bf16.xpose.msra.mxu0 0
      %2806 = vmatprep.subr.bf16.mxu0 0
      %2807 = vmatpush2.bf16.xpose.msra.mxu0 0
      %2808 = vmatprep.subr.bf16.mxu0 0
      %2809 = vmatpush2.bf16.xpose.msra.mxu0 0
      %2810 = vmatprep.subr.bf16.mxu0 0
      %2811 = vmatpush2.bf16.xpose.msra.mxu0 0
      %2812 = vmatprep.subr.bf16.mxu0 0
      %2813 = vmatpush2.bf16.xpose.msra.mxu0 0
      %2814 = vmatprep.subr.bf16.mxu0 0
      %2815 = vmatpush2.bf16.xpose.msra.mxu0 0
      %2816 = vmatprep.subr.bf16.mxu0 0
      %2817 = vmatpush2.bf16.xpose.msra.mxu0 0
      %2818 = vmatprep.subr.bf16.mxu0 0
      %2819 = vmatpush2.bf16.xpose.msra.mxu0 0
      %2820 = vmatprep.mubr.bf16.mxu0 0
      %2821 = vmatmul.mubr.bf16.gmra.mxu0 %v782
      %v2822 = vpop.f32.mrf.mxu0
      %v2823 = vadd.f32 0.0, %v2822
      %v2824 = vpop.f32.mrf.mxu0
      %v2825 = vpop.f32.mrf.mxu0
      %v2826 = vpop.f32.mrf.mxu0
      %2827 = vdwg.mxu0
      %v2828 = vmul.f32 %v2823, 0.17677669
      %v2829 = vsel %vm824, %v2828, -inf
      %2830 = vmax.xlane.f32.xlu0 %v2829
      %v2831 = vpop.xlane.xlu0 %2830
      %v2832 = vsub.f32 %v2828, %v2831
      %v2833 = vmul.f32 %v2832, 1.442695
      %v2834 = vpow.pop %v2833
      %v2835 = vsel %vm824, %v2834, 0.0
      %2836 = vadd.xlane.f32.xlu0 %v2835
      %v2837 = vpop.xlane.xlu0 %2836
      %v2838 = vrcp.pop %v2837
      %v2839 = vmul.f32 %v2834, %v2838
      %v2840 = vsel %vm847, %v777, 0
      %v2841 = vpack.c.bf16 %v2839, %v2839
      %2842 = vmatprep.subr.bf16.mxu0 0
      %2843 = vmatpush1.bf16.xpose.msra.mxu0 0
      %2844 = vmatprep.subr.bf16.mxu0 0
      %2845 = vmatpush1.bf16.xpose.msra.mxu0 0
      %2846 = vmatprep.subr.bf16.mxu0 0
      %2847 = vmatpush1.bf16.xpose.msra.mxu0 0
      %2848 = vmatprep.subr.bf16.mxu0 0
      %2849 = vmatpush1.bf16.xpose.msra.mxu0 0
      %2850 = vmatprep.subr.bf16.mxu0 0
      %2851 = vmatpush1.bf16.xpose.msra.mxu0 0
      %2852 = vmatprep.subr.bf16.mxu0 0
      %2853 = vmatpush1.bf16.xpose.msra.mxu0 0
      %2854 = vmatprep.subr.bf16.mxu0 0
      %2855 = vmatpush1.bf16.xpose.msra.mxu0 0
      %2856 = vmatprep.subr.bf16.mxu0 0
      %2857 = vmatpush1.bf16.xpose.msra.mxu0 %v769
      %2858 = vmatprep.subr.bf16.mxu0 0
      %2859 = vmatpush2.bf16.xpose.msra.mxu0 0
      %2860 = vmatprep.subr.bf16.mxu0 0
      %2861 = vmatpush2.bf16.xpose.msra.mxu0 0
      %2862 = vmatprep.subr.bf16.mxu0 0
      %2863 = vmatpush2.bf16.xpose.msra.mxu0 0
      %2864 = vmatprep.subr.bf16.mxu0 0
      %2865 = vmatpush2.bf16.xpose.msra.mxu0 0
      %2866 = vmatprep.subr.bf16.mxu0 0
      %2867 = vmatpush2.bf16.xpose.msra.mxu0 0
      %2868 = vmatprep.subr.bf16.mxu0 0
      %2869 = vmatpush2.bf16.xpose.msra.mxu0 0
      %2870 = vmatprep.subr.bf16.mxu0 0
      %2871 = vmatpush2.bf16.xpose.msra.mxu0 0
      %2872 = vmatprep.subr.bf16.mxu0 0
      %2873 = vmatpush2.bf16.xpose.msra.mxu0 0
      %2874 = vmatprep.mubr.bf16.mxu0 0
      %2875 = vmatmul.mubr.bf16.gmra.mxu0 %v851
      %v2876 = vpop.f32.mrf.mxu0
      %v2877 = vadd.f32 0.0, %v2876
      %v2878 = vpop.f32.mrf.mxu0
      %v2879 = vpop.f32.mrf.mxu0
      %v2880 = vpop.f32.mrf.mxu0
      %2881 = vdwg.mxu0
      %v2882 = vmul.f32 %v2877, 0.17677669
      %v2883 = vsel %vm824, %v2882, -inf
      %2884 = vmax.xlane.f32.xlu0 %v2883
      %v2885 = vpop.xlane.xlu0 %2884
      %v2886 = vsub.f32 %v2882, %v2885
      %v2887 = vmul.f32 %v2886, 1.442695
      %v2888 = vpow.pop %v2887
      %v2889 = vsel %vm824, %v2888, 0.0
      %2890 = vadd.xlane.f32.xlu0 %v2889
      %v2891 = vpop.xlane.xlu0 %2890
      %v2892 = vrcp.pop %v2891
      %v2893 = vmul.f32 %v2888, %v2892
      %v2894 = vsel %vm915, %v777, 0
      %v2895 = vpack.c.bf16 %v2893, %v2893
      %v2897 = vsel %vm824, %v2895, 0
      %2899 = vmatprep.subr.bf16.mxu0 0
      %2900 = vmatpush1.bf16.msra.mxu0 0
      %2901 = vmatprep.subr.bf16.mxu0 0
      %2902 = vmatpush1.bf16.msra.mxu0 0
      %2903 = vmatprep.subr.bf16.mxu0 0
      %2904 = vmatpush1.bf16.msra.mxu0 0
      %2905 = vmatprep.subr.bf16.mxu0 0
      %2906 = vmatpush1.bf16.msra.mxu0 0
      %2907 = vmatprep.subr.bf16.mxu0 0
      %2908 = vmatpush1.bf16.msra.mxu0 0
      %2909 = vmatprep.subr.bf16.mxu0 0
      %2910 = vmatpush1.bf16.msra.mxu0 0
      %2911 = vmatprep.subr.bf16.mxu0 0
      %2912 = vmatpush1.bf16.msra.mxu0 0
      %2913 = vmatprep.subr.bf16.mxu0 0
      %2914 = vmatpush1.bf16.msra.mxu0 %v2894
      %2915 = vmatprep.subr.bf16.mxu0 0
      %2916 = vmatpush2.bf16.msra.mxu0 0
      %2917 = vmatprep.subr.bf16.mxu0 0
      %2918 = vmatpush2.bf16.msra.mxu0 0
      %2919 = vmatprep.subr.bf16.mxu0 0
      %2920 = vmatpush2.bf16.msra.mxu0 0
      %2921 = vmatprep.subr.bf16.mxu0 0
      %2922 = vmatpush2.bf16.msra.mxu0 0
      %2923 = vmatprep.subr.bf16.mxu0 0
      %2924 = vmatpush2.bf16.msra.mxu0 0
      %2925 = vmatprep.subr.bf16.mxu0 0
      %2926 = vmatpush2.bf16.msra.mxu0 0
      %2927 = vmatprep.subr.bf16.mxu0 0
      %2928 = vmatpush2.bf16.msra.mxu0 0
      %2929 = vmatprep.subr.bf16.mxu0 0
      %2930 = vmatpush2.bf16.msra.mxu0 0
      %2931 = vmatprep.mubr.bf16.mxu0 0
      %2932 = vmatmul.mubr.bf16.gmra.mxu0 %v2897
      %v2933 = vpop.f32.mrf.mxu0
      %v2934 = vadd.f32 0.0, %v2933
      %v2935 = vpop.f32.mrf.mxu0
      %v2936 = vpop.f32.mrf.mxu0
      %v2937 = vpop.f32.mrf.mxu0
      %2938 = vdwg.mxu0
      %v2940 = vsel %vm824, %v2841, 0
      %2942 = vmatprep.subr.bf16.mxu0 0
      %2943 = vmatpush1.bf16.msra.mxu0 0
      %2944 = vmatprep.subr.bf16.mxu0 0
      %2945 = vmatpush1.bf16.msra.mxu0 0
      %2946 = vmatprep.subr.bf16.mxu0 0
      %2947 = vmatpush1.bf16.msra.mxu0 0
      %2948 = vmatprep.subr.bf16.mxu0 0
      %2949 = vmatpush1.bf16.msra.mxu0 0
      %2950 = vmatprep.subr.bf16.mxu0 0
      %2951 = vmatpush1.bf16.msra.mxu0 0
      %2952 = vmatprep.subr.bf16.mxu0 0
      %2953 = vmatpush1.bf16.msra.mxu0 0
      %2954 = vmatprep.subr.bf16.mxu0 0
      %2955 = vmatpush1.bf16.msra.mxu0 0
      %2956 = vmatprep.subr.bf16.mxu0 0
      %2957 = vmatpush1.bf16.msra.mxu0 %v2840
      %2958 = vmatprep.subr.bf16.mxu0 0
      %2959 = vmatpush2.bf16.msra.mxu0 0
      %2960 = vmatprep.subr.bf16.mxu0 0
      %2961 = vmatpush2.bf16.msra.mxu0 0
      %2962 = vmatprep.subr.bf16.mxu0 0
      %2963 = vmatpush2.bf16.msra.mxu0 0
      %2964 = vmatprep.subr.bf16.mxu0 0
      %2965 = vmatpush2.bf16.msra.mxu0 0
      %2966 = vmatprep.subr.bf16.mxu0 0
      %2967 = vmatpush2.bf16.msra.mxu0 0
      %2968 = vmatprep.subr.bf16.mxu0 0
      %2969 = vmatpush2.bf16.msra.mxu0 0
      %2970 = vmatprep.subr.bf16.mxu0 0
      %2971 = vmatpush2.bf16.msra.mxu0 0
      %2972 = vmatprep.subr.bf16.mxu0 0
      %2973 = vmatpush2.bf16.msra.mxu0 0
      %2974 = vmatprep.mubr.bf16.mxu0 0
      %2975 = vmatmul.mubr.bf16.gmra.mxu0 %v2940
      %v2976 = vpop.f32.mrf.mxu0
      %v2977 = vadd.f32 %v2934, %v2976
      %v2978 = vpop.f32.mrf.mxu0
      %v2979 = vpop.f32.mrf.mxu0
      %v2980 = vpop.f32.mrf.mxu0
      %2981 = vdwg.mxu0
      %2982 = vmatprep.subr.bf16.mxu0 0
      %2983 = vmatpush1.bf16.xpose.msra.mxu0 0
      %2984 = vmatprep.subr.bf16.mxu0 0
      %2985 = vmatpush1.bf16.xpose.msra.mxu0 0
      %2986 = vmatprep.subr.bf16.mxu0 0
      %2987 = vmatpush1.bf16.xpose.msra.mxu0 0
      %2988 = vmatprep.subr.bf16.mxu0 0
      %2989 = vmatpush1.bf16.xpose.msra.mxu0 0
      %2990 = vmatprep.subr.bf16.mxu0 0
      %2991 = vmatpush1.bf16.xpose.msra.mxu0 0
      %2992 = vmatprep.subr.bf16.mxu0 0
      %2993 = vmatpush1.bf16.xpose.msra.mxu0 0
      %2994 = vmatprep.subr.bf16.mxu0 0
      %2995 = vmatpush1.bf16.xpose.msra.mxu0 0
      %2996 = vmatprep.subr.bf16.mxu0 0
      %2997 = vmatpush1.bf16.xpose.msra.mxu0 %v769
      %2998 = vmatprep.subr.bf16.mxu0 0
      %2999 = vmatpush2.bf16.xpose.msra.mxu0 0
      %3000 = vmatprep.subr.bf16.mxu0 0
      %3001 = vmatpush2.bf16.xpose.msra.mxu0 0
      %3002 = vmatprep.subr.bf16.mxu0 0
      %3003 = vmatpush2.bf16.xpose.msra.mxu0 0
      %3004 = vmatprep.subr.bf16.mxu0 0
      %3005 = vmatpush2.bf16.xpose.msra.mxu0 0
      %3006 = vmatprep.subr.bf16.mxu0 0
      %3007 = vmatpush2.bf16.xpose.msra.mxu0 0
      %3008 = vmatprep.subr.bf16.mxu0 0
      %3009 = vmatpush2.bf16.xpose.msra.mxu0 0
      %3010 = vmatprep.subr.bf16.mxu0 0
      %3011 = vmatpush2.bf16.xpose.msra.mxu0 0
      %3012 = vmatprep.subr.bf16.mxu0 0
      %3013 = vmatpush2.bf16.xpose.msra.mxu0 0
      %3014 = vmatprep.mubr.bf16.mxu0 0
      %3015 = vmatmul.mubr.bf16.gmra.mxu0 %v1005
      %v3016 = vpop.f32.mrf.mxu0
      %v3017 = vadd.f32 0.0, %v3016
      %v3018 = vpop.f32.mrf.mxu0
      %v3019 = vpop.f32.mrf.mxu0
      %v3020 = vpop.f32.mrf.mxu0
      %3021 = vdwg.mxu0
      %v3022 = vmul.f32 %v3017, 0.17677669
      %v3023 = vsel %vm824, %v3022, -inf
      %3024 = vmax.xlane.f32.xlu0 %v3023
      %v3025 = vpop.xlane.xlu0 %3024
      %v3026 = vsub.f32 %v3022, %v3025
      %v3027 = vmul.f32 %v3026, 1.442695
      %v3028 = vpow.pop %v3027
      %v3029 = vsel %vm824, %v3028, 0.0
      %3030 = vadd.xlane.f32.xlu0 %v3029
      %v3031 = vpop.xlane.xlu0 %3030
      %v3032 = vrcp.pop %v3031
      %v3033 = vmul.f32 %v3028, %v3032
      %v3034 = vsel %vm1069, %v777, 0
      %v3035 = vpack.c.bf16 %v3033, %v3033
      %v3037 = vsel %vm824, %v3035, 0
      %3039 = vmatprep.subr.bf16.mxu0 0
      %3040 = vmatpush1.bf16.msra.mxu0 0
      %3041 = vmatprep.subr.bf16.mxu0 0
      %3042 = vmatpush1.bf16.msra.mxu0 0
      %3043 = vmatprep.subr.bf16.mxu0 0
      %3044 = vmatpush1.bf16.msra.mxu0 0
      %3045 = vmatprep.subr.bf16.mxu0 0
      %3046 = vmatpush1.bf16.msra.mxu0 0
      %3047 = vmatprep.subr.bf16.mxu0 0
      %3048 = vmatpush1.bf16.msra.mxu0 0
      %3049 = vmatprep.subr.bf16.mxu0 0
      %3050 = vmatpush1.bf16.msra.mxu0 0
      %3051 = vmatprep.subr.bf16.mxu0 0
      %3052 = vmatpush1.bf16.msra.mxu0 0
      %3053 = vmatprep.subr.bf16.mxu0 0
      %3054 = vmatpush1.bf16.msra.mxu0 %v3034
      %3055 = vmatprep.subr.bf16.mxu0 0
      %3056 = vmatpush2.bf16.msra.mxu0 0
      %3057 = vmatprep.subr.bf16.mxu0 0
      %3058 = vmatpush2.bf16.msra.mxu0 0
      %3059 = vmatprep.subr.bf16.mxu0 0
      %3060 = vmatpush2.bf16.msra.mxu0 0
      %3061 = vmatprep.subr.bf16.mxu0 0
      %3062 = vmatpush2.bf16.msra.mxu0 0
      %3063 = vmatprep.subr.bf16.mxu0 0
      %3064 = vmatpush2.bf16.msra.mxu0 0
      %3065 = vmatprep.subr.bf16.mxu0 0
      %3066 = vmatpush2.bf16.msra.mxu0 0
      %3067 = vmatprep.subr.bf16.mxu0 0
      %3068 = vmatpush2.bf16.msra.mxu0 0
      %3069 = vmatprep.subr.bf16.mxu0 0
      %3070 = vmatpush2.bf16.msra.mxu0 0
      %3071 = vmatprep.mubr.bf16.mxu0 0
      %3072 = vmatmul.mubr.bf16.gmra.mxu0 %v3037
      %v3073 = vpop.f32.mrf.mxu0
      %v3074 = vadd.f32 0.0, %v3073
      %v3075 = vpop.f32.mrf.mxu0
      %v3076 = vpop.f32.mrf.mxu0
      %v3077 = vpop.f32.mrf.mxu0
      %3078 = vdwg.mxu0
      %v3079 = vadd.f32 %v2977, %v3074
      %3080 = vmatprep.subr.bf16.mxu0 0
      %3081 = vmatpush1.bf16.xpose.msra.mxu0 0
      %3082 = vmatprep.subr.bf16.mxu0 0
      %3083 = vmatpush1.bf16.xpose.msra.mxu0 0
      %3084 = vmatprep.subr.bf16.mxu0 0
      %3085 = vmatpush1.bf16.xpose.msra.mxu0 0
      %3086 = vmatprep.subr.bf16.mxu0 0
      %3087 = vmatpush1.bf16.xpose.msra.mxu0 0
      %3088 = vmatprep.subr.bf16.mxu0 0
      %3089 = vmatpush1.bf16.xpose.msra.mxu0 0
      %3090 = vmatprep.subr.bf16.mxu0 0
      %3091 = vmatpush1.bf16.xpose.msra.mxu0 0
      %3092 = vmatprep.subr.bf16.mxu0 0
      %3093 = vmatpush1.bf16.xpose.msra.mxu0 0
      %3094 = vmatprep.subr.bf16.mxu0 0
      %3095 = vmatpush1.bf16.xpose.msra.mxu0 %v769
      %3096 = vmatprep.subr.bf16.mxu0 0
      %3097 = vmatpush2.bf16.xpose.msra.mxu0 0
      %3098 = vmatprep.subr.bf16.mxu0 0
      %3099 = vmatpush2.bf16.xpose.msra.mxu0 0
      %3100 = vmatprep.subr.bf16.mxu0 0
      %3101 = vmatpush2.bf16.xpose.msra.mxu0 0
      %3102 = vmatprep.subr.bf16.mxu0 0
      %3103 = vmatpush2.bf16.xpose.msra.mxu0 0
      %3104 = vmatprep.subr.bf16.mxu0 0
      %3105 = vmatpush2.bf16.xpose.msra.mxu0 0
      %3106 = vmatprep.subr.bf16.mxu0 0
      %3107 = vmatpush2.bf16.xpose.msra.mxu0 0
      %3108 = vmatprep.subr.bf16.mxu0 0
      %3109 = vmatpush2.bf16.xpose.msra.mxu0 0
      %3110 = vmatprep.subr.bf16.mxu0 0
      %3111 = vmatpush2.bf16.xpose.msra.mxu0 0
      %3112 = vmatprep.mubr.bf16.mxu0 0
      %3113 = vmatmul.mubr.bf16.gmra.mxu0 %v1117
      %v3114 = vpop.f32.mrf.mxu0
      %v3115 = vadd.f32 0.0, %v3114
      %v3116 = vpop.f32.mrf.mxu0
      %v3117 = vpop.f32.mrf.mxu0
      %v3118 = vpop.f32.mrf.mxu0
      %3119 = vdwg.mxu0
      %v3120 = vmul.f32 %v3115, 0.17677669
      %v3121 = vsel %vm824, %v3120, -inf
      %3122 = vmax.xlane.f32.xlu0 %v3121
      %v3123 = vpop.xlane.xlu0 %3122
      %v3124 = vsub.f32 %v3120, %v3123
      %v3125 = vmul.f32 %v3124, 1.442695
      %v3126 = vpow.pop %v3125
      %v3127 = vsel %vm824, %v3126, 0.0
      %3128 = vadd.xlane.f32.xlu0 %v3127
      %v3129 = vpop.xlane.xlu0 %3128
      %v3130 = vrcp.pop %v3129
      %v3131 = vmul.f32 %v3126, %v3130
      %v3132 = vsel %vm1181, %v777, 0
      %v3133 = vpack.c.bf16 %v3131, %v3131
      %v3135 = vsel %vm824, %v3133, 0
      %3137 = vmatprep.subr.bf16.mxu0 0
      %3138 = vmatpush1.bf16.msra.mxu0 0
      %3139 = vmatprep.subr.bf16.mxu0 0
      %3140 = vmatpush1.bf16.msra.mxu0 0
      %3141 = vmatprep.subr.bf16.mxu0 0
      %3142 = vmatpush1.bf16.msra.mxu0 0
      %3143 = vmatprep.subr.bf16.mxu0 0
      %3144 = vmatpush1.bf16.msra.mxu0 0
      %3145 = vmatprep.subr.bf16.mxu0 0
      %3146 = vmatpush1.bf16.msra.mxu0 0
      %3147 = vmatprep.subr.bf16.mxu0 0
      %3148 = vmatpush1.bf16.msra.mxu0 0
      %3149 = vmatprep.subr.bf16.mxu0 0
      %3150 = vmatpush1.bf16.msra.mxu0 0
      %3151 = vmatprep.subr.bf16.mxu0 0
      %3152 = vmatpush1.bf16.msra.mxu0 %v3132
      %3153 = vmatprep.subr.bf16.mxu0 0
      %3154 = vmatpush2.bf16.msra.mxu0 0
      %3155 = vmatprep.subr.bf16.mxu0 0
      %3156 = vmatpush2.bf16.msra.mxu0 0
      %3157 = vmatprep.subr.bf16.mxu0 0
      %3158 = vmatpush2.bf16.msra.mxu0 0
      %3159 = vmatprep.subr.bf16.mxu0 0
      %3160 = vmatpush2.bf16.msra.mxu0 0
      %3161 = vmatprep.subr.bf16.mxu0 0
      %3162 = vmatpush2.bf16.msra.mxu0 0
      %3163 = vmatprep.subr.bf16.mxu0 0
      %3164 = vmatpush2.bf16.msra.mxu0 0
      %3165 = vmatprep.subr.bf16.mxu0 0
      %3166 = vmatpush2.bf16.msra.mxu0 0
      %3167 = vmatprep.subr.bf16.mxu0 0
      %3168 = vmatpush2.bf16.msra.mxu0 0
      %3169 = vmatprep.mubr.bf16.mxu0 0
      %3170 = vmatmul.mubr.bf16.gmra.mxu0 %v3135
      %v3171 = vpop.f32.mrf.mxu0
      %v3172 = vadd.f32 0.0, %v3171
      %v3173 = vpop.f32.mrf.mxu0
      %v3174 = vpop.f32.mrf.mxu0
      %v3175 = vpop.f32.mrf.mxu0
      %3176 = vdwg.mxu0
      %v3177 = vadd.f32 %v3079, %v3172
      %3178 = vmatprep.subr.bf16.mxu0 0
      %3179 = vmatpush1.bf16.xpose.msra.mxu0 0
      %3180 = vmatprep.subr.bf16.mxu0 0
      %3181 = vmatpush1.bf16.xpose.msra.mxu0 0
      %3182 = vmatprep.subr.bf16.mxu0 0
      %3183 = vmatpush1.bf16.xpose.msra.mxu0 0
      %3184 = vmatprep.subr.bf16.mxu0 0
      %3185 = vmatpush1.bf16.xpose.msra.mxu0 0
      %3186 = vmatprep.subr.bf16.mxu0 0
      %3187 = vmatpush1.bf16.xpose.msra.mxu0 0
      %3188 = vmatprep.subr.bf16.mxu0 0
      %3189 = vmatpush1.bf16.xpose.msra.mxu0 0
      %3190 = vmatprep.subr.bf16.mxu0 0
      %3191 = vmatpush1.bf16.xpose.msra.mxu0 0
      %3192 = vmatprep.subr.bf16.mxu0 0
      %3193 = vmatpush1.bf16.xpose.msra.mxu0 %v770
      %3194 = vmatprep.subr.bf16.mxu0 0
      %3195 = vmatpush2.bf16.xpose.msra.mxu0 0
      %3196 = vmatprep.subr.bf16.mxu0 0
      %3197 = vmatpush2.bf16.xpose.msra.mxu0 0
      %3198 = vmatprep.subr.bf16.mxu0 0
      %3199 = vmatpush2.bf16.xpose.msra.mxu0 0
      %3200 = vmatprep.subr.bf16.mxu0 0
      %3201 = vmatpush2.bf16.xpose.msra.mxu0 0
      %3202 = vmatprep.subr.bf16.mxu0 0
      %3203 = vmatpush2.bf16.xpose.msra.mxu0 0
      %3204 = vmatprep.subr.bf16.mxu0 0
      %3205 = vmatpush2.bf16.xpose.msra.mxu0 0
      %3206 = vmatprep.subr.bf16.mxu0 0
      %3207 = vmatpush2.bf16.xpose.msra.mxu0 0
      %3208 = vmatprep.subr.bf16.mxu0 0
      %3209 = vmatpush2.bf16.xpose.msra.mxu0 0
      %3210 = vmatprep.mubr.bf16.mxu0 0
      %3211 = vmatmul.mubr.bf16.gmra.mxu0 %v782
      %v3212 = vpop.f32.mrf.mxu0
      %v3213 = vadd.f32 0.0, %v3212
      %v3214 = vpop.f32.mrf.mxu0
      %v3215 = vpop.f32.mrf.mxu0
      %v3216 = vpop.f32.mrf.mxu0
      %3217 = vdwg.mxu0
      %v3218 = vmul.f32 %v3213, 0.17677669
      %v3219 = vsel %vm824, %v3218, -inf
      %3220 = vmax.xlane.f32.xlu0 %v3219
      %v3221 = vpop.xlane.xlu0 %3220
      %v3222 = vsub.f32 %v3218, %v3221
      %v3223 = vmul.f32 %v3222, 1.442695
      %v3224 = vpow.pop %v3223
      %v3225 = vsel %vm824, %v3224, 0.0
      %3226 = vadd.xlane.f32.xlu0 %v3225
      %v3227 = vpop.xlane.xlu0 %3226
      %v3228 = vrcp.pop %v3227
      %v3229 = vmul.f32 %v3224, %v3228
      %v3230 = vsel %vm847, %v778, 0
      %v3231 = vpack.c.bf16 %v3229, %v3229
      %3232 = vmatprep.subr.bf16.mxu0 0
      %3233 = vmatpush1.bf16.xpose.msra.mxu0 0
      %3234 = vmatprep.subr.bf16.mxu0 0
      %3235 = vmatpush1.bf16.xpose.msra.mxu0 0
      %3236 = vmatprep.subr.bf16.mxu0 0
      %3237 = vmatpush1.bf16.xpose.msra.mxu0 0
      %3238 = vmatprep.subr.bf16.mxu0 0
      %3239 = vmatpush1.bf16.xpose.msra.mxu0 0
      %3240 = vmatprep.subr.bf16.mxu0 0
      %3241 = vmatpush1.bf16.xpose.msra.mxu0 0
      %3242 = vmatprep.subr.bf16.mxu0 0
      %3243 = vmatpush1.bf16.xpose.msra.mxu0 0
      %3244 = vmatprep.subr.bf16.mxu0 0
      %3245 = vmatpush1.bf16.xpose.msra.mxu0 0
      %3246 = vmatprep.subr.bf16.mxu0 0
      %3247 = vmatpush1.bf16.xpose.msra.mxu0 %v770
      %3248 = vmatprep.subr.bf16.mxu0 0
      %3249 = vmatpush2.bf16.xpose.msra.mxu0 0
      %3250 = vmatprep.subr.bf16.mxu0 0
      %3251 = vmatpush2.bf16.xpose.msra.mxu0 0
      %3252 = vmatprep.subr.bf16.mxu0 0
      %3253 = vmatpush2.bf16.xpose.msra.mxu0 0
      %3254 = vmatprep.subr.bf16.mxu0 0
      %3255 = vmatpush2.bf16.xpose.msra.mxu0 0
      %3256 = vmatprep.subr.bf16.mxu0 0
      %3257 = vmatpush2.bf16.xpose.msra.mxu0 0
      %3258 = vmatprep.subr.bf16.mxu0 0
      %3259 = vmatpush2.bf16.xpose.msra.mxu0 0
      %3260 = vmatprep.subr.bf16.mxu0 0
      %3261 = vmatpush2.bf16.xpose.msra.mxu0 0
      %3262 = vmatprep.subr.bf16.mxu0 0
      %3263 = vmatpush2.bf16.xpose.msra.mxu0 0
      %3264 = vmatprep.mubr.bf16.mxu0 0
      %3265 = vmatmul.mubr.bf16.gmra.mxu0 %v851
      %v3266 = vpop.f32.mrf.mxu0
      %v3267 = vadd.f32 0.0, %v3266
      %v3268 = vpop.f32.mrf.mxu0
      %v3269 = vpop.f32.mrf.mxu0
      %v3270 = vpop.f32.mrf.mxu0
      %3271 = vdwg.mxu0
      %v3272 = vmul.f32 %v3267, 0.17677669
      %v3273 = vsel %vm824, %v3272, -inf
      %3274 = vmax.xlane.f32.xlu0 %v3273
      %v3275 = vpop.xlane.xlu0 %3274
      %v3276 = vsub.f32 %v3272, %v3275
      %v3277 = vmul.f32 %v3276, 1.442695
      %v3278 = vpow.pop %v3277
      %v3279 = vsel %vm824, %v3278, 0.0
      %3280 = vadd.xlane.f32.xlu0 %v3279
      %v3281 = vpop.xlane.xlu0 %3280
      %v3282 = vrcp.pop %v3281
      %v3283 = vmul.f32 %v3278, %v3282
      %v3284 = vsel %vm915, %v778, 0
      %v3285 = vpack.c.bf16 %v3283, %v3283
      %v3287 = vsel %vm824, %v3285, 0
      %3289 = vmatprep.subr.bf16.mxu0 0
      %3290 = vmatpush1.bf16.msra.mxu0 0
      %3291 = vmatprep.subr.bf16.mxu0 0
      %3292 = vmatpush1.bf16.msra.mxu0 0
      %3293 = vmatprep.subr.bf16.mxu0 0
      %3294 = vmatpush1.bf16.msra.mxu0 0
      %3295 = vmatprep.subr.bf16.mxu0 0
      %3296 = vmatpush1.bf16.msra.mxu0 0
      %3297 = vmatprep.subr.bf16.mxu0 0
      %3298 = vmatpush1.bf16.msra.mxu0 0
      %3299 = vmatprep.subr.bf16.mxu0 0
      %3300 = vmatpush1.bf16.msra.mxu0 0
      %3301 = vmatprep.subr.bf16.mxu0 0
      %3302 = vmatpush1.bf16.msra.mxu0 0
      %3303 = vmatprep.subr.bf16.mxu0 0
      %3304 = vmatpush1.bf16.msra.mxu0 %v3284
      %3305 = vmatprep.subr.bf16.mxu0 0
      %3306 = vmatpush2.bf16.msra.mxu0 0
      %3307 = vmatprep.subr.bf16.mxu0 0
      %3308 = vmatpush2.bf16.msra.mxu0 0
      %3309 = vmatprep.subr.bf16.mxu0 0
      %3310 = vmatpush2.bf16.msra.mxu0 0
      %3311 = vmatprep.subr.bf16.mxu0 0
      %3312 = vmatpush2.bf16.msra.mxu0 0
      %3313 = vmatprep.subr.bf16.mxu0 0
      %3314 = vmatpush2.bf16.msra.mxu0 0
      %3315 = vmatprep.subr.bf16.mxu0 0
      %3316 = vmatpush2.bf16.msra.mxu0 0
      %3317 = vmatprep.subr.bf16.mxu0 0
      %3318 = vmatpush2.bf16.msra.mxu0 0
      %3319 = vmatprep.subr.bf16.mxu0 0
      %3320 = vmatpush2.bf16.msra.mxu0 0
      %3321 = vmatprep.mubr.bf16.mxu0 0
      %3322 = vmatmul.mubr.bf16.gmra.mxu0 %v3287
      %v3323 = vpop.f32.mrf.mxu0
      %v3324 = vadd.f32 0.0, %v3323
      %v3325 = vpop.f32.mrf.mxu0
      %v3326 = vpop.f32.mrf.mxu0
      %v3327 = vpop.f32.mrf.mxu0
      %3328 = vdwg.mxu0
      %v3330 = vsel %vm824, %v3231, 0
      %3332 = vmatprep.subr.bf16.mxu0 0
      %3333 = vmatpush1.bf16.msra.mxu0 0
      %3334 = vmatprep.subr.bf16.mxu0 0
      %3335 = vmatpush1.bf16.msra.mxu0 0
      %3336 = vmatprep.subr.bf16.mxu0 0
      %3337 = vmatpush1.bf16.msra.mxu0 0
      %3338 = vmatprep.subr.bf16.mxu0 0
      %3339 = vmatpush1.bf16.msra.mxu0 0
      %3340 = vmatprep.subr.bf16.mxu0 0
      %3341 = vmatpush1.bf16.msra.mxu0 0
      %3342 = vmatprep.subr.bf16.mxu0 0
      %3343 = vmatpush1.bf16.msra.mxu0 0
      %3344 = vmatprep.subr.bf16.mxu0 0
      %3345 = vmatpush1.bf16.msra.mxu0 0
      %3346 = vmatprep.subr.bf16.mxu0 0
      %3347 = vmatpush1.bf16.msra.mxu0 %v3230
      %3348 = vmatprep.subr.bf16.mxu0 0
      %3349 = vmatpush2.bf16.msra.mxu0 0
      %3350 = vmatprep.subr.bf16.mxu0 0
      %3351 = vmatpush2.bf16.msra.mxu0 0
      %3352 = vmatprep.subr.bf16.mxu0 0
      %3353 = vmatpush2.bf16.msra.mxu0 0
      %3354 = vmatprep.subr.bf16.mxu0 0
      %3355 = vmatpush2.bf16.msra.mxu0 0
      %3356 = vmatprep.subr.bf16.mxu0 0
      %3357 = vmatpush2.bf16.msra.mxu0 0
      %3358 = vmatprep.subr.bf16.mxu0 0
      %3359 = vmatpush2.bf16.msra.mxu0 0
      %3360 = vmatprep.subr.bf16.mxu0 0
      %3361 = vmatpush2.bf16.msra.mxu0 0
      %3362 = vmatprep.subr.bf16.mxu0 0
      %3363 = vmatpush2.bf16.msra.mxu0 0
      %3364 = vmatprep.mubr.bf16.mxu0 0
      %3365 = vmatmul.mubr.bf16.gmra.mxu0 %v3330
      %v3366 = vpop.f32.mrf.mxu0
      %v3367 = vadd.f32 %v3324, %v3366
      %v3368 = vpop.f32.mrf.mxu0
      %v3369 = vpop.f32.mrf.mxu0
      %v3370 = vpop.f32.mrf.mxu0
      %3371 = vdwg.mxu0
      %3372 = vmatprep.subr.bf16.mxu0 0
      %3373 = vmatpush1.bf16.xpose.msra.mxu0 0
      %3374 = vmatprep.subr.bf16.mxu0 0
      %3375 = vmatpush1.bf16.xpose.msra.mxu0 0
      %3376 = vmatprep.subr.bf16.mxu0 0
      %3377 = vmatpush1.bf16.xpose.msra.mxu0 0
      %3378 = vmatprep.subr.bf16.mxu0 0
      %3379 = vmatpush1.bf16.xpose.msra.mxu0 0
      %3380 = vmatprep.subr.bf16.mxu0 0
      %3381 = vmatpush1.bf16.xpose.msra.mxu0 0
      %3382 = vmatprep.subr.bf16.mxu0 0
      %3383 = vmatpush1.bf16.xpose.msra.mxu0 0
      %3384 = vmatprep.subr.bf16.mxu0 0
      %3385 = vmatpush1.bf16.xpose.msra.mxu0 0
      %3386 = vmatprep.subr.bf16.mxu0 0
      %3387 = vmatpush1.bf16.xpose.msra.mxu0 %v770
      %3388 = vmatprep.subr.bf16.mxu0 0
      %3389 = vmatpush2.bf16.xpose.msra.mxu0 0
      %3390 = vmatprep.subr.bf16.mxu0 0
      %3391 = vmatpush2.bf16.xpose.msra.mxu0 0
      %3392 = vmatprep.subr.bf16.mxu0 0
      %3393 = vmatpush2.bf16.xpose.msra.mxu0 0
      %3394 = vmatprep.subr.bf16.mxu0 0
      %3395 = vmatpush2.bf16.xpose.msra.mxu0 0
      %3396 = vmatprep.subr.bf16.mxu0 0
      %3397 = vmatpush2.bf16.xpose.msra.mxu0 0
      %3398 = vmatprep.subr.bf16.mxu0 0
      %3399 = vmatpush2.bf16.xpose.msra.mxu0 0
      %3400 = vmatprep.subr.bf16.mxu0 0
      %3401 = vmatpush2.bf16.xpose.msra.mxu0 0
      %3402 = vmatprep.subr.bf16.mxu0 0
      %3403 = vmatpush2.bf16.xpose.msra.mxu0 0
      %3404 = vmatprep.mubr.bf16.mxu0 0
      %3405 = vmatmul.mubr.bf16.gmra.mxu0 %v1005
      %v3406 = vpop.f32.mrf.mxu0
      %v3407 = vadd.f32 0.0, %v3406
      %v3408 = vpop.f32.mrf.mxu0
      %v3409 = vpop.f32.mrf.mxu0
      %v3410 = vpop.f32.mrf.mxu0
      %3411 = vdwg.mxu0
      %v3412 = vmul.f32 %v3407, 0.17677669
      %v3413 = vsel %vm824, %v3412, -inf
      %3414 = vmax.xlane.f32.xlu0 %v3413
      %v3415 = vpop.xlane.xlu0 %3414
      %v3416 = vsub.f32 %v3412, %v3415
      %v3417 = vmul.f32 %v3416, 1.442695
      %v3418 = vpow.pop %v3417
      %v3419 = vsel %vm824, %v3418, 0.0
      %3420 = vadd.xlane.f32.xlu0 %v3419
      %v3421 = vpop.xlane.xlu0 %3420
      %v3422 = vrcp.pop %v3421
      %v3423 = vmul.f32 %v3418, %v3422
      %v3424 = vsel %vm1069, %v778, 0
      %v3425 = vpack.c.bf16 %v3423, %v3423
      %v3427 = vsel %vm824, %v3425, 0
      %3429 = vmatprep.subr.bf16.mxu0 0
      %3430 = vmatpush1.bf16.msra.mxu0 0
      %3431 = vmatprep.subr.bf16.mxu0 0
      %3432 = vmatpush1.bf16.msra.mxu0 0
      %3433 = vmatprep.subr.bf16.mxu0 0
      %3434 = vmatpush1.bf16.msra.mxu0 0
      %3435 = vmatprep.subr.bf16.mxu0 0
      %3436 = vmatpush1.bf16.msra.mxu0 0
      %3437 = vmatprep.subr.bf16.mxu0 0
      %3438 = vmatpush1.bf16.msra.mxu0 0
      %3439 = vmatprep.subr.bf16.mxu0 0
      %3440 = vmatpush1.bf16.msra.mxu0 0
      %3441 = vmatprep.subr.bf16.mxu0 0
      %3442 = vmatpush1.bf16.msra.mxu0 0
      %3443 = vmatprep.subr.bf16.mxu0 0
      %3444 = vmatpush1.bf16.msra.mxu0 %v3424
      %3445 = vmatprep.subr.bf16.mxu0 0
      %3446 = vmatpush2.bf16.msra.mxu0 0
      %3447 = vmatprep.subr.bf16.mxu0 0
      %3448 = vmatpush2.bf16.msra.mxu0 0
      %3449 = vmatprep.subr.bf16.mxu0 0
      %3450 = vmatpush2.bf16.msra.mxu0 0
      %3451 = vmatprep.subr.bf16.mxu0 0
      %3452 = vmatpush2.bf16.msra.mxu0 0
      %3453 = vmatprep.subr.bf16.mxu0 0
      %3454 = vmatpush2.bf16.msra.mxu0 0
      %3455 = vmatprep.subr.bf16.mxu0 0
      %3456 = vmatpush2.bf16.msra.mxu0 0
      %3457 = vmatprep.subr.bf16.mxu0 0
      %3458 = vmatpush2.bf16.msra.mxu0 0
      %3459 = vmatprep.subr.bf16.mxu0 0
      %3460 = vmatpush2.bf16.msra.mxu0 0
      %3461 = vmatprep.mubr.bf16.mxu0 0
      %3462 = vmatmul.mubr.bf16.gmra.mxu0 %v3427
      %v3463 = vpop.f32.mrf.mxu0
      %v3464 = vadd.f32 0.0, %v3463
      %v3465 = vpop.f32.mrf.mxu0
      %v3466 = vpop.f32.mrf.mxu0
      %v3467 = vpop.f32.mrf.mxu0
      %3468 = vdwg.mxu0
      %v3469 = vadd.f32 %v3367, %v3464
      %3470 = vmatprep.subr.bf16.mxu0 0
      %3471 = vmatpush1.bf16.xpose.msra.mxu0 0
      %3472 = vmatprep.subr.bf16.mxu0 0
      %3473 = vmatpush1.bf16.xpose.msra.mxu0 0
      %3474 = vmatprep.subr.bf16.mxu0 0
      %3475 = vmatpush1.bf16.xpose.msra.mxu0 0
      %3476 = vmatprep.subr.bf16.mxu0 0
      %3477 = vmatpush1.bf16.xpose.msra.mxu0 0
      %3478 = vmatprep.subr.bf16.mxu0 0
      %3479 = vmatpush1.bf16.xpose.msra.mxu0 0
      %3480 = vmatprep.subr.bf16.mxu0 0
      %3481 = vmatpush1.bf16.xpose.msra.mxu0 0
      %3482 = vmatprep.subr.bf16.mxu0 0
      %3483 = vmatpush1.bf16.xpose.msra.mxu0 0
      %3484 = vmatprep.subr.bf16.mxu0 0
      %3485 = vmatpush1.bf16.xpose.msra.mxu0 %v770
      %3486 = vmatprep.subr.bf16.mxu0 0
      %3487 = vmatpush2.bf16.xpose.msra.mxu0 0
      %3488 = vmatprep.subr.bf16.mxu0 0
      %3489 = vmatpush2.bf16.xpose.msra.mxu0 0
      %3490 = vmatprep.subr.bf16.mxu0 0
      %3491 = vmatpush2.bf16.xpose.msra.mxu0 0
      %3492 = vmatprep.subr.bf16.mxu0 0
      %3493 = vmatpush2.bf16.xpose.msra.mxu0 0
      %3494 = vmatprep.subr.bf16.mxu0 0
      %3495 = vmatpush2.bf16.xpose.msra.mxu0 0
      %3496 = vmatprep.subr.bf16.mxu0 0
      %3497 = vmatpush2.bf16.xpose.msra.mxu0 0
      %3498 = vmatprep.subr.bf16.mxu0 0
      %3499 = vmatpush2.bf16.xpose.msra.mxu0 0
      %3500 = vmatprep.subr.bf16.mxu0 0
      %3501 = vmatpush2.bf16.xpose.msra.mxu0 0
      %3502 = vmatprep.mubr.bf16.mxu0 0
      %3503 = vmatmul.mubr.bf16.gmra.mxu0 %v1117
      %v3504 = vpop.f32.mrf.mxu0
      %v3505 = vadd.f32 0.0, %v3504
      %v3506 = vpop.f32.mrf.mxu0
      %v3507 = vpop.f32.mrf.mxu0
      %v3508 = vpop.f32.mrf.mxu0
      %3509 = vdwg.mxu0
      %v3510 = vmul.f32 %v3505, 0.17677669
      %v3511 = vsel %vm824, %v3510, -inf
      %3512 = vmax.xlane.f32.xlu0 %v3511
      %v3513 = vpop.xlane.xlu0 %3512
      %v3514 = vsub.f32 %v3510, %v3513
      %v3515 = vmul.f32 %v3514, 1.442695
      %v3516 = vpow.pop %v3515
      %v3517 = vsel %vm824, %v3516, 0.0
      %3518 = vadd.xlane.f32.xlu0 %v3517
      %v3519 = vpop.xlane.xlu0 %3518
      %v3520 = vrcp.pop %v3519
      %v3521 = vmul.f32 %v3516, %v3520
      %v3522 = vsel %vm1181, %v778, 0
      %v3523 = vpack.c.bf16 %v3521, %v3521
      %v3525 = vsel %vm824, %v3523, 0
      %3527 = vmatprep.subr.bf16.mxu0 0
      %3528 = vmatpush1.bf16.msra.mxu0 0
      %3529 = vmatprep.subr.bf16.mxu0 0
      %3530 = vmatpush1.bf16.msra.mxu0 0
      %3531 = vmatprep.subr.bf16.mxu0 0
      %3532 = vmatpush1.bf16.msra.mxu0 0
      %3533 = vmatprep.subr.bf16.mxu0 0
      %3534 = vmatpush1.bf16.msra.mxu0 0
      %3535 = vmatprep.subr.bf16.mxu0 0
      %3536 = vmatpush1.bf16.msra.mxu0 0
      %3537 = vmatprep.subr.bf16.mxu0 0
      %3538 = vmatpush1.bf16.msra.mxu0 0
      %3539 = vmatprep.subr.bf16.mxu0 0
      %3540 = vmatpush1.bf16.msra.mxu0 0
      %3541 = vmatprep.subr.bf16.mxu0 0
      %3542 = vmatpush1.bf16.msra.mxu0 %v3522
      %3543 = vmatprep.subr.bf16.mxu0 0
      %3544 = vmatpush2.bf16.msra.mxu0 0
      %3545 = vmatprep.subr.bf16.mxu0 0
      %3546 = vmatpush2.bf16.msra.mxu0 0
      %3547 = vmatprep.subr.bf16.mxu0 0
      %3548 = vmatpush2.bf16.msra.mxu0 0
      %3549 = vmatprep.subr.bf16.mxu0 0
      %3550 = vmatpush2.bf16.msra.mxu0 0
      %3551 = vmatprep.subr.bf16.mxu0 0
      %3552 = vmatpush2.bf16.msra.mxu0 0
      %3553 = vmatprep.subr.bf16.mxu0 0
      %3554 = vmatpush2.bf16.msra.mxu0 0
      %3555 = vmatprep.subr.bf16.mxu0 0
      %3556 = vmatpush2.bf16.msra.mxu0 0
      %3557 = vmatprep.subr.bf16.mxu0 0
      %3558 = vmatpush2.bf16.msra.mxu0 0
      %3559 = vmatprep.mubr.bf16.mxu0 0
      %3560 = vmatmul.mubr.bf16.gmra.mxu0 %v3525
      %v3561 = vpop.f32.mrf.mxu0
      %v3562 = vadd.f32 0.0, %v3561
      %v3563 = vpop.f32.mrf.mxu0
      %v3564 = vpop.f32.mrf.mxu0
      %v3565 = vpop.f32.mrf.mxu0
      %3566 = vdwg.mxu0
      %v3567 = vadd.f32 %v3469, %v3562
      %3568 = vmatprep.subr.bf16.mxu0 0
      %3569 = vmatpush1.bf16.xpose.msra.mxu0 0
      %3570 = vmatprep.subr.bf16.mxu0 0
      %3571 = vmatpush1.bf16.xpose.msra.mxu0 0
      %3572 = vmatprep.subr.bf16.mxu0 0
      %3573 = vmatpush1.bf16.xpose.msra.mxu0 0
      %3574 = vmatprep.subr.bf16.mxu0 0
      %3575 = vmatpush1.bf16.xpose.msra.mxu0 0
      %3576 = vmatprep.subr.bf16.mxu0 0
      %3577 = vmatpush1.bf16.xpose.msra.mxu0 0
      %3578 = vmatprep.subr.bf16.mxu0 0
      %3579 = vmatpush1.bf16.xpose.msra.mxu0 0
      %3580 = vmatprep.subr.bf16.mxu0 0
      %3581 = vmatpush1.bf16.xpose.msra.mxu0 0
      %3582 = vmatprep.subr.bf16.mxu0 0
      %3583 = vmatpush1.bf16.xpose.msra.mxu0 %v771
      %3584 = vmatprep.subr.bf16.mxu0 0
      %3585 = vmatpush2.bf16.xpose.msra.mxu0 0
      %3586 = vmatprep.subr.bf16.mxu0 0
      %3587 = vmatpush2.bf16.xpose.msra.mxu0 0
      %3588 = vmatprep.subr.bf16.mxu0 0
      %3589 = vmatpush2.bf16.xpose.msra.mxu0 0
      %3590 = vmatprep.subr.bf16.mxu0 0
      %3591 = vmatpush2.bf16.xpose.msra.mxu0 0
      %3592 = vmatprep.subr.bf16.mxu0 0
      %3593 = vmatpush2.bf16.xpose.msra.mxu0 0
      %3594 = vmatprep.subr.bf16.mxu0 0
      %3595 = vmatpush2.bf16.xpose.msra.mxu0 0
      %3596 = vmatprep.subr.bf16.mxu0 0
      %3597 = vmatpush2.bf16.xpose.msra.mxu0 0
      %3598 = vmatprep.subr.bf16.mxu0 0
      %3599 = vmatpush2.bf16.xpose.msra.mxu0 0
      %3600 = vmatprep.mubr.bf16.mxu0 0
      %3601 = vmatmul.mubr.bf16.gmra.mxu0 %v782
      %v3602 = vpop.f32.mrf.mxu0
      %v3603 = vadd.f32 0.0, %v3602
      %v3604 = vpop.f32.mrf.mxu0
      %v3605 = vpop.f32.mrf.mxu0
      %v3606 = vpop.f32.mrf.mxu0
      %3607 = vdwg.mxu0
      %v3608 = vmul.f32 %v3603, 0.17677669
      %v3609 = vsel %vm824, %v3608, -inf
      %3610 = vmax.xlane.f32.xlu0 %v3609
      %v3611 = vpop.xlane.xlu0 %3610
      %v3612 = vsub.f32 %v3608, %v3611
      %v3613 = vmul.f32 %v3612, 1.442695
      %v3614 = vpow.pop %v3613
      %v3615 = vsel %vm824, %v3614, 0.0
      %3616 = vadd.xlane.f32.xlu0 %v3615
      %v3617 = vpop.xlane.xlu0 %3616
      %v3618 = vrcp.pop %v3617
      %v3619 = vmul.f32 %v3614, %v3618
      %v3620 = vsel %vm847, %v779, 0
      %v3621 = vpack.c.bf16 %v3619, %v3619
      %3622 = vmatprep.subr.bf16.mxu0 0
      %3623 = vmatpush1.bf16.xpose.msra.mxu0 0
      %3624 = vmatprep.subr.bf16.mxu0 0
      %3625 = vmatpush1.bf16.xpose.msra.mxu0 0
      %3626 = vmatprep.subr.bf16.mxu0 0
      %3627 = vmatpush1.bf16.xpose.msra.mxu0 0
      %3628 = vmatprep.subr.bf16.mxu0 0
      %3629 = vmatpush1.bf16.xpose.msra.mxu0 0
      %3630 = vmatprep.subr.bf16.mxu0 0
      %3631 = vmatpush1.bf16.xpose.msra.mxu0 0
      %3632 = vmatprep.subr.bf16.mxu0 0
      %3633 = vmatpush1.bf16.xpose.msra.mxu0 0
      %3634 = vmatprep.subr.bf16.mxu0 0
      %3635 = vmatpush1.bf16.xpose.msra.mxu0 0
      %3636 = vmatprep.subr.bf16.mxu0 0
      %3637 = vmatpush1.bf16.xpose.msra.mxu0 %v771
      %3638 = vmatprep.subr.bf16.mxu0 0
      %3639 = vmatpush2.bf16.xpose.msra.mxu0 0
      %3640 = vmatprep.subr.bf16.mxu0 0
      %3641 = vmatpush2.bf16.xpose.msra.mxu0 0
      %3642 = vmatprep.subr.bf16.mxu0 0
      %3643 = vmatpush2.bf16.xpose.msra.mxu0 0
      %3644 = vmatprep.subr.bf16.mxu0 0
      %3645 = vmatpush2.bf16.xpose.msra.mxu0 0
      %3646 = vmatprep.subr.bf16.mxu0 0
      %3647 = vmatpush2.bf16.xpose.msra.mxu0 0
      %3648 = vmatprep.subr.bf16.mxu0 0
      %3649 = vmatpush2.bf16.xpose.msra.mxu0 0
      %3650 = vmatprep.subr.bf16.mxu0 0
      %3651 = vmatpush2.bf16.xpose.msra.mxu0 0
      %3652 = vmatprep.subr.bf16.mxu0 0
      %3653 = vmatpush2.bf16.xpose.msra.mxu0 0
      %3654 = vmatprep.mubr.bf16.mxu0 0
      %3655 = vmatmul.mubr.bf16.gmra.mxu0 %v851
      %v3656 = vpop.f32.mrf.mxu0
      %v3657 = vadd.f32 0.0, %v3656
      %v3658 = vpop.f32.mrf.mxu0
      %v3659 = vpop.f32.mrf.mxu0
      %v3660 = vpop.f32.mrf.mxu0
      %3661 = vdwg.mxu0
      %v3662 = vmul.f32 %v3657, 0.17677669
      %v3663 = vsel %vm824, %v3662, -inf
      %3664 = vmax.xlane.f32.xlu0 %v3663
      %v3665 = vpop.xlane.xlu0 %3664
      %v3666 = vsub.f32 %v3662, %v3665
      %v3667 = vmul.f32 %v3666, 1.442695
      %v3668 = vpow.pop %v3667
      %v3669 = vsel %vm824, %v3668, 0.0
      %3670 = vadd.xlane.f32.xlu0 %v3669
      %v3671 = vpop.xlane.xlu0 %3670
      %v3672 = vrcp.pop %v3671
      %v3673 = vmul.f32 %v3668, %v3672
      %v3674 = vsel %vm915, %v779, 0
      %v3675 = vpack.c.bf16 %v3673, %v3673
      %v3677 = vsel %vm824, %v3675, 0
      %3679 = vmatprep.subr.bf16.mxu0 0
      %3680 = vmatpush1.bf16.msra.mxu0 0
      %3681 = vmatprep.subr.bf16.mxu0 0
      %3682 = vmatpush1.bf16.msra.mxu0 0
      %3683 = vmatprep.subr.bf16.mxu0 0
      %3684 = vmatpush1.bf16.msra.mxu0 0
      %3685 = vmatprep.subr.bf16.mxu0 0
      %3686 = vmatpush1.bf16.msra.mxu0 0
      %3687 = vmatprep.subr.bf16.mxu0 0
      %3688 = vmatpush1.bf16.msra.mxu0 0
      %3689 = vmatprep.subr.bf16.mxu0 0
      %3690 = vmatpush1.bf16.msra.mxu0 0
      %3691 = vmatprep.subr.bf16.mxu0 0
      %3692 = vmatpush1.bf16.msra.mxu0 0
      %3693 = vmatprep.subr.bf16.mxu0 0
      %3694 = vmatpush1.bf16.msra.mxu0 %v3674
      %3695 = vmatprep.subr.bf16.mxu0 0
      %3696 = vmatpush2.bf16.msra.mxu0 0
      %3697 = vmatprep.subr.bf16.mxu0 0
      %3698 = vmatpush2.bf16.msra.mxu0 0
      %3699 = vmatprep.subr.bf16.mxu0 0
      %3700 = vmatpush2.bf16.msra.mxu0 0
      %3701 = vmatprep.subr.bf16.mxu0 0
      %3702 = vmatpush2.bf16.msra.mxu0 0
      %3703 = vmatprep.subr.bf16.mxu0 0
      %3704 = vmatpush2.bf16.msra.mxu0 0
      %3705 = vmatprep.subr.bf16.mxu0 0
      %3706 = vmatpush2.bf16.msra.mxu0 0
      %3707 = vmatprep.subr.bf16.mxu0 0
      %3708 = vmatpush2.bf16.msra.mxu0 0
      %3709 = vmatprep.subr.bf16.mxu0 0
      %3710 = vmatpush2.bf16.msra.mxu0 0
      %3711 = vmatprep.mubr.bf16.mxu0 0
      %3712 = vmatmul.mubr.bf16.gmra.mxu0 %v3677
      %v3713 = vpop.f32.mrf.mxu0
      %v3714 = vadd.f32 0.0, %v3713
      %v3715 = vpop.f32.mrf.mxu0
      %v3716 = vpop.f32.mrf.mxu0
      %v3717 = vpop.f32.mrf.mxu0
      %3718 = vdwg.mxu0
      %v3720 = vsel %vm824, %v3621, 0
      %3722 = vmatprep.subr.bf16.mxu0 0
      %3723 = vmatpush1.bf16.msra.mxu0 0
      %3724 = vmatprep.subr.bf16.mxu0 0
      %3725 = vmatpush1.bf16.msra.mxu0 0
      %3726 = vmatprep.subr.bf16.mxu0 0
      %3727 = vmatpush1.bf16.msra.mxu0 0
      %3728 = vmatprep.subr.bf16.mxu0 0
      %3729 = vmatpush1.bf16.msra.mxu0 0
      %3730 = vmatprep.subr.bf16.mxu0 0
      %3731 = vmatpush1.bf16.msra.mxu0 0
      %3732 = vmatprep.subr.bf16.mxu0 0
      %3733 = vmatpush1.bf16.msra.mxu0 0
      %3734 = vmatprep.subr.bf16.mxu0 0
      %3735 = vmatpush1.bf16.msra.mxu0 0
      %3736 = vmatprep.subr.bf16.mxu0 0
      %3737 = vmatpush1.bf16.msra.mxu0 %v3620
      %3738 = vmatprep.subr.bf16.mxu0 0
      %3739 = vmatpush2.bf16.msra.mxu0 0
      %3740 = vmatprep.subr.bf16.mxu0 0
      %3741 = vmatpush2.bf16.msra.mxu0 0
      %3742 = vmatprep.subr.bf16.mxu0 0
      %3743 = vmatpush2.bf16.msra.mxu0 0
      %3744 = vmatprep.subr.bf16.mxu0 0
      %3745 = vmatpush2.bf16.msra.mxu0 0
      %3746 = vmatprep.subr.bf16.mxu0 0
      %3747 = vmatpush2.bf16.msra.mxu0 0
      %3748 = vmatprep.subr.bf16.mxu0 0
      %3749 = vmatpush2.bf16.msra.mxu0 0
      %3750 = vmatprep.subr.bf16.mxu0 0
      %3751 = vmatpush2.bf16.msra.mxu0 0
      %3752 = vmatprep.subr.bf16.mxu0 0
      %3753 = vmatpush2.bf16.msra.mxu0 0
      %3754 = vmatprep.mubr.bf16.mxu0 0
      %3755 = vmatmul.mubr.bf16.gmra.mxu0 %v3720
      %v3756 = vpop.f32.mrf.mxu0
      %v3757 = vadd.f32 %v3714, %v3756
      %v3758 = vpop.f32.mrf.mxu0
      %v3759 = vpop.f32.mrf.mxu0
      %v3760 = vpop.f32.mrf.mxu0
      %3761 = vdwg.mxu0
      %3762 = vmatprep.subr.bf16.mxu0 0
      %3763 = vmatpush1.bf16.xpose.msra.mxu0 0
      %3764 = vmatprep.subr.bf16.mxu0 0
      %3765 = vmatpush1.bf16.xpose.msra.mxu0 0
      %3766 = vmatprep.subr.bf16.mxu0 0
      %3767 = vmatpush1.bf16.xpose.msra.mxu0 0
      %3768 = vmatprep.subr.bf16.mxu0 0
      %3769 = vmatpush1.bf16.xpose.msra.mxu0 0
      %3770 = vmatprep.subr.bf16.mxu0 0
      %3771 = vmatpush1.bf16.xpose.msra.mxu0 0
      %3772 = vmatprep.subr.bf16.mxu0 0
      %3773 = vmatpush1.bf16.xpose.msra.mxu0 0
      %3774 = vmatprep.subr.bf16.mxu0 0
      %3775 = vmatpush1.bf16.xpose.msra.mxu0 0
      %3776 = vmatprep.subr.bf16.mxu0 0
      %3777 = vmatpush1.bf16.xpose.msra.mxu0 %v771
      %3778 = vmatprep.subr.bf16.mxu0 0
      %3779 = vmatpush2.bf16.xpose.msra.mxu0 0
      %3780 = vmatprep.subr.bf16.mxu0 0
      %3781 = vmatpush2.bf16.xpose.msra.mxu0 0
      %3782 = vmatprep.subr.bf16.mxu0 0
      %3783 = vmatpush2.bf16.xpose.msra.mxu0 0
      %3784 = vmatprep.subr.bf16.mxu0 0
      %3785 = vmatpush2.bf16.xpose.msra.mxu0 0
      %3786 = vmatprep.subr.bf16.mxu0 0
      %3787 = vmatpush2.bf16.xpose.msra.mxu0 0
      %3788 = vmatprep.subr.bf16.mxu0 0
      %3789 = vmatpush2.bf16.xpose.msra.mxu0 0
      %3790 = vmatprep.subr.bf16.mxu0 0
      %3791 = vmatpush2.bf16.xpose.msra.mxu0 0
      %3792 = vmatprep.subr.bf16.mxu0 0
      %3793 = vmatpush2.bf16.xpose.msra.mxu0 0
      %3794 = vmatprep.mubr.bf16.mxu0 0
      %3795 = vmatmul.mubr.bf16.gmra.mxu0 %v1005
      %v3796 = vpop.f32.mrf.mxu0
      %v3797 = vadd.f32 0.0, %v3796
      %v3798 = vpop.f32.mrf.mxu0
      %v3799 = vpop.f32.mrf.mxu0
      %v3800 = vpop.f32.mrf.mxu0
      %3801 = vdwg.mxu0
      %v3802 = vmul.f32 %v3797, 0.17677669
      %v3803 = vsel %vm824, %v3802, -inf
      %3804 = vmax.xlane.f32.xlu0 %v3803
      %v3805 = vpop.xlane.xlu0 %3804
      %v3806 = vsub.f32 %v3802, %v3805
      %v3807 = vmul.f32 %v3806, 1.442695
      %v3808 = vpow.pop %v3807
      %v3809 = vsel %vm824, %v3808, 0.0
      %3810 = vadd.xlane.f32.xlu0 %v3809
      %v3811 = vpop.xlane.xlu0 %3810
      %v3812 = vrcp.pop %v3811
      %v3813 = vmul.f32 %v3808, %v3812
      %v3814 = vsel %vm1069, %v779, 0
      %v3815 = vpack.c.bf16 %v3813, %v3813
      %v3817 = vsel %vm824, %v3815, 0
      %3819 = vmatprep.subr.bf16.mxu0 0
      %3820 = vmatpush1.bf16.msra.mxu0 0
      %3821 = vmatprep.subr.bf16.mxu0 0
      %3822 = vmatpush1.bf16.msra.mxu0 0
      %3823 = vmatprep.subr.bf16.mxu0 0
      %3824 = vmatpush1.bf16.msra.mxu0 0
      %3825 = vmatprep.subr.bf16.mxu0 0
      %3826 = vmatpush1.bf16.msra.mxu0 0
      %3827 = vmatprep.subr.bf16.mxu0 0
      %3828 = vmatpush1.bf16.msra.mxu0 0
      %3829 = vmatprep.subr.bf16.mxu0 0
      %3830 = vmatpush1.bf16.msra.mxu0 0
      %3831 = vmatprep.subr.bf16.mxu0 0
      %3832 = vmatpush1.bf16.msra.mxu0 0
      %3833 = vmatprep.subr.bf16.mxu0 0
      %3834 = vmatpush1.bf16.msra.mxu0 %v3814
      %3835 = vmatprep.subr.bf16.mxu0 0
      %3836 = vmatpush2.bf16.msra.mxu0 0
      %3837 = vmatprep.subr.bf16.mxu0 0
      %3838 = vmatpush2.bf16.msra.mxu0 0
      %3839 = vmatprep.subr.bf16.mxu0 0
      %3840 = vmatpush2.bf16.msra.mxu0 0
      %3841 = vmatprep.subr.bf16.mxu0 0
      %3842 = vmatpush2.bf16.msra.mxu0 0
      %3843 = vmatprep.subr.bf16.mxu0 0
      %3844 = vmatpush2.bf16.msra.mxu0 0
      %3845 = vmatprep.subr.bf16.mxu0 0
      %3846 = vmatpush2.bf16.msra.mxu0 0
      %3847 = vmatprep.subr.bf16.mxu0 0
      %3848 = vmatpush2.bf16.msra.mxu0 0
      %3849 = vmatprep.subr.bf16.mxu0 0
      %3850 = vmatpush2.bf16.msra.mxu0 0
      %3851 = vmatprep.mubr.bf16.mxu0 0
      %3852 = vmatmul.mubr.bf16.gmra.mxu0 %v3817
      %v3853 = vpop.f32.mrf.mxu0
      %v3854 = vadd.f32 0.0, %v3853
      %v3855 = vpop.f32.mrf.mxu0
      %v3856 = vpop.f32.mrf.mxu0
      %v3857 = vpop.f32.mrf.mxu0
      %3858 = vdwg.mxu0
      %v3859 = vadd.f32 %v3757, %v3854
      %3860 = vmatprep.subr.bf16.mxu0 0
      %3861 = vmatpush1.bf16.xpose.msra.mxu0 0
      %3862 = vmatprep.subr.bf16.mxu0 0
      %3863 = vmatpush1.bf16.xpose.msra.mxu0 0
      %3864 = vmatprep.subr.bf16.mxu0 0
      %3865 = vmatpush1.bf16.xpose.msra.mxu0 0
      %3866 = vmatprep.subr.bf16.mxu0 0
      %3867 = vmatpush1.bf16.xpose.msra.mxu0 0
      %3868 = vmatprep.subr.bf16.mxu0 0
      %3869 = vmatpush1.bf16.xpose.msra.mxu0 0
      %3870 = vmatprep.subr.bf16.mxu0 0
      %3871 = vmatpush1.bf16.xpose.msra.mxu0 0
      %3872 = vmatprep.subr.bf16.mxu0 0
      %3873 = vmatpush1.bf16.xpose.msra.mxu0 0
      %3874 = vmatprep.subr.bf16.mxu0 0
      %3875 = vmatpush1.bf16.xpose.msra.mxu0 %v771
      %3876 = vmatprep.subr.bf16.mxu0 0
      %3877 = vmatpush2.bf16.xpose.msra.mxu0 0
      %3878 = vmatprep.subr.bf16.mxu0 0
      %3879 = vmatpush2.bf16.xpose.msra.mxu0 0
      %3880 = vmatprep.subr.bf16.mxu0 0
      %3881 = vmatpush2.bf16.xpose.msra.mxu0 0
      %3882 = vmatprep.subr.bf16.mxu0 0
      %3883 = vmatpush2.bf16.xpose.msra.mxu0 0
      %3884 = vmatprep.subr.bf16.mxu0 0
      %3885 = vmatpush2.bf16.xpose.msra.mxu0 0
      %3886 = vmatprep.subr.bf16.mxu0 0
      %3887 = vmatpush2.bf16.xpose.msra.mxu0 0
      %3888 = vmatprep.subr.bf16.mxu0 0
      %3889 = vmatpush2.bf16.xpose.msra.mxu0 0
      %3890 = vmatprep.subr.bf16.mxu0 0
      %3891 = vmatpush2.bf16.xpose.msra.mxu0 0
      %3892 = vmatprep.mubr.bf16.mxu0 0
      %3893 = vmatmul.mubr.bf16.gmra.mxu0 %v1117
      %v3894 = vpop.f32.mrf.mxu0
      %v3895 = vadd.f32 0.0, %v3894
      %v3896 = vpop.f32.mrf.mxu0
      %v3897 = vpop.f32.mrf.mxu0
      %v3898 = vpop.f32.mrf.mxu0
      %3899 = vdwg.mxu0
      %v3900 = vmul.f32 %v3895, 0.17677669
      %v3901 = vsel %vm824, %v3900, -inf
      %3902 = vmax.xlane.f32.xlu0 %v3901
      %v3903 = vpop.xlane.xlu0 %3902
      %v3904 = vsub.f32 %v3900, %v3903
      %v3905 = vmul.f32 %v3904, 1.442695
      %v3906 = vpow.pop %v3905
      %v3907 = vsel %vm824, %v3906, 0.0
      %3908 = vadd.xlane.f32.xlu0 %v3907
      %v3909 = vpop.xlane.xlu0 %3908
      %v3910 = vrcp.pop %v3909
      %v3911 = vmul.f32 %v3906, %v3910
      %v3912 = vsel %vm1181, %v779, 0
      %v3913 = vpack.c.bf16 %v3911, %v3911
      %v3915 = vsel %vm824, %v3913, 0
      %3917 = vmatprep.subr.bf16.mxu0 0
      %3918 = vmatpush1.bf16.msra.mxu0 0
      %3919 = vmatprep.subr.bf16.mxu0 0
      %3920 = vmatpush1.bf16.msra.mxu0 0
      %3921 = vmatprep.subr.bf16.mxu0 0
      %3922 = vmatpush1.bf16.msra.mxu0 0
      %3923 = vmatprep.subr.bf16.mxu0 0
      %3924 = vmatpush1.bf16.msra.mxu0 0
      %3925 = vmatprep.subr.bf16.mxu0 0
      %3926 = vmatpush1.bf16.msra.mxu0 0
      %3927 = vmatprep.subr.bf16.mxu0 0
      %3928 = vmatpush1.bf16.msra.mxu0 0
      %3929 = vmatprep.subr.bf16.mxu0 0
      %3930 = vmatpush1.bf16.msra.mxu0 0
      %3931 = vmatprep.subr.bf16.mxu0 0
      %3932 = vmatpush1.bf16.msra.mxu0 %v3912
      %3933 = vmatprep.subr.bf16.mxu0 0
      %3934 = vmatpush2.bf16.msra.mxu0 0
      %3935 = vmatprep.subr.bf16.mxu0 0
      %3936 = vmatpush2.bf16.msra.mxu0 0
      %3937 = vmatprep.subr.bf16.mxu0 0
      %3938 = vmatpush2.bf16.msra.mxu0 0
      %3939 = vmatprep.subr.bf16.mxu0 0
      %3940 = vmatpush2.bf16.msra.mxu0 0
      %3941 = vmatprep.subr.bf16.mxu0 0
      %3942 = vmatpush2.bf16.msra.mxu0 0
      %3943 = vmatprep.subr.bf16.mxu0 0
      %3944 = vmatpush2.bf16.msra.mxu0 0
      %3945 = vmatprep.subr.bf16.mxu0 0
      %3946 = vmatpush2.bf16.msra.mxu0 0
      %3947 = vmatprep.subr.bf16.mxu0 0
      %3948 = vmatpush2.bf16.msra.mxu0 0
      %3949 = vmatprep.mubr.bf16.mxu0 0
      %3950 = vmatmul.mubr.bf16.gmra.mxu0 %v3915
      %v3951 = vpop.f32.mrf.mxu0
      %v3952 = vadd.f32 0.0, %v3951
      %v3953 = vpop.f32.mrf.mxu0
      %v3954 = vpop.f32.mrf.mxu0
      %v3955 = vpop.f32.mrf.mxu0
      %3956 = vdwg.mxu0
      %v3957 = vadd.f32 %v3859, %v3952
      %v3958 = vpack.c.bf16 %v1617, %v1227
      %v3959 = vpack.c.bf16 %v2397, %v2007
      %v3960 = vpack.c.bf16 %v3177, %v2787
      %v3961 = vpack.c.bf16 %v3957, %v3567
      %v3962 = vld [vmem:[%s4] sm:$0xf]
      %v3963 = vld [vmem:[%s4 + $0x4] sm:$0xf]
      %v3964 = vld [vmem:[%s4 + $0x8] sm:$0xf]
      %v3965 = vld [vmem:[%s4 + $0xc] sm:$0xf]
      %v3966 = vld [vmem:[%s4 + $0x10] sm:$0xf]
      %v3967 = vld [vmem:[%s4 + $0x14] sm:$0xf]
      %v3968 = vld [vmem:[%s4 + $0x18] sm:$0xf]
      %v3969 = vld [vmem:[%s4 + $0x1c] sm:$0xf]
      %v3970 = vld [vmem:[%s4 + $0x20] sm:$0xf]
      %v3971 = vld [vmem:[%s4 + $0x24] sm:$0xf]
      %v3972 = vld [vmem:[%s4 + $0x28] sm:$0xf]
      %v3973 = vld [vmem:[%s4 + $0x2c] sm:$0xf]
      %v3974 = vld [vmem:[%s4 + $0x30] sm:$0xf]
      %v3975 = vld [vmem:[%s4 + $0x34] sm:$0xf]
      %v3976 = vld [vmem:[%s4 + $0x38] sm:$0xf]
      %v3977 = vld [vmem:[%s4 + $0x3c] sm:$0xf]
      %v3978 = vld [vmem:[%s8 + $0x2] sm:$0x1]
      %v3979 = vlaneseq
      %v3980 = vshrl.u32 %v3979, 7
      %v3981 = vsub.s32 0, %v3980
      %v3982 = vrot.slane %v3978, %v3981
      %v3999 = vunpack.c.l.b16 %v3962
      %v4000 = vunpack.c.l.b16 %v3963
      %v4001 = vunpack.c.l.b16 %v3964
      %v4002 = vunpack.c.l.b16 %v3965
      %v4003 = vunpack.c.l.b16 %v3966
      %v4004 = vunpack.c.l.b16 %v3967
      %v4005 = vunpack.c.l.b16 %v3968
      %v4006 = vunpack.c.l.b16 %v3969
      %v4007 = vunpack.c.l.b16 %v3970
      %v4008 = vunpack.c.l.b16 %v3971
      %v4009 = vunpack.c.l.b16 %v3972
      %v4010 = vunpack.c.l.b16 %v3973
      %v4011 = vunpack.c.l.b16 %v3974
      %v4012 = vunpack.c.l.b16 %v3975
      %v4013 = vunpack.c.l.b16 %v3976
      %v4014 = vunpack.c.l.b16 %v3977
      %v4015 = vpack.c.b16 %v4000, %v3999
      %v4016 = vpack.c.b16 %v4002, %v4001
      %v4017 = vpack.c.b16 %v4004, %v4003
      %v4018 = vpack.c.b16 %v4006, %v4005
      %v4019 = vpack.c.b16 %v4008, %v4007
      %v4020 = vpack.c.b16 %v4010, %v4009
      %v4021 = vpack.c.b16 %v4012, %v4011
      %v4022 = vpack.c.b16 %v4014, %v4013
      %4031 = vmatprep.subr.bf16.mxu0 0
      %4032 = vmatpush1.bf16.msra.mxu0 %v4022
      %4033 = vmatprep.subr.bf16.mxu0 0
      %4034 = vmatpush1.bf16.msra.mxu0 %v4021
      %4035 = vmatprep.subr.bf16.mxu0 0
      %4036 = vmatpush1.bf16.msra.mxu0 %v4020
      %4037 = vmatprep.subr.bf16.mxu0 0
      %4038 = vmatpush1.bf16.msra.mxu0 %v4019
      %4039 = vmatprep.subr.bf16.mxu0 0
      %4040 = vmatpush1.bf16.msra.mxu0 %v4018
      %4041 = vmatprep.subr.bf16.mxu0 0
      %4042 = vmatpush1.bf16.msra.mxu0 %v4017
      %4043 = vmatprep.subr.bf16.mxu0 0
      %4044 = vmatpush1.bf16.msra.mxu0 %v4016
      %4045 = vmatprep.subr.bf16.mxu0 0
      %4046 = vmatpush1.bf16.msra.mxu0 %v4015
      %4047 = vmatprep.subr.bf16.mxu0 0
      %4048 = vmatpush2.bf16.msra.mxu0 0
      %4049 = vmatprep.subr.bf16.mxu0 0
      %4050 = vmatpush2.bf16.msra.mxu0 0
      %4051 = vmatprep.subr.bf16.mxu0 0
      %4052 = vmatpush2.bf16.msra.mxu0 0
      %4053 = vmatprep.subr.bf16.mxu0 0
      %4054 = vmatpush2.bf16.msra.mxu0 0
      %4055 = vmatprep.subr.bf16.mxu0 0
      %4056 = vmatpush2.bf16.msra.mxu0 0
      %4057 = vmatprep.subr.bf16.mxu0 0
      %4058 = vmatpush2.bf16.msra.mxu0 0
      %4059 = vmatprep.subr.bf16.mxu0 0
      %4060 = vmatpush2.bf16.msra.mxu0 0
      %4061 = vmatprep.subr.bf16.mxu0 0
      %4062 = vmatpush2.bf16.msra.mxu0 0
      %4063 = vmatprep.mubr.bf16.mxu0 0
      %4064 = vmatmul.mubr.bf16.gmra.mxu0 %v3958
      %v4065 = vpop.f32.mrf.mxu0
      %v4066 = vadd.f32 %v3982, %v4065
      %v4067 = vpop.f32.mrf.mxu0
      %v4068 = vpop.f32.mrf.mxu0
      %v4069 = vadd.f32 %v3982, %v4068
      %v4070 = vpop.f32.mrf.mxu0
      %4071 = vmatprep.mubr.bf16.mxu0 0
      %4072 = vmatmul.mubr.bf16.gmra.mxu0 %v3959
      %v4073 = vpop.f32.mrf.mxu0
      %v4074 = vadd.f32 %v3982, %v4073
      %v4075 = vpop.f32.mrf.mxu0
      %v4076 = vpop.f32.mrf.mxu0
      %v4077 = vadd.f32 %v3982, %v4076
      %v4078 = vpop.f32.mrf.mxu0
      %4079 = vmatprep.mubr.bf16.mxu0 0
      %4080 = vmatmul.mubr.bf16.gmra.mxu0 %v3960
      %v4081 = vpop.f32.mrf.mxu0
      %v4082 = vadd.f32 %v3982, %v4081
      %v4083 = vpop.f32.mrf.mxu0
      %v4084 = vpop.f32.mrf.mxu0
      %v4085 = vadd.f32 %v3982, %v4084
      %v4086 = vpop.f32.mrf.mxu0
      %4087 = vmatprep.mubr.bf16.mxu0 0
      %4088 = vmatmul.mubr.bf16.gmra.mxu0 %v3961
      %v4089 = vpop.f32.mrf.mxu0
      %v4090 = vadd.f32 %v3982, %v4089
      %v4091 = vpop.f32.mrf.mxu0
      %v4092 = vpop.f32.mrf.mxu0
      %v4093 = vadd.f32 %v3982, %v4092
      %v4094 = vpop.f32.mrf.mxu0
      %4095 = vdwg.mxu0
      %v4096 = vpack.c.bf16 %v4069, %v4066
      %v4097 = vpack.c.bf16 %v4077, %v4074
      %v4098 = vpack.c.bf16 %v4085, %v4082
      %v4099 = vpack.c.bf16 %v4093, %v4090
      %v4100 = vld [vmem:[%s5] sm:$0xff]
      %v4101 = vld [vmem:[%s5 + $0x10] sm:$0xff]
      %v4102 = vld [vmem:[%s5 + $0x20] sm:$0xff]
      %v4103 = vld [vmem:[%s5 + $0x30] sm:$0xff]
      %v4104 = vld [vmem:[%s5 + $0x40] sm:$0xff]
      %v4105 = vld [vmem:[%s5 + $0x50] sm:$0xff]
      %v4106 = vld [vmem:[%s5 + $0x60] sm:$0xff]
      %v4107 = vld [vmem:[%s5 + $0x70] sm:$0xff]
      %v4108 = vld [vmem:[%s5 + $0x80] sm:$0xff]
      %v4109 = vld [vmem:[%s5 + $0x90] sm:$0xff]
      %v4110 = vld [vmem:[%s5 + $0xa0] sm:$0xff]
      %v4111 = vld [vmem:[%s5 + $0xb0] sm:$0xff]
      %v4112 = vld [vmem:[%s5 + $0xc0] sm:$0xff]
      %v4113 = vld [vmem:[%s5 + $0xd0] sm:$0xff]
      %v4114 = vld [vmem:[%s5 + $0xe0] sm:$0xff]
      %v4115 = vld [vmem:[%s5 + $0xf0] sm:$0xff]
      %v4116 = vld [vmem:[%s9] sm:$0x3]
      %v4118 = vlaneseq
      %v4119 = vshrl.u32 %v4118, 7
      %v4120 = vsub.s32 0, %v4119
      %v4121 = vrot.slane %v4116, %v4120
      %v4122 = vlaneseq
      %v4123 = vshrl.u32 %v4122, 7
      %v4124 = vsub.s32 1, %v4123
      %v4125 = vrot.slane %v4116, %v4124
      %v4144 = vunpack.c.l.b16 %v4100
      %v4145 = vunpack.c.h.b16 %v4100
      %v4146 = vunpack.c.l.b16 %v4101
      %v4147 = vunpack.c.h.b16 %v4101
      %v4148 = vunpack.c.l.b16 %v4102
      %v4149 = vunpack.c.h.b16 %v4102
      %v4150 = vunpack.c.l.b16 %v4103
      %v4151 = vunpack.c.h.b16 %v4103
      %v4152 = vunpack.c.l.b16 %v4104
      %v4153 = vunpack.c.h.b16 %v4104
      %v4154 = vunpack.c.l.b16 %v4105
      %v4155 = vunpack.c.h.b16 %v4105
      %v4156 = vunpack.c.l.b16 %v4106
      %v4157 = vunpack.c.h.b16 %v4106
      %v4158 = vunpack.c.l.b16 %v4107
      %v4159 = vunpack.c.h.b16 %v4107
      %v4160 = vunpack.c.l.b16 %v4108
      %v4161 = vunpack.c.h.b16 %v4108
      %v4162 = vunpack.c.l.b16 %v4109
      %v4163 = vunpack.c.h.b16 %v4109
      %v4164 = vunpack.c.l.b16 %v4110
      %v4165 = vunpack.c.h.b16 %v4110
      %v4166 = vunpack.c.l.b16 %v4111
      %v4167 = vunpack.c.h.b16 %v4111
      %v4168 = vunpack.c.l.b16 %v4112
      %v4169 = vunpack.c.h.b16 %v4112
      %v4170 = vunpack.c.l.b16 %v4113
      %v4171 = vunpack.c.h.b16 %v4113
      %v4172 = vunpack.c.l.b16 %v4114
      %v4173 = vunpack.c.h.b16 %v4114
      %v4174 = vunpack.c.l.b16 %v4115
      %v4175 = vunpack.c.h.b16 %v4115
      %v4176 = vpack.c.b16 %v4146, %v4144
      %v4177 = vpack.c.b16 %v4147, %v4145
      %v4178 = vpack.c.b16 %v4150, %v4148
      %v4179 = vpack.c.b16 %v4151, %v4149
      %v4180 = vpack.c.b16 %v4154, %v4152
      %v4181 = vpack.c.b16 %v4155, %v4153
      %v4182 = vpack.c.b16 %v4158, %v4156
      %v4183 = vpack.c.b16 %v4159, %v4157
      %v4184 = vpack.c.b16 %v4162, %v4160
      %v4185 = vpack.c.b16 %v4163, %v4161
      %v4186 = vpack.c.b16 %v4166, %v4164
      %v4187 = vpack.c.b16 %v4167, %v4165
      %v4188 = vpack.c.b16 %v4170, %v4168
      %v4189 = vpack.c.b16 %v4171, %v4169
      %v4190 = vpack.c.b16 %v4174, %v4172
      %v4191 = vpack.c.b16 %v4175, %v4173
      %4208 = vmatprep.subr.bf16.mxu0 %v4191
      %4209 = vmatpush1.bf16.msra.mxu0 %v4190
      %4210 = vmatprep.subr.bf16.mxu0 %v4189
      %4211 = vmatpush1.bf16.msra.mxu0 %v4188
      %4212 = vmatprep.subr.bf16.mxu0 %v4187
      %4213 = vmatpush1.bf16.msra.mxu0 %v4186
      %4214 = vmatprep.subr.bf16.mxu0 %v4185
      %4215 = vmatpush1.bf16.msra.mxu0 %v4184
      %4216 = vmatprep.subr.bf16.mxu0 %v4183
      %4217 = vmatpush1.bf16.msra.mxu0 %v4182
      %4218 = vmatprep.subr.bf16.mxu0 %v4181
      %4219 = vmatpush1.bf16.msra.mxu0 %v4180
      %4220 = vmatprep.subr.bf16.mxu0 %v4179
      %4221 = vmatpush1.bf16.msra.mxu0 %v4178
      %4222 = vmatprep.subr.bf16.mxu0 %v4177
      %4223 = vmatpush1.bf16.msra.mxu0 %v4176
      %4224 = vmatprep.subr.bf16.mxu0 0
      %4225 = vmatpush2.bf16.msra.mxu0 0
      %4226 = vmatprep.subr.bf16.mxu0 0
      %4227 = vmatpush2.bf16.msra.mxu0 0
      %4228 = vmatprep.subr.bf16.mxu0 0
      %4229 = vmatpush2.bf16.msra.mxu0 0
      %4230 = vmatprep.subr.bf16.mxu0 0
      %4231 = vmatpush2.bf16.msra.mxu0 0
      %4232 = vmatprep.subr.bf16.mxu0 0
      %4233 = vmatpush2.bf16.msra.mxu0 0
      %4234 = vmatprep.subr.bf16.mxu0 0
      %4235 = vmatpush2.bf16.msra.mxu0 0
      %4236 = vmatprep.subr.bf16.mxu0 0
      %4237 = vmatpush2.bf16.msra.mxu0 0
      %4238 = vmatprep.subr.bf16.mxu0 0
      %4239 = vmatpush2.bf16.msra.mxu0 0
      %4240 = vmatprep.mubr.bf16.mxu0 0
      %4241 = vmatmul.mubr.bf16.gmra.mxu0 %v4096
      %v4242 = vpop.f32.mrf.mxu0
      %v4243 = vadd.f32 %v4121, %v4242
      %v4244 = vpop.f32.mrf.mxu0
      %v4245 = vadd.f32 %v4125, %v4244
      %v4246 = vpop.f32.mrf.mxu0
      %v4247 = vadd.f32 %v4121, %v4246
      %v4248 = vpop.f32.mrf.mxu0
      %v4249 = vadd.f32 %v4125, %v4248
      %4250 = vmatprep.mubr.bf16.mxu0 0
      %4251 = vmatmul.mubr.bf16.gmra.mxu0 %v4097
      %v4252 = vpop.f32.mrf.mxu0
      %v4253 = vadd.f32 %v4121, %v4252
      %v4254 = vpop.f32.mrf.mxu0
      %v4255 = vadd.f32 %v4125, %v4254
      %v4256 = vpop.f32.mrf.mxu0
      %v4257 = vadd.f32 %v4121, %v4256
      %v4258 = vpop.f32.mrf.mxu0
      %v4259 = vadd.f32 %v4125, %v4258
      %4260 = vmatprep.mubr.bf16.mxu0 0
      %4261 = vmatmul.mubr.bf16.gmra.mxu0 %v4098
      %v4262 = vpop.f32.mrf.mxu0
      %v4263 = vadd.f32 %v4121, %v4262
      %v4264 = vpop.f32.mrf.mxu0
      %v4265 = vadd.f32 %v4125, %v4264
      %v4266 = vpop.f32.mrf.mxu0
      %v4267 = vadd.f32 %v4121, %v4266
      %v4268 = vpop.f32.mrf.mxu0
      %v4269 = vadd.f32 %v4125, %v4268
      %4270 = vmatprep.mubr.bf16.mxu0 0
      %4271 = vmatmul.mubr.bf16.gmra.mxu0 %v4099
      %v4272 = vpop.f32.mrf.mxu0
      %v4273 = vadd.f32 %v4121, %v4272
      %v4274 = vpop.f32.mrf.mxu0
      %v4275 = vadd.f32 %v4125, %v4274
      %v4276 = vpop.f32.mrf.mxu0
      %v4277 = vadd.f32 %v4121, %v4276
      %v4278 = vpop.f32.mrf.mxu0
      %v4279 = vadd.f32 %v4125, %v4278
      %4280 = vdwg.mxu0
      %v4281 = vmul.f32 %v4243, %v4243
      %v4282 = vmul.f32 %v4245, %v4245
      %v4283 = vmul.f32 %v4247, %v4247
      %v4284 = vmul.f32 %v4249, %v4249
      %v4285 = vmul.f32 %v4253, %v4253
      %v4286 = vmul.f32 %v4255, %v4255
      %v4287 = vmul.f32 %v4257, %v4257
      %v4288 = vmul.f32 %v4259, %v4259
      %v4289 = vmul.f32 %v4263, %v4263
      %v4290 = vmul.f32 %v4265, %v4265
      %v4291 = vmul.f32 %v4267, %v4267
      %v4292 = vmul.f32 %v4269, %v4269
      %v4293 = vmul.f32 %v4273, %v4273
      %v4294 = vmul.f32 %v4275, %v4275
      %v4295 = vmul.f32 %v4277, %v4277
      %v4296 = vmul.f32 %v4279, %v4279
      %v4297 = vmul.f32 %v4243, %v4281
      %v4298 = vmul.f32 %v4245, %v4282
      %v4299 = vmul.f32 %v4247, %v4283
      %v4300 = vmul.f32 %v4249, %v4284
      %v4301 = vmul.f32 %v4253, %v4285
      %v4302 = vmul.f32 %v4255, %v4286
      %v4303 = vmul.f32 %v4257, %v4287
      %v4304 = vmul.f32 %v4259, %v4288
      %v4305 = vmul.f32 %v4263, %v4289
      %v4306 = vmul.f32 %v4265, %v4290
      %v4307 = vmul.f32 %v4267, %v4291
      %v4308 = vmul.f32 %v4269, %v4292
      %v4309 = vmul.f32 %v4273, %v4293
      %v4310 = vmul.f32 %v4275, %v4294
      %v4311 = vmul.f32 %v4277, %v4295
      %v4312 = vmul.f32 %v4279, %v4296
      %v4313 = vmul.f32 %v4297, 0.044715
      %v4314 = vmul.f32 %v4298, 0.044715
      %v4315 = vmul.f32 %v4299, 0.044715
      %v4316 = vmul.f32 %v4300, 0.044715
      %v4317 = vmul.f32 %v4301, 0.044715
      %v4318 = vmul.f32 %v4302, 0.044715
      %v4319 = vmul.f32 %v4303, 0.044715
      %v4320 = vmul.f32 %v4304, 0.044715
      %v4321 = vmul.f32 %v4305, 0.044715
      %v4322 = vmul.f32 %v4306, 0.044715
      %v4323 = vmul.f32 %v4307, 0.044715
      %v4324 = vmul.f32 %v4308, 0.044715
      %v4325 = vmul.f32 %v4309, 0.044715
      %v4326 = vmul.f32 %v4310, 0.044715
      %v4327 = vmul.f32 %v4311, 0.044715
      %v4328 = vmul.f32 %v4312, 0.044715
      %v4329 = vadd.f32 %v4243, %v4313
      %v4330 = vadd.f32 %v4245, %v4314
      %v4331 = vadd.f32 %v4247, %v4315
      %v4332 = vadd.f32 %v4249, %v4316
      %v4333 = vadd.f32 %v4253, %v4317
      %v4334 = vadd.f32 %v4255, %v4318
      %v4335 = vadd.f32 %v4257, %v4319
      %v4336 = vadd.f32 %v4259, %v4320
      %v4337 = vadd.f32 %v4263, %v4321
      %v4338 = vadd.f32 %v4265, %v4322
      %v4339 = vadd.f32 %v4267, %v4323
      %v4340 = vadd.f32 %v4269, %v4324
      %v4341 = vadd.f32 %v4273, %v4325
      %v4342 = vadd.f32 %v4275, %v4326
      %v4343 = vadd.f32 %v4277, %v4327
      %v4344 = vadd.f32 %v4279, %v4328
      %v4345 = vmul.f32 %v4329, 0.7978846
      %v4346 = vmul.f32 %v4330, 0.7978846
      %v4347 = vmul.f32 %v4331, 0.7978846
      %v4348 = vmul.f32 %v4332, 0.7978846
      %v4349 = vmul.f32 %v4333, 0.7978846
      %v4350 = vmul.f32 %v4334, 0.7978846
      %v4351 = vmul.f32 %v4335, 0.7978846
      %v4352 = vmul.f32 %v4336, 0.7978846
      %v4353 = vmul.f32 %v4337, 0.7978846
      %v4354 = vmul.f32 %v4338, 0.7978846
      %v4355 = vmul.f32 %v4339, 0.7978846
      %v4356 = vmul.f32 %v4340, 0.7978846
      %v4357 = vmul.f32 %v4341, 0.7978846
      %v4358 = vmul.f32 %v4342, 0.7978846
      %v4359 = vmul.f32 %v4343, 0.7978846
      %v4360 = vmul.f32 %v4344, 0.7978846
      %v4361 = vtanh.pop %v4345
      %v4362 = vtanh.pop %v4346
      %v4363 = vtanh.pop %v4347
      %v4364 = vtanh.pop %v4348
      %v4365 = vtanh.pop %v4349
      %v4366 = vtanh.pop %v4350
      %v4367 = vtanh.pop %v4351
      %v4368 = vtanh.pop %v4352
      %v4369 = vtanh.pop %v4353
      %v4370 = vtanh.pop %v4354
      %v4371 = vtanh.pop %v4355
      %v4372 = vtanh.pop %v4356
      %v4373 = vtanh.pop %v4357
      %v4374 = vtanh.pop %v4358
      %v4375 = vtanh.pop %v4359
      %v4376 = vtanh.pop %v4360
      %v4377 = vadd.f32 %v4361, 1.0
      %v4378 = vadd.f32 %v4362, 1.0
      %v4379 = vadd.f32 %v4363, 1.0
      %v4380 = vadd.f32 %v4364, 1.0
      %v4381 = vadd.f32 %v4365, 1.0
      %v4382 = vadd.f32 %v4366, 1.0
      %v4383 = vadd.f32 %v4367, 1.0
      %v4384 = vadd.f32 %v4368, 1.0
      %v4385 = vadd.f32 %v4369, 1.0
      %v4386 = vadd.f32 %v4370, 1.0
      %v4387 = vadd.f32 %v4371, 1.0
      %v4388 = vadd.f32 %v4372, 1.0
      %v4389 = vadd.f32 %v4373, 1.0
      %v4390 = vadd.f32 %v4374, 1.0
      %v4391 = vadd.f32 %v4375, 1.0
      %v4392 = vadd.f32 %v4376, 1.0
      %v4393 = vmul.f32 %v4377, 0.5
      %v4394 = vmul.f32 %v4378, 0.5
      %v4395 = vmul.f32 %v4379, 0.5
      %v4396 = vmul.f32 %v4380, 0.5
      %v4397 = vmul.f32 %v4381, 0.5
      %v4398 = vmul.f32 %v4382, 0.5
      %v4399 = vmul.f32 %v4383, 0.5
      %v4400 = vmul.f32 %v4384, 0.5
      %v4401 = vmul.f32 %v4385, 0.5
      %v4402 = vmul.f32 %v4386, 0.5
      %v4403 = vmul.f32 %v4387, 0.5
      %v4404 = vmul.f32 %v4388, 0.5
      %v4405 = vmul.f32 %v4389, 0.5
      %v4406 = vmul.f32 %v4390, 0.5
      %v4407 = vmul.f32 %v4391, 0.5
      %v4408 = vmul.f32 %v4392, 0.5
      %v4409 = vmul.f32 %v4243, %v4393
      %v4410 = vmul.f32 %v4245, %v4394
      %v4411 = vmul.f32 %v4247, %v4395
      %v4412 = vmul.f32 %v4249, %v4396
      %v4413 = vmul.f32 %v4253, %v4397
      %v4414 = vmul.f32 %v4255, %v4398
      %v4415 = vmul.f32 %v4257, %v4399
      %v4416 = vmul.f32 %v4259, %v4400
      %v4417 = vmul.f32 %v4263, %v4401
      %v4418 = vmul.f32 %v4265, %v4402
      %v4419 = vmul.f32 %v4267, %v4403
      %v4420 = vmul.f32 %v4269, %v4404
      %v4421 = vmul.f32 %v4273, %v4405
      %v4422 = vmul.f32 %v4275, %v4406
      %v4423 = vmul.f32 %v4277, %v4407
      %v4424 = vmul.f32 %v4279, %v4408
      %v4425 = vpack.c.bf16 %v4411, %v4409
      %v4426 = vpack.c.bf16 %v4412, %v4410
      %v4427 = vpack.c.bf16 %v4415, %v4413
      %v4428 = vpack.c.bf16 %v4416, %v4414
      %v4429 = vpack.c.bf16 %v4419, %v4417
      %v4430 = vpack.c.bf16 %v4420, %v4418
      %v4431 = vpack.c.bf16 %v4423, %v4421
      %v4432 = vpack.c.bf16 %v4424, %v4422
      %v4433 = vld [vmem:[%s6] sm:$0xf]
      %v4434 = vld [vmem:[%s6 + $0x4] sm:$0xf]
      %v4435 = vld [vmem:[%s6 + $0x8] sm:$0xf]
      %v4436 = vld [vmem:[%s6 + $0xc] sm:$0xf]
      %v4437 = vld [vmem:[%s6 + $0x10] sm:$0xf]
      %v4438 = vld [vmem:[%s6 + $0x14] sm:$0xf]
      %v4439 = vld [vmem:[%s6 + $0x18] sm:$0xf]
      %v4440 = vld [vmem:[%s6 + $0x1c] sm:$0xf]
      %v4441 = vld [vmem:[%s6 + $0x20] sm:$0xf]
      %v4442 = vld [vmem:[%s6 + $0x24] sm:$0xf]
      %v4443 = vld [vmem:[%s6 + $0x28] sm:$0xf]
      %v4444 = vld [vmem:[%s6 + $0x2c] sm:$0xf]
      %v4445 = vld [vmem:[%s6 + $0x30] sm:$0xf]
      %v4446 = vld [vmem:[%s6 + $0x34] sm:$0xf]
      %v4447 = vld [vmem:[%s6 + $0x38] sm:$0xf]
      %v4448 = vld [vmem:[%s6 + $0x3c] sm:$0xf]
      %v4449 = vld [vmem:[%s6 + $0x40] sm:$0xf]
      %v4450 = vld [vmem:[%s6 + $0x44] sm:$0xf]
      %v4451 = vld [vmem:[%s6 + $0x48] sm:$0xf]
      %v4452 = vld [vmem:[%s6 + $0x4c] sm:$0xf]
      %v4453 = vld [vmem:[%s6 + $0x50] sm:$0xf]
      %v4454 = vld [vmem:[%s6 + $0x54] sm:$0xf]
      %v4455 = vld [vmem:[%s6 + $0x58] sm:$0xf]
      %v4456 = vld [vmem:[%s6 + $0x5c] sm:$0xf]
      %v4457 = vld [vmem:[%s6 + $0x60] sm:$0xf]
      %v4458 = vld [vmem:[%s6 + $0x64] sm:$0xf]
      %v4459 = vld [vmem:[%s6 + $0x68] sm:$0xf]
      %v4460 = vld [vmem:[%s6 + $0x6c] sm:$0xf]
      %v4461 = vld [vmem:[%s6 + $0x70] sm:$0xf]
      %v4462 = vld [vmem:[%s6 + $0x74] sm:$0xf]
      %v4463 = vld [vmem:[%s6 + $0x78] sm:$0xf]
      %v4464 = vld [vmem:[%s6 + $0x7c] sm:$0xf]
      %v4465 = vld [vmem:[%s5 + $0x8] sm:$0xff]
      %v4466 = vld [vmem:[%s5 + $0x18] sm:$0xff]
      %v4467 = vld [vmem:[%s5 + $0x28] sm:$0xff]
      %v4468 = vld [vmem:[%s5 + $0x38] sm:$0xff]
      %v4469 = vld [vmem:[%s5 + $0x48] sm:$0xff]
      %v4470 = vld [vmem:[%s5 + $0x58] sm:$0xff]
      %v4471 = vld [vmem:[%s5 + $0x68] sm:$0xff]
      %v4472 = vld [vmem:[%s5 + $0x78] sm:$0xff]
      %v4473 = vld [vmem:[%s5 + $0x88] sm:$0xff]
      %v4474 = vld [vmem:[%s5 + $0x98] sm:$0xff]
      %v4475 = vld [vmem:[%s5 + $0xa8] sm:$0xff]
      %v4476 = vld [vmem:[%s5 + $0xb8] sm:$0xff]
      %v4477 = vld [vmem:[%s5 + $0xc8] sm:$0xff]
      %v4478 = vld [vmem:[%s5 + $0xd8] sm:$0xff]
      %v4479 = vld [vmem:[%s5 + $0xe8] sm:$0xff]
      %v4480 = vld [vmem:[%s5 + $0xf8] sm:$0xff]
      %v4481 = vld [vmem:[%s9 + $0x2] sm:$0x3]
      %v4483 = vlaneseq
      %v4484 = vshrl.u32 %v4483, 7
      %v4485 = vsub.s32 0, %v4484
      %v4486 = vrot.slane %v4481, %v4485
      %v4487 = vlaneseq
      %v4488 = vshrl.u32 %v4487, 7
      %v4489 = vsub.s32 1, %v4488
      %v4490 = vrot.slane %v4481, %v4489
      %v4509 = vunpack.c.l.b16 %v4465
      %v4510 = vunpack.c.h.b16 %v4465
      %v4511 = vunpack.c.l.b16 %v4466
      %v4512 = vunpack.c.h.b16 %v4466
      %v4513 = vunpack.c.l.b16 %v4467
      %v4514 = vunpack.c.h.b16 %v4467
      %v4515 = vunpack.c.l.b16 %v4468
      %v4516 = vunpack.c.h.b16 %v4468
      %v4517 = vunpack.c.l.b16 %v4469
      %v4518 = vunpack.c.h.b16 %v4469
      %v4519 = vunpack.c.l.b16 %v4470
      %v4520 = vunpack.c.h.b16 %v4470
      %v4521 = vunpack.c.l.b16 %v4471
      %v4522 = vunpack.c.h.b16 %v4471
      %v4523 = vunpack.c.l.b16 %v4472
      %v4524 = vunpack.c.h.b16 %v4472
      %v4525 = vunpack.c.l.b16 %v4473
      %v4526 = vunpack.c.h.b16 %v4473
      %v4527 = vunpack.c.l.b16 %v4474
      %v4528 = vunpack.c.h.b16 %v4474
      %v4529 = vunpack.c.l.b16 %v4475
      %v4530 = vunpack.c.h.b16 %v4475
      %v4531 = vunpack.c.l.b16 %v4476
      %v4532 = vunpack.c.h.b16 %v4476
      %v4533 = vunpack.c.l.b16 %v4477
      %v4534 = vunpack.c.h.b16 %v4477
      %v4535 = vunpack.c.l.b16 %v4478
      %v4536 = vunpack.c.h.b16 %v4478
      %v4537 = vunpack.c.l.b16 %v4479
      %v4538 = vunpack.c.h.b16 %v4479
      %v4539 = vunpack.c.l.b16 %v4480
      %v4540 = vunpack.c.h.b16 %v4480
      %v4541 = vpack.c.b16 %v4511, %v4509
      %v4542 = vpack.c.b16 %v4512, %v4510
      %v4543 = vpack.c.b16 %v4515, %v4513
      %v4544 = vpack.c.b16 %v4516, %v4514
      %v4545 = vpack.c.b16 %v4519, %v4517
      %v4546 = vpack.c.b16 %v4520, %v4518
      %v4547 = vpack.c.b16 %v4523, %v4521
      %v4548 = vpack.c.b16 %v4524, %v4522
      %v4549 = vpack.c.b16 %v4527, %v4525
      %v4550 = vpack.c.b16 %v4528, %v4526
      %v4551 = vpack.c.b16 %v4531, %v4529
      %v4552 = vpack.c.b16 %v4532, %v4530
      %v4553 = vpack.c.b16 %v4535, %v4533
      %v4554 = vpack.c.b16 %v4536, %v4534
      %v4555 = vpack.c.b16 %v4539, %v4537
      %v4556 = vpack.c.b16 %v4540, %v4538
      %4573 = vmatprep.subr.bf16.mxu0 %v4556
      %4574 = vmatpush1.bf16.msra.mxu0 %v4555
      %4575 = vmatprep.subr.bf16.mxu0 %v4554
      %4576 = vmatpush1.bf16.msra.mxu0 %v4553
      %4577 = vmatprep.subr.bf16.mxu0 %v4552
      %4578 = vmatpush1.bf16.msra.mxu0 %v4551
      %4579 = vmatprep.subr.bf16.mxu0 %v4550
      %4580 = vmatpush1.bf16.msra.mxu0 %v4549
      %4581 = vmatprep.subr.bf16.mxu0 %v4548
      %4582 = vmatpush1.bf16.msra.mxu0 %v4547
      %4583 = vmatprep.subr.bf16.mxu0 %v4546
      %4584 = vmatpush1.bf16.msra.mxu0 %v4545
      %4585 = vmatprep.subr.bf16.mxu0 %v4544
      %4586 = vmatpush1.bf16.msra.mxu0 %v4543
      %4587 = vmatprep.subr.bf16.mxu0 %v4542
      %4588 = vmatpush1.bf16.msra.mxu0 %v4541
      %4589 = vmatprep.subr.bf16.mxu0 0
      %4590 = vmatpush2.bf16.msra.mxu0 0
      %4591 = vmatprep.subr.bf16.mxu0 0
      %4592 = vmatpush2.bf16.msra.mxu0 0
      %4593 = vmatprep.subr.bf16.mxu0 0
      %4594 = vmatpush2.bf16.msra.mxu0 0
      %4595 = vmatprep.subr.bf16.mxu0 0
      %4596 = vmatpush2.bf16.msra.mxu0 0
      %4597 = vmatprep.subr.bf16.mxu0 0
      %4598 = vmatpush2.bf16.msra.mxu0 0
      %4599 = vmatprep.subr.bf16.mxu0 0
      %4600 = vmatpush2.bf16.msra.mxu0 0
      %4601 = vmatprep.subr.bf16.mxu0 0
      %4602 = vmatpush2.bf16.msra.mxu0 0
      %4603 = vmatprep.subr.bf16.mxu0 0
      %4604 = vmatpush2.bf16.msra.mxu0 0
      %4605 = vmatprep.mubr.bf16.mxu0 0
      %4606 = vmatmul.mubr.bf16.gmra.mxu0 %v4096
      %v4607 = vpop.f32.mrf.mxu0
      %v4608 = vadd.f32 %v4486, %v4607
      %v4609 = vpop.f32.mrf.mxu0
      %v4610 = vadd.f32 %v4490, %v4609
      %v4611 = vpop.f32.mrf.mxu0
      %v4612 = vadd.f32 %v4486, %v4611
      %v4613 = vpop.f32.mrf.mxu0
      %v4614 = vadd.f32 %v4490, %v4613
      %4615 = vmatprep.mubr.bf16.mxu0 0
      %4616 = vmatmul.mubr.bf16.gmra.mxu0 %v4097
      %v4617 = vpop.f32.mrf.mxu0
      %v4618 = vadd.f32 %v4486, %v4617
      %v4619 = vpop.f32.mrf.mxu0
      %v4620 = vadd.f32 %v4490, %v4619
      %v4621 = vpop.f32.mrf.mxu0
      %v4622 = vadd.f32 %v4486, %v4621
      %v4623 = vpop.f32.mrf.mxu0
      %v4624 = vadd.f32 %v4490, %v4623
      %4625 = vmatprep.mubr.bf16.mxu0 0
      %4626 = vmatmul.mubr.bf16.gmra.mxu0 %v4098
      %v4627 = vpop.f32.mrf.mxu0
      %v4628 = vadd.f32 %v4486, %v4627
      %v4629 = vpop.f32.mrf.mxu0
      %v4630 = vadd.f32 %v4490, %v4629
      %v4631 = vpop.f32.mrf.mxu0
      %v4632 = vadd.f32 %v4486, %v4631
      %v4633 = vpop.f32.mrf.mxu0
      %v4634 = vadd.f32 %v4490, %v4633
      %4635 = vmatprep.mubr.bf16.mxu0 0
      %4636 = vmatmul.mubr.bf16.gmra.mxu0 %v4099
      %v4637 = vpop.f32.mrf.mxu0
      %v4638 = vadd.f32 %v4486, %v4637
      %v4639 = vpop.f32.mrf.mxu0
      %v4640 = vadd.f32 %v4490, %v4639
      %v4641 = vpop.f32.mrf.mxu0
      %v4642 = vadd.f32 %v4486, %v4641
      %v4643 = vpop.f32.mrf.mxu0
      %v4644 = vadd.f32 %v4490, %v4643
      %4645 = vdwg.mxu0
      %v4646 = vmul.f32 %v4608, %v4608
      %v4647 = vmul.f32 %v4610, %v4610
      %v4648 = vmul.f32 %v4612, %v4612
      %v4649 = vmul.f32 %v4614, %v4614
      %v4650 = vmul.f32 %v4618, %v4618
      %v4651 = vmul.f32 %v4620, %v4620
      %v4652 = vmul.f32 %v4622, %v4622
      %v4653 = vmul.f32 %v4624, %v4624
      %v4654 = vmul.f32 %v4628, %v4628
      %v4655 = vmul.f32 %v4630, %v4630
      %v4656 = vmul.f32 %v4632, %v4632
      %v4657 = vmul.f32 %v4634, %v4634
      %v4658 = vmul.f32 %v4638, %v4638
      %v4659 = vmul.f32 %v4640, %v4640
      %v4660 = vmul.f32 %v4642, %v4642
      %v4661 = vmul.f32 %v4644, %v4644
      %v4662 = vmul.f32 %v4608, %v4646
      %v4663 = vmul.f32 %v4610, %v4647
      %v4664 = vmul.f32 %v4612, %v4648
      %v4665 = vmul.f32 %v4614, %v4649
      %v4666 = vmul.f32 %v4618, %v4650
      %v4667 = vmul.f32 %v4620, %v4651
      %v4668 = vmul.f32 %v4622, %v4652
      %v4669 = vmul.f32 %v4624, %v4653
      %v4670 = vmul.f32 %v4628, %v4654
      %v4671 = vmul.f32 %v4630, %v4655
      %v4672 = vmul.f32 %v4632, %v4656
      %v4673 = vmul.f32 %v4634, %v4657
      %v4674 = vmul.f32 %v4638, %v4658
      %v4675 = vmul.f32 %v4640, %v4659
      %v4676 = vmul.f32 %v4642, %v4660
      %v4677 = vmul.f32 %v4644, %v4661
      %v4678 = vmul.f32 %v4662, 0.044715
      %v4679 = vmul.f32 %v4663, 0.044715
      %v4680 = vmul.f32 %v4664, 0.044715
      %v4681 = vmul.f32 %v4665, 0.044715
      %v4682 = vmul.f32 %v4666, 0.044715
      %v4683 = vmul.f32 %v4667, 0.044715
      %v4684 = vmul.f32 %v4668, 0.044715
      %v4685 = vmul.f32 %v4669, 0.044715
      %v4686 = vmul.f32 %v4670, 0.044715
      %v4687 = vmul.f32 %v4671, 0.044715
      %v4688 = vmul.f32 %v4672, 0.044715
      %v4689 = vmul.f32 %v4673, 0.044715
      %v4690 = vmul.f32 %v4674, 0.044715
      %v4691 = vmul.f32 %v4675, 0.044715
      %v4692 = vmul.f32 %v4676, 0.044715
      %v4693 = vmul.f32 %v4677, 0.044715
      %v4694 = vadd.f32 %v4608, %v4678
      %v4695 = vadd.f32 %v4610, %v4679
      %v4696 = vadd.f32 %v4612, %v4680
      %v4697 = vadd.f32 %v4614, %v4681
      %v4698 = vadd.f32 %v4618, %v4682
      %v4699 = vadd.f32 %v4620, %v4683
      %v4700 = vadd.f32 %v4622, %v4684
      %v4701 = vadd.f32 %v4624, %v4685
      %v4702 = vadd.f32 %v4628, %v4686
      %v4703 = vadd.f32 %v4630, %v4687
      %v4704 = vadd.f32 %v4632, %v4688
      %v4705 = vadd.f32 %v4634, %v4689
      %v4706 = vadd.f32 %v4638, %v4690
      %v4707 = vadd.f32 %v4640, %v4691
      %v4708 = vadd.f32 %v4642, %v4692
      %v4709 = vadd.f32 %v4644, %v4693
      %v4710 = vmul.f32 %v4694, 0.7978846
      %v4711 = vmul.f32 %v4695, 0.7978846
      %v4712 = vmul.f32 %v4696, 0.7978846
      %v4713 = vmul.f32 %v4697, 0.7978846
      %v4714 = vmul.f32 %v4698, 0.7978846
      %v4715 = vmul.f32 %v4699, 0.7978846
      %v4716 = vmul.f32 %v4700, 0.7978846
      %v4717 = vmul.f32 %v4701, 0.7978846
      %v4718 = vmul.f32 %v4702, 0.7978846
      %v4719 = vmul.f32 %v4703, 0.7978846
      %v4720 = vmul.f32 %v4704, 0.7978846
      %v4721 = vmul.f32 %v4705, 0.7978846
      %v4722 = vmul.f32 %v4706, 0.7978846
      %v4723 = vmul.f32 %v4707, 0.7978846
      %v4724 = vmul.f32 %v4708, 0.7978846
      %v4725 = vmul.f32 %v4709, 0.7978846
      %v4726 = vtanh.pop %v4710
      %v4727 = vtanh.pop %v4711
      %v4728 = vtanh.pop %v4712
      %v4729 = vtanh.pop %v4713
      %v4730 = vtanh.pop %v4714
      %v4731 = vtanh.pop %v4715
      %v4732 = vtanh.pop %v4716
      %v4733 = vtanh.pop %v4717
      %v4734 = vtanh.pop %v4718
      %v4735 = vtanh.pop %v4719
      %v4736 = vtanh.pop %v4720
      %v4737 = vtanh.pop %v4721
      %v4738 = vtanh.pop %v4722
      %v4739 = vtanh.pop %v4723
      %v4740 = vtanh.pop %v4724
      %v4741 = vtanh.pop %v4725
      %v4742 = vadd.f32 %v4726, 1.0
      %v4743 = vadd.f32 %v4727, 1.0
      %v4744 = vadd.f32 %v4728, 1.0
      %v4745 = vadd.f32 %v4729, 1.0
      %v4746 = vadd.f32 %v4730, 1.0
      %v4747 = vadd.f32 %v4731, 1.0
      %v4748 = vadd.f32 %v4732, 1.0
      %v4749 = vadd.f32 %v4733, 1.0
      %v4750 = vadd.f32 %v4734, 1.0
      %v4751 = vadd.f32 %v4735, 1.0
      %v4752 = vadd.f32 %v4736, 1.0
      %v4753 = vadd.f32 %v4737, 1.0
      %v4754 = vadd.f32 %v4738, 1.0
      %v4755 = vadd.f32 %v4739, 1.0
      %v4756 = vadd.f32 %v4740, 1.0
      %v4757 = vadd.f32 %v4741, 1.0
      %v4758 = vmul.f32 %v4742, 0.5
      %v4759 = vmul.f32 %v4743, 0.5
      %v4760 = vmul.f32 %v4744, 0.5
      %v4761 = vmul.f32 %v4745, 0.5
      %v4762 = vmul.f32 %v4746, 0.5
      %v4763 = vmul.f32 %v4747, 0.5
      %v4764 = vmul.f32 %v4748, 0.5
      %v4765 = vmul.f32 %v4749, 0.5
      %v4766 = vmul.f32 %v4750, 0.5
      %v4767 = vmul.f32 %v4751, 0.5
      %v4768 = vmul.f32 %v4752, 0.5
      %v4769 = vmul.f32 %v4753, 0.5
      %v4770 = vmul.f32 %v4754, 0.5
      %v4771 = vmul.f32 %v4755, 0.5
      %v4772 = vmul.f32 %v4756, 0.5
      %v4773 = vmul.f32 %v4757, 0.5
      %v4774 = vmul.f32 %v4608, %v4758
      %v4775 = vmul.f32 %v4610, %v4759
      %v4776 = vmul.f32 %v4612, %v4760
      %v4777 = vmul.f32 %v4614, %v4761
      %v4778 = vmul.f32 %v4618, %v4762
      %v4779 = vmul.f32 %v4620, %v4763
      %v4780 = vmul.f32 %v4622, %v4764
      %v4781 = vmul.f32 %v4624, %v4765
      %v4782 = vmul.f32 %v4628, %v4766
      %v4783 = vmul.f32 %v4630, %v4767
      %v4784 = vmul.f32 %v4632, %v4768
      %v4785 = vmul.f32 %v4634, %v4769
      %v4786 = vmul.f32 %v4638, %v4770
      %v4787 = vmul.f32 %v4640, %v4771
      %v4788 = vmul.f32 %v4642, %v4772
      %v4789 = vmul.f32 %v4644, %v4773
      %v4790 = vpack.c.bf16 %v4776, %v4774
      %v4791 = vpack.c.bf16 %v4777, %v4775
      %v4792 = vpack.c.bf16 %v4780, %v4778
      %v4793 = vpack.c.bf16 %v4781, %v4779
      %v4794 = vpack.c.bf16 %v4784, %v4782
      %v4795 = vpack.c.bf16 %v4785, %v4783
      %v4796 = vpack.c.bf16 %v4788, %v4786
      %v4797 = vpack.c.bf16 %v4789, %v4787
      %v4798 = vld [vmem:[%s6 + $0x80] sm:$0xf]
      %v4799 = vld [vmem:[%s6 + $0x84] sm:$0xf]
      %v4800 = vld [vmem:[%s6 + $0x88] sm:$0xf]
      %v4801 = vld [vmem:[%s6 + $0x8c] sm:$0xf]
      %v4802 = vld [vmem:[%s6 + $0x90] sm:$0xf]
      %v4803 = vld [vmem:[%s6 + $0x94] sm:$0xf]
      %v4804 = vld [vmem:[%s6 + $0x98] sm:$0xf]
      %v4805 = vld [vmem:[%s6 + $0x9c] sm:$0xf]
      %v4806 = vld [vmem:[%s6 + $0xa0] sm:$0xf]
      %v4807 = vld [vmem:[%s6 + $0xa4] sm:$0xf]
      %v4808 = vld [vmem:[%s6 + $0xa8] sm:$0xf]
      %v4809 = vld [vmem:[%s6 + $0xac] sm:$0xf]
      %v4810 = vld [vmem:[%s6 + $0xb0] sm:$0xf]
      %v4811 = vld [vmem:[%s6 + $0xb4] sm:$0xf]
      %v4812 = vld [vmem:[%s6 + $0xb8] sm:$0xf]
      %v4813 = vld [vmem:[%s6 + $0xbc] sm:$0xf]
      %v4814 = vld [vmem:[%s6 + $0xc0] sm:$0xf]
      %v4815 = vld [vmem:[%s6 + $0xc4] sm:$0xf]
      %v4816 = vld [vmem:[%s6 + $0xc8] sm:$0xf]
      %v4817 = vld [vmem:[%s6 + $0xcc] sm:$0xf]
      %v4818 = vld [vmem:[%s6 + $0xd0] sm:$0xf]
      %v4819 = vld [vmem:[%s6 + $0xd4] sm:$0xf]
      %v4820 = vld [vmem:[%s6 + $0xd8] sm:$0xf]
      %v4821 = vld [vmem:[%s6 + $0xdc] sm:$0xf]
      %v4822 = vld [vmem:[%s6 + $0xe0] sm:$0xf]
      %v4823 = vld [vmem:[%s6 + $0xe4] sm:$0xf]
      %v4824 = vld [vmem:[%s6 + $0xe8] sm:$0xf]
      %v4825 = vld [vmem:[%s6 + $0xec] sm:$0xf]
      %v4826 = vld [vmem:[%s6 + $0xf0] sm:$0xf]
      %v4827 = vld [vmem:[%s6 + $0xf4] sm:$0xf]
      %v4828 = vld [vmem:[%s6 + $0xf8] sm:$0xf]
      %v4829 = vld [vmem:[%s6 + $0xfc] sm:$0xf]
      %v4862 = vunpack.c.l.b16 %v4798
      %v4863 = vunpack.c.l.b16 %v4799
      %v4864 = vunpack.c.l.b16 %v4800
      %v4865 = vunpack.c.l.b16 %v4801
      %v4866 = vunpack.c.l.b16 %v4802
      %v4867 = vunpack.c.l.b16 %v4803
      %v4868 = vunpack.c.l.b16 %v4804
      %v4869 = vunpack.c.l.b16 %v4805
      %v4870 = vunpack.c.l.b16 %v4806
      %v4871 = vunpack.c.l.b16 %v4807
      %v4872 = vunpack.c.l.b16 %v4808
      %v4873 = vunpack.c.l.b16 %v4809
      %v4874 = vunpack.c.l.b16 %v4810
      %v4875 = vunpack.c.l.b16 %v4811
      %v4876 = vunpack.c.l.b16 %v4812
      %v4877 = vunpack.c.l.b16 %v4813
      %v4878 = vunpack.c.l.b16 %v4814
      %v4879 = vunpack.c.l.b16 %v4815
      %v4880 = vunpack.c.l.b16 %v4816
      %v4881 = vunpack.c.l.b16 %v4817
      %v4882 = vunpack.c.l.b16 %v4818
      %v4883 = vunpack.c.l.b16 %v4819
      %v4884 = vunpack.c.l.b16 %v4820
      %v4885 = vunpack.c.l.b16 %v4821
      %v4886 = vunpack.c.l.b16 %v4822
      %v4887 = vunpack.c.l.b16 %v4823
      %v4888 = vunpack.c.l.b16 %v4824
      %v4889 = vunpack.c.l.b16 %v4825
      %v4890 = vunpack.c.l.b16 %v4826
      %v4891 = vunpack.c.l.b16 %v4827
      %v4892 = vunpack.c.l.b16 %v4828
      %v4893 = vunpack.c.l.b16 %v4829
      %v4894 = vpack.c.b16 %v4863, %v4862
      %v4895 = vpack.c.b16 %v4865, %v4864
      %v4896 = vpack.c.b16 %v4867, %v4866
      %v4897 = vpack.c.b16 %v4869, %v4868
      %v4898 = vpack.c.b16 %v4871, %v4870
      %v4899 = vpack.c.b16 %v4873, %v4872
      %v4900 = vpack.c.b16 %v4875, %v4874
      %v4901 = vpack.c.b16 %v4877, %v4876
      %v4902 = vpack.c.b16 %v4879, %v4878
      %v4903 = vpack.c.b16 %v4881, %v4880
      %v4904 = vpack.c.b16 %v4883, %v4882
      %v4905 = vpack.c.b16 %v4885, %v4884
      %v4906 = vpack.c.b16 %v4887, %v4886
      %v4907 = vpack.c.b16 %v4889, %v4888
      %v4908 = vpack.c.b16 %v4891, %v4890
      %v4909 = vpack.c.b16 %v4893, %v4892
      %4926 = vmatprep.subr.bf16.mxu0 0
      %4927 = vmatpush1.bf16.msra.mxu0 %v4901
      %4928 = vmatprep.subr.bf16.mxu0 0
      %4929 = vmatpush1.bf16.msra.mxu0 %v4900
      %4930 = vmatprep.subr.bf16.mxu0 0
      %4931 = vmatpush1.bf16.msra.mxu0 %v4899
      %4932 = vmatprep.subr.bf16.mxu0 0
      %4933 = vmatpush1.bf16.msra.mxu0 %v4898
      %4934 = vmatprep.subr.bf16.mxu0 0
      %4935 = vmatpush1.bf16.msra.mxu0 %v4897
      %4936 = vmatprep.subr.bf16.mxu0 0
      %4937 = vmatpush1.bf16.msra.mxu0 %v4896
      %4938 = vmatprep.subr.bf16.mxu0 0
      %4939 = vmatpush1.bf16.msra.mxu0 %v4895
      %4940 = vmatprep.subr.bf16.mxu0 0
      %4941 = vmatpush1.bf16.msra.mxu0 %v4894
      %4942 = vmatprep.subr.bf16.mxu0 0
      %4943 = vmatpush2.bf16.msra.mxu0 %v4909
      %4944 = vmatprep.subr.bf16.mxu0 0
      %4945 = vmatpush2.bf16.msra.mxu0 %v4908
      %4946 = vmatprep.subr.bf16.mxu0 0
      %4947 = vmatpush2.bf16.msra.mxu0 %v4907
      %4948 = vmatprep.subr.bf16.mxu0 0
      %4949 = vmatpush2.bf16.msra.mxu0 %v4906
      %4950 = vmatprep.subr.bf16.mxu0 0
      %4951 = vmatpush2.bf16.msra.mxu0 %v4905
      %4952 = vmatprep.subr.bf16.mxu0 0
      %4953 = vmatpush2.bf16.msra.mxu0 %v4904
      %4954 = vmatprep.subr.bf16.mxu0 0
      %4955 = vmatpush2.bf16.msra.mxu0 %v4903
      %4956 = vmatprep.subr.bf16.mxu0 0
      %4957 = vmatpush2.bf16.msra.mxu0 %v4902
      %4958 = vmatprep.mubr.bf16.mxu0 %v4791
      %4959 = vmatmul.mubr.bf16.gmra.mxu0 %v4790
      %v4960 = vpop.f32.mrf.mxu0
      %v4961 = vadd.f32 0.0, %v4960
      %v4962 = vpop.f32.mrf.mxu0
      %v4963 = vpop.f32.mrf.mxu0
      %v4964 = vadd.f32 0.0, %v4963
      %v4965 = vpop.f32.mrf.mxu0
      %4966 = vmatprep.mubr.bf16.mxu0 %v4793
      %4967 = vmatmul.mubr.bf16.gmra.mxu0 %v4792
      %v4968 = vpop.f32.mrf.mxu0
      %v4969 = vadd.f32 0.0, %v4968
      %v4970 = vpop.f32.mrf.mxu0
      %v4971 = vpop.f32.mrf.mxu0
      %v4972 = vadd.f32 0.0, %v4971
      %v4973 = vpop.f32.mrf.mxu0
      %4974 = vmatprep.mubr.bf16.mxu0 %v4795
      %4975 = vmatmul.mubr.bf16.gmra.mxu0 %v4794
      %v4976 = vpop.f32.mrf.mxu0
      %v4977 = vadd.f32 0.0, %v4976
      %v4978 = vpop.f32.mrf.mxu0
      %v4979 = vpop.f32.mrf.mxu0
      %v4980 = vadd.f32 0.0, %v4979
      %v4981 = vpop.f32.mrf.mxu0
      %4982 = vmatprep.mubr.bf16.mxu0 %v4797
      %4983 = vmatmul.mubr.bf16.gmra.mxu0 %v4796
      %v4984 = vpop.f32.mrf.mxu0
      %v4985 = vadd.f32 0.0, %v4984
      %v4986 = vpop.f32.mrf.mxu0
      %v4987 = vpop.f32.mrf.mxu0
      %v4988 = vadd.f32 0.0, %v4987
      %v4989 = vpop.f32.mrf.mxu0
      %4990 = vdwg.mxu0
      %v5023 = vunpack.c.l.b16 %v4433
      %v5024 = vunpack.c.l.b16 %v4434
      %v5025 = vunpack.c.l.b16 %v4435
      %v5026 = vunpack.c.l.b16 %v4436
      %v5027 = vunpack.c.l.b16 %v4437
      %v5028 = vunpack.c.l.b16 %v4438
      %v5029 = vunpack.c.l.b16 %v4439
      %v5030 = vunpack.c.l.b16 %v4440
      %v5031 = vunpack.c.l.b16 %v4441
      %v5032 = vunpack.c.l.b16 %v4442
      %v5033 = vunpack.c.l.b16 %v4443
      %v5034 = vunpack.c.l.b16 %v4444
      %v5035 = vunpack.c.l.b16 %v4445
      %v5036 = vunpack.c.l.b16 %v4446
      %v5037 = vunpack.c.l.b16 %v4447
      %v5038 = vunpack.c.l.b16 %v4448
      %v5039 = vunpack.c.l.b16 %v4449
      %v5040 = vunpack.c.l.b16 %v4450
      %v5041 = vunpack.c.l.b16 %v4451
      %v5042 = vunpack.c.l.b16 %v4452
      %v5043 = vunpack.c.l.b16 %v4453
      %v5044 = vunpack.c.l.b16 %v4454
      %v5045 = vunpack.c.l.b16 %v4455
      %v5046 = vunpack.c.l.b16 %v4456
      %v5047 = vunpack.c.l.b16 %v4457
      %v5048 = vunpack.c.l.b16 %v4458
      %v5049 = vunpack.c.l.b16 %v4459
      %v5050 = vunpack.c.l.b16 %v4460
      %v5051 = vunpack.c.l.b16 %v4461
      %v5052 = vunpack.c.l.b16 %v4462
      %v5053 = vunpack.c.l.b16 %v4463
      %v5054 = vunpack.c.l.b16 %v4464
      %v5055 = vpack.c.b16 %v5024, %v5023
      %v5056 = vpack.c.b16 %v5026, %v5025
      %v5057 = vpack.c.b16 %v5028, %v5027
      %v5058 = vpack.c.b16 %v5030, %v5029
      %v5059 = vpack.c.b16 %v5032, %v5031
      %v5060 = vpack.c.b16 %v5034, %v5033
      %v5061 = vpack.c.b16 %v5036, %v5035
      %v5062 = vpack.c.b16 %v5038, %v5037
      %v5063 = vpack.c.b16 %v5040, %v5039
      %v5064 = vpack.c.b16 %v5042, %v5041
      %v5065 = vpack.c.b16 %v5044, %v5043
      %v5066 = vpack.c.b16 %v5046, %v5045
      %v5067 = vpack.c.b16 %v5048, %v5047
      %v5068 = vpack.c.b16 %v5050, %v5049
      %v5069 = vpack.c.b16 %v5052, %v5051
      %v5070 = vpack.c.b16 %v5054, %v5053
      %5087 = vmatprep.subr.bf16.mxu0 0
      %5088 = vmatpush1.bf16.msra.mxu0 %v5062
      %5089 = vmatprep.subr.bf16.mxu0 0
      %5090 = vmatpush1.bf16.msra.mxu0 %v5061
      %5091 = vmatprep.subr.bf16.mxu0 0
      %5092 = vmatpush1.bf16.msra.mxu0 %v5060
      %5093 = vmatprep.subr.bf16.mxu0 0
      %5094 = vmatpush1.bf16.msra.mxu0 %v5059
      %5095 = vmatprep.subr.bf16.mxu0 0
      %5096 = vmatpush1.bf16.msra.mxu0 %v5058
      %5097 = vmatprep.subr.bf16.mxu0 0
      %5098 = vmatpush1.bf16.msra.mxu0 %v5057
      %5099 = vmatprep.subr.bf16.mxu0 0
      %5100 = vmatpush1.bf16.msra.mxu0 %v5056
      %5101 = vmatprep.subr.bf16.mxu0 0
      %5102 = vmatpush1.bf16.msra.mxu0 %v5055
      %5103 = vmatprep.subr.bf16.mxu0 0
      %5104 = vmatpush2.bf16.msra.mxu0 %v5070
      %5105 = vmatprep.subr.bf16.mxu0 0
      %5106 = vmatpush2.bf16.msra.mxu0 %v5069
      %5107 = vmatprep.subr.bf16.mxu0 0
      %5108 = vmatpush2.bf16.msra.mxu0 %v5068
      %5109 = vmatprep.subr.bf16.mxu0 0
      %5110 = vmatpush2.bf16.msra.mxu0 %v5067
      %5111 = vmatprep.subr.bf16.mxu0 0
      %5112 = vmatpush2.bf16.msra.mxu0 %v5066
      %5113 = vmatprep.subr.bf16.mxu0 0
      %5114 = vmatpush2.bf16.msra.mxu0 %v5065
      %5115 = vmatprep.subr.bf16.mxu0 0
      %5116 = vmatpush2.bf16.msra.mxu0 %v5064
      %5117 = vmatprep.subr.bf16.mxu0 0
      %5118 = vmatpush2.bf16.msra.mxu0 %v5063
      %5119 = vmatprep.mubr.bf16.mxu0 %v4426
      %5120 = vmatmul.mubr.bf16.gmra.mxu0 %v4425
      %v5121 = vpop.f32.mrf.mxu0
      %v5122 = vadd.f32 %v4961, %v5121
      %v5123 = vpop.f32.mrf.mxu0
      %v5124 = vpop.f32.mrf.mxu0
      %v5125 = vadd.f32 %v4964, %v5124
      %v5126 = vpop.f32.mrf.mxu0
      %5127 = vmatprep.mubr.bf16.mxu0 %v4428
      %5128 = vmatmul.mubr.bf16.gmra.mxu0 %v4427
      %v5129 = vpop.f32.mrf.mxu0
      %v5130 = vadd.f32 %v4969, %v5129
      %v5131 = vpop.f32.mrf.mxu0
      %v5132 = vpop.f32.mrf.mxu0
      %v5133 = vadd.f32 %v4972, %v5132
      %v5134 = vpop.f32.mrf.mxu0
      %5135 = vmatprep.mubr.bf16.mxu0 %v4430
      %5136 = vmatmul.mubr.bf16.gmra.mxu0 %v4429
      %v5137 = vpop.f32.mrf.mxu0
      %v5138 = vadd.f32 %v4977, %v5137
      %v5139 = vpop.f32.mrf.mxu0
      %v5140 = vpop.f32.mrf.mxu0
      %v5141 = vadd.f32 %v4980, %v5140
      %v5142 = vpop.f32.mrf.mxu0
      %5143 = vmatprep.mubr.bf16.mxu0 %v4432
      %5144 = vmatmul.mubr.bf16.gmra.mxu0 %v4431
      %v5145 = vpop.f32.mrf.mxu0
      %v5146 = vadd.f32 %v4985, %v5145
      %v5147 = vpop.f32.mrf.mxu0
      %v5148 = vpop.f32.mrf.mxu0
      %v5149 = vadd.f32 %v4988, %v5148
      %v5150 = vpop.f32.mrf.mxu0
      %5151 = vdwg.mxu0
      %v5152 = vld [vmem:[%s8 + $0x3] sm:$0x1]
      %v5153 = vlaneseq
      %v5154 = vshrl.u32 %v5153, 7
      %v5155 = vsub.s32 0, %v5154
      %v5156 = vrot.slane %v5152, %v5155
      %v5157 = vadd.f32 %v5122, %v5156
      %v5158 = vadd.f32 %v5125, %v5156
      %v5159 = vadd.f32 %v5130, %v5156
      %v5160 = vadd.f32 %v5133, %v5156
      %v5161 = vadd.f32 %v5138, %v5156
      %v5162 = vadd.f32 %v5141, %v5156
      %v5163 = vadd.f32 %v5146, %v5156
      %v5164 = vadd.f32 %v5149, %v5156
      %5165 = vadd.xlane.f32.xlu0 %v5157
      %v5166 = vpop.xlane.xlu0 %5165
      %5167 = vadd.xlane.f32.xlu0 %v5158
      %v5168 = vpop.xlane.xlu0 %5167
      %5169 = vadd.xlane.f32.xlu0 %v5159
      %v5170 = vpop.xlane.xlu0 %5169
      %5171 = vadd.xlane.f32.xlu0 %v5160
      %v5172 = vpop.xlane.xlu0 %5171
      %5173 = vadd.xlane.f32.xlu0 %v5161
      %v5174 = vpop.xlane.xlu0 %5173
      %5175 = vadd.xlane.f32.xlu0 %v5162
      %v5176 = vpop.xlane.xlu0 %5175
      %5177 = vadd.xlane.f32.xlu0 %v5163
      %v5178 = vpop.xlane.xlu0 %5177
      %5179 = vadd.xlane.f32.xlu0 %v5164
      %v5180 = vpop.xlane.xlu0 %5179
      %v5181 = vrcp.pop 128.0
      %v5182 = vmul.f32 %v5166, %v5181
      %v5183 = vmul.f32 %v5168, %v5181
      %v5184 = vmul.f32 %v5170, %v5181
      %v5185 = vmul.f32 %v5172, %v5181
      %v5186 = vmul.f32 %v5174, %v5181
      %v5187 = vmul.f32 %v5176, %v5181
      %v5188 = vmul.f32 %v5178, %v5181
      %v5189 = vmul.f32 %v5180, %v5181
      %v5190 = vsub.f32 %v5157, %v5182
      %v5191 = vsub.f32 %v5158, %v5183
      %v5192 = vsub.f32 %v5159, %v5184
      %v5193 = vsub.f32 %v5160, %v5185
      %v5194 = vsub.f32 %v5161, %v5186
      %v5195 = vsub.f32 %v5162, %v5187
      %v5196 = vsub.f32 %v5163, %v5188
      %v5197 = vsub.f32 %v5164, %v5189
      %v5198 = vmul.f32 %v5190, %v5190
      %v5199 = vmul.f32 %v5191, %v5191
      %v5200 = vmul.f32 %v5192, %v5192
      %v5201 = vmul.f32 %v5193, %v5193
      %v5202 = vmul.f32 %v5194, %v5194
      %v5203 = vmul.f32 %v5195, %v5195
      %v5204 = vmul.f32 %v5196, %v5196
      %v5205 = vmul.f32 %v5197, %v5197
      %5206 = vadd.xlane.f32.xlu0 %v5198
      %v5207 = vpop.xlane.xlu0 %5206
      %5208 = vadd.xlane.f32.xlu0 %v5199
      %v5209 = vpop.xlane.xlu0 %5208
      %5210 = vadd.xlane.f32.xlu0 %v5200
      %v5211 = vpop.xlane.xlu0 %5210
      %5212 = vadd.xlane.f32.xlu0 %v5201
      %v5213 = vpop.xlane.xlu0 %5212
      %5214 = vadd.xlane.f32.xlu0 %v5202
      %v5215 = vpop.xlane.xlu0 %5214
      %5216 = vadd.xlane.f32.xlu0 %v5203
      %v5217 = vpop.xlane.xlu0 %5216
      %5218 = vadd.xlane.f32.xlu0 %v5204
      %v5219 = vpop.xlane.xlu0 %5218
      %5220 = vadd.xlane.f32.xlu0 %v5205
      %v5221 = vpop.xlane.xlu0 %5220
      %v5222 = vmul.f32 %v5207, %v5181
      %v5223 = vmul.f32 %v5209, %v5181
      %v5224 = vmul.f32 %v5211, %v5181
      %v5225 = vmul.f32 %v5213, %v5181
      %v5226 = vmul.f32 %v5215, %v5181
      %v5227 = vmul.f32 %v5217, %v5181
      %v5228 = vmul.f32 %v5219, %v5181
      %v5229 = vmul.f32 %v5221, %v5181
      %v5230 = vadd.f32 %v5222, 1e-05
      %v5231 = vadd.f32 %v5223, 1e-05
      %v5232 = vadd.f32 %v5224, 1e-05
      %v5233 = vadd.f32 %v5225, 1e-05
      %v5234 = vadd.f32 %v5226, 1e-05
      %v5235 = vadd.f32 %v5227, 1e-05
      %v5236 = vadd.f32 %v5228, 1e-05
      %v5237 = vadd.f32 %v5229, 1e-05
      %v5238 = vrsqrt.pop %v5230
      %v5239 = vrsqrt.pop %v5231
      %v5240 = vrsqrt.pop %v5232
      %v5241 = vrsqrt.pop %v5233
      %v5242 = vrsqrt.pop %v5234
      %v5243 = vrsqrt.pop %v5235
      %v5244 = vrsqrt.pop %v5236
      %v5245 = vrsqrt.pop %v5237
      %v5246 = vmul.f32 %v5190, %v5238
      %v5247 = vmul.f32 %v5191, %v5239
      %v5248 = vmul.f32 %v5192, %v5240
      %v5249 = vmul.f32 %v5193, %v5241
      %v5250 = vmul.f32 %v5194, %v5242
      %v5251 = vmul.f32 %v5195, %v5243
      %v5252 = vmul.f32 %v5196, %v5244
      %v5253 = vmul.f32 %v5197, %v5245
      %v5254 = vld [vmem:[%s8 + $0x4] sm:$0x1]
      %v5255 = vlaneseq
      %v5256 = vshrl.u32 %v5255, 7
      %v5257 = vsub.s32 0, %v5256
      %v5258 = vrot.slane %v5254, %v5257
      %v5259 = vmul.f32 %v5246, %v5258
      %v5260 = vmul.f32 %v5247, %v5258
      %v5261 = vmul.f32 %v5248, %v5258
      %v5262 = vmul.f32 %v5249, %v5258
      %v5263 = vmul.f32 %v5250, %v5258
      %v5264 = vmul.f32 %v5251, %v5258
      %v5265 = vmul.f32 %v5252, %v5258
      %v5266 = vmul.f32 %v5253, %v5258
      %v5267 = vld [vmem:[%s8 + $0x5] sm:$0x1]
      %v5268 = vlaneseq
      %v5269 = vshrl.u32 %v5268, 7
      %v5270 = vsub.s32 0, %v5269
      %v5271 = vrot.slane %v5267, %v5270
      %v5272 = vadd.f32 %v5259, %v5271
      %v5273 = vadd.f32 %v5260, %v5271
      %v5274 = vadd.f32 %v5261, %v5271
      %v5275 = vadd.f32 %v5262, %v5271
      %v5276 = vadd.f32 %v5263, %v5271
      %v5277 = vadd.f32 %v5264, %v5271
      %v5278 = vadd.f32 %v5265, %v5271
      %v5279 = vadd.f32 %v5266, %v5271
      %v5280 = vpack.c.bf16 %v5273, %v5272
      %v5281 = vpack.c.bf16 %v5275, %v5274
      %v5282 = vpack.c.bf16 %v5277, %v5276
      %v5283 = vpack.c.bf16 %v5279, %v5278
      %v5284 = vld [vmem:[%s7] sm:$0xff]
      %v5285 = vld [vmem:[%s7 + $0x8] sm:$0xff]
      %v5286 = vld [vmem:[%s7 + $0x10] sm:$0xff]
      %v5287 = vld [vmem:[%s7 + $0x18] sm:$0xff]
      %v5288 = vld [vmem:[%s7 + $0x20] sm:$0xff]
      %v5289 = vld [vmem:[%s7 + $0x28] sm:$0xff]
      %v5290 = vld [vmem:[%s7 + $0x30] sm:$0xff]
      %v5291 = vld [vmem:[%s7 + $0x38] sm:$0xff]
      %v5292 = vld [vmem:[%s7 + $0x40] sm:$0xff]
      %v5293 = vld [vmem:[%s7 + $0x48] sm:$0xff]
      %v5294 = vld [vmem:[%s7 + $0x50] sm:$0xff]
      %v5295 = vld [vmem:[%s7 + $0x58] sm:$0xff]
      %v5296 = vld [vmem:[%s7 + $0x60] sm:$0xff]
      %v5297 = vld [vmem:[%s7 + $0x68] sm:$0xff]
      %v5298 = vld [vmem:[%s7 + $0x70] sm:$0xff]
      %v5299 = vld [vmem:[%s7 + $0x78] sm:$0xff]
      %v5316 = vunpack.c.l.b16 %v5284
      %v5317 = vunpack.c.h.b16 %v5284
      %v5318 = vunpack.c.l.b16 %v5285
      %v5319 = vunpack.c.h.b16 %v5285
      %v5320 = vunpack.c.l.b16 %v5286
      %v5321 = vunpack.c.h.b16 %v5286
      %v5322 = vunpack.c.l.b16 %v5287
      %v5323 = vunpack.c.h.b16 %v5287
      %v5324 = vunpack.c.l.b16 %v5288
      %v5325 = vunpack.c.h.b16 %v5288
      %v5326 = vunpack.c.l.b16 %v5289
      %v5327 = vunpack.c.h.b16 %v5289
      %v5328 = vunpack.c.l.b16 %v5290
      %v5329 = vunpack.c.h.b16 %v5290
      %v5330 = vunpack.c.l.b16 %v5291
      %v5331 = vunpack.c.h.b16 %v5291
      %v5332 = vunpack.c.l.b16 %v5292
      %v5333 = vunpack.c.h.b16 %v5292
      %v5334 = vunpack.c.l.b16 %v5293
      %v5335 = vunpack.c.h.b16 %v5293
      %v5336 = vunpack.c.l.b16 %v5294
      %v5337 = vunpack.c.h.b16 %v5294
      %v5338 = vunpack.c.l.b16 %v5295
      %v5339 = vunpack.c.h.b16 %v5295
      %v5340 = vunpack.c.l.b16 %v5296
      %v5341 = vunpack.c.h.b16 %v5296
      %v5342 = vunpack.c.l.b16 %v5297
      %v5343 = vunpack.c.h.b16 %v5297
      %v5344 = vunpack.c.l.b16 %v5298
      %v5345 = vunpack.c.h.b16 %v5298
      %v5346 = vunpack.c.l.b16 %v5299
      %v5347 = vunpack.c.h.b16 %v5299
      %v5348 = vpack.c.b16 %v5318, %v5316
      %v5349 = vpack.c.b16 %v5319, %v5317
      %v5350 = vpack.c.b16 %v5322, %v5320
      %v5351 = vpack.c.b16 %v5323, %v5321
      %v5352 = vpack.c.b16 %v5326, %v5324
      %v5353 = vpack.c.b16 %v5327, %v5325
      %v5354 = vpack.c.b16 %v5330, %v5328
      %v5355 = vpack.c.b16 %v5331, %v5329
      %v5356 = vpack.c.b16 %v5334, %v5332
      %v5357 = vpack.c.b16 %v5335, %v5333
      %v5358 = vpack.c.b16 %v5338, %v5336
      %v5359 = vpack.c.b16 %v5339, %v5337
      %v5360 = vpack.c.b16 %v5342, %v5340
      %v5361 = vpack.c.b16 %v5343, %v5341
      %v5362 = vpack.c.b16 %v5346, %v5344
      %v5363 = vpack.c.b16 %v5347, %v5345
      %5380 = vmatprep.subr.bf16.mxu0 %v5363
      %5381 = vmatpush1.bf16.msra.mxu0 %v5362
      %5382 = vmatprep.subr.bf16.mxu0 %v5361
      %5383 = vmatpush1.bf16.msra.mxu0 %v5360
      %5384 = vmatprep.subr.bf16.mxu0 %v5359
      %5385 = vmatpush1.bf16.msra.mxu0 %v5358
      %5386 = vmatprep.subr.bf16.mxu0 %v5357
      %5387 = vmatpush1.bf16.msra.mxu0 %v5356
      %5388 = vmatprep.subr.bf16.mxu0 %v5355
      %5389 = vmatpush1.bf16.msra.mxu0 %v5354
      %5390 = vmatprep.subr.bf16.mxu0 %v5353
      %5391 = vmatpush1.bf16.msra.mxu0 %v5352
      %5392 = vmatprep.subr.bf16.mxu0 %v5351
      %5393 = vmatpush1.bf16.msra.mxu0 %v5350
      %5394 = vmatprep.subr.bf16.mxu0 %v5349
      %5395 = vmatpush1.bf16.msra.mxu0 %v5348
      %5396 = vmatprep.subr.bf16.mxu0 0
      %5397 = vmatpush2.bf16.msra.mxu0 0
      %5398 = vmatprep.subr.bf16.mxu0 0
      %5399 = vmatpush2.bf16.msra.mxu0 0
      %5400 = vmatprep.subr.bf16.mxu0 0
      %5401 = vmatpush2.bf16.msra.mxu0 0
      %5402 = vmatprep.subr.bf16.mxu0 0
      %5403 = vmatpush2.bf16.msra.mxu0 0
      %5404 = vmatprep.subr.bf16.mxu0 0
      %5405 = vmatpush2.bf16.msra.mxu0 0
      %5406 = vmatprep.subr.bf16.mxu0 0
      %5407 = vmatpush2.bf16.msra.mxu0 0
      %5408 = vmatprep.subr.bf16.mxu0 0
      %5409 = vmatpush2.bf16.msra.mxu0 0
      %5410 = vmatprep.subr.bf16.mxu0 0
      %5411 = vmatpush2.bf16.msra.mxu0 0
      %5412 = vmatprep.mubr.bf16.mxu0 0
      %5413 = vmatmul.mubr.bf16.gmra.mxu0 %v5280
      %v5414 = vpop.f32.mrf.mxu0
      %v5415 = vadd.f32 0.0, %v5414
      %v5416 = vpop.f32.mrf.mxu0
      %v5417 = vadd.f32 0.0, %v5416
      %v5418 = vpop.f32.mrf.mxu0
      %v5419 = vadd.f32 0.0, %v5418
      %v5420 = vpop.f32.mrf.mxu0
      %v5421 = vadd.f32 0.0, %v5420
      %5422 = vmatprep.mubr.bf16.mxu0 0
      %5423 = vmatmul.mubr.bf16.gmra.mxu0 %v5281
      %v5424 = vpop.f32.mrf.mxu0
      %v5425 = vadd.f32 0.0, %v5424
      %v5426 = vpop.f32.mrf.mxu0
      %v5427 = vadd.f32 0.0, %v5426
      %v5428 = vpop.f32.mrf.mxu0
      %v5429 = vadd.f32 0.0, %v5428
      %v5430 = vpop.f32.mrf.mxu0
      %v5431 = vadd.f32 0.0, %v5430
      %5432 = vmatprep.mubr.bf16.mxu0 0
      %5433 = vmatmul.mubr.bf16.gmra.mxu0 %v5282
      %v5434 = vpop.f32.mrf.mxu0
      %v5435 = vadd.f32 0.0, %v5434
      %v5436 = vpop.f32.mrf.mxu0
      %v5437 = vadd.f32 0.0, %v5436
      %v5438 = vpop.f32.mrf.mxu0
      %v5439 = vadd.f32 0.0, %v5438
      %v5440 = vpop.f32.mrf.mxu0
      %v5441 = vadd.f32 0.0, %v5440
      %5442 = vmatprep.mubr.bf16.mxu0 0
      %5443 = vmatmul.mubr.bf16.gmra.mxu0 %v5283
      %v5444 = vpop.f32.mrf.mxu0
      %v5445 = vadd.f32 0.0, %v5444
      %v5446 = vpop.f32.mrf.mxu0
      %v5447 = vadd.f32 0.0, %v5446
      %v5448 = vpop.f32.mrf.mxu0
      %v5449 = vadd.f32 0.0, %v5448
      %v5450 = vpop.f32.mrf.mxu0
      %v5451 = vadd.f32 0.0, %v5450
      %5452 = vdwg.mxu0
      %v5453 = vmul.f32 %v5415, %v5415
      %v5454 = vmul.f32 %v5419, %v5419
      %v5455 = vmul.f32 %v5425, %v5425
      %v5456 = vmul.f32 %v5429, %v5429
      %v5457 = vmul.f32 %v5435, %v5435
      %v5458 = vmul.f32 %v5439, %v5439
      %v5459 = vmul.f32 %v5445, %v5445
      %v5460 = vmul.f32 %v5449, %v5449
      %5461 = vadd.xlane.f32.xlu0 %v5453
      %v5462 = vpop.xlane.xlu0 %5461
      %5463 = vadd.xlane.f32.xlu0 %v5454
      %v5464 = vpop.xlane.xlu0 %5463
      %5465 = vadd.xlane.f32.xlu0 %v5455
      %v5466 = vpop.xlane.xlu0 %5465
      %5467 = vadd.xlane.f32.xlu0 %v5456
      %v5468 = vpop.xlane.xlu0 %5467
      %5469 = vadd.xlane.f32.xlu0 %v5457
      %v5470 = vpop.xlane.xlu0 %5469
      %5471 = vadd.xlane.f32.xlu0 %v5458
      %v5472 = vpop.xlane.xlu0 %5471
      %5473 = vadd.xlane.f32.xlu0 %v5459
      %v5474 = vpop.xlane.xlu0 %5473
      %5475 = vadd.xlane.f32.xlu0 %v5460
      %v5476 = vpop.xlane.xlu0 %5475
      %v5477 = vmax.f32 %v5462, 1e-24
      %v5478 = vmax.f32 %v5464, 1e-24
      %v5479 = vmax.f32 %v5466, 1e-24
      %v5480 = vmax.f32 %v5468, 1e-24
      %v5481 = vmax.f32 %v5470, 1e-24
      %v5482 = vmax.f32 %v5472, 1e-24
      %v5483 = vmax.f32 %v5474, 1e-24
      %v5484 = vmax.f32 %v5476, 1e-24
      %v5485 = vrsqrt.pop %v5477
      %v5486 = vrsqrt.pop %v5478
      %v5487 = vrsqrt.pop %v5479
      %v5488 = vrsqrt.pop %v5480
      %v5489 = vrsqrt.pop %v5481
      %v5490 = vrsqrt.pop %v5482
      %v5491 = vrsqrt.pop %v5483
      %v5492 = vrsqrt.pop %v5484
      %v5493 = vmul.f32 %v5417, %v5417
      %v5494 = vmul.f32 %v5421, %v5421
      %v5495 = vmul.f32 %v5427, %v5427
      %v5496 = vmul.f32 %v5431, %v5431
      %v5497 = vmul.f32 %v5437, %v5437
      %v5498 = vmul.f32 %v5441, %v5441
      %v5499 = vmul.f32 %v5447, %v5447
      %v5500 = vmul.f32 %v5451, %v5451
      %5501 = vadd.xlane.f32.xlu0 %v5493
      %v5502 = vpop.xlane.xlu0 %5501
      %5503 = vadd.xlane.f32.xlu0 %v5494
      %v5504 = vpop.xlane.xlu0 %5503
      %5505 = vadd.xlane.f32.xlu0 %v5495
      %v5506 = vpop.xlane.xlu0 %5505
      %5507 = vadd.xlane.f32.xlu0 %v5496
      %v5508 = vpop.xlane.xlu0 %5507
      %5509 = vadd.xlane.f32.xlu0 %v5497
      %v5510 = vpop.xlane.xlu0 %5509
      %5511 = vadd.xlane.f32.xlu0 %v5498
      %v5512 = vpop.xlane.xlu0 %5511
      %5513 = vadd.xlane.f32.xlu0 %v5499
      %v5514 = vpop.xlane.xlu0 %5513
      %5515 = vadd.xlane.f32.xlu0 %v5500
      %v5516 = vpop.xlane.xlu0 %5515
      %v5517 = vmax.f32 %v5502, 1e-24
      %v5518 = vmax.f32 %v5504, 1e-24
      %v5519 = vmax.f32 %v5506, 1e-24
      %v5520 = vmax.f32 %v5508, 1e-24
      %v5521 = vmax.f32 %v5510, 1e-24
      %v5522 = vmax.f32 %v5512, 1e-24
      %v5523 = vmax.f32 %v5514, 1e-24
      %v5524 = vmax.f32 %v5516, 1e-24
      %v5525 = vrsqrt.pop %v5517
      %v5526 = vrsqrt.pop %v5518
      %v5527 = vrsqrt.pop %v5519
      %v5528 = vrsqrt.pop %v5520
      %v5529 = vrsqrt.pop %v5521
      %v5530 = vrsqrt.pop %v5522
      %v5531 = vrsqrt.pop %v5523
      %v5532 = vrsqrt.pop %v5524
      %v5533 = vmul.f32 %v5415, %v5485
      %v5534 = vmul.f32 %v5419, %v5486
      %v5535 = vmul.f32 %v5425, %v5487
      %v5536 = vmul.f32 %v5429, %v5488
      %v5537 = vmul.f32 %v5435, %v5489
      %v5538 = vmul.f32 %v5439, %v5490
      %v5539 = vmul.f32 %v5445, %v5491
      %v5540 = vmul.f32 %v5449, %v5492
      %5541 = vst [vmem:[%s363] sm:$0xff] %v5533
      %5542 = vst [vmem:[%s363 + $0x10] sm:$0xff] %v5534
      %5543 = vst [vmem:[%s363 + $0x20] sm:$0xff] %v5535
      %5544 = vst [vmem:[%s363 + $0x30] sm:$0xff] %v5536
      %5545 = vst [vmem:[%s363 + $0x40] sm:$0xff] %v5537
      %5546 = vst [vmem:[%s363 + $0x50] sm:$0xff] %v5538
      %5547 = vst [vmem:[%s363 + $0x60] sm:$0xff] %v5539
      %5548 = vst [vmem:[%s363 + $0x70] sm:$0xff] %v5540
      %v5549 = vmul.f32 %v5417, %v5525
      %v5550 = vmul.f32 %v5421, %v5526
      %v5551 = vmul.f32 %v5427, %v5527
      %v5552 = vmul.f32 %v5431, %v5528
      %v5553 = vmul.f32 %v5437, %v5529
      %v5554 = vmul.f32 %v5441, %v5530
      %v5555 = vmul.f32 %v5447, %v5531
      %v5556 = vmul.f32 %v5451, %v5532
      %5557 = vst [vmem:[%s363 + $0x8] sm:$0xff] %v5549
      %5558 = vst [vmem:[%s363 + $0x18] sm:$0xff] %v5550
      %5559 = vst [vmem:[%s363 + $0x28] sm:$0xff] %v5551
      %5560 = vst [vmem:[%s363 + $0x38] sm:$0xff] %v5552
      %5561 = vst [vmem:[%s363 + $0x48] sm:$0xff] %v5553
      %5562 = vst [vmem:[%s363 + $0x58] sm:$0xff] %v5554
      %5563 = vst [vmem:[%s363 + $0x68] sm:$0xff] %v5555
      %5564 = vst [vmem:[%s363 + $0x78] sm:$0xff] %v5556
      %s5565 = smul.u32 8, %s21
      %p5566 = scmp.lt.s32.totalorder %s5565, 15
      %s5567 = scalar_select %p5566, %s5565, 15
      %s5568 = smul.addr %s5567, 2
      %s5569 = smul.addr %s5568, 8
      %s5570 = scalar_lea.vmem %s10, %s5569
      // Predicated region
      $region61: #{explicd_forward.1} parent=59 // pred_check
        %p5571 = pneg %p254
      $region62: #{explicd_forward.1} parent=59 // pred_check_branch
        %5573 = sbr.rel (%p5571) target = $region64
      $region63: #{explicd_forward.1} parent=59 // pred_region
        %s5574 = smul.u32 8, %s21
      $region64: #{explicd_forward.1} parent=59 // pred_fallthru
        _
    $region60: #{explicd_forward.1} parent=5 // pred_fallthru
      _
    %p5575 = scmp.le.s32.totalorder 2, %s16
    // Predicated region
    $region65: #{explicd_forward.1} parent=5 // pred_check
      %p5576 = pneg %p5575
    $region66: #{explicd_forward.1} parent=5 // pred_check_branch
      %5578 = sbr.rel (%p5576) target = $region68
    $region67: #{explicd_forward.1} parent=5 // pred_region
      %s5579 = ssub.s32 %s16, 2
      // Predicated region
      $region69: #{explicd_forward.1} parent=67 // pred_check
        %p5580 = pneg %p260
      $region70: #{explicd_forward.1} parent=67 // pred_check_branch
        %5582 = sbr.rel (%p5580) target = $region72
      $region71: #{explicd_forward.1} parent=67 // pred_region
        %s5583 = smul.u32 8, %s22
        %p5584 = scmp.lt.s32.totalorder %s5583, 15
        %s5585 = scalar_select %p5584, %s5583, 15
        %s5586 = smul.addr %s5585, 2
        %s5587 = smul.addr %s5586, 8
        %s5588 = scalar_lea.vmem %s10, %s5587
      $region72: #{explicd_forward.1} parent=67 // pred_fallthru
        _
    $region68: #{explicd_forward.1} parent=5 // pred_fallthru
      _
  $region6: #{explicd_forward.1} parent=0 // loop_footer
    %s20 = sadd.s32 1, %s16
  $region7: #{explicd_forward.1} parent=0 // loop_footer_branch
    %15 = sbr.rel target = $region3
  $region8: #{explicd_forward.1} parent=0 // loop_exit
    _

</llo_original>
